<compile_context>
chip_gen: v7x
topology: tpu7x:2x2x1
jax: 0.10.0
libtpu: 0.0.40
codegen_flags: <defaults>
</compile_context>

<pallas_src>
import functools

import jax
import jax.numpy as jnp
from jax.experimental import pallas as pl
from jax.experimental.pallas import tpu as pltpu

EPS = 1e-5

# Polyphase tap table for ConvTranspose2d(kernel=4, stride=2, padding=1).
# Along one axis, output parity q satisfies: out[2*i + q] += in[i + delta] * w[k]
# for the (delta, k) pairs below.
_PARITY_TAPS = (
    ((-1, 3), (0, 1)),   # parity 0
    ((0, 2), (1, 0)),    # parity 1
)


# ---------------------------------------------------------------------------
# Fused Pallas kernel
# ---------------------------------------------------------------------------
def _decoder_kernel(x_ref, w1_ref, g1_ref, be1_ref, w2_ref, g2_ref, be2_ref,
                    wt_ref, out_ref, h1_ref, h2_ref, *,
                    wp, hp, d0, ld, tail, inv_cnt):
    """Conv3x3+BN+ReLU -> Conv3x3+BN+ReLU -> ConvTranspose4x4(s2,p1), fully fused.

    Activations are 2D (rows, C) "padded row" matrices: row r = lead + n*(hp*wp) +
    (y+1)*wp + (x+1) holds spatial (y, x) of image n; border rows hold the zero halo.
    A conv tap (dy, dx) is a pure row shift, so the whole 3x3 neighbourhood of every
    interior row is assembled as one (ld, 9*C) bf16 matrix and each conv is a single
    wide-K matmul accumulated on the MXU in f32 (no HBM staging, no per-tap RMW).
    """
    # Interior-row mask, generated in-kernel (no (rows,1) DMA stream).  Integer mod is
    # emulated with f32 floor-division, which is exact at these magnitudes.
    idx = jax.lax.broadcasted_iota(jnp.int32, (ld, 1), 0).astype(jnp.float32) + float(wp + 1)
    col = idx - jnp.floor(idx / wp) * wp
    rmod = idx - jnp.floor(idx / (hp * wp)) * (hp * wp)
    rowi = jnp.floor(rmod / wp)
    mk = ((col >= 1.0) & (col <= float(wp - 2)) &
          (rowi >= 1.0) & (rowi <= float(hp - 2))).astype(jnp.float32)   # (ld, 1)

    def gather9(src_ref):
        # im2col fused in VMEM: 9 shifted reads concatenated along lanes -> (ld, 9*C) bf16.
        parts = []
        for t in range(9):
            off = (t // 3 - 1) * wp + (t % 3 - 1)
            parts.append(src_ref[pl.ds(d0 + off, ld), :])
        return jnp.concatenate(parts, axis=1)

    def conv3_bn_relu(src_ref, w_ref, g_ref, be_ref, dst_ref):
        c_out = w_ref.shape[-1]
        # ONE wide-K matmul per stage (K = 9*Cin), accumulated in f32 on the MXU.
        acc = jnp.dot(gather9(src_ref), w_ref[...],
                      preferred_element_type=jnp.float32)              # (ld, c_out)
        # BatchNorm2d training-mode batch stats over (N, H, W); halo rows masked out.
        # Conv bias omitted: exactly cancelled by the mean subtraction.
        mk_b = jnp.broadcast_to(mk, (ld, c_out))                       # hoisted once
        macc = acc * mk_b
        mean = jnp.sum(macc, axis=0, keepdims=True) * inv_cnt
        var = jnp.sum(macc * acc, axis=0, keepdims=True) * inv_cnt - mean * mean
        scale = g_ref[...] * jax.lax.rsqrt(jnp.maximum(var, 0.0) + EPS)
        h = jnp.maximum((acc - mean) * scale + be_ref[...], 0.0) * mk_b
        # Re-establish the zero halo: only the tiny head/tail strips need explicit zeros;
        # the interior (incl. in-range halo rows, zeroed by * mk_b) is overwritten below.
        dst_ref[pl.ds(0, d0), :] = jnp.zeros((d0, c_out), dst_ref.dtype)
        dst_ref[pl.ds(d0 + ld, tail), :] = jnp.zeros((tail, c_out), dst_ref.dtype)
        dst_ref[pl.ds(d0, ld), :] = h.astype(dst_ref.dtype)

    conv3_bn_relu(x_ref, w1_ref, g1_ref, be1_ref, h1_ref)    # intermediate stays in VMEM
    conv3_bn_relu(h1_ref, w2_ref, g2_ref, be2_ref, h2_ref)   # intermediate stays in VMEM

    # Transposed conv (4x4, s2, p1) as ONE matmul: the 16 polyphase taps are folded into a
    # zero-padded (9*Ct, 4*Cout) RHS, so all four output parities are produced lane-adjacent
    # in a single lane-dense store.  Output halo rows are intentionally left uninitialized;
    # the wrapper slices them away.
    out_ref[pl.ds(d0, ld), :] = jnp.dot(gather9(h2_ref), wt_ref[...],
                                        preferred_element_type=jnp.float32)


# ---------------------------------------------------------------------------
# Wrapper: layout plumbing + single pallas_call
# ---------------------------------------------------------------------------
def decoder_forward(x_nchw, p):
    n, cin, h, w = x_nchw.shape
    cmid = p['w1'].shape[-1]
    cout = p['w2'].shape[-1]
    hp, wp = h + 2, w + 2
    lead = (-(wp + 1)) % 16            # align first interior row to a sublane boundary
    d0 = lead + wp + 1                 # first interior padded row (multiple of 16)
    ld = n * hp * wp - 2 * wp - 2      # rows [d0, d0+ld) cover every interior row
    tail = wp + 1
    rows = lead + n * hp * wp
    inv_cnt = 1.0 / float(n * h * w)

    # NCHW -> NHWC -> zero spatial halo -> flatten to (rows, C), bf16 for the MXU.
    # Only the (small) network input is padded by XLA; intermediate halos live in VMEM.
    x = jnp.transpose(x_nchw, (0, 2, 3, 1))
    x2d = jnp.pad(x, ((0, 0), (1, 1), (1, 1), (0, 0))).reshape(n * hp * wp, cin)
    x2d = jnp.pad(x2d, ((lead, 0), (0, 0))).astype(jnp.bfloat16)

    # 3x3 conv weights packed for one wide-K matmul per stage: (9*Cin, Cout), bf16.
    w1p = p['w1'].reshape(9 * cin, cmid).astype(jnp.bfloat16)
    w2p = p['w2'].reshape(9 * cmid, cout).astype(jnp.bfloat16)

    # Transposed-conv weights: fold the 16 polyphase taps into a zero-padded
    # (9*Ct, 4*Cout) matrix keyed by the same 9 row offsets used by gather9.
    wt9 = jnp.zeros((9, cout, 4 * cout), jnp.float32)
    for py in range(2):
        for px in range(2):
            pidx = py * 2 + px
            for (dy, ky) in _PARITY_TAPS[py]:
                for (dx, kx) in _PARITY_TAPS[px]:
                    t = (dy + 1) * 3 + (dx + 1)
                    wt9 = wt9.at[t, :, pidx * cout:(pidx + 1) * cout].set(
                        p['wt'][:, :, ky, kx])
    wtp = wt9.reshape(9 * cout, 4 * cout).astype(jnp.bfloat16)

    g1 = p['g1'].reshape(1, cmid).astype(jnp.float32)
    be1 = p['be1'].reshape(1, cmid).astype(jnp.float32)
    g2 = p['g2'].reshape(1, cout).astype(jnp.float32)
    be2 = p['be2'].reshape(1, cout).astype(jnp.float32)

    kernel = functools.partial(_decoder_kernel, wp=wp, hp=hp, d0=d0, ld=ld,
                               tail=tail, inv_cnt=inv_cnt)
    out = pl.pallas_call(
        kernel,
        out_shape=jax.ShapeDtypeStruct((rows, 4 * cout), jnp.float32),
        grid=(1,),
        in_specs=[
            pl.BlockSpec((rows, cin), lambda i: (0, 0)),
            pl.BlockSpec((9 * cin, cmid), lambda i: (0, 0)),
            pl.BlockSpec((1, cmid), lambda i: (0, 0)),
            pl.BlockSpec((1, cmid), lambda i: (0, 0)),
            pl.BlockSpec((9 * cmid, cout), lambda i: (0, 0)),
            pl.BlockSpec((1, cout), lambda i: (0, 0)),
            pl.BlockSpec((1, cout), lambda i: (0, 0)),
            pl.BlockSpec((9 * cout, 4 * cout), lambda i: (0, 0)),
        ],
        out_specs=pl.BlockSpec((rows, 4 * cout), lambda i: (0, 0)),
        scratch_shapes=[
            pltpu.VMEM((rows, cmid), jnp.bfloat16),   # h1: VMEM-resident, bf16
            pltpu.VMEM((rows, cout), jnp.bfloat16),   # h2: VMEM-resident, bf16
        ],
        compiler_params=pltpu.CompilerParams(dimension_semantics=("arbitrary",)),
    )(x2d, w1p, g1, be1, w2p, g2, be2, wtp)

    # Undo the padded-row layout and interleave the four parities (pure layout plumbing).
    # INVARIANT: only interior rows of `out` were written by the kernel; every row kept by
    # this slice is an interior row.
    out6 = out[lead:].reshape(n, hp, wp, 2, 2, cout)[:, 1:h + 1, 1:w + 1]
    return jnp.transpose(out6, (0, 5, 1, 3, 2, 4)).reshape(n, cout, 2 * h, 2 * w)


# ---------------------------------------------------------------------------
# Parameters
# ---------------------------------------------------------------------------
def init_params(key, n_in, n_mid, n_out):
    ks = jax.random.split(key, 9)
    p = {}
    p['w1'] = 0.1 * jax.random.normal(ks[0], (3, 3, n_in, n_mid), jnp.float32)
    p['b1'] = 0.1 * jax.random.normal(ks[1], (n_mid,), jnp.float32)   # cancelled by BN
    p['g1'] = 1.0 + 0.1 * jax.random.normal(ks[2], (n_mid,), jnp.float32)
    p['be1'] = 0.1 * jax.random.normal(ks[3], (n_mid,), jnp.float32)
    p['w2'] = 0.1 * jax.random.normal(ks[4], (3, 3, n_mid, n_out), jnp.float32)
    p['b2'] = 0.1 * jax.random.normal(ks[5], (n_out,), jnp.float32)   # cancelled by BN
    p['g2'] = 1.0 + 0.1 * jax.random.normal(ks[6], (n_out,), jnp.float32)
    p['be2'] = 0.1 * jax.random.normal(ks[7], (n_out,), jnp.float32)
    p['wt'] = 0.1 * jax.random.normal(ks[8], (n_out, n_out, 4, 4), jnp.float32)
    return p


# ---------------------------------------------------------------------------
# Pure-JAX reference (correctness check only; includes the conv biases to show the
# bias-dropped kernel is exactly equivalent under training-mode BatchNorm).
# ---------------------------------------------------------------------------
def ref_forward(x_nchw, p):
    x = jnp.transpose(x_nchw, (0, 2, 3, 1))

    def conv_bn_relu(x, w, b, g, be):
        y = jax.lax.conv_general_dilated(
            x, w, (1, 1), ((1, 1), (1, 1)),
            dimension_numbers=('NHWC', 'HWIO', 'NHWC'),
            precision=jax.lax.Precision.HIGHEST)
        y = y + b
        mean = jnp.mean(y, axis=(0, 1, 2), keepdims=True)
        var = jnp.mean((y - mean) ** 2, axis=(0, 1, 2), keepdims=True)
        y = (y - mean) / jnp.sqrt(var + EPS) * g + be
        return jnp.maximum(y, 0.0)

    y = conv_bn_relu(x, p['w1'], p['b1'], p['g1'], p['be1'])
    y = conv_bn_relu(y, p['w2'], p['b2'], p['g2'], p['be2'])
    w_conv = jnp.transpose(p['wt'][:, :, ::-1, ::-1], (2, 3, 0, 1))
    y = jax.lax.conv_general_dilated(
        y, w_conv, (1, 1), ((2, 2), (2, 2)), lhs_dilation=(2, 2),
        dimension_numbers=('NHWC', 'HWIO', 'NHWC'),
        precision=jax.lax.Precision.HIGHEST)
    return jnp.transpose(y, (0, 3, 1, 2))


if __name__ == "__main__":
    key = jax.random.PRNGKey(0)
    n_in, n_mid, n_out = 4, 8, 4
    N, H, W = 2, 16, 16
    kx, kp = jax.random.split(key)
    x = jax.random.normal(kx, (N, n_in, H, W), jnp.float32)
    params = init_params(kp, n_in, n_mid, n_out)

    fwd = jax.jit(decoder_forward)
    out = jax.block_until_ready(fwd(x, params))
    assert out.shape == (N, n_out, 2 * H, 2 * W), out.shape
    assert out.dtype == jnp.float32

    ref = jax.block_until_ready(jax.jit(ref_forward)(x, params))
    max_err = float(jnp.max(jnp.abs(out - ref)))
    # bf16 MXU operands vs a Precision.HIGHEST f32 reference -> loose-ish tolerance.
    assert max_err < 5e-2, f"max abs error too large: {max_err}"

    print("KERNEL_OK")
</pallas_src>

<mosaic_0001>
module attributes {stable_mosaic.version = 11 : i64} {
  func.func @_decoder_kernel(%arg0: i32, %arg1: memref<661x4xbf16, #tpu.memory_space<vmem>>, %arg2: memref<36x8xbf16, #tpu.memory_space<vmem>>, %arg3: memref<1x8xf32, #tpu.memory_space<vmem>>, %arg4: memref<1x8xf32, #tpu.memory_space<vmem>>, %arg5: memref<72x4xbf16, #tpu.memory_space<vmem>>, %arg6: memref<1x4xf32, #tpu.memory_space<vmem>>, %arg7: memref<1x4xf32, #tpu.memory_space<vmem>>, %arg8: memref<36x16xbf16, #tpu.memory_space<vmem>>, %arg9: memref<661x16xf32, #tpu.memory_space<vmem>>, %arg10: memref<661x8xbf16, #tpu.memory_space<vmem>>, %arg11: memref<661x4xbf16, #tpu.memory_space<vmem>>) attributes {dimension_semantics = [#tpu.dimension_semantics<arbitrary>], iteration_bounds = array<i64: 1>, scalar_prefetch = 0 : i64, scratch_operands = 2 : i64, tpu.core_type = #tpu.core_type<tc>, window_params = [{pipeline_mode = #tpu.pipeline_mode<synchronous>, transform_indices = @transform_0, window_bounds = array<i64: 661, 4>}, {pipeline_mode = #tpu.pipeline_mode<synchronous>, transform_indices = @transform_1, window_bounds = array<i64: 36, 8>}, {pipeline_mode = #tpu.pipeline_mode<synchronous>, transform_indices = @transform_2, window_bounds = array<i64: 1, 8>}, {pipeline_mode = #tpu.pipeline_mode<synchronous>, transform_indices = @transform_3, window_bounds = array<i64: 1, 8>}, {pipeline_mode = #tpu.pipeline_mode<synchronous>, transform_indices = @transform_4, window_bounds = array<i64: 72, 4>}, {pipeline_mode = #tpu.pipeline_mode<synchronous>, transform_indices = @transform_5, window_bounds = array<i64: 1, 4>}, {pipeline_mode = #tpu.pipeline_mode<synchronous>, transform_indices = @transform_6, window_bounds = array<i64: 1, 4>}, {pipeline_mode = #tpu.pipeline_mode<synchronous>, transform_indices = @transform_7, window_bounds = array<i64: 36, 16>}, {pipeline_mode = #tpu.pipeline_mode<synchronous>, transform_indices = @transform_8, window_bounds = array<i64: 661, 16>}]} {
    %0 = tpu.iota {dimensions = array<i32: 0>} : vector<610x1xi32>
    %1 = arith.sitofp %0 : vector<610x1xi32> to vector<610x1xf32>
    %cst = arith.constant 1.900000e+01 : f32
    %2 = vector.broadcast %cst : f32 to vector<610x1xf32>
    %3 = arith.addf %1, %2 : vector<610x1xf32>
    %cst_0 = arith.constant 1.800000e+01 : f32
    %4 = vector.broadcast %cst_0 : f32 to vector<610x1xf32>
    %5 = arith.divf %3, %4 : vector<610x1xf32>
    %6 = math.floor %5 : vector<610x1xf32>
    %cst_1 = arith.constant 1.800000e+01 : f32
    %7 = vector.broadcast %cst_1 : f32 to vector<610x1xf32>
    %8 = arith.mulf %6, %7 : vector<610x1xf32>
    %9 = arith.subf %3, %8 : vector<610x1xf32>
    %cst_2 = arith.constant 3.240000e+02 : f32
    %10 = vector.broadcast %cst_2 : f32 to vector<610x1xf32>
    %11 = arith.divf %3, %10 : vector<610x1xf32>
    %12 = math.floor %11 : vector<610x1xf32>
    %cst_3 = arith.constant 3.240000e+02 : f32
    %13 = vector.broadcast %cst_3 : f32 to vector<610x1xf32>
    %14 = arith.mulf %12, %13 : vector<610x1xf32>
    %15 = arith.subf %3, %14 : vector<610x1xf32>
    %cst_4 = arith.constant 1.800000e+01 : f32
    %16 = vector.broadcast %cst_4 : f32 to vector<610x1xf32>
    %17 = arith.divf %15, %16 : vector<610x1xf32>
    %18 = math.floor %17 : vector<610x1xf32>
    %cst_5 = arith.constant 1.000000e+00 : f32
    %19 = vector.broadcast %cst_5 : f32 to vector<610x1xf32>
    %20 = arith.cmpf oge, %9, %19 : vector<610x1xf32>
    %cst_6 = arith.constant 1.600000e+01 : f32
    %21 = vector.broadcast %cst_6 : f32 to vector<610x1xf32>
    %22 = arith.cmpf ole, %9, %21 : vector<610x1xf32>
    %23 = arith.andi %20, %22 : vector<610x1xi1>
    %cst_7 = arith.constant 1.000000e+00 : f32
    %24 = vector.broadcast %cst_7 : f32 to vector<610x1xf32>
    %25 = arith.cmpf oge, %18, %24 : vector<610x1xf32>
    %26 = arith.andi %23, %25 : vector<610x1xi1>
    %cst_8 = arith.constant 1.600000e+01 : f32
    %27 = vector.broadcast %cst_8 : f32 to vector<610x1xf32>
    %28 = arith.cmpf ole, %18, %27 : vector<610x1xf32>
    %29 = arith.andi %26, %28 : vector<610x1xi1>
    %30 = arith.extui %29 : vector<610x1xi1> to vector<610x1xi32>
    %31 = arith.sitofp %30 : vector<610x1xi32> to vector<610x1xf32>
    %c13 = arith.constant 13 : index
    %c0 = arith.constant 0 : index
    %32 = vector.load %arg1[%c13, %c0] : memref<661x4xbf16, #tpu.memory_space<vmem>>, vector<610x4xbf16>
    %c14 = arith.constant 14 : index
    %c0_9 = arith.constant 0 : index
    %33 = vector.load %arg1[%c14, %c0_9] : memref<661x4xbf16, #tpu.memory_space<vmem>>, vector<610x4xbf16>
    %c15 = arith.constant 15 : index
    %c0_10 = arith.constant 0 : index
    %34 = vector.load %arg1[%c15, %c0_10] : memref<661x4xbf16, #tpu.memory_space<vmem>>, vector<610x4xbf16>
    %c31 = arith.constant 31 : index
    %c0_11 = arith.constant 0 : index
    %35 = vector.load %arg1[%c31, %c0_11] : memref<661x4xbf16, #tpu.memory_space<vmem>>, vector<610x4xbf16>
    %c32 = arith.constant 32 : index
    %c0_12 = arith.constant 0 : index
    %36 = vector.load %arg1[%c32, %c0_12] : memref<661x4xbf16, #tpu.memory_space<vmem>>, vector<610x4xbf16>
    %c33 = arith.constant 33 : index
    %c0_13 = arith.constant 0 : index
    %37 = vector.load %arg1[%c33, %c0_13] : memref<661x4xbf16, #tpu.memory_space<vmem>>, vector<610x4xbf16>
    %c49 = arith.constant 49 : index
    %c0_14 = arith.constant 0 : index
    %38 = vector.load %arg1[%c49, %c0_14] : memref<661x4xbf16, #tpu.memory_space<vmem>>, vector<610x4xbf16>
    %c50 = arith.constant 50 : index
    %c0_15 = arith.constant 0 : index
    %39 = vector.load %arg1[%c50, %c0_15] : memref<661x4xbf16, #tpu.memory_space<vmem>>, vector<610x4xbf16>
    %c51 = arith.constant 51 : index
    %c0_16 = arith.constant 0 : index
    %40 = vector.load %arg1[%c51, %c0_16] : memref<661x4xbf16, #tpu.memory_space<vmem>>, vector<610x4xbf16>
    %41 = tpu.concatenate %32, %33, %34, %35, %36, %37, %38, %39, %40 in 1 : vector<610x4xbf16>, vector<610x4xbf16>, vector<610x4xbf16>, vector<610x4xbf16>, vector<610x4xbf16>, vector<610x4xbf16>, vector<610x4xbf16>, vector<610x4xbf16>, vector<610x4xbf16> -> vector<610x36xbf16>
    %c0_17 = arith.constant 0 : index
    %c0_18 = arith.constant 0 : index
    %42 = vector.load %arg2[%c0_17, %c0_18] : memref<36x8xbf16, #tpu.memory_space<vmem>>, vector<36x8xbf16>
    %cst_19 = arith.constant dense<0.000000e+00> : vector<610x8xf32>
    %43 = tpu.matmul %41, %42, %cst_19 {dimension_numbers = #tpu.dot_dimension_numbers<[1], [0], [0], [1], [0, 0, 1, 1], [], []>} : vector<610x36xbf16>, vector<36x8xbf16>, vector<610x8xf32> -> vector<610x8xf32>
    %44 = vector.shape_cast %31 : vector<610x1xf32> to vector<610x1xf32>
    %45 = vector.broadcast %44 : vector<610x1xf32> to vector<610x8xf32>
    %46 = arith.mulf %43, %45 : vector<610x8xf32>
    %cst_20 = arith.constant dense<0.000000e+00> : vector<8xf32>
    %47 = vector.multi_reduction <add>, %46, %cst_20 [0] : vector<610x8xf32> to vector<8xf32>
    %48 = vector.shape_cast %47 : vector<8xf32> to vector<1x8xf32>
    %cst_21 = arith.constant 0.001953125 : f32
    %49 = vector.broadcast %cst_21 : f32 to vector<1x8xf32>
    %50 = arith.mulf %48, %49 : vector<1x8xf32>
    %51 = arith.mulf %46, %43 : vector<610x8xf32>
    %cst_22 = arith.constant dense<0.000000e+00> : vector<8xf32>
    %52 = vector.multi_reduction <add>, %51, %cst_22 [0] : vector<610x8xf32> to vector<8xf32>
    %53 = vector.shape_cast %52 : vector<8xf32> to vector<1x8xf32>
    %cst_23 = arith.constant 0.001953125 : f32
    %54 = vector.broadcast %cst_23 : f32 to vector<1x8xf32>
    %55 = arith.mulf %53, %54 : vector<1x8xf32>
    %56 = arith.mulf %50, %50 : vector<1x8xf32>
    %57 = arith.subf %55, %56 : vector<1x8xf32>
    %c0_24 = arith.constant 0 : index
    %c0_25 = arith.constant 0 : index
    %58 = vector.load %arg3[%c0_24, %c0_25] : memref<1x8xf32, #tpu.memory_space<vmem>>, vector<1x8xf32>
    %cst_26 = arith.constant 0.000000e+00 : f32
    %59 = vector.broadcast %cst_26 : f32 to vector<1x8xf32>
    %60 = arith.maximumf %57, %59 : vector<1x8xf32>
    %cst_27 = arith.constant 9.99999974E-6 : f32
    %61 = vector.broadcast %cst_27 : f32 to vector<1x8xf32>
    %62 = arith.addf %60, %61 : vector<1x8xf32>
    %63 = math.rsqrt %62 : vector<1x8xf32>
    %64 = arith.mulf %58, %63 : vector<1x8xf32>
    %65 = vector.broadcast %50 : vector<1x8xf32> to vector<610x8xf32>
    %66 = arith.subf %43, %65 : vector<610x8xf32>
    %67 = vector.broadcast %64 : vector<1x8xf32> to vector<610x8xf32>
    %68 = arith.mulf %66, %67 : vector<610x8xf32>
    %c0_28 = arith.constant 0 : index
    %c0_29 = arith.constant 0 : index
    %69 = vector.load %arg4[%c0_28, %c0_29] : memref<1x8xf32, #tpu.memory_space<vmem>>, vector<1x8xf32>
    %70 = vector.broadcast %69 : vector<1x8xf32> to vector<610x8xf32>
    %71 = arith.addf %68, %70 : vector<610x8xf32>
    %cst_30 = arith.constant 0.000000e+00 : f32
    %72 = vector.broadcast %cst_30 : f32 to vector<610x8xf32>
    %73 = arith.maximumf %71, %72 : vector<610x8xf32>
    %74 = arith.mulf %73, %45 : vector<610x8xf32>
    %cst_31 = arith.constant 0.000000e+00 : bf16
    %75 = vector.broadcast %cst_31 : bf16 to vector<32x8xbf16>
    %c0_32 = arith.constant 0 : index
    %c0_33 = arith.constant 0 : index
    %76 = vector.load %arg10[%c0_32, %c0_33] : memref<661x8xbf16, #tpu.memory_space<vmem>>, vector<32x8xbf16>
    tpu.vector_store %arg10[%c0_32, %c0_33], %75 {strides = array<i32>} : memref<661x8xbf16, #tpu.memory_space<vmem>>, vector<32x8xbf16>,
    %cst_34 = arith.constant 0.000000e+00 : bf16
    %77 = vector.broadcast %cst_34 : bf16 to vector<19x8xbf16>
    %c642 = arith.constant 642 : index
    %c0_35 = arith.constant 0 : index
    %78 = vector.load %arg10[%c642, %c0_35] : memref<661x8xbf16, #tpu.memory_space<vmem>>, vector<19x8xbf16>
    tpu.vector_store %arg10[%c642, %c0_35], %77 {strides = array<i32>} : memref<661x8xbf16, #tpu.memory_space<vmem>>, vector<19x8xbf16>,
    %79 = arith.truncf %74 : vector<610x8xf32> to vector<610x8xbf16>
    %c32_36 = arith.constant 32 : index
    %c0_37 = arith.constant 0 : index
    %80 = vector.load %arg10[%c32_36, %c0_37] : memref<661x8xbf16, #tpu.memory_space<vmem>>, vector<610x8xbf16>
    tpu.vector_store %arg10[%c32_36, %c0_37], %79 {strides = array<i32>} : memref<661x8xbf16, #tpu.memory_space<vmem>>, vector<610x8xbf16>,
    %c13_38 = arith.constant 13 : index
    %c0_39 = arith.constant 0 : index
    %81 = vector.load %arg10[%c13_38, %c0_39] : memref<661x8xbf16, #tpu.memory_space<vmem>>, vector<610x8xbf16>
    %c14_40 = arith.constant 14 : index
    %c0_41 = arith.constant 0 : index
    %82 = vector.load %arg10[%c14_40, %c0_41] : memref<661x8xbf16, #tpu.memory_space<vmem>>, vector<610x8xbf16>
    %c15_42 = arith.constant 15 : index
    %c0_43 = arith.constant 0 : index
    %83 = vector.load %arg10[%c15_42, %c0_43] : memref<661x8xbf16, #tpu.memory_space<vmem>>, vector<610x8xbf16>
    %c31_44 = arith.constant 31 : index
    %c0_45 = arith.constant 0 : index
    %84 = vector.load %arg10[%c31_44, %c0_45] : memref<661x8xbf16, #tpu.memory_space<vmem>>, vector<610x8xbf16>
    %c32_46 = arith.constant 32 : index
    %c0_47 = arith.constant 0 : index
    %85 = vector.load %arg10[%c32_46, %c0_47] : memref<661x8xbf16, #tpu.memory_space<vmem>>, vector<610x8xbf16>
    %c33_48 = arith.constant 33 : index
    %c0_49 = arith.constant 0 : index
    %86 = vector.load %arg10[%c33_48, %c0_49] : memref<661x8xbf16, #tpu.memory_space<vmem>>, vector<610x8xbf16>
    %c49_50 = arith.constant 49 : index
    %c0_51 = arith.constant 0 : index
    %87 = vector.load %arg10[%c49_50, %c0_51] : memref<661x8xbf16, #tpu.memory_space<vmem>>, vector<610x8xbf16>
    %c50_52 = arith.constant 50 : index
    %c0_53 = arith.constant 0 : index
    %88 = vector.load %arg10[%c50_52, %c0_53] : memref<661x8xbf16, #tpu.memory_space<vmem>>, vector<610x8xbf16>
    %c51_54 = arith.constant 51 : index
    %c0_55 = arith.constant 0 : index
    %89 = vector.load %arg10[%c51_54, %c0_55] : memref<661x8xbf16, #tpu.memory_space<vmem>>, vector<610x8xbf16>
    %90 = tpu.concatenate %81, %82, %83, %84, %85, %86, %87, %88, %89 in 1 : vector<610x8xbf16>, vector<610x8xbf16>, vector<610x8xbf16>, vector<610x8xbf16>, vector<610x8xbf16>, vector<610x8xbf16>, vector<610x8xbf16>, vector<610x8xbf16>, vector<610x8xbf16> -> vector<610x72xbf16>
    %c0_56 = arith.constant 0 : index
    %c0_57 = arith.constant 0 : index
    %91 = vector.load %arg5[%c0_56, %c0_57] : memref<72x4xbf16, #tpu.memory_space<vmem>>, vector<72x4xbf16>
    %cst_58 = arith.constant dense<0.000000e+00> : vector<610x4xf32>
    %92 = tpu.matmul %90, %91, %cst_58 {dimension_numbers = #tpu.dot_dimension_numbers<[1], [0], [0], [1], [0, 0, 1, 1], [], []>} : vector<610x72xbf16>, vector<72x4xbf16>, vector<610x4xf32> -> vector<610x4xf32>
    %93 = vector.shape_cast %31 : vector<610x1xf32> to vector<610x1xf32>
    %94 = vector.broadcast %93 : vector<610x1xf32> to vector<610x4xf32>
    %95 = arith.mulf %92, %94 : vector<610x4xf32>
    %cst_59 = arith.constant dense<0.000000e+00> : vector<4xf32>
    %96 = vector.multi_reduction <add>, %95, %cst_59 [0] : vector<610x4xf32> to vector<4xf32>
    %97 = vector.shape_cast %96 : vector<4xf32> to vector<1x4xf32>
    %cst_60 = arith.constant 0.001953125 : f32
    %98 = vector.broadcast %cst_60 : f32 to vector<1x4xf32>
    %99 = arith.mulf %97, %98 : vector<1x4xf32>
    %100 = arith.mulf %95, %92 : vector<610x4xf32>
    %cst_61 = arith.constant dense<0.000000e+00> : vector<4xf32>
    %101 = vector.multi_reduction <add>, %100, %cst_61 [0] : vector<610x4xf32> to vector<4xf32>
    %102 = vector.shape_cast %101 : vector<4xf32> to vector<1x4xf32>
    %cst_62 = arith.constant 0.001953125 : f32
    %103 = vector.broadcast %cst_62 : f32 to vector<1x4xf32>
    %104 = arith.mulf %102, %103 : vector<1x4xf32>
    %105 = arith.mulf %99, %99 : vector<1x4xf32>
    %106 = arith.subf %104, %105 : vector<1x4xf32>
    %c0_63 = arith.constant 0 : index
    %c0_64 = arith.constant 0 : index
    %107 = vector.load %arg6[%c0_63, %c0_64] : memref<1x4xf32, #tpu.memory_space<vmem>>, vector<1x4xf32>
    %cst_65 = arith.constant 0.000000e+00 : f32
    %108 = vector.broadcast %cst_65 : f32 to vector<1x4xf32>
    %109 = arith.maximumf %106, %108 : vector<1x4xf32>
    %cst_66 = arith.constant 9.99999974E-6 : f32
    %110 = vector.broadcast %cst_66 : f32 to vector<1x4xf32>
    %111 = arith.addf %109, %110 : vector<1x4xf32>
    %112 = math.rsqrt %111 : vector<1x4xf32>
    %113 = arith.mulf %107, %112 : vector<1x4xf32>
    %114 = vector.broadcast %99 : vector<1x4xf32> to vector<610x4xf32>
    %115 = arith.subf %92, %114 : vector<610x4xf32>
    %116 = vector.broadcast %113 : vector<1x4xf32> to vector<610x4xf32>
    %117 = arith.mulf %115, %116 : vector<610x4xf32>
    %c0_67 = arith.constant 0 : index
    %c0_68 = arith.constant 0 : index
    %118 = vector.load %arg7[%c0_67, %c0_68] : memref<1x4xf32, #tpu.memory_space<vmem>>, vector<1x4xf32>
    %119 = vector.broadcast %118 : vector<1x4xf32> to vector<610x4xf32>
    %120 = arith.addf %117, %119 : vector<610x4xf32>
    %cst_69 = arith.constant 0.000000e+00 : f32
    %121 = vector.broadcast %cst_69 : f32 to vector<610x4xf32>
    %122 = arith.maximumf %120, %121 : vector<610x4xf32>
    %123 = arith.mulf %122, %94 : vector<610x4xf32>
    %cst_70 = arith.constant 0.000000e+00 : bf16
    %124 = vector.broadcast %cst_70 : bf16 to vector<32x4xbf16>
    %c0_71 = arith.constant 0 : index
    %c0_72 = arith.constant 0 : index
    %125 = vector.load %arg11[%c0_71, %c0_72] : memref<661x4xbf16, #tpu.memory_space<vmem>>, vector<32x4xbf16>
    tpu.vector_store %arg11[%c0_71, %c0_72], %124 {strides = array<i32>} : memref<661x4xbf16, #tpu.memory_space<vmem>>, vector<32x4xbf16>,
    %cst_73 = arith.constant 0.000000e+00 : bf16
    %126 = vector.broadcast %cst_73 : bf16 to vector<19x4xbf16>
    %c642_74 = arith.constant 642 : index
    %c0_75 = arith.constant 0 : index
    %127 = vector.load %arg11[%c642_74, %c0_75] : memref<661x4xbf16, #tpu.memory_space<vmem>>, vector<19x4xbf16>
    tpu.vector_store %arg11[%c642_74, %c0_75], %126 {strides = array<i32>} : memref<661x4xbf16, #tpu.memory_space<vmem>>, vector<19x4xbf16>,
    %128 = arith.truncf %123 : vector<610x4xf32> to vector<610x4xbf16>
    %c32_76 = arith.constant 32 : index
    %c0_77 = arith.constant 0 : index
    %129 = vector.load %arg11[%c32_76, %c0_77] : memref<661x4xbf16, #tpu.memory_space<vmem>>, vector<610x4xbf16>
    tpu.vector_store %arg11[%c32_76, %c0_77], %128 {strides = array<i32>} : memref<661x4xbf16, #tpu.memory_space<vmem>>, vector<610x4xbf16>,
    %c13_78 = arith.constant 13 : index
    %c0_79 = arith.constant 0 : index
    %130 = vector.load %arg11[%c13_78, %c0_79] : memref<661x4xbf16, #tpu.memory_space<vmem>>, vector<610x4xbf16>
    %c14_80 = arith.constant 14 : index
    %c0_81 = arith.constant 0 : index
    %131 = vector.load %arg11[%c14_80, %c0_81] : memref<661x4xbf16, #tpu.memory_space<vmem>>, vector<610x4xbf16>
    %c15_82 = arith.constant 15 : index
    %c0_83 = arith.constant 0 : index
    %132 = vector.load %arg11[%c15_82, %c0_83] : memref<661x4xbf16, #tpu.memory_space<vmem>>, vector<610x4xbf16>
    %c31_84 = arith.constant 31 : index
    %c0_85 = arith.constant 0 : index
    %133 = vector.load %arg11[%c31_84, %c0_85] : memref<661x4xbf16, #tpu.memory_space<vmem>>, vector<610x4xbf16>
    %c32_86 = arith.constant 32 : index
    %c0_87 = arith.constant 0 : index
    %134 = vector.load %arg11[%c32_86, %c0_87] : memref<661x4xbf16, #tpu.memory_space<vmem>>, vector<610x4xbf16>
    %c33_88 = arith.constant 33 : index
    %c0_89 = arith.constant 0 : index
    %135 = vector.load %arg11[%c33_88, %c0_89] : memref<661x4xbf16, #tpu.memory_space<vmem>>, vector<610x4xbf16>
    %c49_90 = arith.constant 49 : index
    %c0_91 = arith.constant 0 : index
    %136 = vector.load %arg11[%c49_90, %c0_91] : memref<661x4xbf16, #tpu.memory_space<vmem>>, vector<610x4xbf16>
    %c50_92 = arith.constant 50 : index
    %c0_93 = arith.constant 0 : index
    %137 = vector.load %arg11[%c50_92, %c0_93] : memref<661x4xbf16, #tpu.memory_space<vmem>>, vector<610x4xbf16>
    %c51_94 = arith.constant 51 : index
    %c0_95 = arith.constant 0 : index
    %138 = vector.load %arg11[%c51_94, %c0_95] : memref<661x4xbf16, #tpu.memory_space<vmem>>, vector<610x4xbf16>
    %139 = tpu.concatenate %130, %131, %132, %133, %134, %135, %136, %137, %138 in 1 : vector<610x4xbf16>, vector<610x4xbf16>, vector<610x4xbf16>, vector<610x4xbf16>, vector<610x4xbf16>, vector<610x4xbf16>, vector<610x4xbf16>, vector<610x4xbf16>, vector<610x4xbf16> -> vector<610x36xbf16>
    %c0_96 = arith.constant 0 : index
    %c0_97 = arith.constant 0 : index
    %140 = vector.load %arg8[%c0_96, %c0_97] : memref<36x16xbf16, #tpu.memory_space<vmem>>, vector<36x16xbf16>
    %cst_98 = arith.constant dense<0.000000e+00> : vector<610x16xf32>
    %141 = tpu.matmul %139, %140, %cst_98 {dimension_numbers = #tpu.dot_dimension_numbers<[1], [0], [0], [1], [0, 0, 1, 1], [], []>} : vector<610x36xbf16>, vector<36x16xbf16>, vector<610x16xf32> -> vector<610x16xf32>
    %c32_99 = arith.constant 32 : index
    %c0_100 = arith.constant 0 : index
    %142 = vector.load %arg9[%c32_99, %c0_100] : memref<661x16xf32, #tpu.memory_space<vmem>>, vector<610x16xf32>
    tpu.vector_store %arg9[%c32_99, %c0_100], %141 {strides = array<i32>} : memref<661x16xf32, #tpu.memory_space<vmem>>, vector<610x16xf32>,
    return
  }
  func.func @transform_0(%arg0: i32) -> (i32, i32) {
    %c0_i32 = arith.constant 0 : i32
    %c0_i32_0 = arith.constant 0 : i32
    %c0_i32_1 = arith.constant 0 : i32
    return %c0_i32, %c0_i32_0 : i32, i32
  }
  func.func @transform_1(%arg0: i32) -> (i32, i32) {
    %c0_i32 = arith.constant 0 : i32
    %c0_i32_0 = arith.constant 0 : i32
    %c0_i32_1 = arith.constant 0 : i32
    return %c0_i32, %c0_i32_0 : i32, i32
  }
  func.func @transform_2(%arg0: i32) -> (i32, i32) {
    %c0_i32 = arith.constant 0 : i32
    %c0_i32_0 = arith.constant 0 : i32
    %c0_i32_1 = arith.constant 0 : i32
    return %c0_i32, %c0_i32_0 : i32, i32
  }
  func.func @transform_3(%arg0: i32) -> (i32, i32) {
    %c0_i32 = arith.constant 0 : i32
    %c0_i32_0 = arith.constant 0 : i32
    %c0_i32_1 = arith.constant 0 : i32
    return %c0_i32, %c0_i32_0 : i32, i32
  }
  func.func @transform_4(%arg0: i32) -> (i32, i32) {
    %c0_i32 = arith.constant 0 : i32
    %c0_i32_0 = arith.constant 0 : i32
    %c0_i32_1 = arith.constant 0 : i32
    return %c0_i32, %c0_i32_0 : i32, i32
  }
  func.func @transform_5(%arg0: i32) -> (i32, i32) {
    %c0_i32 = arith.constant 0 : i32
    %c0_i32_0 = arith.constant 0 : i32
    %c0_i32_1 = arith.constant 0 : i32
    return %c0_i32, %c0_i32_0 : i32, i32
  }
  func.func @transform_6(%arg0: i32) -> (i32, i32) {
    %c0_i32 = arith.constant 0 : i32
    %c0_i32_0 = arith.constant 0 : i32
    %c0_i32_1 = arith.constant 0 : i32
    return %c0_i32, %c0_i32_0 : i32, i32
  }
  func.func @transform_7(%arg0: i32) -> (i32, i32) {
    %c0_i32 = arith.constant 0 : i32
    %c0_i32_0 = arith.constant 0 : i32
    %c0_i32_1 = arith.constant 0 : i32
    return %c0_i32, %c0_i32_0 : i32, i32
  }
  func.func @transform_8(%arg0: i32) -> (i32, i32) {
    %c0_i32 = arith.constant 0 : i32
    %c0_i32_0 = arith.constant 0 : i32
    %c0_i32_1 = arith.constant 0 : i32
    return %c0_i32, %c0_i32_0 : i32, i32
  }
}

</mosaic_0001>

<llo_original>
// kernel: decoder_forward.1
$region0: #{decoder_forward.1}
  #allocation0 [shape = 'u32[]', space=smem, size = 0x4, offset = 0x4, fixed_abs, tag = 'smem constant byte address 0x4 - core index']
  #allocation1 [shape = 'u32[144,128]{1,0:T(1,128)}', space=vmem, size = 0x12000, scoped, tag = 'internal scratch']
  #allocation2 [shape = 'bf16[661,8]{1,0:T(8,128)(2,1)}', space=vmem, size = 0x29800, scoped, tag = 'scratch operand']
  #allocation3 [shape = 'bf16[661,4]{1,0:T(8,128)(2,1)}', space=vmem, size = 0x29800, scoped, tag = 'scratch operand']
  %s0 = inlined_call_operand.vmem [shape: bf16[661,4], index: 0, kind: input, shape index: {}]
  %s1 = inlined_call_operand.vmem [shape: bf16[36,8], index: 1, kind: input, shape index: {}]
  %s2 = inlined_call_operand.vmem [shape: f32[1,8], index: 2, kind: input, shape index: {}]
  %s3 = inlined_call_operand.vmem [shape: f32[1,8], index: 3, kind: input, shape index: {}]
  %s4 = inlined_call_operand.vmem [shape: bf16[72,4], index: 4, kind: input, shape index: {}]
  %s5 = inlined_call_operand.vmem [shape: f32[1,4], index: 5, kind: input, shape index: {}]
  %s6 = inlined_call_operand.vmem [shape: f32[1,4], index: 6, kind: input, shape index: {}]
  %s7 = inlined_call_operand.vmem [shape: bf16[36,16], index: 7, kind: input, shape index: {}]
  %s8 = inlined_call_operand.vmem [shape: f32[661,16], index: 8, kind: output, shape index: {}]
  %s9 = sld [smem:[#allocation0]]
  $region42: #{decoder_forward.1} parent=0
    _
  %s11 = ssub.s32 1, %s9
  %s12 = scalar_select 0, %s11, %s9
  // Predicated region
  $region2: #{decoder_forward.1} parent=0 // pred_check
    _
  $region3: #{decoder_forward.1} parent=0 // pred_check_branch
    %14 = sbr.rel (0) target = $region5
  $region4: #{decoder_forward.1} parent=0 // pred_region
    _
  $region5: #{decoder_forward.1} parent=0 // pred_fallthru
    _
  // Predicated region
  $region6: #{decoder_forward.1} parent=0 // pred_check
    _
  $region7: #{decoder_forward.1} parent=0 // pred_check_branch
    %16 = sbr.rel (0) target = $region9
  $region8: #{decoder_forward.1} parent=0 // pred_region
    _
  $region9: #{decoder_forward.1} parent=0 // pred_fallthru
    _
  // Predicated region
  $region10: #{decoder_forward.1} parent=0 // pred_check
    _
  $region11: #{decoder_forward.1} parent=0 // pred_check_branch
    %18 = sbr.rel (0) target = $region13
  $region12: #{decoder_forward.1} parent=0 // pred_region
    _
  $region13: #{decoder_forward.1} parent=0 // pred_fallthru
    _
  // Predicated region
  $region14: #{decoder_forward.1} parent=0 // pred_check
    _
  $region15: #{decoder_forward.1} parent=0 // pred_check_branch
    %20 = sbr.rel (0) target = $region17
  $region16: #{decoder_forward.1} parent=0 // pred_region
    _
  $region17: #{decoder_forward.1} parent=0 // pred_fallthru
    _
  // Predicated region
  $region18: #{decoder_forward.1} parent=0 // pred_check
    _
  $region19: #{decoder_forward.1} parent=0 // pred_check_branch
    %22 = sbr.rel (0) target = $region21
  $region20: #{decoder_forward.1} parent=0 // pred_region
    _
  $region21: #{decoder_forward.1} parent=0 // pred_fallthru
    _
  // Predicated region
  $region22: #{decoder_forward.1} parent=0 // pred_check
    _
  $region23: #{decoder_forward.1} parent=0 // pred_check_branch
    %24 = sbr.rel (0) target = $region25
  $region24: #{decoder_forward.1} parent=0 // pred_region
    _
  $region25: #{decoder_forward.1} parent=0 // pred_fallthru
    _
  // Predicated region
  $region26: #{decoder_forward.1} parent=0 // pred_check
    _
  $region27: #{decoder_forward.1} parent=0 // pred_check_branch
    %26 = sbr.rel (0) target = $region29
  $region28: #{decoder_forward.1} parent=0 // pred_region
    _
  $region29: #{decoder_forward.1} parent=0 // pred_fallthru
    _
  // Predicated region
  $region30: #{decoder_forward.1} parent=0 // pred_check
    _
  $region31: #{decoder_forward.1} parent=0 // pred_check_branch
    %28 = sbr.rel (0) target = $region33
  $region32: #{decoder_forward.1} parent=0 // pred_region
    _
  $region33: #{decoder_forward.1} parent=0 // pred_fallthru
    _
  %v30 = vlaneseq
  %v31 = vshrl.u32 %v30, 7
  %v32 = vadd.s32 %v31, 8
  %v33 = vadd.s32 %v31, 16
  %v34 = vadd.s32 %v31, 24
  %v35 = vadd.s32 %v31, 32
  %v36 = vadd.s32 %v31, 40
  %v37 = vadd.s32 %v31, 48
  %v38 = vadd.s32 %v31, 56
  %v39 = vadd.s32 %v31, 64
  %v40 = vadd.s32 %v31, 72
  %v41 = vadd.s32 %v31, 80
  %v42 = vadd.s32 %v31, 88
  %v43 = vadd.s32 %v31, 96
  %v44 = vadd.s32 %v31, 104
  %v45 = vadd.s32 %v31, 112
  %v46 = vadd.s32 %v31, 120
  %v47 = vadd.s32 %v31, 128
  %v48 = vadd.s32 %v31, 136
  %v49 = vadd.s32 %v31, 144
  %v50 = vadd.s32 %v31, 152
  %v51 = vadd.s32 %v31, 160
  %v52 = vadd.s32 %v31, 168
  %v53 = vadd.s32 %v31, 176
  %v54 = vadd.s32 %v31, 184
  %v55 = vadd.s32 %v31, 192
  %v56 = vadd.s32 %v31, 200
  %v57 = vadd.s32 %v31, 208
  %v58 = vadd.s32 %v31, 216
  %v59 = vadd.s32 %v31, 224
  %v60 = vadd.s32 %v31, 232
  %v61 = vadd.s32 %v31, 240
  %v62 = vadd.s32 %v31, 248
  %v63 = vadd.s32 %v31, 256
  %v64 = vadd.s32 %v31, 264
  %v65 = vadd.s32 %v31, 272
  %v66 = vadd.s32 %v31, 280
  %v67 = vadd.s32 %v31, 288
  %v68 = vadd.s32 %v31, 296
  %v69 = vadd.s32 %v31, 304
  %v70 = vadd.s32 %v31, 312
  %v71 = vadd.s32 %v31, 320
  %v72 = vadd.s32 %v31, 328
  %v73 = vadd.s32 %v31, 336
  %v74 = vadd.s32 %v31, 344
  %v75 = vadd.s32 %v31, 352
  %v76 = vadd.s32 %v31, 360
  %v77 = vadd.s32 %v31, 368
  %v78 = vadd.s32 %v31, 376
  %v79 = vadd.s32 %v31, 384
  %v80 = vadd.s32 %v31, 392
  %v81 = vadd.s32 %v31, 400
  %v82 = vadd.s32 %v31, 408
  %v83 = vadd.s32 %v31, 416
  %v84 = vadd.s32 %v31, 424
  %v85 = vadd.s32 %v31, 432
  %v86 = vadd.s32 %v31, 440
  %v87 = vadd.s32 %v31, 448
  %v88 = vadd.s32 %v31, 456
  %v89 = vadd.s32 %v31, 464
  %v90 = vadd.s32 %v31, 472
  %v91 = vadd.s32 %v31, 480
  %v92 = vadd.s32 %v31, 488
  %v93 = vadd.s32 %v31, 496
  %v94 = vadd.s32 %v31, 504
  %v95 = vadd.s32 %v31, 512
  %v96 = vadd.s32 %v31, 520
  %v97 = vadd.s32 %v31, 528
  %v98 = vadd.s32 %v31, 536
  %v99 = vadd.s32 %v31, 544
  %v100 = vadd.s32 %v31, 552
  %v101 = vadd.s32 %v31, 560
  %v102 = vadd.s32 %v31, 568
  %v103 = vadd.s32 %v31, 576
  %v104 = vadd.s32 %v31, 584
  %v105 = vadd.s32 %v31, 592
  %v106 = vadd.s32 %v31, 600
  %v107 = vadd.s32 %v31, 608
  %v108 = vcvt.s32.f32 %v31
  %v109 = vcvt.s32.f32 %v32
  %v110 = vcvt.s32.f32 %v33
  %v111 = vcvt.s32.f32 %v34
  %v112 = vcvt.s32.f32 %v35
  %v113 = vcvt.s32.f32 %v36
  %v114 = vcvt.s32.f32 %v37
  %v115 = vcvt.s32.f32 %v38
  %v116 = vcvt.s32.f32 %v39
  %v117 = vcvt.s32.f32 %v40
  %v118 = vcvt.s32.f32 %v41
  %v119 = vcvt.s32.f32 %v42
  %v120 = vcvt.s32.f32 %v43
  %v121 = vcvt.s32.f32 %v44
  %v122 = vcvt.s32.f32 %v45
  %v123 = vcvt.s32.f32 %v46
  %v124 = vcvt.s32.f32 %v47
  %v125 = vcvt.s32.f32 %v48
  %v126 = vcvt.s32.f32 %v49
  %v127 = vcvt.s32.f32 %v50
  %v128 = vcvt.s32.f32 %v51
  %v129 = vcvt.s32.f32 %v52
  %v130 = vcvt.s32.f32 %v53
  %v131 = vcvt.s32.f32 %v54
  %v132 = vcvt.s32.f32 %v55
  %v133 = vcvt.s32.f32 %v56
  %v134 = vcvt.s32.f32 %v57
  %v135 = vcvt.s32.f32 %v58
  %v136 = vcvt.s32.f32 %v59
  %v137 = vcvt.s32.f32 %v60
  %v138 = vcvt.s32.f32 %v61
  %v139 = vcvt.s32.f32 %v62
  %v140 = vcvt.s32.f32 %v63
  %v141 = vcvt.s32.f32 %v64
  %v142 = vcvt.s32.f32 %v65
  %v143 = vcvt.s32.f32 %v66
  %v144 = vcvt.s32.f32 %v67
  %v145 = vcvt.s32.f32 %v68
  %v146 = vcvt.s32.f32 %v69
  %v147 = vcvt.s32.f32 %v70
  %v148 = vcvt.s32.f32 %v71
  %v149 = vcvt.s32.f32 %v72
  %v150 = vcvt.s32.f32 %v73
  %v151 = vcvt.s32.f32 %v74
  %v152 = vcvt.s32.f32 %v75
  %v153 = vcvt.s32.f32 %v76
  %v154 = vcvt.s32.f32 %v77
  %v155 = vcvt.s32.f32 %v78
  %v156 = vcvt.s32.f32 %v79
  %v157 = vcvt.s32.f32 %v80
  %v158 = vcvt.s32.f32 %v81
  %v159 = vcvt.s32.f32 %v82
  %v160 = vcvt.s32.f32 %v83
  %v161 = vcvt.s32.f32 %v84
  %v162 = vcvt.s32.f32 %v85
  %v163 = vcvt.s32.f32 %v86
  %v164 = vcvt.s32.f32 %v87
  %v165 = vcvt.s32.f32 %v88
  %v166 = vcvt.s32.f32 %v89
  %v167 = vcvt.s32.f32 %v90
  %v168 = vcvt.s32.f32 %v91
  %v169 = vcvt.s32.f32 %v92
  %v170 = vcvt.s32.f32 %v93
  %v171 = vcvt.s32.f32 %v94
  %v172 = vcvt.s32.f32 %v95
  %v173 = vcvt.s32.f32 %v96
  %v174 = vcvt.s32.f32 %v97
  %v175 = vcvt.s32.f32 %v98
  %v176 = vcvt.s32.f32 %v99
  %v177 = vcvt.s32.f32 %v100
  %v178 = vcvt.s32.f32 %v101
  %v179 = vcvt.s32.f32 %v102
  %v180 = vcvt.s32.f32 %v103
  %v181 = vcvt.s32.f32 %v104
  %v182 = vcvt.s32.f32 %v105
  %v183 = vcvt.s32.f32 %v106
  %v184 = vcvt.s32.f32 %v107
  %v185 = vadd.f32 %v108, 19.0
  %v186 = vadd.f32 %v109, 19.0
  %v187 = vadd.f32 %v110, 19.0
  %v188 = vadd.f32 %v111, 19.0
  %v189 = vadd.f32 %v112, 19.0
  %v190 = vadd.f32 %v113, 19.0
  %v191 = vadd.f32 %v114, 19.0
  %v192 = vadd.f32 %v115, 19.0
  %v193 = vadd.f32 %v116, 19.0
  %v194 = vadd.f32 %v117, 19.0
  %v195 = vadd.f32 %v118, 19.0
  %v196 = vadd.f32 %v119, 19.0
  %v197 = vadd.f32 %v120, 19.0
  %v198 = vadd.f32 %v121, 19.0
  %v199 = vadd.f32 %v122, 19.0
  %v200 = vadd.f32 %v123, 19.0
  %v201 = vadd.f32 %v124, 19.0
  %v202 = vadd.f32 %v125, 19.0
  %v203 = vadd.f32 %v126, 19.0
  %v204 = vadd.f32 %v127, 19.0
  %v205 = vadd.f32 %v128, 19.0
  %v206 = vadd.f32 %v129, 19.0
  %v207 = vadd.f32 %v130, 19.0
  %v208 = vadd.f32 %v131, 19.0
  %v209 = vadd.f32 %v132, 19.0
  %v210 = vadd.f32 %v133, 19.0
  %v211 = vadd.f32 %v134, 19.0
  %v212 = vadd.f32 %v135, 19.0
  %v213 = vadd.f32 %v136, 19.0
  %v214 = vadd.f32 %v137, 19.0
  %v215 = vadd.f32 %v138, 19.0
  %v216 = vadd.f32 %v139, 19.0
  %v217 = vadd.f32 %v140, 19.0
  %v218 = vadd.f32 %v141, 19.0
  %v219 = vadd.f32 %v142, 19.0
  %v220 = vadd.f32 %v143, 19.0
  %v221 = vadd.f32 %v144, 19.0
  %v222 = vadd.f32 %v145, 19.0
  %v223 = vadd.f32 %v146, 19.0
  %v224 = vadd.f32 %v147, 19.0
  %v225 = vadd.f32 %v148, 19.0
  %v226 = vadd.f32 %v149, 19.0
  %v227 = vadd.f32 %v150, 19.0
  %v228 = vadd.f32 %v151, 19.0
  %v229 = vadd.f32 %v152, 19.0
  %v230 = vadd.f32 %v153, 19.0
  %v231 = vadd.f32 %v154, 19.0
  %v232 = vadd.f32 %v155, 19.0
  %v233 = vadd.f32 %v156, 19.0
  %v234 = vadd.f32 %v157, 19.0
  %v235 = vadd.f32 %v158, 19.0
  %v236 = vadd.f32 %v159, 19.0
  %v237 = vadd.f32 %v160, 19.0
  %v238 = vadd.f32 %v161, 19.0
  %v239 = vadd.f32 %v162, 19.0
  %v240 = vadd.f32 %v163, 19.0
  %v241 = vadd.f32 %v164, 19.0
  %v242 = vadd.f32 %v165, 19.0
  %v243 = vadd.f32 %v166, 19.0
  %v244 = vadd.f32 %v167, 19.0
  %v245 = vadd.f32 %v168, 19.0
  %v246 = vadd.f32 %v169, 19.0
  %v247 = vadd.f32 %v170, 19.0
  %v248 = vadd.f32 %v171, 19.0
  %v249 = vadd.f32 %v172, 19.0
  %v250 = vadd.f32 %v173, 19.0
  %v251 = vadd.f32 %v174, 19.0
  %v252 = vadd.f32 %v175, 19.0
  %v253 = vadd.f32 %v176, 19.0
  %v254 = vadd.f32 %v177, 19.0
  %v255 = vadd.f32 %v178, 19.0
  %v256 = vadd.f32 %v179, 19.0
  %v257 = vadd.f32 %v180, 19.0
  %v258 = vadd.f32 %v181, 19.0
  %v259 = vadd.f32 %v182, 19.0
  %v260 = vadd.f32 %v183, 19.0
  %v261 = vadd.f32 %v184, 19.0
  %v262 = vrcp.pop 18.0
  %v263 = vmul.f32 %v185, %v262
  %v264 = vmul.f32 %v186, %v262
  %v265 = vmul.f32 %v187, %v262
  %v266 = vmul.f32 %v188, %v262
  %v267 = vmul.f32 %v189, %v262
  %v268 = vmul.f32 %v190, %v262
  %v269 = vmul.f32 %v191, %v262
  %v270 = vmul.f32 %v192, %v262
  %v271 = vmul.f32 %v193, %v262
  %v272 = vmul.f32 %v194, %v262
  %v273 = vmul.f32 %v195, %v262
  %v274 = vmul.f32 %v196, %v262
  %v275 = vmul.f32 %v197, %v262
  %v276 = vmul.f32 %v198, %v262
  %v277 = vmul.f32 %v199, %v262
  %v278 = vmul.f32 %v200, %v262
  %v279 = vmul.f32 %v201, %v262
  %v280 = vmul.f32 %v202, %v262
  %v281 = vmul.f32 %v203, %v262
  %v282 = vmul.f32 %v204, %v262
  %v283 = vmul.f32 %v205, %v262
  %v284 = vmul.f32 %v206, %v262
  %v285 = vmul.f32 %v207, %v262
  %v286 = vmul.f32 %v208, %v262
  %v287 = vmul.f32 %v209, %v262
  %v288 = vmul.f32 %v210, %v262
  %v289 = vmul.f32 %v211, %v262
  %v290 = vmul.f32 %v212, %v262
  %v291 = vmul.f32 %v213, %v262
  %v292 = vmul.f32 %v214, %v262
  %v293 = vmul.f32 %v215, %v262
  %v294 = vmul.f32 %v216, %v262
  %v295 = vmul.f32 %v217, %v262
  %v296 = vmul.f32 %v218, %v262
  %v297 = vmul.f32 %v219, %v262
  %v298 = vmul.f32 %v220, %v262
  %v299 = vmul.f32 %v221, %v262
  %v300 = vmul.f32 %v222, %v262
  %v301 = vmul.f32 %v223, %v262
  %v302 = vmul.f32 %v224, %v262
  %v303 = vmul.f32 %v225, %v262
  %v304 = vmul.f32 %v226, %v262
  %v305 = vmul.f32 %v227, %v262
  %v306 = vmul.f32 %v228, %v262
  %v307 = vmul.f32 %v229, %v262
  %v308 = vmul.f32 %v230, %v262
  %v309 = vmul.f32 %v231, %v262
  %v310 = vmul.f32 %v232, %v262
  %v311 = vmul.f32 %v233, %v262
  %v312 = vmul.f32 %v234, %v262
  %v313 = vmul.f32 %v235, %v262
  %v314 = vmul.f32 %v236, %v262
  %v315 = vmul.f32 %v237, %v262
  %v316 = vmul.f32 %v238, %v262
  %v317 = vmul.f32 %v239, %v262
  %v318 = vmul.f32 %v240, %v262
  %v319 = vmul.f32 %v241, %v262
  %v320 = vmul.f32 %v242, %v262
  %v321 = vmul.f32 %v243, %v262
  %v322 = vmul.f32 %v244, %v262
  %v323 = vmul.f32 %v245, %v262
  %v324 = vmul.f32 %v246, %v262
  %v325 = vmul.f32 %v247, %v262
  %v326 = vmul.f32 %v248, %v262
  %v327 = vmul.f32 %v249, %v262
  %v328 = vmul.f32 %v250, %v262
  %v329 = vmul.f32 %v251, %v262
  %v330 = vmul.f32 %v252, %v262
  %v331 = vmul.f32 %v253, %v262
  %v332 = vmul.f32 %v254, %v262
  %v333 = vmul.f32 %v255, %v262
  %v334 = vmul.f32 %v256, %v262
  %v335 = vmul.f32 %v257, %v262
  %v336 = vmul.f32 %v258, %v262
  %v337 = vmul.f32 %v259, %v262
  %v338 = vmul.f32 %v260, %v262
  %v339 = vmul.f32 %v261, %v262
  %v340 = vfloor.f32 %v263
  %v341 = vfloor.f32 %v264
  %v342 = vfloor.f32 %v265
  %v343 = vfloor.f32 %v266
  %v344 = vfloor.f32 %v267
  %v345 = vfloor.f32 %v268
  %v346 = vfloor.f32 %v269
  %v347 = vfloor.f32 %v270
  %v348 = vfloor.f32 %v271
  %v349 = vfloor.f32 %v272
  %v350 = vfloor.f32 %v273
  %v351 = vfloor.f32 %v274
  %v352 = vfloor.f32 %v275
  %v353 = vfloor.f32 %v276
  %v354 = vfloor.f32 %v277
  %v355 = vfloor.f32 %v278
  %v356 = vfloor.f32 %v279
  %v357 = vfloor.f32 %v280
  %v358 = vfloor.f32 %v281
  %v359 = vfloor.f32 %v282
  %v360 = vfloor.f32 %v283
  %v361 = vfloor.f32 %v284
  %v362 = vfloor.f32 %v285
  %v363 = vfloor.f32 %v286
  %v364 = vfloor.f32 %v287
  %v365 = vfloor.f32 %v288
  %v366 = vfloor.f32 %v289
  %v367 = vfloor.f32 %v290
  %v368 = vfloor.f32 %v291
  %v369 = vfloor.f32 %v292
  %v370 = vfloor.f32 %v293
  %v371 = vfloor.f32 %v294
  %v372 = vfloor.f32 %v295
  %v373 = vfloor.f32 %v296
  %v374 = vfloor.f32 %v297
  %v375 = vfloor.f32 %v298
  %v376 = vfloor.f32 %v299
  %v377 = vfloor.f32 %v300
  %v378 = vfloor.f32 %v301
  %v379 = vfloor.f32 %v302
  %v380 = vfloor.f32 %v303
  %v381 = vfloor.f32 %v304
  %v382 = vfloor.f32 %v305
  %v383 = vfloor.f32 %v306
  %v384 = vfloor.f32 %v307
  %v385 = vfloor.f32 %v308
  %v386 = vfloor.f32 %v309
  %v387 = vfloor.f32 %v310
  %v388 = vfloor.f32 %v311
  %v389 = vfloor.f32 %v312
  %v390 = vfloor.f32 %v313
  %v391 = vfloor.f32 %v314
  %v392 = vfloor.f32 %v315
  %v393 = vfloor.f32 %v316
  %v394 = vfloor.f32 %v317
  %v395 = vfloor.f32 %v318
  %v396 = vfloor.f32 %v319
  %v397 = vfloor.f32 %v320
  %v398 = vfloor.f32 %v321
  %v399 = vfloor.f32 %v322
  %v400 = vfloor.f32 %v323
  %v401 = vfloor.f32 %v324
  %v402 = vfloor.f32 %v325
  %v403 = vfloor.f32 %v326
  %v404 = vfloor.f32 %v327
  %v405 = vfloor.f32 %v328
  %v406 = vfloor.f32 %v329
  %v407 = vfloor.f32 %v330
  %v408 = vfloor.f32 %v331
  %v409 = vfloor.f32 %v332
  %v410 = vfloor.f32 %v333
  %v411 = vfloor.f32 %v334
  %v412 = vfloor.f32 %v335
  %v413 = vfloor.f32 %v336
  %v414 = vfloor.f32 %v337
  %v415 = vfloor.f32 %v338
  %v416 = vfloor.f32 %v339
  %v417 = vmul.f32 %v340, 18.0
  %v418 = vmul.f32 %v341, 18.0
  %v419 = vmul.f32 %v342, 18.0
  %v420 = vmul.f32 %v343, 18.0
  %v421 = vmul.f32 %v344, 18.0
  %v422 = vmul.f32 %v345, 18.0
  %v423 = vmul.f32 %v346, 18.0
  %v424 = vmul.f32 %v347, 18.0
  %v425 = vmul.f32 %v348, 18.0
  %v426 = vmul.f32 %v349, 18.0
  %v427 = vmul.f32 %v350, 18.0
  %v428 = vmul.f32 %v351, 18.0
  %v429 = vmul.f32 %v352, 18.0
  %v430 = vmul.f32 %v353, 18.0
  %v431 = vmul.f32 %v354, 18.0
  %v432 = vmul.f32 %v355, 18.0
  %v433 = vmul.f32 %v356, 18.0
  %v434 = vmul.f32 %v357, 18.0
  %v435 = vmul.f32 %v358, 18.0
  %v436 = vmul.f32 %v359, 18.0
  %v437 = vmul.f32 %v360, 18.0
  %v438 = vmul.f32 %v361, 18.0
  %v439 = vmul.f32 %v362, 18.0
  %v440 = vmul.f32 %v363, 18.0
  %v441 = vmul.f32 %v364, 18.0
  %v442 = vmul.f32 %v365, 18.0
  %v443 = vmul.f32 %v366, 18.0
  %v444 = vmul.f32 %v367, 18.0
  %v445 = vmul.f32 %v368, 18.0
  %v446 = vmul.f32 %v369, 18.0
  %v447 = vmul.f32 %v370, 18.0
  %v448 = vmul.f32 %v371, 18.0
  %v449 = vmul.f32 %v372, 18.0
  %v450 = vmul.f32 %v373, 18.0
  %v451 = vmul.f32 %v374, 18.0
  %v452 = vmul.f32 %v375, 18.0
  %v453 = vmul.f32 %v376, 18.0
  %v454 = vmul.f32 %v377, 18.0
  %v455 = vmul.f32 %v378, 18.0
  %v456 = vmul.f32 %v379, 18.0
  %v457 = vmul.f32 %v380, 18.0
  %v458 = vmul.f32 %v381, 18.0
  %v459 = vmul.f32 %v382, 18.0
  %v460 = vmul.f32 %v383, 18.0
  %v461 = vmul.f32 %v384, 18.0
  %v462 = vmul.f32 %v385, 18.0
  %v463 = vmul.f32 %v386, 18.0
  %v464 = vmul.f32 %v387, 18.0
  %v465 = vmul.f32 %v388, 18.0
  %v466 = vmul.f32 %v389, 18.0
  %v467 = vmul.f32 %v390, 18.0
  %v468 = vmul.f32 %v391, 18.0
  %v469 = vmul.f32 %v392, 18.0
  %v470 = vmul.f32 %v393, 18.0
  %v471 = vmul.f32 %v394, 18.0
  %v472 = vmul.f32 %v395, 18.0
  %v473 = vmul.f32 %v396, 18.0
  %v474 = vmul.f32 %v397, 18.0
  %v475 = vmul.f32 %v398, 18.0
  %v476 = vmul.f32 %v399, 18.0
  %v477 = vmul.f32 %v400, 18.0
  %v478 = vmul.f32 %v401, 18.0
  %v479 = vmul.f32 %v402, 18.0
  %v480 = vmul.f32 %v403, 18.0
  %v481 = vmul.f32 %v404, 18.0
  %v482 = vmul.f32 %v405, 18.0
  %v483 = vmul.f32 %v406, 18.0
  %v484 = vmul.f32 %v407, 18.0
  %v485 = vmul.f32 %v408, 18.0
  %v486 = vmul.f32 %v409, 18.0
  %v487 = vmul.f32 %v410, 18.0
  %v488 = vmul.f32 %v411, 18.0
  %v489 = vmul.f32 %v412, 18.0
  %v490 = vmul.f32 %v413, 18.0
  %v491 = vmul.f32 %v414, 18.0
  %v492 = vmul.f32 %v415, 18.0
  %v493 = vmul.f32 %v416, 18.0
  %v494 = vsub.f32 %v185, %v417
  %v495 = vsub.f32 %v186, %v418
  %v496 = vsub.f32 %v187, %v419
  %v497 = vsub.f32 %v188, %v420
  %v498 = vsub.f32 %v189, %v421
  %v499 = vsub.f32 %v190, %v422
  %v500 = vsub.f32 %v191, %v423
  %v501 = vsub.f32 %v192, %v424
  %v502 = vsub.f32 %v193, %v425
  %v503 = vsub.f32 %v194, %v426
  %v504 = vsub.f32 %v195, %v427
  %v505 = vsub.f32 %v196, %v428
  %v506 = vsub.f32 %v197, %v429
  %v507 = vsub.f32 %v198, %v430
  %v508 = vsub.f32 %v199, %v431
  %v509 = vsub.f32 %v200, %v432
  %v510 = vsub.f32 %v201, %v433
  %v511 = vsub.f32 %v202, %v434
  %v512 = vsub.f32 %v203, %v435
  %v513 = vsub.f32 %v204, %v436
  %v514 = vsub.f32 %v205, %v437
  %v515 = vsub.f32 %v206, %v438
  %v516 = vsub.f32 %v207, %v439
  %v517 = vsub.f32 %v208, %v440
  %v518 = vsub.f32 %v209, %v441
  %v519 = vsub.f32 %v210, %v442
  %v520 = vsub.f32 %v211, %v443
  %v521 = vsub.f32 %v212, %v444
  %v522 = vsub.f32 %v213, %v445
  %v523 = vsub.f32 %v214, %v446
  %v524 = vsub.f32 %v215, %v447
  %v525 = vsub.f32 %v216, %v448
  %v526 = vsub.f32 %v217, %v449
  %v527 = vsub.f32 %v218, %v450
  %v528 = vsub.f32 %v219, %v451
  %v529 = vsub.f32 %v220, %v452
  %v530 = vsub.f32 %v221, %v453
  %v531 = vsub.f32 %v222, %v454
  %v532 = vsub.f32 %v223, %v455
  %v533 = vsub.f32 %v224, %v456
  %v534 = vsub.f32 %v225, %v457
  %v535 = vsub.f32 %v226, %v458
  %v536 = vsub.f32 %v227, %v459
  %v537 = vsub.f32 %v228, %v460
  %v538 = vsub.f32 %v229, %v461
  %v539 = vsub.f32 %v230, %v462
  %v540 = vsub.f32 %v231, %v463
  %v541 = vsub.f32 %v232, %v464
  %v542 = vsub.f32 %v233, %v465
  %v543 = vsub.f32 %v234, %v466
  %v544 = vsub.f32 %v235, %v467
  %v545 = vsub.f32 %v236, %v468
  %v546 = vsub.f32 %v237, %v469
  %v547 = vsub.f32 %v238, %v470
  %v548 = vsub.f32 %v239, %v471
  %v549 = vsub.f32 %v240, %v472
  %v550 = vsub.f32 %v241, %v473
  %v551 = vsub.f32 %v242, %v474
  %v552 = vsub.f32 %v243, %v475
  %v553 = vsub.f32 %v244, %v476
  %v554 = vsub.f32 %v245, %v477
  %v555 = vsub.f32 %v246, %v478
  %v556 = vsub.f32 %v247, %v479
  %v557 = vsub.f32 %v248, %v480
  %v558 = vsub.f32 %v249, %v481
  %v559 = vsub.f32 %v250, %v482
  %v560 = vsub.f32 %v251, %v483
  %v561 = vsub.f32 %v252, %v484
  %v562 = vsub.f32 %v253, %v485
  %v563 = vsub.f32 %v254, %v486
  %v564 = vsub.f32 %v255, %v487
  %v565 = vsub.f32 %v256, %v488
  %v566 = vsub.f32 %v257, %v489
  %v567 = vsub.f32 %v258, %v490
  %v568 = vsub.f32 %v259, %v491
  %v569 = vsub.f32 %v260, %v492
  %v570 = vsub.f32 %v261, %v493
  %v571 = vrcp.pop 324.0
  %v572 = vmul.f32 %v185, %v571
  %v573 = vmul.f32 %v186, %v571
  %v574 = vmul.f32 %v187, %v571
  %v575 = vmul.f32 %v188, %v571
  %v576 = vmul.f32 %v189, %v571
  %v577 = vmul.f32 %v190, %v571
  %v578 = vmul.f32 %v191, %v571
  %v579 = vmul.f32 %v192, %v571
  %v580 = vmul.f32 %v193, %v571
  %v581 = vmul.f32 %v194, %v571
  %v582 = vmul.f32 %v195, %v571
  %v583 = vmul.f32 %v196, %v571
  %v584 = vmul.f32 %v197, %v571
  %v585 = vmul.f32 %v198, %v571
  %v586 = vmul.f32 %v199, %v571
  %v587 = vmul.f32 %v200, %v571
  %v588 = vmul.f32 %v201, %v571
  %v589 = vmul.f32 %v202, %v571
  %v590 = vmul.f32 %v203, %v571
  %v591 = vmul.f32 %v204, %v571
  %v592 = vmul.f32 %v205, %v571
  %v593 = vmul.f32 %v206, %v571
  %v594 = vmul.f32 %v207, %v571
  %v595 = vmul.f32 %v208, %v571
  %v596 = vmul.f32 %v209, %v571
  %v597 = vmul.f32 %v210, %v571
  %v598 = vmul.f32 %v211, %v571
  %v599 = vmul.f32 %v212, %v571
  %v600 = vmul.f32 %v213, %v571
  %v601 = vmul.f32 %v214, %v571
  %v602 = vmul.f32 %v215, %v571
  %v603 = vmul.f32 %v216, %v571
  %v604 = vmul.f32 %v217, %v571
  %v605 = vmul.f32 %v218, %v571
  %v606 = vmul.f32 %v219, %v571
  %v607 = vmul.f32 %v220, %v571
  %v608 = vmul.f32 %v221, %v571
  %v609 = vmul.f32 %v222, %v571
  %v610 = vmul.f32 %v223, %v571
  %v611 = vmul.f32 %v224, %v571
  %v612 = vmul.f32 %v225, %v571
  %v613 = vmul.f32 %v226, %v571
  %v614 = vmul.f32 %v227, %v571
  %v615 = vmul.f32 %v228, %v571
  %v616 = vmul.f32 %v229, %v571
  %v617 = vmul.f32 %v230, %v571
  %v618 = vmul.f32 %v231, %v571
  %v619 = vmul.f32 %v232, %v571
  %v620 = vmul.f32 %v233, %v571
  %v621 = vmul.f32 %v234, %v571
  %v622 = vmul.f32 %v235, %v571
  %v623 = vmul.f32 %v236, %v571
  %v624 = vmul.f32 %v237, %v571
  %v625 = vmul.f32 %v238, %v571
  %v626 = vmul.f32 %v239, %v571
  %v627 = vmul.f32 %v240, %v571
  %v628 = vmul.f32 %v241, %v571
  %v629 = vmul.f32 %v242, %v571
  %v630 = vmul.f32 %v243, %v571
  %v631 = vmul.f32 %v244, %v571
  %v632 = vmul.f32 %v245, %v571
  %v633 = vmul.f32 %v246, %v571
  %v634 = vmul.f32 %v247, %v571
  %v635 = vmul.f32 %v248, %v571
  %v636 = vmul.f32 %v249, %v571
  %v637 = vmul.f32 %v250, %v571
  %v638 = vmul.f32 %v251, %v571
  %v639 = vmul.f32 %v252, %v571
  %v640 = vmul.f32 %v253, %v571
  %v641 = vmul.f32 %v254, %v571
  %v642 = vmul.f32 %v255, %v571
  %v643 = vmul.f32 %v256, %v571
  %v644 = vmul.f32 %v257, %v571
  %v645 = vmul.f32 %v258, %v571
  %v646 = vmul.f32 %v259, %v571
  %v647 = vmul.f32 %v260, %v571
  %v648 = vmul.f32 %v261, %v571
  %v649 = vfloor.f32 %v572
  %v650 = vfloor.f32 %v573
  %v651 = vfloor.f32 %v574
  %v652 = vfloor.f32 %v575
  %v653 = vfloor.f32 %v576
  %v654 = vfloor.f32 %v577
  %v655 = vfloor.f32 %v578
  %v656 = vfloor.f32 %v579
  %v657 = vfloor.f32 %v580
  %v658 = vfloor.f32 %v581
  %v659 = vfloor.f32 %v582
  %v660 = vfloor.f32 %v583
  %v661 = vfloor.f32 %v584
  %v662 = vfloor.f32 %v585
  %v663 = vfloor.f32 %v586
  %v664 = vfloor.f32 %v587
  %v665 = vfloor.f32 %v588
  %v666 = vfloor.f32 %v589
  %v667 = vfloor.f32 %v590
  %v668 = vfloor.f32 %v591
  %v669 = vfloor.f32 %v592
  %v670 = vfloor.f32 %v593
  %v671 = vfloor.f32 %v594
  %v672 = vfloor.f32 %v595
  %v673 = vfloor.f32 %v596
  %v674 = vfloor.f32 %v597
  %v675 = vfloor.f32 %v598
  %v676 = vfloor.f32 %v599
  %v677 = vfloor.f32 %v600
  %v678 = vfloor.f32 %v601
  %v679 = vfloor.f32 %v602
  %v680 = vfloor.f32 %v603
  %v681 = vfloor.f32 %v604
  %v682 = vfloor.f32 %v605
  %v683 = vfloor.f32 %v606
  %v684 = vfloor.f32 %v607
  %v685 = vfloor.f32 %v608
  %v686 = vfloor.f32 %v609
  %v687 = vfloor.f32 %v610
  %v688 = vfloor.f32 %v611
  %v689 = vfloor.f32 %v612
  %v690 = vfloor.f32 %v613
  %v691 = vfloor.f32 %v614
  %v692 = vfloor.f32 %v615
  %v693 = vfloor.f32 %v616
  %v694 = vfloor.f32 %v617
  %v695 = vfloor.f32 %v618
  %v696 = vfloor.f32 %v619
  %v697 = vfloor.f32 %v620
  %v698 = vfloor.f32 %v621
  %v699 = vfloor.f32 %v622
  %v700 = vfloor.f32 %v623
  %v701 = vfloor.f32 %v624
  %v702 = vfloor.f32 %v625
  %v703 = vfloor.f32 %v626
  %v704 = vfloor.f32 %v627
  %v705 = vfloor.f32 %v628
  %v706 = vfloor.f32 %v629
  %v707 = vfloor.f32 %v630
  %v708 = vfloor.f32 %v631
  %v709 = vfloor.f32 %v632
  %v710 = vfloor.f32 %v633
  %v711 = vfloor.f32 %v634
  %v712 = vfloor.f32 %v635
  %v713 = vfloor.f32 %v636
  %v714 = vfloor.f32 %v637
  %v715 = vfloor.f32 %v638
  %v716 = vfloor.f32 %v639
  %v717 = vfloor.f32 %v640
  %v718 = vfloor.f32 %v641
  %v719 = vfloor.f32 %v642
  %v720 = vfloor.f32 %v643
  %v721 = vfloor.f32 %v644
  %v722 = vfloor.f32 %v645
  %v723 = vfloor.f32 %v646
  %v724 = vfloor.f32 %v647
  %v725 = vfloor.f32 %v648
  %v726 = vmul.f32 %v649, 324.0
  %v727 = vmul.f32 %v650, 324.0
  %v728 = vmul.f32 %v651, 324.0
  %v729 = vmul.f32 %v652, 324.0
  %v730 = vmul.f32 %v653, 324.0
  %v731 = vmul.f32 %v654, 324.0
  %v732 = vmul.f32 %v655, 324.0
  %v733 = vmul.f32 %v656, 324.0
  %v734 = vmul.f32 %v657, 324.0
  %v735 = vmul.f32 %v658, 324.0
  %v736 = vmul.f32 %v659, 324.0
  %v737 = vmul.f32 %v660, 324.0
  %v738 = vmul.f32 %v661, 324.0
  %v739 = vmul.f32 %v662, 324.0
  %v740 = vmul.f32 %v663, 324.0
  %v741 = vmul.f32 %v664, 324.0
  %v742 = vmul.f32 %v665, 324.0
  %v743 = vmul.f32 %v666, 324.0
  %v744 = vmul.f32 %v667, 324.0
  %v745 = vmul.f32 %v668, 324.0
  %v746 = vmul.f32 %v669, 324.0
  %v747 = vmul.f32 %v670, 324.0
  %v748 = vmul.f32 %v671, 324.0
  %v749 = vmul.f32 %v672, 324.0
  %v750 = vmul.f32 %v673, 324.0
  %v751 = vmul.f32 %v674, 324.0
  %v752 = vmul.f32 %v675, 324.0
  %v753 = vmul.f32 %v676, 324.0
  %v754 = vmul.f32 %v677, 324.0
  %v755 = vmul.f32 %v678, 324.0
  %v756 = vmul.f32 %v679, 324.0
  %v757 = vmul.f32 %v680, 324.0
  %v758 = vmul.f32 %v681, 324.0
  %v759 = vmul.f32 %v682, 324.0
  %v760 = vmul.f32 %v683, 324.0
  %v761 = vmul.f32 %v684, 324.0
  %v762 = vmul.f32 %v685, 324.0
  %v763 = vmul.f32 %v686, 324.0
  %v764 = vmul.f32 %v687, 324.0
  %v765 = vmul.f32 %v688, 324.0
  %v766 = vmul.f32 %v689, 324.0
  %v767 = vmul.f32 %v690, 324.0
  %v768 = vmul.f32 %v691, 324.0
  %v769 = vmul.f32 %v692, 324.0
  %v770 = vmul.f32 %v693, 324.0
  %v771 = vmul.f32 %v694, 324.0
  %v772 = vmul.f32 %v695, 324.0
  %v773 = vmul.f32 %v696, 324.0
  %v774 = vmul.f32 %v697, 324.0
  %v775 = vmul.f32 %v698, 324.0
  %v776 = vmul.f32 %v699, 324.0
  %v777 = vmul.f32 %v700, 324.0
  %v778 = vmul.f32 %v701, 324.0
  %v779 = vmul.f32 %v702, 324.0
  %v780 = vmul.f32 %v703, 324.0
  %v781 = vmul.f32 %v704, 324.0
  %v782 = vmul.f32 %v705, 324.0
  %v783 = vmul.f32 %v706, 324.0
  %v784 = vmul.f32 %v707, 324.0
  %v785 = vmul.f32 %v708, 324.0
  %v786 = vmul.f32 %v709, 324.0
  %v787 = vmul.f32 %v710, 324.0
  %v788 = vmul.f32 %v711, 324.0
  %v789 = vmul.f32 %v712, 324.0
  %v790 = vmul.f32 %v713, 324.0
  %v791 = vmul.f32 %v714, 324.0
  %v792 = vmul.f32 %v715, 324.0
  %v793 = vmul.f32 %v716, 324.0
  %v794 = vmul.f32 %v717, 324.0
  %v795 = vmul.f32 %v718, 324.0
  %v796 = vmul.f32 %v719, 324.0
  %v797 = vmul.f32 %v720, 324.0
  %v798 = vmul.f32 %v721, 324.0
  %v799 = vmul.f32 %v722, 324.0
  %v800 = vmul.f32 %v723, 324.0
  %v801 = vmul.f32 %v724, 324.0
  %v802 = vmul.f32 %v725, 324.0
  %v803 = vsub.f32 %v185, %v726
  %v804 = vsub.f32 %v186, %v727
  %v805 = vsub.f32 %v187, %v728
  %v806 = vsub.f32 %v188, %v729
  %v807 = vsub.f32 %v189, %v730
  %v808 = vsub.f32 %v190, %v731
  %v809 = vsub.f32 %v191, %v732
  %v810 = vsub.f32 %v192, %v733
  %v811 = vsub.f32 %v193, %v734
  %v812 = vsub.f32 %v194, %v735
  %v813 = vsub.f32 %v195, %v736
  %v814 = vsub.f32 %v196, %v737
  %v815 = vsub.f32 %v197, %v738
  %v816 = vsub.f32 %v198, %v739
  %v817 = vsub.f32 %v199, %v740
  %v818 = vsub.f32 %v200, %v741
  %v819 = vsub.f32 %v201, %v742
  %v820 = vsub.f32 %v202, %v743
  %v821 = vsub.f32 %v203, %v744
  %v822 = vsub.f32 %v204, %v745
  %v823 = vsub.f32 %v205, %v746
  %v824 = vsub.f32 %v206, %v747
  %v825 = vsub.f32 %v207, %v748
  %v826 = vsub.f32 %v208, %v749
  %v827 = vsub.f32 %v209, %v750
  %v828 = vsub.f32 %v210, %v751
  %v829 = vsub.f32 %v211, %v752
  %v830 = vsub.f32 %v212, %v753
  %v831 = vsub.f32 %v213, %v754
  %v832 = vsub.f32 %v214, %v755
  %v833 = vsub.f32 %v215, %v756
  %v834 = vsub.f32 %v216, %v757
  %v835 = vsub.f32 %v217, %v758
  %v836 = vsub.f32 %v218, %v759
  %v837 = vsub.f32 %v219, %v760
  %v838 = vsub.f32 %v220, %v761
  %v839 = vsub.f32 %v221, %v762
  %v840 = vsub.f32 %v222, %v763
  %v841 = vsub.f32 %v223, %v764
  %v842 = vsub.f32 %v224, %v765
  %v843 = vsub.f32 %v225, %v766
  %v844 = vsub.f32 %v226, %v767
  %v845 = vsub.f32 %v227, %v768
  %v846 = vsub.f32 %v228, %v769
  %v847 = vsub.f32 %v229, %v770
  %v848 = vsub.f32 %v230, %v771
  %v849 = vsub.f32 %v231, %v772
  %v850 = vsub.f32 %v232, %v773
  %v851 = vsub.f32 %v233, %v774
  %v852 = vsub.f32 %v234, %v775
  %v853 = vsub.f32 %v235, %v776
  %v854 = vsub.f32 %v236, %v777
  %v855 = vsub.f32 %v237, %v778
  %v856 = vsub.f32 %v238, %v779
  %v857 = vsub.f32 %v239, %v780
  %v858 = vsub.f32 %v240, %v781
  %v859 = vsub.f32 %v241, %v782
  %v860 = vsub.f32 %v242, %v783
  %v861 = vsub.f32 %v243, %v784
  %v862 = vsub.f32 %v244, %v785
  %v863 = vsub.f32 %v245, %v786
  %v864 = vsub.f32 %v246, %v787
  %v865 = vsub.f32 %v247, %v788
  %v866 = vsub.f32 %v248, %v789
  %v867 = vsub.f32 %v249, %v790
  %v868 = vsub.f32 %v250, %v791
  %v869 = vsub.f32 %v251, %v792
  %v870 = vsub.f32 %v252, %v793
  %v871 = vsub.f32 %v253, %v794
  %v872 = vsub.f32 %v254, %v795
  %v873 = vsub.f32 %v255, %v796
  %v874 = vsub.f32 %v256, %v797
  %v875 = vsub.f32 %v257, %v798
  %v876 = vsub.f32 %v258, %v799
  %v877 = vsub.f32 %v259, %v800
  %v878 = vsub.f32 %v260, %v801
  %v879 = vsub.f32 %v261, %v802
  %v880 = vmul.f32 %v803, %v262
  %v881 = vmul.f32 %v804, %v262
  %v882 = vmul.f32 %v805, %v262
  %v883 = vmul.f32 %v806, %v262
  %v884 = vmul.f32 %v807, %v262
  %v885 = vmul.f32 %v808, %v262
  %v886 = vmul.f32 %v809, %v262
  %v887 = vmul.f32 %v810, %v262
  %v888 = vmul.f32 %v811, %v262
  %v889 = vmul.f32 %v812, %v262
  %v890 = vmul.f32 %v813, %v262
  %v891 = vmul.f32 %v814, %v262
  %v892 = vmul.f32 %v815, %v262
  %v893 = vmul.f32 %v816, %v262
  %v894 = vmul.f32 %v817, %v262
  %v895 = vmul.f32 %v818, %v262
  %v896 = vmul.f32 %v819, %v262
  %v897 = vmul.f32 %v820, %v262
  %v898 = vmul.f32 %v821, %v262
  %v899 = vmul.f32 %v822, %v262
  %v900 = vmul.f32 %v823, %v262
  %v901 = vmul.f32 %v824, %v262
  %v902 = vmul.f32 %v825, %v262
  %v903 = vmul.f32 %v826, %v262
  %v904 = vmul.f32 %v827, %v262
  %v905 = vmul.f32 %v828, %v262
  %v906 = vmul.f32 %v829, %v262
  %v907 = vmul.f32 %v830, %v262
  %v908 = vmul.f32 %v831, %v262
  %v909 = vmul.f32 %v832, %v262
  %v910 = vmul.f32 %v833, %v262
  %v911 = vmul.f32 %v834, %v262
  %v912 = vmul.f32 %v835, %v262
  %v913 = vmul.f32 %v836, %v262
  %v914 = vmul.f32 %v837, %v262
  %v915 = vmul.f32 %v838, %v262
  %v916 = vmul.f32 %v839, %v262
  %v917 = vmul.f32 %v840, %v262
  %v918 = vmul.f32 %v841, %v262
  %v919 = vmul.f32 %v842, %v262
  %v920 = vmul.f32 %v843, %v262
  %v921 = vmul.f32 %v844, %v262
  %v922 = vmul.f32 %v845, %v262
  %v923 = vmul.f32 %v846, %v262
  %v924 = vmul.f32 %v847, %v262
  %v925 = vmul.f32 %v848, %v262
  %v926 = vmul.f32 %v849, %v262
  %v927 = vmul.f32 %v850, %v262
  %v928 = vmul.f32 %v851, %v262
  %v929 = vmul.f32 %v852, %v262
  %v930 = vmul.f32 %v853, %v262
  %v931 = vmul.f32 %v854, %v262
  %v932 = vmul.f32 %v855, %v262
  %v933 = vmul.f32 %v856, %v262
  %v934 = vmul.f32 %v857, %v262
  %v935 = vmul.f32 %v858, %v262
  %v936 = vmul.f32 %v859, %v262
  %v937 = vmul.f32 %v860, %v262
  %v938 = vmul.f32 %v861, %v262
  %v939 = vmul.f32 %v862, %v262
  %v940 = vmul.f32 %v863, %v262
  %v941 = vmul.f32 %v864, %v262
  %v942 = vmul.f32 %v865, %v262
  %v943 = vmul.f32 %v866, %v262
  %v944 = vmul.f32 %v867, %v262
  %v945 = vmul.f32 %v868, %v262
  %v946 = vmul.f32 %v869, %v262
  %v947 = vmul.f32 %v870, %v262
  %v948 = vmul.f32 %v871, %v262
  %v949 = vmul.f32 %v872, %v262
  %v950 = vmul.f32 %v873, %v262
  %v951 = vmul.f32 %v874, %v262
  %v952 = vmul.f32 %v875, %v262
  %v953 = vmul.f32 %v876, %v262
  %v954 = vmul.f32 %v877, %v262
  %v955 = vmul.f32 %v878, %v262
  %v956 = vmul.f32 %v879, %v262
  %v957 = vfloor.f32 %v880
  %v958 = vfloor.f32 %v881
  %v959 = vfloor.f32 %v882
  %v960 = vfloor.f32 %v883
  %v961 = vfloor.f32 %v884
  %v962 = vfloor.f32 %v885
  %v963 = vfloor.f32 %v886
  %v964 = vfloor.f32 %v887
  %v965 = vfloor.f32 %v888
  %v966 = vfloor.f32 %v889
  %v967 = vfloor.f32 %v890
  %v968 = vfloor.f32 %v891
  %v969 = vfloor.f32 %v892
  %v970 = vfloor.f32 %v893
  %v971 = vfloor.f32 %v894
  %v972 = vfloor.f32 %v895
  %v973 = vfloor.f32 %v896
  %v974 = vfloor.f32 %v897
  %v975 = vfloor.f32 %v898
  %v976 = vfloor.f32 %v899
  %v977 = vfloor.f32 %v900
  %v978 = vfloor.f32 %v901
  %v979 = vfloor.f32 %v902
  %v980 = vfloor.f32 %v903
  %v981 = vfloor.f32 %v904
  %v982 = vfloor.f32 %v905
  %v983 = vfloor.f32 %v906
  %v984 = vfloor.f32 %v907
  %v985 = vfloor.f32 %v908
  %v986 = vfloor.f32 %v909
  %v987 = vfloor.f32 %v910
  %v988 = vfloor.f32 %v911
  %v989 = vfloor.f32 %v912
  %v990 = vfloor.f32 %v913
  %v991 = vfloor.f32 %v914
  %v992 = vfloor.f32 %v915
  %v993 = vfloor.f32 %v916
  %v994 = vfloor.f32 %v917
  %v995 = vfloor.f32 %v918
  %v996 = vfloor.f32 %v919
  %v997 = vfloor.f32 %v920
  %v998 = vfloor.f32 %v921
  %v999 = vfloor.f32 %v922
  %v1000 = vfloor.f32 %v923
  %v1001 = vfloor.f32 %v924
  %v1002 = vfloor.f32 %v925
  %v1003 = vfloor.f32 %v926
  %v1004 = vfloor.f32 %v927
  %v1005 = vfloor.f32 %v928
  %v1006 = vfloor.f32 %v929
  %v1007 = vfloor.f32 %v930
  %v1008 = vfloor.f32 %v931
  %v1009 = vfloor.f32 %v932
  %v1010 = vfloor.f32 %v933
  %v1011 = vfloor.f32 %v934
  %v1012 = vfloor.f32 %v935
  %v1013 = vfloor.f32 %v936
  %v1014 = vfloor.f32 %v937
  %v1015 = vfloor.f32 %v938
  %v1016 = vfloor.f32 %v939
  %v1017 = vfloor.f32 %v940
  %v1018 = vfloor.f32 %v941
  %v1019 = vfloor.f32 %v942
  %v1020 = vfloor.f32 %v943
  %v1021 = vfloor.f32 %v944
  %v1022 = vfloor.f32 %v945
  %v1023 = vfloor.f32 %v946
  %v1024 = vfloor.f32 %v947
  %v1025 = vfloor.f32 %v948
  %v1026 = vfloor.f32 %v949
  %v1027 = vfloor.f32 %v950
  %v1028 = vfloor.f32 %v951
  %v1029 = vfloor.f32 %v952
  %v1030 = vfloor.f32 %v953
  %v1031 = vfloor.f32 %v954
  %v1032 = vfloor.f32 %v955
  %v1033 = vfloor.f32 %v956
  %vm1034 = vcmp.ge.f32.partialorder %v494, 1.0
  %vm1035 = vcmp.ge.f32.partialorder %v495, 1.0
  %vm1036 = vcmp.ge.f32.partialorder %v496, 1.0
  %vm1037 = vcmp.ge.f32.partialorder %v497, 1.0
  %vm1038 = vcmp.ge.f32.partialorder %v498, 1.0
  %vm1039 = vcmp.ge.f32.partialorder %v499, 1.0
  %vm1040 = vcmp.ge.f32.partialorder %v500, 1.0
  %vm1041 = vcmp.ge.f32.partialorder %v501, 1.0
  %vm1042 = vcmp.ge.f32.partialorder %v502, 1.0
  %vm1043 = vcmp.ge.f32.partialorder %v503, 1.0
  %vm1044 = vcmp.ge.f32.partialorder %v504, 1.0
  %vm1045 = vcmp.ge.f32.partialorder %v505, 1.0
  %vm1046 = vcmp.ge.f32.partialorder %v506, 1.0
  %vm1047 = vcmp.ge.f32.partialorder %v507, 1.0
  %vm1048 = vcmp.ge.f32.partialorder %v508, 1.0
  %vm1049 = vcmp.ge.f32.partialorder %v509, 1.0
  %vm1050 = vcmp.ge.f32.partialorder %v510, 1.0
  %vm1051 = vcmp.ge.f32.partialorder %v511, 1.0
  %vm1052 = vcmp.ge.f32.partialorder %v512, 1.0
  %vm1053 = vcmp.ge.f32.partialorder %v513, 1.0
  %vm1054 = vcmp.ge.f32.partialorder %v514, 1.0
  %vm1055 = vcmp.ge.f32.partialorder %v515, 1.0
  %vm1056 = vcmp.ge.f32.partialorder %v516, 1.0
  %vm1057 = vcmp.ge.f32.partialorder %v517, 1.0
  %vm1058 = vcmp.ge.f32.partialorder %v518, 1.0
  %vm1059 = vcmp.ge.f32.partialorder %v519, 1.0
  %vm1060 = vcmp.ge.f32.partialorder %v520, 1.0
  %vm1061 = vcmp.ge.f32.partialorder %v521, 1.0
  %vm1062 = vcmp.ge.f32.partialorder %v522, 1.0
  %vm1063 = vcmp.ge.f32.partialorder %v523, 1.0
  %vm1064 = vcmp.ge.f32.partialorder %v524, 1.0
  %vm1065 = vcmp.ge.f32.partialorder %v525, 1.0
  %vm1066 = vcmp.ge.f32.partialorder %v526, 1.0
  %vm1067 = vcmp.ge.f32.partialorder %v527, 1.0
  %vm1068 = vcmp.ge.f32.partialorder %v528, 1.0
  %vm1069 = vcmp.ge.f32.partialorder %v529, 1.0
  %vm1070 = vcmp.ge.f32.partialorder %v530, 1.0
  %vm1071 = vcmp.ge.f32.partialorder %v531, 1.0
  %vm1072 = vcmp.ge.f32.partialorder %v532, 1.0
  %vm1073 = vcmp.ge.f32.partialorder %v533, 1.0
  %vm1074 = vcmp.ge.f32.partialorder %v534, 1.0
  %vm1075 = vcmp.ge.f32.partialorder %v535, 1.0
  %vm1076 = vcmp.ge.f32.partialorder %v536, 1.0
  %vm1077 = vcmp.ge.f32.partialorder %v537, 1.0
  %vm1078 = vcmp.ge.f32.partialorder %v538, 1.0
  %vm1079 = vcmp.ge.f32.partialorder %v539, 1.0
  %vm1080 = vcmp.ge.f32.partialorder %v540, 1.0
  %vm1081 = vcmp.ge.f32.partialorder %v541, 1.0
  %vm1082 = vcmp.ge.f32.partialorder %v542, 1.0
  %vm1083 = vcmp.ge.f32.partialorder %v543, 1.0
  %vm1084 = vcmp.ge.f32.partialorder %v544, 1.0
  %vm1085 = vcmp.ge.f32.partialorder %v545, 1.0
  %vm1086 = vcmp.ge.f32.partialorder %v546, 1.0
  %vm1087 = vcmp.ge.f32.partialorder %v547, 1.0
  %vm1088 = vcmp.ge.f32.partialorder %v548, 1.0
  %vm1089 = vcmp.ge.f32.partialorder %v549, 1.0
  %vm1090 = vcmp.ge.f32.partialorder %v550, 1.0
  %vm1091 = vcmp.ge.f32.partialorder %v551, 1.0
  %vm1092 = vcmp.ge.f32.partialorder %v552, 1.0
  %vm1093 = vcmp.ge.f32.partialorder %v553, 1.0
  %vm1094 = vcmp.ge.f32.partialorder %v554, 1.0
  %vm1095 = vcmp.ge.f32.partialorder %v555, 1.0
  %vm1096 = vcmp.ge.f32.partialorder %v556, 1.0
  %vm1097 = vcmp.ge.f32.partialorder %v557, 1.0
  %vm1098 = vcmp.ge.f32.partialorder %v558, 1.0
  %vm1099 = vcmp.ge.f32.partialorder %v559, 1.0
  %vm1100 = vcmp.ge.f32.partialorder %v560, 1.0
  %vm1101 = vcmp.ge.f32.partialorder %v561, 1.0
  %vm1102 = vcmp.ge.f32.partialorder %v562, 1.0
  %vm1103 = vcmp.ge.f32.partialorder %v563, 1.0
  %vm1104 = vcmp.ge.f32.partialorder %v564, 1.0
  %vm1105 = vcmp.ge.f32.partialorder %v565, 1.0
  %vm1106 = vcmp.ge.f32.partialorder %v566, 1.0
  %vm1107 = vcmp.ge.f32.partialorder %v567, 1.0
  %vm1108 = vcmp.ge.f32.partialorder %v568, 1.0
  %vm1109 = vcmp.ge.f32.partialorder %v569, 1.0
  %vm1110 = vcmp.ge.f32.partialorder %v570, 1.0
  %vm1111 = vcmp.le.f32.partialorder %v494, 16.0
  %vm1112 = vcmp.le.f32.partialorder %v495, 16.0
  %vm1113 = vcmp.le.f32.partialorder %v496, 16.0
  %vm1114 = vcmp.le.f32.partialorder %v497, 16.0
  %vm1115 = vcmp.le.f32.partialorder %v498, 16.0
  %vm1116 = vcmp.le.f32.partialorder %v499, 16.0
  %vm1117 = vcmp.le.f32.partialorder %v500, 16.0
  %vm1118 = vcmp.le.f32.partialorder %v501, 16.0
  %vm1119 = vcmp.le.f32.partialorder %v502, 16.0
  %vm1120 = vcmp.le.f32.partialorder %v503, 16.0
  %vm1121 = vcmp.le.f32.partialorder %v504, 16.0
  %vm1122 = vcmp.le.f32.partialorder %v505, 16.0
  %vm1123 = vcmp.le.f32.partialorder %v506, 16.0
  %vm1124 = vcmp.le.f32.partialorder %v507, 16.0
  %vm1125 = vcmp.le.f32.partialorder %v508, 16.0
  %vm1126 = vcmp.le.f32.partialorder %v509, 16.0
  %vm1127 = vcmp.le.f32.partialorder %v510, 16.0
  %vm1128 = vcmp.le.f32.partialorder %v511, 16.0
  %vm1129 = vcmp.le.f32.partialorder %v512, 16.0
  %vm1130 = vcmp.le.f32.partialorder %v513, 16.0
  %vm1131 = vcmp.le.f32.partialorder %v514, 16.0
  %vm1132 = vcmp.le.f32.partialorder %v515, 16.0
  %vm1133 = vcmp.le.f32.partialorder %v516, 16.0
  %vm1134 = vcmp.le.f32.partialorder %v517, 16.0
  %vm1135 = vcmp.le.f32.partialorder %v518, 16.0
  %vm1136 = vcmp.le.f32.partialorder %v519, 16.0
  %vm1137 = vcmp.le.f32.partialorder %v520, 16.0
  %vm1138 = vcmp.le.f32.partialorder %v521, 16.0
  %vm1139 = vcmp.le.f32.partialorder %v522, 16.0
  %vm1140 = vcmp.le.f32.partialorder %v523, 16.0
  %vm1141 = vcmp.le.f32.partialorder %v524, 16.0
  %vm1142 = vcmp.le.f32.partialorder %v525, 16.0
  %vm1143 = vcmp.le.f32.partialorder %v526, 16.0
  %vm1144 = vcmp.le.f32.partialorder %v527, 16.0
  %vm1145 = vcmp.le.f32.partialorder %v528, 16.0
  %vm1146 = vcmp.le.f32.partialorder %v529, 16.0
  %vm1147 = vcmp.le.f32.partialorder %v530, 16.0
  %vm1148 = vcmp.le.f32.partialorder %v531, 16.0
  %vm1149 = vcmp.le.f32.partialorder %v532, 16.0
  %vm1150 = vcmp.le.f32.partialorder %v533, 16.0
  %vm1151 = vcmp.le.f32.partialorder %v534, 16.0
  %vm1152 = vcmp.le.f32.partialorder %v535, 16.0
  %vm1153 = vcmp.le.f32.partialorder %v536, 16.0
  %vm1154 = vcmp.le.f32.partialorder %v537, 16.0
  %vm1155 = vcmp.le.f32.partialorder %v538, 16.0
  %vm1156 = vcmp.le.f32.partialorder %v539, 16.0
  %vm1157 = vcmp.le.f32.partialorder %v540, 16.0
  %vm1158 = vcmp.le.f32.partialorder %v541, 16.0
  %vm1159 = vcmp.le.f32.partialorder %v542, 16.0
  %vm1160 = vcmp.le.f32.partialorder %v543, 16.0
  %vm1161 = vcmp.le.f32.partialorder %v544, 16.0
  %vm1162 = vcmp.le.f32.partialorder %v545, 16.0
  %vm1163 = vcmp.le.f32.partialorder %v546, 16.0
  %vm1164 = vcmp.le.f32.partialorder %v547, 16.0
  %vm1165 = vcmp.le.f32.partialorder %v548, 16.0
  %vm1166 = vcmp.le.f32.partialorder %v549, 16.0
  %vm1167 = vcmp.le.f32.partialorder %v550, 16.0
  %vm1168 = vcmp.le.f32.partialorder %v551, 16.0
  %vm1169 = vcmp.le.f32.partialorder %v552, 16.0
  %vm1170 = vcmp.le.f32.partialorder %v553, 16.0
  %vm1171 = vcmp.le.f32.partialorder %v554, 16.0
  %vm1172 = vcmp.le.f32.partialorder %v555, 16.0
  %vm1173 = vcmp.le.f32.partialorder %v556, 16.0
  %vm1174 = vcmp.le.f32.partialorder %v557, 16.0
  %vm1175 = vcmp.le.f32.partialorder %v558, 16.0
  %vm1176 = vcmp.le.f32.partialorder %v559, 16.0
  %vm1177 = vcmp.le.f32.partialorder %v560, 16.0
  %vm1178 = vcmp.le.f32.partialorder %v561, 16.0
  %vm1179 = vcmp.le.f32.partialorder %v562, 16.0
  %vm1180 = vcmp.le.f32.partialorder %v563, 16.0
  %vm1181 = vcmp.le.f32.partialorder %v564, 16.0
  %vm1182 = vcmp.le.f32.partialorder %v565, 16.0
  %vm1183 = vcmp.le.f32.partialorder %v566, 16.0
  %vm1184 = vcmp.le.f32.partialorder %v567, 16.0
  %vm1185 = vcmp.le.f32.partialorder %v568, 16.0
  %vm1186 = vcmp.le.f32.partialorder %v569, 16.0
  %vm1187 = vcmp.le.f32.partialorder %v570, 16.0
  %vm1188 = vmand %vm1034, %vm1111
  %vm1189 = vmand %vm1035, %vm1112
  %vm1190 = vmand %vm1036, %vm1113
  %vm1191 = vmand %vm1037, %vm1114
  %vm1192 = vmand %vm1038, %vm1115
  %vm1193 = vmand %vm1039, %vm1116
  %vm1194 = vmand %vm1040, %vm1117
  %vm1195 = vmand %vm1041, %vm1118
  %vm1196 = vmand %vm1042, %vm1119
  %vm1197 = vmand %vm1043, %vm1120
  %vm1198 = vmand %vm1044, %vm1121
  %vm1199 = vmand %vm1045, %vm1122
  %vm1200 = vmand %vm1046, %vm1123
  %vm1201 = vmand %vm1047, %vm1124
  %vm1202 = vmand %vm1048, %vm1125
  %vm1203 = vmand %vm1049, %vm1126
  %vm1204 = vmand %vm1050, %vm1127
  %vm1205 = vmand %vm1051, %vm1128
  %vm1206 = vmand %vm1052, %vm1129
  %vm1207 = vmand %vm1053, %vm1130
  %vm1208 = vmand %vm1054, %vm1131
  %vm1209 = vmand %vm1055, %vm1132
  %vm1210 = vmand %vm1056, %vm1133
  %vm1211 = vmand %vm1057, %vm1134
  %vm1212 = vmand %vm1058, %vm1135
  %vm1213 = vmand %vm1059, %vm1136
  %vm1214 = vmand %vm1060, %vm1137
  %vm1215 = vmand %vm1061, %vm1138
  %vm1216 = vmand %vm1062, %vm1139
  %vm1217 = vmand %vm1063, %vm1140
  %vm1218 = vmand %vm1064, %vm1141
  %vm1219 = vmand %vm1065, %vm1142
  %vm1220 = vmand %vm1066, %vm1143
  %vm1221 = vmand %vm1067, %vm1144
  %vm1222 = vmand %vm1068, %vm1145
  %vm1223 = vmand %vm1069, %vm1146
  %vm1224 = vmand %vm1070, %vm1147
  %vm1225 = vmand %vm1071, %vm1148
  %vm1226 = vmand %vm1072, %vm1149
  %vm1227 = vmand %vm1073, %vm1150
  %vm1228 = vmand %vm1074, %vm1151
  %vm1229 = vmand %vm1075, %vm1152
  %vm1230 = vmand %vm1076, %vm1153
  %vm1231 = vmand %vm1077, %vm1154
  %vm1232 = vmand %vm1078, %vm1155
  %vm1233 = vmand %vm1079, %vm1156
  %vm1234 = vmand %vm1080, %vm1157
  %vm1235 = vmand %vm1081, %vm1158
  %vm1236 = vmand %vm1082, %vm1159
  %vm1237 = vmand %vm1083, %vm1160
  %vm1238 = vmand %vm1084, %vm1161
  %vm1239 = vmand %vm1085, %vm1162
  %vm1240 = vmand %vm1086, %vm1163
  %vm1241 = vmand %vm1087, %vm1164
  %vm1242 = vmand %vm1088, %vm1165
  %vm1243 = vmand %vm1089, %vm1166
  %vm1244 = vmand %vm1090, %vm1167
  %vm1245 = vmand %vm1091, %vm1168
  %vm1246 = vmand %vm1092, %vm1169
  %vm1247 = vmand %vm1093, %vm1170
  %vm1248 = vmand %vm1094, %vm1171
  %vm1249 = vmand %vm1095, %vm1172
  %vm1250 = vmand %vm1096, %vm1173
  %vm1251 = vmand %vm1097, %vm1174
  %vm1252 = vmand %vm1098, %vm1175
  %vm1253 = vmand %vm1099, %vm1176
  %vm1254 = vmand %vm1100, %vm1177
  %vm1255 = vmand %vm1101, %vm1178
  %vm1256 = vmand %vm1102, %vm1179
  %vm1257 = vmand %vm1103, %vm1180
  %vm1258 = vmand %vm1104, %vm1181
  %vm1259 = vmand %vm1105, %vm1182
  %vm1260 = vmand %vm1106, %vm1183
  %vm1261 = vmand %vm1107, %vm1184
  %vm1262 = vmand %vm1108, %vm1185
  %vm1263 = vmand %vm1109, %vm1186
  %vm1264 = vmand %vm1110, %vm1187
  %vm1265 = vcmp.ge.f32.partialorder %v957, 1.0
  %vm1266 = vcmp.ge.f32.partialorder %v958, 1.0
  %vm1267 = vcmp.ge.f32.partialorder %v959, 1.0
  %vm1268 = vcmp.ge.f32.partialorder %v960, 1.0
  %vm1269 = vcmp.ge.f32.partialorder %v961, 1.0
  %vm1270 = vcmp.ge.f32.partialorder %v962, 1.0
  %vm1271 = vcmp.ge.f32.partialorder %v963, 1.0
  %vm1272 = vcmp.ge.f32.partialorder %v964, 1.0
  %vm1273 = vcmp.ge.f32.partialorder %v965, 1.0
  %vm1274 = vcmp.ge.f32.partialorder %v966, 1.0
  %vm1275 = vcmp.ge.f32.partialorder %v967, 1.0
  %vm1276 = vcmp.ge.f32.partialorder %v968, 1.0
  %vm1277 = vcmp.ge.f32.partialorder %v969, 1.0
  %vm1278 = vcmp.ge.f32.partialorder %v970, 1.0
  %vm1279 = vcmp.ge.f32.partialorder %v971, 1.0
  %vm1280 = vcmp.ge.f32.partialorder %v972, 1.0
  %vm1281 = vcmp.ge.f32.partialorder %v973, 1.0
  %vm1282 = vcmp.ge.f32.partialorder %v974, 1.0
  %vm1283 = vcmp.ge.f32.partialorder %v975, 1.0
  %vm1284 = vcmp.ge.f32.partialorder %v976, 1.0
  %vm1285 = vcmp.ge.f32.partialorder %v977, 1.0
  %vm1286 = vcmp.ge.f32.partialorder %v978, 1.0
  %vm1287 = vcmp.ge.f32.partialorder %v979, 1.0
  %vm1288 = vcmp.ge.f32.partialorder %v980, 1.0
  %vm1289 = vcmp.ge.f32.partialorder %v981, 1.0
  %vm1290 = vcmp.ge.f32.partialorder %v982, 1.0
  %vm1291 = vcmp.ge.f32.partialorder %v983, 1.0
  %vm1292 = vcmp.ge.f32.partialorder %v984, 1.0
  %vm1293 = vcmp.ge.f32.partialorder %v985, 1.0
  %vm1294 = vcmp.ge.f32.partialorder %v986, 1.0
  %vm1295 = vcmp.ge.f32.partialorder %v987, 1.0
  %vm1296 = vcmp.ge.f32.partialorder %v988, 1.0
  %vm1297 = vcmp.ge.f32.partialorder %v989, 1.0
  %vm1298 = vcmp.ge.f32.partialorder %v990, 1.0
  %vm1299 = vcmp.ge.f32.partialorder %v991, 1.0
  %vm1300 = vcmp.ge.f32.partialorder %v992, 1.0
  %vm1301 = vcmp.ge.f32.partialorder %v993, 1.0
  %vm1302 = vcmp.ge.f32.partialorder %v994, 1.0
  %vm1303 = vcmp.ge.f32.partialorder %v995, 1.0
  %vm1304 = vcmp.ge.f32.partialorder %v996, 1.0
  %vm1305 = vcmp.ge.f32.partialorder %v997, 1.0
  %vm1306 = vcmp.ge.f32.partialorder %v998, 1.0
  %vm1307 = vcmp.ge.f32.partialorder %v999, 1.0
  %vm1308 = vcmp.ge.f32.partialorder %v1000, 1.0
  %vm1309 = vcmp.ge.f32.partialorder %v1001, 1.0
  %vm1310 = vcmp.ge.f32.partialorder %v1002, 1.0
  %vm1311 = vcmp.ge.f32.partialorder %v1003, 1.0
  %vm1312 = vcmp.ge.f32.partialorder %v1004, 1.0
  %vm1313 = vcmp.ge.f32.partialorder %v1005, 1.0
  %vm1314 = vcmp.ge.f32.partialorder %v1006, 1.0
  %vm1315 = vcmp.ge.f32.partialorder %v1007, 1.0
  %vm1316 = vcmp.ge.f32.partialorder %v1008, 1.0
  %vm1317 = vcmp.ge.f32.partialorder %v1009, 1.0
  %vm1318 = vcmp.ge.f32.partialorder %v1010, 1.0
  %vm1319 = vcmp.ge.f32.partialorder %v1011, 1.0
  %vm1320 = vcmp.ge.f32.partialorder %v1012, 1.0
  %vm1321 = vcmp.ge.f32.partialorder %v1013, 1.0
  %vm1322 = vcmp.ge.f32.partialorder %v1014, 1.0
  %vm1323 = vcmp.ge.f32.partialorder %v1015, 1.0
  %vm1324 = vcmp.ge.f32.partialorder %v1016, 1.0
  %vm1325 = vcmp.ge.f32.partialorder %v1017, 1.0
  %vm1326 = vcmp.ge.f32.partialorder %v1018, 1.0
  %vm1327 = vcmp.ge.f32.partialorder %v1019, 1.0
  %vm1328 = vcmp.ge.f32.partialorder %v1020, 1.0
  %vm1329 = vcmp.ge.f32.partialorder %v1021, 1.0
  %vm1330 = vcmp.ge.f32.partialorder %v1022, 1.0
  %vm1331 = vcmp.ge.f32.partialorder %v1023, 1.0
  %vm1332 = vcmp.ge.f32.partialorder %v1024, 1.0
  %vm1333 = vcmp.ge.f32.partialorder %v1025, 1.0
  %vm1334 = vcmp.ge.f32.partialorder %v1026, 1.0
  %vm1335 = vcmp.ge.f32.partialorder %v1027, 1.0
  %vm1336 = vcmp.ge.f32.partialorder %v1028, 1.0
  %vm1337 = vcmp.ge.f32.partialorder %v1029, 1.0
  %vm1338 = vcmp.ge.f32.partialorder %v1030, 1.0
  %vm1339 = vcmp.ge.f32.partialorder %v1031, 1.0
  %vm1340 = vcmp.ge.f32.partialorder %v1032, 1.0
  %vm1341 = vcmp.ge.f32.partialorder %v1033, 1.0
  %vm1342 = vmand %vm1188, %vm1265
  %vm1343 = vmand %vm1189, %vm1266
  %vm1344 = vmand %vm1190, %vm1267
  %vm1345 = vmand %vm1191, %vm1268
  %vm1346 = vmand %vm1192, %vm1269
  %vm1347 = vmand %vm1193, %vm1270
  %vm1348 = vmand %vm1194, %vm1271
  %vm1349 = vmand %vm1195, %vm1272
  %vm1350 = vmand %vm1196, %vm1273
  %vm1351 = vmand %vm1197, %vm1274
  %vm1352 = vmand %vm1198, %vm1275
  %vm1353 = vmand %vm1199, %vm1276
  %vm1354 = vmand %vm1200, %vm1277
  %vm1355 = vmand %vm1201, %vm1278
  %vm1356 = vmand %vm1202, %vm1279
  %vm1357 = vmand %vm1203, %vm1280
  %vm1358 = vmand %vm1204, %vm1281
  %vm1359 = vmand %vm1205, %vm1282
  %vm1360 = vmand %vm1206, %vm1283
  %vm1361 = vmand %vm1207, %vm1284
  %vm1362 = vmand %vm1208, %vm1285
  %vm1363 = vmand %vm1209, %vm1286
  %vm1364 = vmand %vm1210, %vm1287
  %vm1365 = vmand %vm1211, %vm1288
  %vm1366 = vmand %vm1212, %vm1289
  %vm1367 = vmand %vm1213, %vm1290
  %vm1368 = vmand %vm1214, %vm1291
  %vm1369 = vmand %vm1215, %vm1292
  %vm1370 = vmand %vm1216, %vm1293
  %vm1371 = vmand %vm1217, %vm1294
  %vm1372 = vmand %vm1218, %vm1295
  %vm1373 = vmand %vm1219, %vm1296
  %vm1374 = vmand %vm1220, %vm1297
  %vm1375 = vmand %vm1221, %vm1298
  %vm1376 = vmand %vm1222, %vm1299
  %vm1377 = vmand %vm1223, %vm1300
  %vm1378 = vmand %vm1224, %vm1301
  %vm1379 = vmand %vm1225, %vm1302
  %vm1380 = vmand %vm1226, %vm1303
  %vm1381 = vmand %vm1227, %vm1304
  %vm1382 = vmand %vm1228, %vm1305
  %vm1383 = vmand %vm1229, %vm1306
  %vm1384 = vmand %vm1230, %vm1307
  %vm1385 = vmand %vm1231, %vm1308
  %vm1386 = vmand %vm1232, %vm1309
  %vm1387 = vmand %vm1233, %vm1310
  %vm1388 = vmand %vm1234, %vm1311
  %vm1389 = vmand %vm1235, %vm1312
  %vm1390 = vmand %vm1236, %vm1313
  %vm1391 = vmand %vm1237, %vm1314
  %vm1392 = vmand %vm1238, %vm1315
  %vm1393 = vmand %vm1239, %vm1316
  %vm1394 = vmand %vm1240, %vm1317
  %vm1395 = vmand %vm1241, %vm1318
  %vm1396 = vmand %vm1242, %vm1319
  %vm1397 = vmand %vm1243, %vm1320
  %vm1398 = vmand %vm1244, %vm1321
  %vm1399 = vmand %vm1245, %vm1322
  %vm1400 = vmand %vm1246, %vm1323
  %vm1401 = vmand %vm1247, %vm1324
  %vm1402 = vmand %vm1248, %vm1325
  %vm1403 = vmand %vm1249, %vm1326
  %vm1404 = vmand %vm1250, %vm1327
  %vm1405 = vmand %vm1251, %vm1328
  %vm1406 = vmand %vm1252, %vm1329
  %vm1407 = vmand %vm1253, %vm1330
  %vm1408 = vmand %vm1254, %vm1331
  %vm1409 = vmand %vm1255, %vm1332
  %vm1410 = vmand %vm1256, %vm1333
  %vm1411 = vmand %vm1257, %vm1334
  %vm1412 = vmand %vm1258, %vm1335
  %vm1413 = vmand %vm1259, %vm1336
  %vm1414 = vmand %vm1260, %vm1337
  %vm1415 = vmand %vm1261, %vm1338
  %vm1416 = vmand %vm1262, %vm1339
  %vm1417 = vmand %vm1263, %vm1340
  %vm1418 = vmand %vm1264, %vm1341
  %vm1419 = vcmp.le.f32.partialorder %v957, 16.0
  %vm1420 = vcmp.le.f32.partialorder %v958, 16.0
  %vm1421 = vcmp.le.f32.partialorder %v959, 16.0
  %vm1422 = vcmp.le.f32.partialorder %v960, 16.0
  %vm1423 = vcmp.le.f32.partialorder %v961, 16.0
  %vm1424 = vcmp.le.f32.partialorder %v962, 16.0
  %vm1425 = vcmp.le.f32.partialorder %v963, 16.0
  %vm1426 = vcmp.le.f32.partialorder %v964, 16.0
  %vm1427 = vcmp.le.f32.partialorder %v965, 16.0
  %vm1428 = vcmp.le.f32.partialorder %v966, 16.0
  %vm1429 = vcmp.le.f32.partialorder %v967, 16.0
  %vm1430 = vcmp.le.f32.partialorder %v968, 16.0
  %vm1431 = vcmp.le.f32.partialorder %v969, 16.0
  %vm1432 = vcmp.le.f32.partialorder %v970, 16.0
  %vm1433 = vcmp.le.f32.partialorder %v971, 16.0
  %vm1434 = vcmp.le.f32.partialorder %v972, 16.0
  %vm1435 = vcmp.le.f32.partialorder %v973, 16.0
  %vm1436 = vcmp.le.f32.partialorder %v974, 16.0
  %vm1437 = vcmp.le.f32.partialorder %v975, 16.0
  %vm1438 = vcmp.le.f32.partialorder %v976, 16.0
  %vm1439 = vcmp.le.f32.partialorder %v977, 16.0
  %vm1440 = vcmp.le.f32.partialorder %v978, 16.0
  %vm1441 = vcmp.le.f32.partialorder %v979, 16.0
  %vm1442 = vcmp.le.f32.partialorder %v980, 16.0
  %vm1443 = vcmp.le.f32.partialorder %v981, 16.0
  %vm1444 = vcmp.le.f32.partialorder %v982, 16.0
  %vm1445 = vcmp.le.f32.partialorder %v983, 16.0
  %vm1446 = vcmp.le.f32.partialorder %v984, 16.0
  %vm1447 = vcmp.le.f32.partialorder %v985, 16.0
  %vm1448 = vcmp.le.f32.partialorder %v986, 16.0
  %vm1449 = vcmp.le.f32.partialorder %v987, 16.0
  %vm1450 = vcmp.le.f32.partialorder %v988, 16.0
  %vm1451 = vcmp.le.f32.partialorder %v989, 16.0
  %vm1452 = vcmp.le.f32.partialorder %v990, 16.0
  %vm1453 = vcmp.le.f32.partialorder %v991, 16.0
  %vm1454 = vcmp.le.f32.partialorder %v992, 16.0
  %vm1455 = vcmp.le.f32.partialorder %v993, 16.0
  %vm1456 = vcmp.le.f32.partialorder %v994, 16.0
  %vm1457 = vcmp.le.f32.partialorder %v995, 16.0
  %vm1458 = vcmp.le.f32.partialorder %v996, 16.0
  %vm1459 = vcmp.le.f32.partialorder %v997, 16.0
  %vm1460 = vcmp.le.f32.partialorder %v998, 16.0
  %vm1461 = vcmp.le.f32.partialorder %v999, 16.0
  %vm1462 = vcmp.le.f32.partialorder %v1000, 16.0
  %vm1463 = vcmp.le.f32.partialorder %v1001, 16.0
  %vm1464 = vcmp.le.f32.partialorder %v1002, 16.0
  %vm1465 = vcmp.le.f32.partialorder %v1003, 16.0
  %vm1466 = vcmp.le.f32.partialorder %v1004, 16.0
  %vm1467 = vcmp.le.f32.partialorder %v1005, 16.0
  %vm1468 = vcmp.le.f32.partialorder %v1006, 16.0
  %vm1469 = vcmp.le.f32.partialorder %v1007, 16.0
  %vm1470 = vcmp.le.f32.partialorder %v1008, 16.0
  %vm1471 = vcmp.le.f32.partialorder %v1009, 16.0
  %vm1472 = vcmp.le.f32.partialorder %v1010, 16.0
  %vm1473 = vcmp.le.f32.partialorder %v1011, 16.0
  %vm1474 = vcmp.le.f32.partialorder %v1012, 16.0
  %vm1475 = vcmp.le.f32.partialorder %v1013, 16.0
  %vm1476 = vcmp.le.f32.partialorder %v1014, 16.0
  %vm1477 = vcmp.le.f32.partialorder %v1015, 16.0
  %vm1478 = vcmp.le.f32.partialorder %v1016, 16.0
  %vm1479 = vcmp.le.f32.partialorder %v1017, 16.0
  %vm1480 = vcmp.le.f32.partialorder %v1018, 16.0
  %vm1481 = vcmp.le.f32.partialorder %v1019, 16.0
  %vm1482 = vcmp.le.f32.partialorder %v1020, 16.0
  %vm1483 = vcmp.le.f32.partialorder %v1021, 16.0
  %vm1484 = vcmp.le.f32.partialorder %v1022, 16.0
  %vm1485 = vcmp.le.f32.partialorder %v1023, 16.0
  %vm1486 = vcmp.le.f32.partialorder %v1024, 16.0
  %vm1487 = vcmp.le.f32.partialorder %v1025, 16.0
  %vm1488 = vcmp.le.f32.partialorder %v1026, 16.0
  %vm1489 = vcmp.le.f32.partialorder %v1027, 16.0
  %vm1490 = vcmp.le.f32.partialorder %v1028, 16.0
  %vm1491 = vcmp.le.f32.partialorder %v1029, 16.0
  %vm1492 = vcmp.le.f32.partialorder %v1030, 16.0
  %vm1493 = vcmp.le.f32.partialorder %v1031, 16.0
  %vm1494 = vcmp.le.f32.partialorder %v1032, 16.0
  %vm1495 = vcmp.le.f32.partialorder %v1033, 16.0
  %vm1496 = vmand %vm1342, %vm1419
  %vm1497 = vmand %vm1343, %vm1420
  %vm1498 = vmand %vm1344, %vm1421
  %vm1499 = vmand %vm1345, %vm1422
  %vm1500 = vmand %vm1346, %vm1423
  %vm1501 = vmand %vm1347, %vm1424
  %vm1502 = vmand %vm1348, %vm1425
  %vm1503 = vmand %vm1349, %vm1426
  %vm1504 = vmand %vm1350, %vm1427
  %vm1505 = vmand %vm1351, %vm1428
  %vm1506 = vmand %vm1352, %vm1429
  %vm1507 = vmand %vm1353, %vm1430
  %vm1508 = vmand %vm1354, %vm1431
  %vm1509 = vmand %vm1355, %vm1432
  %vm1510 = vmand %vm1356, %vm1433
  %vm1511 = vmand %vm1357, %vm1434
  %vm1512 = vmand %vm1358, %vm1435
  %vm1513 = vmand %vm1359, %vm1436
  %vm1514 = vmand %vm1360, %vm1437
  %vm1515 = vmand %vm1361, %vm1438
  %vm1516 = vmand %vm1362, %vm1439
  %vm1517 = vmand %vm1363, %vm1440
  %vm1518 = vmand %vm1364, %vm1441
  %vm1519 = vmand %vm1365, %vm1442
  %vm1520 = vmand %vm1366, %vm1443
  %vm1521 = vmand %vm1367, %vm1444
  %vm1522 = vmand %vm1368, %vm1445
  %vm1523 = vmand %vm1369, %vm1446
  %vm1524 = vmand %vm1370, %vm1447
  %vm1525 = vmand %vm1371, %vm1448
  %vm1526 = vmand %vm1372, %vm1449
  %vm1527 = vmand %vm1373, %vm1450
  %vm1528 = vmand %vm1374, %vm1451
  %vm1529 = vmand %vm1375, %vm1452
  %vm1530 = vmand %vm1376, %vm1453
  %vm1531 = vmand %vm1377, %vm1454
  %vm1532 = vmand %vm1378, %vm1455
  %vm1533 = vmand %vm1379, %vm1456
  %vm1534 = vmand %vm1380, %vm1457
  %vm1535 = vmand %vm1381, %vm1458
  %vm1536 = vmand %vm1382, %vm1459
  %vm1537 = vmand %vm1383, %vm1460
  %vm1538 = vmand %vm1384, %vm1461
  %vm1539 = vmand %vm1385, %vm1462
  %vm1540 = vmand %vm1386, %vm1463
  %vm1541 = vmand %vm1387, %vm1464
  %vm1542 = vmand %vm1388, %vm1465
  %vm1543 = vmand %vm1389, %vm1466
  %vm1544 = vmand %vm1390, %vm1467
  %vm1545 = vmand %vm1391, %vm1468
  %vm1546 = vmand %vm1392, %vm1469
  %vm1547 = vmand %vm1393, %vm1470
  %vm1548 = vmand %vm1394, %vm1471
  %vm1549 = vmand %vm1395, %vm1472
  %vm1550 = vmand %vm1396, %vm1473
  %vm1551 = vmand %vm1397, %vm1474
  %vm1552 = vmand %vm1398, %vm1475
  %vm1553 = vmand %vm1399, %vm1476
  %vm1554 = vmand %vm1400, %vm1477
  %vm1555 = vmand %vm1401, %vm1478
  %vm1556 = vmand %vm1402, %vm1479
  %vm1557 = vmand %vm1403, %vm1480
  %vm1558 = vmand %vm1404, %vm1481
  %vm1559 = vmand %vm1405, %vm1482
  %vm1560 = vmand %vm1406, %vm1483
  %vm1561 = vmand %vm1407, %vm1484
  %vm1562 = vmand %vm1408, %vm1485
  %vm1563 = vmand %vm1409, %vm1486
  %vm1564 = vmand %vm1410, %vm1487
  %vm1565 = vmand %vm1411, %vm1488
  %vm1566 = vmand %vm1412, %vm1489
  %vm1567 = vmand %vm1413, %vm1490
  %vm1568 = vmand %vm1414, %vm1491
  %vm1569 = vmand %vm1415, %vm1492
  %vm1570 = vmand %vm1416, %vm1493
  %vm1571 = vmand %vm1417, %vm1494
  %vm1572 = vmand %vm1418, %vm1495
  %v1573 = vsel %vm1496, 1, 0
  %v1574 = vsel %vm1497, 1, 0
  %v1575 = vsel %vm1498, 1, 0
  %v1576 = vsel %vm1499, 1, 0
  %v1577 = vsel %vm1500, 1, 0
  %v1578 = vsel %vm1501, 1, 0
  %v1579 = vsel %vm1502, 1, 0
  %v1580 = vsel %vm1503, 1, 0
  %v1581 = vsel %vm1504, 1, 0
  %v1582 = vsel %vm1505, 1, 0
  %v1583 = vsel %vm1506, 1, 0
  %v1584 = vsel %vm1507, 1, 0
  %v1585 = vsel %vm1508, 1, 0
  %v1586 = vsel %vm1509, 1, 0
  %v1587 = vsel %vm1510, 1, 0
  %v1588 = vsel %vm1511, 1, 0
  %v1589 = vsel %vm1512, 1, 0
  %v1590 = vsel %vm1513, 1, 0
  %v1591 = vsel %vm1514, 1, 0
  %v1592 = vsel %vm1515, 1, 0
  %v1593 = vsel %vm1516, 1, 0
  %v1594 = vsel %vm1517, 1, 0
  %v1595 = vsel %vm1518, 1, 0
  %v1596 = vsel %vm1519, 1, 0
  %v1597 = vsel %vm1520, 1, 0
  %v1598 = vsel %vm1521, 1, 0
  %v1599 = vsel %vm1522, 1, 0
  %v1600 = vsel %vm1523, 1, 0
  %v1601 = vsel %vm1524, 1, 0
  %v1602 = vsel %vm1525, 1, 0
  %v1603 = vsel %vm1526, 1, 0
  %v1604 = vsel %vm1527, 1, 0
  %v1605 = vsel %vm1528, 1, 0
  %v1606 = vsel %vm1529, 1, 0
  %v1607 = vsel %vm1530, 1, 0
  %v1608 = vsel %vm1531, 1, 0
  %v1609 = vsel %vm1532, 1, 0
  %v1610 = vsel %vm1533, 1, 0
  %v1611 = vsel %vm1534, 1, 0
  %v1612 = vsel %vm1535, 1, 0
  %v1613 = vsel %vm1536, 1, 0
  %v1614 = vsel %vm1537, 1, 0
  %v1615 = vsel %vm1538, 1, 0
  %v1616 = vsel %vm1539, 1, 0
  %v1617 = vsel %vm1540, 1, 0
  %v1618 = vsel %vm1541, 1, 0
  %v1619 = vsel %vm1542, 1, 0
  %v1620 = vsel %vm1543, 1, 0
  %v1621 = vsel %vm1544, 1, 0
  %v1622 = vsel %vm1545, 1, 0
  %v1623 = vsel %vm1546, 1, 0
  %v1624 = vsel %vm1547, 1, 0
  %v1625 = vsel %vm1548, 1, 0
  %v1626 = vsel %vm1549, 1, 0
  %v1627 = vsel %vm1550, 1, 0
  %v1628 = vsel %vm1551, 1, 0
  %v1629 = vsel %vm1552, 1, 0
  %v1630 = vsel %vm1553, 1, 0
  %v1631 = vsel %vm1554, 1, 0
  %v1632 = vsel %vm1555, 1, 0
  %v1633 = vsel %vm1556, 1, 0
  %v1634 = vsel %vm1557, 1, 0
  %v1635 = vsel %vm1558, 1, 0
  %v1636 = vsel %vm1559, 1, 0
  %v1637 = vsel %vm1560, 1, 0
  %v1638 = vsel %vm1561, 1, 0
  %v1639 = vsel %vm1562, 1, 0
  %v1640 = vsel %vm1563, 1, 0
  %v1641 = vsel %vm1564, 1, 0
  %v1642 = vsel %vm1565, 1, 0
  %v1643 = vsel %vm1566, 1, 0
  %v1644 = vsel %vm1567, 1, 0
  %v1645 = vsel %vm1568, 1, 0
  %v1646 = vsel %vm1569, 1, 0
  %v1647 = vsel %vm1570, 1, 0
  %v1648 = vsel %vm1571, 1, 0
  %v1649 = vsel %vm1572, 1, 0
  %v1650 = vcvt.s32.f32 %v1573
  %v1651 = vcvt.s32.f32 %v1574
  %v1652 = vcvt.s32.f32 %v1575
  %v1653 = vcvt.s32.f32 %v1576
  %v1654 = vcvt.s32.f32 %v1577
  %v1655 = vcvt.s32.f32 %v1578
  %v1656 = vcvt.s32.f32 %v1579
  %v1657 = vcvt.s32.f32 %v1580
  %v1658 = vcvt.s32.f32 %v1581
  %v1659 = vcvt.s32.f32 %v1582
  %v1660 = vcvt.s32.f32 %v1583
  %v1661 = vcvt.s32.f32 %v1584
  %v1662 = vcvt.s32.f32 %v1585
  %v1663 = vcvt.s32.f32 %v1586
  %v1664 = vcvt.s32.f32 %v1587
  %v1665 = vcvt.s32.f32 %v1588
  %v1666 = vcvt.s32.f32 %v1589
  %v1667 = vcvt.s32.f32 %v1590
  %v1668 = vcvt.s32.f32 %v1591
  %v1669 = vcvt.s32.f32 %v1592
  %v1670 = vcvt.s32.f32 %v1593
  %v1671 = vcvt.s32.f32 %v1594
  %v1672 = vcvt.s32.f32 %v1595
  %v1673 = vcvt.s32.f32 %v1596
  %v1674 = vcvt.s32.f32 %v1597
  %v1675 = vcvt.s32.f32 %v1598
  %v1676 = vcvt.s32.f32 %v1599
  %v1677 = vcvt.s32.f32 %v1600
  %v1678 = vcvt.s32.f32 %v1601
  %v1679 = vcvt.s32.f32 %v1602
  %v1680 = vcvt.s32.f32 %v1603
  %v1681 = vcvt.s32.f32 %v1604
  %v1682 = vcvt.s32.f32 %v1605
  %v1683 = vcvt.s32.f32 %v1606
  %v1684 = vcvt.s32.f32 %v1607
  %v1685 = vcvt.s32.f32 %v1608
  %v1686 = vcvt.s32.f32 %v1609
  %v1687 = vcvt.s32.f32 %v1610
  %v1688 = vcvt.s32.f32 %v1611
  %v1689 = vcvt.s32.f32 %v1612
  %v1690 = vcvt.s32.f32 %v1613
  %v1691 = vcvt.s32.f32 %v1614
  %v1692 = vcvt.s32.f32 %v1615
  %v1693 = vcvt.s32.f32 %v1616
  %v1694 = vcvt.s32.f32 %v1617
  %v1695 = vcvt.s32.f32 %v1618
  %v1696 = vcvt.s32.f32 %v1619
  %v1697 = vcvt.s32.f32 %v1620
  %v1698 = vcvt.s32.f32 %v1621
  %v1699 = vcvt.s32.f32 %v1622
  %v1700 = vcvt.s32.f32 %v1623
  %v1701 = vcvt.s32.f32 %v1624
  %v1702 = vcvt.s32.f32 %v1625
  %v1703 = vcvt.s32.f32 %v1626
  %v1704 = vcvt.s32.f32 %v1627
  %v1705 = vcvt.s32.f32 %v1628
  %v1706 = vcvt.s32.f32 %v1629
  %v1707 = vcvt.s32.f32 %v1630
  %v1708 = vcvt.s32.f32 %v1631
  %v1709 = vcvt.s32.f32 %v1632
  %v1710 = vcvt.s32.f32 %v1633
  %v1711 = vcvt.s32.f32 %v1634
  %v1712 = vcvt.s32.f32 %v1635
  %v1713 = vcvt.s32.f32 %v1636
  %v1714 = vcvt.s32.f32 %v1637
  %v1715 = vcvt.s32.f32 %v1638
  %v1716 = vcvt.s32.f32 %v1639
  %v1717 = vcvt.s32.f32 %v1640
  %v1718 = vcvt.s32.f32 %v1641
  %v1719 = vcvt.s32.f32 %v1642
  %v1720 = vcvt.s32.f32 %v1643
  %v1721 = vcvt.s32.f32 %v1644
  %v1722 = vcvt.s32.f32 %v1645
  %v1723 = vcvt.s32.f32 %v1646
  %v1724 = vcvt.s32.f32 %v1647
  %v1725 = vcvt.s32.f32 %v1648
  %v1726 = vcvt.s32.f32 %v1649
  %v1727 = vld [vmem:[%s0 + $0x4] sm:$0xc]
  %v1728 = vld [vmem:[%s0 + $0x8] sm:$0xf]
  %v1729 = vld [vmem:[%s0 + $0xc] sm:$0xf]
  %v1730 = vld [vmem:[%s0 + $0x10] sm:$0xf]
  %v1731 = vld [vmem:[%s0 + $0x14] sm:$0xf]
  %v1732 = vld [vmem:[%s0 + $0x18] sm:$0xf]
  %v1733 = vld [vmem:[%s0 + $0x1c] sm:$0xf]
  %v1734 = vld [vmem:[%s0 + $0x20] sm:$0xf]
  %v1735 = vld [vmem:[%s0 + $0x24] sm:$0xf]
  %v1736 = vld [vmem:[%s0 + $0x28] sm:$0xf]
  %v1737 = vld [vmem:[%s0 + $0x2c] sm:$0xf]
  %v1738 = vld [vmem:[%s0 + $0x30] sm:$0xf]
  %v1739 = vld [vmem:[%s0 + $0x34] sm:$0xf]
  %v1740 = vld [vmem:[%s0 + $0x38] sm:$0xf]
  %v1741 = vld [vmem:[%s0 + $0x3c] sm:$0xf]
  %v1742 = vld [vmem:[%s0 + $0x40] sm:$0xf]
  %v1743 = vld [vmem:[%s0 + $0x44] sm:$0xf]
  %v1744 = vld [vmem:[%s0 + $0x48] sm:$0xf]
  %v1745 = vld [vmem:[%s0 + $0x4c] sm:$0xf]
  %v1746 = vld [vmem:[%s0 + $0x50] sm:$0xf]
  %v1747 = vld [vmem:[%s0 + $0x54] sm:$0xf]
  %v1748 = vld [vmem:[%s0 + $0x58] sm:$0xf]
  %v1749 = vld [vmem:[%s0 + $0x5c] sm:$0xf]
  %v1750 = vld [vmem:[%s0 + $0x60] sm:$0xf]
  %v1751 = vld [vmem:[%s0 + $0x64] sm:$0xf]
  %v1752 = vld [vmem:[%s0 + $0x68] sm:$0xf]
  %v1753 = vld [vmem:[%s0 + $0x6c] sm:$0xf]
  %v1754 = vld [vmem:[%s0 + $0x70] sm:$0xf]
  %v1755 = vld [vmem:[%s0 + $0x74] sm:$0xf]
  %v1756 = vld [vmem:[%s0 + $0x78] sm:$0xf]
  %v1757 = vld [vmem:[%s0 + $0x7c] sm:$0xf]
  %v1758 = vld [vmem:[%s0 + $0x80] sm:$0xf]
  %v1759 = vld [vmem:[%s0 + $0x84] sm:$0xf]
  %v1760 = vld [vmem:[%s0 + $0x88] sm:$0xf]
  %v1761 = vld [vmem:[%s0 + $0x8c] sm:$0xf]
  %v1762 = vld [vmem:[%s0 + $0x90] sm:$0xf]
  %v1763 = vld [vmem:[%s0 + $0x94] sm:$0xf]
  %v1764 = vld [vmem:[%s0 + $0x98] sm:$0xf]
  %v1765 = vld [vmem:[%s0 + $0x9c] sm:$0xf]
  %v1766 = vld [vmem:[%s0 + $0xa0] sm:$0xf]
  %v1767 = vld [vmem:[%s0 + $0xa4] sm:$0xf]
  %v1768 = vld [vmem:[%s0 + $0xa8] sm:$0xf]
  %v1769 = vld [vmem:[%s0 + $0xac] sm:$0xf]
  %v1770 = vld [vmem:[%s0 + $0xb0] sm:$0xf]
  %v1771 = vld [vmem:[%s0 + $0xb4] sm:$0xf]
  %v1772 = vld [vmem:[%s0 + $0xb8] sm:$0xf]
  %v1773 = vld [vmem:[%s0 + $0xbc] sm:$0xf]
  %v1774 = vld [vmem:[%s0 + $0xc0] sm:$0xf]
  %v1775 = vld [vmem:[%s0 + $0xc4] sm:$0xf]
  %v1776 = vld [vmem:[%s0 + $0xc8] sm:$0xf]
  %v1777 = vld [vmem:[%s0 + $0xcc] sm:$0xf]
  %v1778 = vld [vmem:[%s0 + $0xd0] sm:$0xf]
  %v1779 = vld [vmem:[%s0 + $0xd4] sm:$0xf]
  %v1780 = vld [vmem:[%s0 + $0xd8] sm:$0xf]
  %v1781 = vld [vmem:[%s0 + $0xdc] sm:$0xf]
  %v1782 = vld [vmem:[%s0 + $0xe0] sm:$0xf]
  %v1783 = vld [vmem:[%s0 + $0xe4] sm:$0xf]
  %v1784 = vld [vmem:[%s0 + $0xe8] sm:$0xf]
  %v1785 = vld [vmem:[%s0 + $0xec] sm:$0xf]
  %v1786 = vld [vmem:[%s0 + $0xf0] sm:$0xf]
  %v1787 = vld [vmem:[%s0 + $0xf4] sm:$0xf]
  %v1788 = vld [vmem:[%s0 + $0xf8] sm:$0xf]
  %v1789 = vld [vmem:[%s0 + $0xfc] sm:$0xf]
  %v1790 = vld [vmem:[%s0 + $0x100] sm:$0xf]
  %v1791 = vld [vmem:[%s0 + $0x104] sm:$0xf]
  %v1792 = vld [vmem:[%s0 + $0x108] sm:$0xf]
  %v1793 = vld [vmem:[%s0 + $0x10c] sm:$0xf]
  %v1794 = vld [vmem:[%s0 + $0x110] sm:$0xf]
  %v1795 = vld [vmem:[%s0 + $0x114] sm:$0xf]
  %v1796 = vld [vmem:[%s0 + $0x118] sm:$0xf]
  %v1797 = vld [vmem:[%s0 + $0x11c] sm:$0xf]
  %v1798 = vld [vmem:[%s0 + $0x120] sm:$0xf]
  %v1799 = vld [vmem:[%s0 + $0x124] sm:$0xf]
  %v1800 = vld [vmem:[%s0 + $0x128] sm:$0xf]
  %v1801 = vld [vmem:[%s0 + $0x12c] sm:$0xf]
  %v1802 = vld [vmem:[%s0 + $0x130] sm:$0xf]
  %v1803 = vld [vmem:[%s0 + $0x134] sm:$0xf]
  %v1804 = vld [vmem:[%s0 + $0x4] sm:$0x8]
  %v1805 = vld [vmem:[%s0 + $0x138] sm:$0x1]
  %v1806 = vld [vmem:[%s0 + $0xc] sm:$0x8]
  %v1807 = vld [vmem:[%s0 + $0x138] sm:$0xf]
  %v1808 = vld [vmem:[%s0 + $0x13c] sm:$0xf]
  %v1809 = vld [vmem:[%s0 + $0x140] sm:$0x1]
  %v1810 = vld [vmem:[%s0 + $0x140] sm:$0x3]
  %v1811 = vld [vmem:[%s0 + $0x140] sm:$0xf]
  %v1812 = vld [vmem:[%s0 + $0x144] sm:$0xf]
  %v1813 = vld [vmem:[%s0 + $0x148] sm:$0x3]
  %v1814 = vld [vmem:[%s0 + $0x18] sm:$0xe]
  %v1815 = vld [vmem:[%s0 + $0x148] sm:$0x7]
  %v1893 = vunpack.c.l.b16 %v1727
  %v1894 = vunpack.c.l.b16 %v1728
  %v1895 = vunpack.c.l.b16 %v1729
  %v1896 = vunpack.c.l.b16 %v1730
  %v1897 = vunpack.c.l.b16 %v1731
  %v1898 = vunpack.c.l.b16 %v1732
  %v1899 = vunpack.c.l.b16 %v1733
  %v1900 = vunpack.c.l.b16 %v1734
  %v1901 = vunpack.c.l.b16 %v1735
  %v1902 = vunpack.c.l.b16 %v1736
  %v1903 = vunpack.c.l.b16 %v1737
  %v1904 = vunpack.c.l.b16 %v1738
  %v1905 = vunpack.c.l.b16 %v1739
  %v1906 = vunpack.c.l.b16 %v1740
  %v1907 = vunpack.c.l.b16 %v1741
  %v1908 = vunpack.c.l.b16 %v1742
  %v1909 = vunpack.c.l.b16 %v1743
  %v1910 = vunpack.c.l.b16 %v1744
  %v1911 = vunpack.c.l.b16 %v1745
  %v1912 = vunpack.c.l.b16 %v1746
  %v1913 = vunpack.c.l.b16 %v1747
  %v1914 = vunpack.c.l.b16 %v1748
  %v1915 = vunpack.c.l.b16 %v1749
  %v1916 = vunpack.c.l.b16 %v1750
  %v1917 = vunpack.c.l.b16 %v1751
  %v1918 = vunpack.c.l.b16 %v1752
  %v1919 = vunpack.c.l.b16 %v1753
  %v1920 = vunpack.c.l.b16 %v1754
  %v1921 = vunpack.c.l.b16 %v1755
  %v1922 = vunpack.c.l.b16 %v1756
  %v1923 = vunpack.c.l.b16 %v1757
  %v1924 = vunpack.c.l.b16 %v1758
  %v1925 = vunpack.c.l.b16 %v1759
  %v1926 = vunpack.c.l.b16 %v1760
  %v1927 = vunpack.c.l.b16 %v1761
  %v1928 = vunpack.c.l.b16 %v1762
  %v1929 = vunpack.c.l.b16 %v1763
  %v1930 = vunpack.c.l.b16 %v1764
  %v1931 = vunpack.c.l.b16 %v1765
  %v1932 = vunpack.c.l.b16 %v1766
  %v1933 = vunpack.c.l.b16 %v1767
  %v1934 = vunpack.c.l.b16 %v1768
  %v1935 = vunpack.c.l.b16 %v1769
  %v1936 = vunpack.c.l.b16 %v1770
  %v1937 = vunpack.c.l.b16 %v1771
  %v1938 = vunpack.c.l.b16 %v1772
  %v1939 = vunpack.c.l.b16 %v1773
  %v1940 = vunpack.c.l.b16 %v1774
  %v1941 = vunpack.c.l.b16 %v1775
  %v1942 = vunpack.c.l.b16 %v1776
  %v1943 = vunpack.c.l.b16 %v1777
  %v1944 = vunpack.c.l.b16 %v1778
  %v1945 = vunpack.c.l.b16 %v1779
  %v1946 = vunpack.c.l.b16 %v1780
  %v1947 = vunpack.c.l.b16 %v1781
  %v1948 = vunpack.c.l.b16 %v1782
  %v1949 = vunpack.c.l.b16 %v1783
  %v1950 = vunpack.c.l.b16 %v1784
  %v1951 = vunpack.c.l.b16 %v1785
  %v1952 = vunpack.c.l.b16 %v1786
  %v1953 = vunpack.c.l.b16 %v1787
  %v1954 = vunpack.c.l.b16 %v1788
  %v1955 = vunpack.c.l.b16 %v1789
  %v1956 = vunpack.c.l.b16 %v1790
  %v1957 = vunpack.c.l.b16 %v1791
  %v1958 = vunpack.c.l.b16 %v1792
  %v1959 = vunpack.c.l.b16 %v1793
  %v1960 = vunpack.c.l.b16 %v1794
  %v1961 = vunpack.c.l.b16 %v1795
  %v1962 = vunpack.c.l.b16 %v1796
  %v1963 = vunpack.c.l.b16 %v1797
  %v1964 = vunpack.c.l.b16 %v1798
  %v1965 = vunpack.c.l.b16 %v1799
  %v1966 = vunpack.c.l.b16 %v1800
  %v1967 = vunpack.c.l.b16 %v1801
  %v1968 = vunpack.c.l.b16 %v1802
  %v1969 = vunpack.c.l.b16 %v1803
  %v1970 = vpack.c.b16 %v1894, %v1893
  %v1971 = vpack.c.b16 %v1896, %v1895
  %v1972 = vpack.c.b16 %v1898, %v1897
  %v1973 = vpack.c.b16 %v1900, %v1899
  %v1974 = vpack.c.b16 %v1902, %v1901
  %v1975 = vpack.c.b16 %v1904, %v1903
  %v1976 = vpack.c.b16 %v1906, %v1905
  %v1977 = vpack.c.b16 %v1908, %v1907
  %v1978 = vpack.c.b16 %v1910, %v1909
  %v1979 = vpack.c.b16 %v1912, %v1911
  %v1980 = vpack.c.b16 %v1914, %v1913
  %v1981 = vpack.c.b16 %v1916, %v1915
  %v1982 = vpack.c.b16 %v1918, %v1917
  %v1983 = vpack.c.b16 %v1920, %v1919
  %v1984 = vpack.c.b16 %v1922, %v1921
  %v1985 = vpack.c.b16 %v1924, %v1923
  %v1986 = vpack.c.b16 %v1926, %v1925
  %v1987 = vpack.c.b16 %v1928, %v1927
  %v1988 = vpack.c.b16 %v1930, %v1929
  %v1989 = vpack.c.b16 %v1932, %v1931
  %v1990 = vpack.c.b16 %v1934, %v1933
  %v1991 = vpack.c.b16 %v1936, %v1935
  %v1992 = vpack.c.b16 %v1938, %v1937
  %v1993 = vpack.c.b16 %v1940, %v1939
  %v1994 = vpack.c.b16 %v1942, %v1941
  %v1995 = vpack.c.b16 %v1944, %v1943
  %v1996 = vpack.c.b16 %v1946, %v1945
  %v1997 = vpack.c.b16 %v1948, %v1947
  %v1998 = vpack.c.b16 %v1950, %v1949
  %v1999 = vpack.c.b16 %v1952, %v1951
  %v2000 = vpack.c.b16 %v1954, %v1953
  %v2001 = vpack.c.b16 %v1956, %v1955
  %v2002 = vpack.c.b16 %v1958, %v1957
  %v2003 = vpack.c.b16 %v1960, %v1959
  %v2004 = vpack.c.b16 %v1962, %v1961
  %v2005 = vpack.c.b16 %v1964, %v1963
  %v2006 = vpack.c.b16 %v1966, %v1965
  %v2007 = vpack.c.b16 %v1968, %v1967
  %v2008 = vpack.c.b16 %v1969, %v1969
  %v2010 = vunpack.c.l.b16 %v1804
  %v2011 = vpack.c.b16 %v1894, %v2010
  %vm2012 = vsmask.f32 7424
  %v2014 = vshrl.u32 %v2011, 16
  %v2016 = vshll.u32 %v2011, 16
  %v2018 = vrot.slane %v2016, 1
  %v2019 = vor.u32 %v2014, %v2018
  %v2021 = vshll.u32 %v1971, 16
  %v2023 = vrot.slane %v2021, 1
  %v2024 = vsel %vm2012, %v2019, %v2023
  %v2025 = vshrl.u32 %v1971, 16
  %v2027 = vor.u32 %v2025, %v2023
  %v2029 = vshll.u32 %v1972, 16
  %v2031 = vrot.slane %v2029, 1
  %v2032 = vsel %vm2012, %v2027, %v2031
  %v2033 = vshrl.u32 %v1972, 16
  %v2035 = vor.u32 %v2033, %v2031
  %v2037 = vshll.u32 %v1973, 16
  %v2039 = vrot.slane %v2037, 1
  %v2040 = vsel %vm2012, %v2035, %v2039
  %v2041 = vshrl.u32 %v1973, 16
  %v2043 = vor.u32 %v2041, %v2039
  %v2045 = vshll.u32 %v1974, 16
  %v2047 = vrot.slane %v2045, 1
  %v2048 = vsel %vm2012, %v2043, %v2047
  %v2049 = vshrl.u32 %v1974, 16
  %v2051 = vor.u32 %v2049, %v2047
  %v2053 = vshll.u32 %v1975, 16
  %v2055 = vrot.slane %v2053, 1
  %v2056 = vsel %vm2012, %v2051, %v2055
  %v2057 = vshrl.u32 %v1975, 16
  %v2059 = vor.u32 %v2057, %v2055
  %v2061 = vshll.u32 %v1976, 16
  %v2063 = vrot.slane %v2061, 1
  %v2064 = vsel %vm2012, %v2059, %v2063
  %v2065 = vshrl.u32 %v1976, 16
  %v2067 = vor.u32 %v2065, %v2063
  %v2069 = vshll.u32 %v1977, 16
  %v2071 = vrot.slane %v2069, 1
  %v2072 = vsel %vm2012, %v2067, %v2071
  %v2073 = vshrl.u32 %v1977, 16
  %v2075 = vor.u32 %v2073, %v2071
  %v2077 = vshll.u32 %v1978, 16
  %v2079 = vrot.slane %v2077, 1
  %v2080 = vsel %vm2012, %v2075, %v2079
  %v2081 = vshrl.u32 %v1978, 16
  %v2083 = vor.u32 %v2081, %v2079
  %v2085 = vshll.u32 %v1979, 16
  %v2087 = vrot.slane %v2085, 1
  %v2088 = vsel %vm2012, %v2083, %v2087
  %v2089 = vshrl.u32 %v1979, 16
  %v2091 = vor.u32 %v2089, %v2087
  %v2093 = vshll.u32 %v1980, 16
  %v2095 = vrot.slane %v2093, 1
  %v2096 = vsel %vm2012, %v2091, %v2095
  %v2097 = vshrl.u32 %v1980, 16
  %v2099 = vor.u32 %v2097, %v2095
  %v2101 = vshll.u32 %v1981, 16
  %v2103 = vrot.slane %v2101, 1
  %v2104 = vsel %vm2012, %v2099, %v2103
  %v2105 = vshrl.u32 %v1981, 16
  %v2107 = vor.u32 %v2105, %v2103
  %v2109 = vshll.u32 %v1982, 16
  %v2111 = vrot.slane %v2109, 1
  %v2112 = vsel %vm2012, %v2107, %v2111
  %v2113 = vshrl.u32 %v1982, 16
  %v2115 = vor.u32 %v2113, %v2111
  %v2117 = vshll.u32 %v1983, 16
  %v2119 = vrot.slane %v2117, 1
  %v2120 = vsel %vm2012, %v2115, %v2119
  %v2121 = vshrl.u32 %v1983, 16
  %v2123 = vor.u32 %v2121, %v2119
  %v2125 = vshll.u32 %v1984, 16
  %v2127 = vrot.slane %v2125, 1
  %v2128 = vsel %vm2012, %v2123, %v2127
  %v2129 = vshrl.u32 %v1984, 16
  %v2131 = vor.u32 %v2129, %v2127
  %v2133 = vshll.u32 %v1985, 16
  %v2135 = vrot.slane %v2133, 1
  %v2136 = vsel %vm2012, %v2131, %v2135
  %v2137 = vshrl.u32 %v1985, 16
  %v2139 = vor.u32 %v2137, %v2135
  %v2141 = vshll.u32 %v1986, 16
  %v2143 = vrot.slane %v2141, 1
  %v2144 = vsel %vm2012, %v2139, %v2143
  %v2145 = vshrl.u32 %v1986, 16
  %v2147 = vor.u32 %v2145, %v2143
  %v2149 = vshll.u32 %v1987, 16
  %v2151 = vrot.slane %v2149, 1
  %v2152 = vsel %vm2012, %v2147, %v2151
  %v2153 = vshrl.u32 %v1987, 16
  %v2155 = vor.u32 %v2153, %v2151
  %v2157 = vshll.u32 %v1988, 16
  %v2159 = vrot.slane %v2157, 1
  %v2160 = vsel %vm2012, %v2155, %v2159
  %v2161 = vshrl.u32 %v1988, 16
  %v2163 = vor.u32 %v2161, %v2159
  %v2165 = vshll.u32 %v1989, 16
  %v2167 = vrot.slane %v2165, 1
  %v2168 = vsel %vm2012, %v2163, %v2167
  %v2169 = vshrl.u32 %v1989, 16
  %v2171 = vor.u32 %v2169, %v2167
  %v2173 = vshll.u32 %v1990, 16
  %v2175 = vrot.slane %v2173, 1
  %v2176 = vsel %vm2012, %v2171, %v2175
  %v2177 = vshrl.u32 %v1990, 16
  %v2179 = vor.u32 %v2177, %v2175
  %v2181 = vshll.u32 %v1991, 16
  %v2183 = vrot.slane %v2181, 1
  %v2184 = vsel %vm2012, %v2179, %v2183
  %v2185 = vshrl.u32 %v1991, 16
  %v2187 = vor.u32 %v2185, %v2183
  %v2189 = vshll.u32 %v1992, 16
  %v2191 = vrot.slane %v2189, 1
  %v2192 = vsel %vm2012, %v2187, %v2191
  %v2193 = vshrl.u32 %v1992, 16
  %v2195 = vor.u32 %v2193, %v2191
  %v2197 = vshll.u32 %v1993, 16
  %v2199 = vrot.slane %v2197, 1
  %v2200 = vsel %vm2012, %v2195, %v2199
  %v2201 = vshrl.u32 %v1993, 16
  %v2203 = vor.u32 %v2201, %v2199
  %v2205 = vshll.u32 %v1994, 16
  %v2207 = vrot.slane %v2205, 1
  %v2208 = vsel %vm2012, %v2203, %v2207
  %v2209 = vshrl.u32 %v1994, 16
  %v2211 = vor.u32 %v2209, %v2207
  %v2213 = vshll.u32 %v1995, 16
  %v2215 = vrot.slane %v2213, 1
  %v2216 = vsel %vm2012, %v2211, %v2215
  %v2217 = vshrl.u32 %v1995, 16
  %v2219 = vor.u32 %v2217, %v2215
  %v2221 = vshll.u32 %v1996, 16
  %v2223 = vrot.slane %v2221, 1
  %v2224 = vsel %vm2012, %v2219, %v2223
  %v2225 = vshrl.u32 %v1996, 16
  %v2227 = vor.u32 %v2225, %v2223
  %v2229 = vshll.u32 %v1997, 16
  %v2231 = vrot.slane %v2229, 1
  %v2232 = vsel %vm2012, %v2227, %v2231
  %v2233 = vshrl.u32 %v1997, 16
  %v2235 = vor.u32 %v2233, %v2231
  %v2237 = vshll.u32 %v1998, 16
  %v2239 = vrot.slane %v2237, 1
  %v2240 = vsel %vm2012, %v2235, %v2239
  %v2241 = vshrl.u32 %v1998, 16
  %v2243 = vor.u32 %v2241, %v2239
  %v2245 = vshll.u32 %v1999, 16
  %v2247 = vrot.slane %v2245, 1
  %v2248 = vsel %vm2012, %v2243, %v2247
  %v2249 = vshrl.u32 %v1999, 16
  %v2251 = vor.u32 %v2249, %v2247
  %v2253 = vshll.u32 %v2000, 16
  %v2255 = vrot.slane %v2253, 1
  %v2256 = vsel %vm2012, %v2251, %v2255
  %v2257 = vshrl.u32 %v2000, 16
  %v2259 = vor.u32 %v2257, %v2255
  %v2261 = vshll.u32 %v2001, 16
  %v2263 = vrot.slane %v2261, 1
  %v2264 = vsel %vm2012, %v2259, %v2263
  %v2265 = vshrl.u32 %v2001, 16
  %v2267 = vor.u32 %v2265, %v2263
  %v2269 = vshll.u32 %v2002, 16
  %v2271 = vrot.slane %v2269, 1
  %v2272 = vsel %vm2012, %v2267, %v2271
  %v2273 = vshrl.u32 %v2002, 16
  %v2275 = vor.u32 %v2273, %v2271
  %v2277 = vshll.u32 %v2003, 16
  %v2279 = vrot.slane %v2277, 1
  %v2280 = vsel %vm2012, %v2275, %v2279
  %v2281 = vshrl.u32 %v2003, 16
  %v2283 = vor.u32 %v2281, %v2279
  %v2285 = vshll.u32 %v2004, 16
  %v2287 = vrot.slane %v2285, 1
  %v2288 = vsel %vm2012, %v2283, %v2287
  %v2289 = vshrl.u32 %v2004, 16
  %v2291 = vor.u32 %v2289, %v2287
  %v2293 = vshll.u32 %v2005, 16
  %v2295 = vrot.slane %v2293, 1
  %v2296 = vsel %vm2012, %v2291, %v2295
  %v2297 = vshrl.u32 %v2005, 16
  %v2299 = vor.u32 %v2297, %v2295
  %v2301 = vshll.u32 %v2006, 16
  %v2303 = vrot.slane %v2301, 1
  %v2304 = vsel %vm2012, %v2299, %v2303
  %v2305 = vshrl.u32 %v2006, 16
  %v2307 = vor.u32 %v2305, %v2303
  %v2309 = vshll.u32 %v2007, 16
  %v2311 = vrot.slane %v2309, 1
  %v2312 = vsel %vm2012, %v2307, %v2311
  %v2313 = vshrl.u32 %v2007, 16
  %v2315 = vor.u32 %v2313, %v2311
  %v2317 = vshll.u32 %v2008, 16
  %v2319 = vrot.slane %v2317, 1
  %v2320 = vsel %vm2012, %v2315, %v2319
  %v2321 = vshrl.u32 %v2008, 16
  %v2323 = vor.u32 %v2321, %v2319
  %2324 = vrot.lane.b32.xlu0 %v2024, 4
  %v2325 = vpop.permute.xlu0 %2324
  %2326 = vrot.lane.b32.xlu0 %v2032, 4
  %v2327 = vpop.permute.xlu0 %2326
  %2328 = vrot.lane.b32.xlu0 %v2040, 4
  %v2329 = vpop.permute.xlu0 %2328
  %2330 = vrot.lane.b32.xlu0 %v2048, 4
  %v2331 = vpop.permute.xlu0 %2330
  %2332 = vrot.lane.b32.xlu0 %v2056, 4
  %v2333 = vpop.permute.xlu0 %2332
  %2334 = vrot.lane.b32.xlu0 %v2064, 4
  %v2335 = vpop.permute.xlu0 %2334
  %2336 = vrot.lane.b32.xlu0 %v2072, 4
  %v2337 = vpop.permute.xlu0 %2336
  %2338 = vrot.lane.b32.xlu0 %v2080, 4
  %v2339 = vpop.permute.xlu0 %2338
  %2340 = vrot.lane.b32.xlu0 %v2088, 4
  %v2341 = vpop.permute.xlu0 %2340
  %2342 = vrot.lane.b32.xlu0 %v2096, 4
  %v2343 = vpop.permute.xlu0 %2342
  %2344 = vrot.lane.b32.xlu0 %v2104, 4
  %v2345 = vpop.permute.xlu0 %2344
  %2346 = vrot.lane.b32.xlu0 %v2112, 4
  %v2347 = vpop.permute.xlu0 %2346
  %2348 = vrot.lane.b32.xlu0 %v2120, 4
  %v2349 = vpop.permute.xlu0 %2348
  %2350 = vrot.lane.b32.xlu0 %v2128, 4
  %v2351 = vpop.permute.xlu0 %2350
  %2352 = vrot.lane.b32.xlu0 %v2136, 4
  %v2353 = vpop.permute.xlu0 %2352
  %2354 = vrot.lane.b32.xlu0 %v2144, 4
  %v2355 = vpop.permute.xlu0 %2354
  %2356 = vrot.lane.b32.xlu0 %v2152, 4
  %v2357 = vpop.permute.xlu0 %2356
  %2358 = vrot.lane.b32.xlu0 %v2160, 4
  %v2359 = vpop.permute.xlu0 %2358
  %2360 = vrot.lane.b32.xlu0 %v2168, 4
  %v2361 = vpop.permute.xlu0 %2360
  %2362 = vrot.lane.b32.xlu0 %v2176, 4
  %v2363 = vpop.permute.xlu0 %2362
  %2364 = vrot.lane.b32.xlu0 %v2184, 4
  %v2365 = vpop.permute.xlu0 %2364
  %2366 = vrot.lane.b32.xlu0 %v2192, 4
  %v2367 = vpop.permute.xlu0 %2366
  %2368 = vrot.lane.b32.xlu0 %v2200, 4
  %v2369 = vpop.permute.xlu0 %2368
  %2370 = vrot.lane.b32.xlu0 %v2208, 4
  %v2371 = vpop.permute.xlu0 %2370
  %2372 = vrot.lane.b32.xlu0 %v2216, 4
  %v2373 = vpop.permute.xlu0 %2372
  %2374 = vrot.lane.b32.xlu0 %v2224, 4
  %v2375 = vpop.permute.xlu0 %2374
  %2376 = vrot.lane.b32.xlu0 %v2232, 4
  %v2377 = vpop.permute.xlu0 %2376
  %2378 = vrot.lane.b32.xlu0 %v2240, 4
  %v2379 = vpop.permute.xlu0 %2378
  %2380 = vrot.lane.b32.xlu0 %v2248, 4
  %v2381 = vpop.permute.xlu0 %2380
  %2382 = vrot.lane.b32.xlu0 %v2256, 4
  %v2383 = vpop.permute.xlu0 %2382
  %2384 = vrot.lane.b32.xlu0 %v2264, 4
  %v2385 = vpop.permute.xlu0 %2384
  %2386 = vrot.lane.b32.xlu0 %v2272, 4
  %v2387 = vpop.permute.xlu0 %2386
  %2388 = vrot.lane.b32.xlu0 %v2280, 4
  %v2389 = vpop.permute.xlu0 %2388
  %2390 = vrot.lane.b32.xlu0 %v2288, 4
  %v2391 = vpop.permute.xlu0 %2390
  %2392 = vrot.lane.b32.xlu0 %v2296, 4
  %v2393 = vpop.permute.xlu0 %2392
  %2394 = vrot.lane.b32.xlu0 %v2304, 4
  %v2395 = vpop.permute.xlu0 %2394
  %2396 = vrot.lane.b32.xlu0 %v2312, 4
  %v2397 = vpop.permute.xlu0 %2396
  %2398 = vrot.lane.b32.xlu0 %v2320, 4
  %v2399 = vpop.permute.xlu0 %2398
  %2400 = vrot.lane.b32.xlu0 %v2323, 4
  %v2401 = vpop.permute.xlu0 %2400
  %v2403 = vunpack.c.l.b16 %v1805
  %v2404 = vpack.c.b16 %v2403, %v1969
  %vm2405 = vcmask 1046528
  %v2406 = vrot.slane %v2011, 1
  %v2407 = vrot.slane %v1971, 1
  %v2408 = vsel %vm2405, %v2406, %v2407
  %v2409 = vrot.slane %v1972, 1
  %v2410 = vsel %vm2405, %v2407, %v2409
  %v2411 = vrot.slane %v1973, 1
  %v2412 = vsel %vm2405, %v2409, %v2411
  %v2413 = vrot.slane %v1974, 1
  %v2414 = vsel %vm2405, %v2411, %v2413
  %v2415 = vrot.slane %v1975, 1
  %v2416 = vsel %vm2405, %v2413, %v2415
  %v2417 = vrot.slane %v1976, 1
  %v2418 = vsel %vm2405, %v2415, %v2417
  %v2419 = vrot.slane %v1977, 1
  %v2420 = vsel %vm2405, %v2417, %v2419
  %v2421 = vrot.slane %v1978, 1
  %v2422 = vsel %vm2405, %v2419, %v2421
  %v2423 = vrot.slane %v1979, 1
  %v2424 = vsel %vm2405, %v2421, %v2423
  %v2425 = vrot.slane %v1980, 1
  %v2426 = vsel %vm2405, %v2423, %v2425
  %v2427 = vrot.slane %v1981, 1
  %v2428 = vsel %vm2405, %v2425, %v2427
  %v2429 = vrot.slane %v1982, 1
  %v2430 = vsel %vm2405, %v2427, %v2429
  %v2431 = vrot.slane %v1983, 1
  %v2432 = vsel %vm2405, %v2429, %v2431
  %v2433 = vrot.slane %v1984, 1
  %v2434 = vsel %vm2405, %v2431, %v2433
  %v2435 = vrot.slane %v1985, 1
  %v2436 = vsel %vm2405, %v2433, %v2435
  %v2437 = vrot.slane %v1986, 1
  %v2438 = vsel %vm2405, %v2435, %v2437
  %v2439 = vrot.slane %v1987, 1
  %v2440 = vsel %vm2405, %v2437, %v2439
  %v2441 = vrot.slane %v1988, 1
  %v2442 = vsel %vm2405, %v2439, %v2441
  %v2443 = vrot.slane %v1989, 1
  %v2444 = vsel %vm2405, %v2441, %v2443
  %v2445 = vrot.slane %v1990, 1
  %v2446 = vsel %vm2405, %v2443, %v2445
  %v2447 = vrot.slane %v1991, 1
  %v2448 = vsel %vm2405, %v2445, %v2447
  %v2449 = vrot.slane %v1992, 1
  %v2450 = vsel %vm2405, %v2447, %v2449
  %v2451 = vrot.slane %v1993, 1
  %v2452 = vsel %vm2405, %v2449, %v2451
  %v2453 = vrot.slane %v1994, 1
  %v2454 = vsel %vm2405, %v2451, %v2453
  %v2455 = vrot.slane %v1995, 1
  %v2456 = vsel %vm2405, %v2453, %v2455
  %v2457 = vrot.slane %v1996, 1
  %v2458 = vsel %vm2405, %v2455, %v2457
  %v2459 = vrot.slane %v1997, 1
  %v2460 = vsel %vm2405, %v2457, %v2459
  %v2461 = vrot.slane %v1998, 1
  %v2462 = vsel %vm2405, %v2459, %v2461
  %v2463 = vrot.slane %v1999, 1
  %v2464 = vsel %vm2405, %v2461, %v2463
  %v2465 = vrot.slane %v2000, 1
  %v2466 = vsel %vm2405, %v2463, %v2465
  %v2467 = vrot.slane %v2001, 1
  %v2468 = vsel %vm2405, %v2465, %v2467
  %v2469 = vrot.slane %v2002, 1
  %v2470 = vsel %vm2405, %v2467, %v2469
  %v2471 = vrot.slane %v2003, 1
  %v2472 = vsel %vm2405, %v2469, %v2471
  %v2473 = vrot.slane %v2004, 1
  %v2474 = vsel %vm2405, %v2471, %v2473
  %v2475 = vrot.slane %v2005, 1
  %v2476 = vsel %vm2405, %v2473, %v2475
  %v2477 = vrot.slane %v2006, 1
  %v2478 = vsel %vm2405, %v2475, %v2477
  %v2479 = vrot.slane %v2007, 1
  %v2480 = vsel %vm2405, %v2477, %v2479
  %v2481 = vrot.slane %v2404, 1
  %v2482 = vsel %vm2405, %v2479, %v2481
  %2483 = vrot.lane.b32.xlu0 %v2408, 8
  %v2484 = vpop.permute.xlu0 %2483
  %2485 = vrot.lane.b32.xlu0 %v2410, 8
  %v2486 = vpop.permute.xlu0 %2485
  %2487 = vrot.lane.b32.xlu0 %v2412, 8
  %v2488 = vpop.permute.xlu0 %2487
  %2489 = vrot.lane.b32.xlu0 %v2414, 8
  %v2490 = vpop.permute.xlu0 %2489
  %2491 = vrot.lane.b32.xlu0 %v2416, 8
  %v2492 = vpop.permute.xlu0 %2491
  %2493 = vrot.lane.b32.xlu0 %v2418, 8
  %v2494 = vpop.permute.xlu0 %2493
  %2495 = vrot.lane.b32.xlu0 %v2420, 8
  %v2496 = vpop.permute.xlu0 %2495
  %2497 = vrot.lane.b32.xlu0 %v2422, 8
  %v2498 = vpop.permute.xlu0 %2497
  %2499 = vrot.lane.b32.xlu0 %v2424, 8
  %v2500 = vpop.permute.xlu0 %2499
  %2501 = vrot.lane.b32.xlu0 %v2426, 8
  %v2502 = vpop.permute.xlu0 %2501
  %2503 = vrot.lane.b32.xlu0 %v2428, 8
  %v2504 = vpop.permute.xlu0 %2503
  %2505 = vrot.lane.b32.xlu0 %v2430, 8
  %v2506 = vpop.permute.xlu0 %2505
  %2507 = vrot.lane.b32.xlu0 %v2432, 8
  %v2508 = vpop.permute.xlu0 %2507
  %2509 = vrot.lane.b32.xlu0 %v2434, 8
  %v2510 = vpop.permute.xlu0 %2509
  %2511 = vrot.lane.b32.xlu0 %v2436, 8
  %v2512 = vpop.permute.xlu0 %2511
  %2513 = vrot.lane.b32.xlu0 %v2438, 8
  %v2514 = vpop.permute.xlu0 %2513
  %2515 = vrot.lane.b32.xlu0 %v2440, 8
  %v2516 = vpop.permute.xlu0 %2515
  %2517 = vrot.lane.b32.xlu0 %v2442, 8
  %v2518 = vpop.permute.xlu0 %2517
  %2519 = vrot.lane.b32.xlu0 %v2444, 8
  %v2520 = vpop.permute.xlu0 %2519
  %2521 = vrot.lane.b32.xlu0 %v2446, 8
  %v2522 = vpop.permute.xlu0 %2521
  %2523 = vrot.lane.b32.xlu0 %v2448, 8
  %v2524 = vpop.permute.xlu0 %2523
  %2525 = vrot.lane.b32.xlu0 %v2450, 8
  %v2526 = vpop.permute.xlu0 %2525
  %2527 = vrot.lane.b32.xlu0 %v2452, 8
  %v2528 = vpop.permute.xlu0 %2527
  %2529 = vrot.lane.b32.xlu0 %v2454, 8
  %v2530 = vpop.permute.xlu0 %2529
  %2531 = vrot.lane.b32.xlu0 %v2456, 8
  %v2532 = vpop.permute.xlu0 %2531
  %2533 = vrot.lane.b32.xlu0 %v2458, 8
  %v2534 = vpop.permute.xlu0 %2533
  %2535 = vrot.lane.b32.xlu0 %v2460, 8
  %v2536 = vpop.permute.xlu0 %2535
  %2537 = vrot.lane.b32.xlu0 %v2462, 8
  %v2538 = vpop.permute.xlu0 %2537
  %2539 = vrot.lane.b32.xlu0 %v2464, 8
  %v2540 = vpop.permute.xlu0 %2539
  %2541 = vrot.lane.b32.xlu0 %v2466, 8
  %v2542 = vpop.permute.xlu0 %2541
  %2543 = vrot.lane.b32.xlu0 %v2468, 8
  %v2544 = vpop.permute.xlu0 %2543
  %2545 = vrot.lane.b32.xlu0 %v2470, 8
  %v2546 = vpop.permute.xlu0 %2545
  %2547 = vrot.lane.b32.xlu0 %v2472, 8
  %v2548 = vpop.permute.xlu0 %2547
  %2549 = vrot.lane.b32.xlu0 %v2474, 8
  %v2550 = vpop.permute.xlu0 %2549
  %2551 = vrot.lane.b32.xlu0 %v2476, 8
  %v2552 = vpop.permute.xlu0 %2551
  %2553 = vrot.lane.b32.xlu0 %v2478, 8
  %v2554 = vpop.permute.xlu0 %2553
  %2555 = vrot.lane.b32.xlu0 %v2480, 8
  %v2556 = vpop.permute.xlu0 %2555
  %2557 = vrot.lane.b32.xlu0 %v2482, 8
  %v2558 = vpop.permute.xlu0 %2557
  %2559 = vrot.lane.b32.xlu0 %v2481, 8
  %v2560 = vpop.permute.xlu0 %2559
  %v2565 = vunpack.c.l.b16 %v1806
  %v2566 = vunpack.c.l.b16 %v1807
  %v2567 = vunpack.c.l.b16 %v1808
  %v2568 = vunpack.c.l.b16 %v1809
  %v2569 = vpack.c.b16 %v1896, %v2565
  %v2570 = vpack.c.b16 %v2566, %v1969
  %v2571 = vpack.c.b16 %v2568, %v2567
  %v2572 = vrot.slane %v2569, 1
  %v2573 = vsel %vm2405, %v2572, %v2409
  %v2574 = vrot.slane %v2570, 1
  %v2575 = vsel %vm2405, %v2479, %v2574
  %v2576 = vrot.slane %v2571, 1
  %v2577 = vsel %vm2405, %v2574, %v2576
  %2578 = vrot.lane.b32.xlu0 %v2573, 12
  %v2579 = vpop.permute.xlu0 %2578
  %2580 = vrot.lane.b32.xlu0 %v2412, 12
  %v2581 = vpop.permute.xlu0 %2580
  %2582 = vrot.lane.b32.xlu0 %v2414, 12
  %v2583 = vpop.permute.xlu0 %2582
  %2584 = vrot.lane.b32.xlu0 %v2416, 12
  %v2585 = vpop.permute.xlu0 %2584
  %2586 = vrot.lane.b32.xlu0 %v2418, 12
  %v2587 = vpop.permute.xlu0 %2586
  %2588 = vrot.lane.b32.xlu0 %v2420, 12
  %v2589 = vpop.permute.xlu0 %2588
  %2590 = vrot.lane.b32.xlu0 %v2422, 12
  %v2591 = vpop.permute.xlu0 %2590
  %2592 = vrot.lane.b32.xlu0 %v2424, 12
  %v2593 = vpop.permute.xlu0 %2592
  %2594 = vrot.lane.b32.xlu0 %v2426, 12
  %v2595 = vpop.permute.xlu0 %2594
  %2596 = vrot.lane.b32.xlu0 %v2428, 12
  %v2597 = vpop.permute.xlu0 %2596
  %2598 = vrot.lane.b32.xlu0 %v2430, 12
  %v2599 = vpop.permute.xlu0 %2598
  %2600 = vrot.lane.b32.xlu0 %v2432, 12
  %v2601 = vpop.permute.xlu0 %2600
  %2602 = vrot.lane.b32.xlu0 %v2434, 12
  %v2603 = vpop.permute.xlu0 %2602
  %2604 = vrot.lane.b32.xlu0 %v2436, 12
  %v2605 = vpop.permute.xlu0 %2604
  %2606 = vrot.lane.b32.xlu0 %v2438, 12
  %v2607 = vpop.permute.xlu0 %2606
  %2608 = vrot.lane.b32.xlu0 %v2440, 12
  %v2609 = vpop.permute.xlu0 %2608
  %2610 = vrot.lane.b32.xlu0 %v2442, 12
  %v2611 = vpop.permute.xlu0 %2610
  %2612 = vrot.lane.b32.xlu0 %v2444, 12
  %v2613 = vpop.permute.xlu0 %2612
  %2614 = vrot.lane.b32.xlu0 %v2446, 12
  %v2615 = vpop.permute.xlu0 %2614
  %2616 = vrot.lane.b32.xlu0 %v2448, 12
  %v2617 = vpop.permute.xlu0 %2616
  %2618 = vrot.lane.b32.xlu0 %v2450, 12
  %v2619 = vpop.permute.xlu0 %2618
  %2620 = vrot.lane.b32.xlu0 %v2452, 12
  %v2621 = vpop.permute.xlu0 %2620
  %2622 = vrot.lane.b32.xlu0 %v2454, 12
  %v2623 = vpop.permute.xlu0 %2622
  %2624 = vrot.lane.b32.xlu0 %v2456, 12
  %v2625 = vpop.permute.xlu0 %2624
  %2626 = vrot.lane.b32.xlu0 %v2458, 12
  %v2627 = vpop.permute.xlu0 %2626
  %2628 = vrot.lane.b32.xlu0 %v2460, 12
  %v2629 = vpop.permute.xlu0 %2628
  %2630 = vrot.lane.b32.xlu0 %v2462, 12
  %v2631 = vpop.permute.xlu0 %2630
  %2632 = vrot.lane.b32.xlu0 %v2464, 12
  %v2633 = vpop.permute.xlu0 %2632
  %2634 = vrot.lane.b32.xlu0 %v2466, 12
  %v2635 = vpop.permute.xlu0 %2634
  %2636 = vrot.lane.b32.xlu0 %v2468, 12
  %v2637 = vpop.permute.xlu0 %2636
  %2638 = vrot.lane.b32.xlu0 %v2470, 12
  %v2639 = vpop.permute.xlu0 %2638
  %2640 = vrot.lane.b32.xlu0 %v2472, 12
  %v2641 = vpop.permute.xlu0 %2640
  %2642 = vrot.lane.b32.xlu0 %v2474, 12
  %v2643 = vpop.permute.xlu0 %2642
  %2644 = vrot.lane.b32.xlu0 %v2476, 12
  %v2645 = vpop.permute.xlu0 %2644
  %2646 = vrot.lane.b32.xlu0 %v2478, 12
  %v2647 = vpop.permute.xlu0 %2646
  %2648 = vrot.lane.b32.xlu0 %v2480, 12
  %v2649 = vpop.permute.xlu0 %2648
  %2650 = vrot.lane.b32.xlu0 %v2575, 12
  %v2651 = vpop.permute.xlu0 %2650
  %2652 = vrot.lane.b32.xlu0 %v2577, 12
  %v2653 = vpop.permute.xlu0 %2652
  %2654 = vrot.lane.b32.xlu0 %v2576, 12
  %v2655 = vpop.permute.xlu0 %2654
  %v2656 = vpack.c.b16 %v1897, %v1896
  %v2657 = vpack.c.b16 %v1899, %v1898
  %v2658 = vpack.c.b16 %v1901, %v1900
  %v2659 = vpack.c.b16 %v1903, %v1902
  %v2660 = vpack.c.b16 %v1905, %v1904
  %v2661 = vpack.c.b16 %v1907, %v1906
  %v2662 = vpack.c.b16 %v1909, %v1908
  %v2663 = vpack.c.b16 %v1911, %v1910
  %v2664 = vpack.c.b16 %v1913, %v1912
  %v2665 = vpack.c.b16 %v1915, %v1914
  %v2666 = vpack.c.b16 %v1917, %v1916
  %v2667 = vpack.c.b16 %v1919, %v1918
  %v2668 = vpack.c.b16 %v1921, %v1920
  %v2669 = vpack.c.b16 %v1923, %v1922
  %v2670 = vpack.c.b16 %v1925, %v1924
  %v2671 = vpack.c.b16 %v1927, %v1926
  %v2672 = vpack.c.b16 %v1929, %v1928
  %v2673 = vpack.c.b16 %v1931, %v1930
  %v2674 = vpack.c.b16 %v1933, %v1932
  %v2675 = vpack.c.b16 %v1935, %v1934
  %v2676 = vpack.c.b16 %v1937, %v1936
  %v2677 = vpack.c.b16 %v1939, %v1938
  %v2678 = vpack.c.b16 %v1941, %v1940
  %v2679 = vpack.c.b16 %v1943, %v1942
  %v2680 = vpack.c.b16 %v1945, %v1944
  %v2681 = vpack.c.b16 %v1947, %v1946
  %v2682 = vpack.c.b16 %v1949, %v1948
  %v2683 = vpack.c.b16 %v1951, %v1950
  %v2684 = vpack.c.b16 %v1953, %v1952
  %v2685 = vpack.c.b16 %v1955, %v1954
  %v2686 = vpack.c.b16 %v1957, %v1956
  %v2687 = vpack.c.b16 %v1959, %v1958
  %v2688 = vpack.c.b16 %v1961, %v1960
  %v2689 = vpack.c.b16 %v1963, %v1962
  %v2690 = vpack.c.b16 %v1965, %v1964
  %v2691 = vpack.c.b16 %v1967, %v1966
  %v2692 = vpack.c.b16 %v1969, %v1968
  %v2693 = vpack.c.b16 %v2567, %v2566
  %v2694 = vpack.c.b16 %v2568, %v2568
  %vm2695 = vsmask.f32 2304
  %v2697 = vshrl.u32 %v2656, 16
  %v2699 = vrot.slane %v2697, 5
  %v2700 = vshll.u32 %v2656, 16
  %v2702 = vrot.slane %v2700, 6
  %v2703 = vor.u32 %v2699, %v2702
  %v2705 = vshrl.u32 %v2657, 16
  %v2707 = vrot.slane %v2705, 5
  %v2708 = vshll.u32 %v2657, 16
  %v2710 = vrot.slane %v2708, 6
  %v2711 = vor.u32 %v2707, %v2710
  %v2712 = vsel %vm2695, %v2703, %v2711
  %v2714 = vshrl.u32 %v2658, 16
  %v2716 = vrot.slane %v2714, 5
  %v2717 = vshll.u32 %v2658, 16
  %v2719 = vrot.slane %v2717, 6
  %v2720 = vor.u32 %v2716, %v2719
  %v2721 = vsel %vm2695, %v2711, %v2720
  %v2723 = vshrl.u32 %v2659, 16
  %v2725 = vrot.slane %v2723, 5
  %v2726 = vshll.u32 %v2659, 16
  %v2728 = vrot.slane %v2726, 6
  %v2729 = vor.u32 %v2725, %v2728
  %v2730 = vsel %vm2695, %v2720, %v2729
  %v2732 = vshrl.u32 %v2660, 16
  %v2734 = vrot.slane %v2732, 5
  %v2735 = vshll.u32 %v2660, 16
  %v2737 = vrot.slane %v2735, 6
  %v2738 = vor.u32 %v2734, %v2737
  %v2739 = vsel %vm2695, %v2729, %v2738
  %v2741 = vshrl.u32 %v2661, 16
  %v2743 = vrot.slane %v2741, 5
  %v2744 = vshll.u32 %v2661, 16
  %v2746 = vrot.slane %v2744, 6
  %v2747 = vor.u32 %v2743, %v2746
  %v2748 = vsel %vm2695, %v2738, %v2747
  %v2750 = vshrl.u32 %v2662, 16
  %v2752 = vrot.slane %v2750, 5
  %v2753 = vshll.u32 %v2662, 16
  %v2755 = vrot.slane %v2753, 6
  %v2756 = vor.u32 %v2752, %v2755
  %v2757 = vsel %vm2695, %v2747, %v2756
  %v2759 = vshrl.u32 %v2663, 16
  %v2761 = vrot.slane %v2759, 5
  %v2762 = vshll.u32 %v2663, 16
  %v2764 = vrot.slane %v2762, 6
  %v2765 = vor.u32 %v2761, %v2764
  %v2766 = vsel %vm2695, %v2756, %v2765
  %v2768 = vshrl.u32 %v2664, 16
  %v2770 = vrot.slane %v2768, 5
  %v2771 = vshll.u32 %v2664, 16
  %v2773 = vrot.slane %v2771, 6
  %v2774 = vor.u32 %v2770, %v2773
  %v2775 = vsel %vm2695, %v2765, %v2774
  %v2777 = vshrl.u32 %v2665, 16
  %v2779 = vrot.slane %v2777, 5
  %v2780 = vshll.u32 %v2665, 16
  %v2782 = vrot.slane %v2780, 6
  %v2783 = vor.u32 %v2779, %v2782
  %v2784 = vsel %vm2695, %v2774, %v2783
  %v2786 = vshrl.u32 %v2666, 16
  %v2788 = vrot.slane %v2786, 5
  %v2789 = vshll.u32 %v2666, 16
  %v2791 = vrot.slane %v2789, 6
  %v2792 = vor.u32 %v2788, %v2791
  %v2793 = vsel %vm2695, %v2783, %v2792
  %v2795 = vshrl.u32 %v2667, 16
  %v2797 = vrot.slane %v2795, 5
  %v2798 = vshll.u32 %v2667, 16
  %v2800 = vrot.slane %v2798, 6
  %v2801 = vor.u32 %v2797, %v2800
  %v2802 = vsel %vm2695, %v2792, %v2801
  %v2804 = vshrl.u32 %v2668, 16
  %v2806 = vrot.slane %v2804, 5
  %v2807 = vshll.u32 %v2668, 16
  %v2809 = vrot.slane %v2807, 6
  %v2810 = vor.u32 %v2806, %v2809
  %v2811 = vsel %vm2695, %v2801, %v2810
  %v2813 = vshrl.u32 %v2669, 16
  %v2815 = vrot.slane %v2813, 5
  %v2816 = vshll.u32 %v2669, 16
  %v2818 = vrot.slane %v2816, 6
  %v2819 = vor.u32 %v2815, %v2818
  %v2820 = vsel %vm2695, %v2810, %v2819
  %v2822 = vshrl.u32 %v2670, 16
  %v2824 = vrot.slane %v2822, 5
  %v2825 = vshll.u32 %v2670, 16
  %v2827 = vrot.slane %v2825, 6
  %v2828 = vor.u32 %v2824, %v2827
  %v2829 = vsel %vm2695, %v2819, %v2828
  %v2831 = vshrl.u32 %v2671, 16
  %v2833 = vrot.slane %v2831, 5
  %v2834 = vshll.u32 %v2671, 16
  %v2836 = vrot.slane %v2834, 6
  %v2837 = vor.u32 %v2833, %v2836
  %v2838 = vsel %vm2695, %v2828, %v2837
  %v2840 = vshrl.u32 %v2672, 16
  %v2842 = vrot.slane %v2840, 5
  %v2843 = vshll.u32 %v2672, 16
  %v2845 = vrot.slane %v2843, 6
  %v2846 = vor.u32 %v2842, %v2845
  %v2847 = vsel %vm2695, %v2837, %v2846
  %v2849 = vshrl.u32 %v2673, 16
  %v2851 = vrot.slane %v2849, 5
  %v2852 = vshll.u32 %v2673, 16
  %v2854 = vrot.slane %v2852, 6
  %v2855 = vor.u32 %v2851, %v2854
  %v2856 = vsel %vm2695, %v2846, %v2855
  %v2858 = vshrl.u32 %v2674, 16
  %v2860 = vrot.slane %v2858, 5
  %v2861 = vshll.u32 %v2674, 16
  %v2863 = vrot.slane %v2861, 6
  %v2864 = vor.u32 %v2860, %v2863
  %v2865 = vsel %vm2695, %v2855, %v2864
  %v2867 = vshrl.u32 %v2675, 16
  %v2869 = vrot.slane %v2867, 5
  %v2870 = vshll.u32 %v2675, 16
  %v2872 = vrot.slane %v2870, 6
  %v2873 = vor.u32 %v2869, %v2872
  %v2874 = vsel %vm2695, %v2864, %v2873
  %v2876 = vshrl.u32 %v2676, 16
  %v2878 = vrot.slane %v2876, 5
  %v2879 = vshll.u32 %v2676, 16
  %v2881 = vrot.slane %v2879, 6
  %v2882 = vor.u32 %v2878, %v2881
  %v2883 = vsel %vm2695, %v2873, %v2882
  %v2885 = vshrl.u32 %v2677, 16
  %v2887 = vrot.slane %v2885, 5
  %v2888 = vshll.u32 %v2677, 16
  %v2890 = vrot.slane %v2888, 6
  %v2891 = vor.u32 %v2887, %v2890
  %v2892 = vsel %vm2695, %v2882, %v2891
  %v2894 = vshrl.u32 %v2678, 16
  %v2896 = vrot.slane %v2894, 5
  %v2897 = vshll.u32 %v2678, 16
  %v2899 = vrot.slane %v2897, 6
  %v2900 = vor.u32 %v2896, %v2899
  %v2901 = vsel %vm2695, %v2891, %v2900
  %v2903 = vshrl.u32 %v2679, 16
  %v2905 = vrot.slane %v2903, 5
  %v2906 = vshll.u32 %v2679, 16
  %v2908 = vrot.slane %v2906, 6
  %v2909 = vor.u32 %v2905, %v2908
  %v2910 = vsel %vm2695, %v2900, %v2909
  %v2912 = vshrl.u32 %v2680, 16
  %v2914 = vrot.slane %v2912, 5
  %v2915 = vshll.u32 %v2680, 16
  %v2917 = vrot.slane %v2915, 6
  %v2918 = vor.u32 %v2914, %v2917
  %v2919 = vsel %vm2695, %v2909, %v2918
  %v2921 = vshrl.u32 %v2681, 16
  %v2923 = vrot.slane %v2921, 5
  %v2924 = vshll.u32 %v2681, 16
  %v2926 = vrot.slane %v2924, 6
  %v2927 = vor.u32 %v2923, %v2926
  %v2928 = vsel %vm2695, %v2918, %v2927
  %v2930 = vshrl.u32 %v2682, 16
  %v2932 = vrot.slane %v2930, 5
  %v2933 = vshll.u32 %v2682, 16
  %v2935 = vrot.slane %v2933, 6
  %v2936 = vor.u32 %v2932, %v2935
  %v2937 = vsel %vm2695, %v2927, %v2936
  %v2939 = vshrl.u32 %v2683, 16
  %v2941 = vrot.slane %v2939, 5
  %v2942 = vshll.u32 %v2683, 16
  %v2944 = vrot.slane %v2942, 6
  %v2945 = vor.u32 %v2941, %v2944
  %v2946 = vsel %vm2695, %v2936, %v2945
  %v2948 = vshrl.u32 %v2684, 16
  %v2950 = vrot.slane %v2948, 5
  %v2951 = vshll.u32 %v2684, 16
  %v2953 = vrot.slane %v2951, 6
  %v2954 = vor.u32 %v2950, %v2953
  %v2955 = vsel %vm2695, %v2945, %v2954
  %v2957 = vshrl.u32 %v2685, 16
  %v2959 = vrot.slane %v2957, 5
  %v2960 = vshll.u32 %v2685, 16
  %v2962 = vrot.slane %v2960, 6
  %v2963 = vor.u32 %v2959, %v2962
  %v2964 = vsel %vm2695, %v2954, %v2963
  %v2966 = vshrl.u32 %v2686, 16
  %v2968 = vrot.slane %v2966, 5
  %v2969 = vshll.u32 %v2686, 16
  %v2971 = vrot.slane %v2969, 6
  %v2972 = vor.u32 %v2968, %v2971
  %v2973 = vsel %vm2695, %v2963, %v2972
  %v2975 = vshrl.u32 %v2687, 16
  %v2977 = vrot.slane %v2975, 5
  %v2978 = vshll.u32 %v2687, 16
  %v2980 = vrot.slane %v2978, 6
  %v2981 = vor.u32 %v2977, %v2980
  %v2982 = vsel %vm2695, %v2972, %v2981
  %v2984 = vshrl.u32 %v2688, 16
  %v2986 = vrot.slane %v2984, 5
  %v2987 = vshll.u32 %v2688, 16
  %v2989 = vrot.slane %v2987, 6
  %v2990 = vor.u32 %v2986, %v2989
  %v2991 = vsel %vm2695, %v2981, %v2990
  %v2993 = vshrl.u32 %v2689, 16
  %v2995 = vrot.slane %v2993, 5
  %v2996 = vshll.u32 %v2689, 16
  %v2998 = vrot.slane %v2996, 6
  %v2999 = vor.u32 %v2995, %v2998
  %v3000 = vsel %vm2695, %v2990, %v2999
  %v3002 = vshrl.u32 %v2690, 16
  %v3004 = vrot.slane %v3002, 5
  %v3005 = vshll.u32 %v2690, 16
  %v3007 = vrot.slane %v3005, 6
  %v3008 = vor.u32 %v3004, %v3007
  %v3009 = vsel %vm2695, %v2999, %v3008
  %v3011 = vshrl.u32 %v2691, 16
  %v3013 = vrot.slane %v3011, 5
  %v3014 = vshll.u32 %v2691, 16
  %v3016 = vrot.slane %v3014, 6
  %v3017 = vor.u32 %v3013, %v3016
  %v3018 = vsel %vm2695, %v3008, %v3017
  %v3020 = vshrl.u32 %v2692, 16
  %v3022 = vrot.slane %v3020, 5
  %v3023 = vshll.u32 %v2692, 16
  %v3025 = vrot.slane %v3023, 6
  %v3026 = vor.u32 %v3022, %v3025
  %v3027 = vsel %vm2695, %v3017, %v3026
  %v3029 = vshrl.u32 %v2693, 16
  %v3031 = vrot.slane %v3029, 5
  %v3032 = vshll.u32 %v2693, 16
  %v3034 = vrot.slane %v3032, 6
  %v3035 = vor.u32 %v3031, %v3034
  %v3036 = vsel %vm2695, %v3026, %v3035
  %v3038 = vshrl.u32 %v2694, 16
  %v3040 = vrot.slane %v3038, 5
  %v3041 = vshll.u32 %v2694, 16
  %v3043 = vrot.slane %v3041, 6
  %v3044 = vor.u32 %v3040, %v3043
  %v3045 = vsel %vm2695, %v3035, %v3044
  %3046 = vrot.lane.b32.xlu0 %v2703, 16
  %v3047 = vpop.permute.xlu0 %3046
  %3048 = vrot.lane.b32.xlu0 %v2712, 16
  %v3049 = vpop.permute.xlu0 %3048
  %3050 = vrot.lane.b32.xlu0 %v2721, 16
  %v3051 = vpop.permute.xlu0 %3050
  %3052 = vrot.lane.b32.xlu0 %v2730, 16
  %v3053 = vpop.permute.xlu0 %3052
  %3054 = vrot.lane.b32.xlu0 %v2739, 16
  %v3055 = vpop.permute.xlu0 %3054
  %3056 = vrot.lane.b32.xlu0 %v2748, 16
  %v3057 = vpop.permute.xlu0 %3056
  %3058 = vrot.lane.b32.xlu0 %v2757, 16
  %v3059 = vpop.permute.xlu0 %3058
  %3060 = vrot.lane.b32.xlu0 %v2766, 16
  %v3061 = vpop.permute.xlu0 %3060
  %3062 = vrot.lane.b32.xlu0 %v2775, 16
  %v3063 = vpop.permute.xlu0 %3062
  %3064 = vrot.lane.b32.xlu0 %v2784, 16
  %v3065 = vpop.permute.xlu0 %3064
  %3066 = vrot.lane.b32.xlu0 %v2793, 16
  %v3067 = vpop.permute.xlu0 %3066
  %3068 = vrot.lane.b32.xlu0 %v2802, 16
  %v3069 = vpop.permute.xlu0 %3068
  %3070 = vrot.lane.b32.xlu0 %v2811, 16
  %v3071 = vpop.permute.xlu0 %3070
  %3072 = vrot.lane.b32.xlu0 %v2820, 16
  %v3073 = vpop.permute.xlu0 %3072
  %3074 = vrot.lane.b32.xlu0 %v2829, 16
  %v3075 = vpop.permute.xlu0 %3074
  %3076 = vrot.lane.b32.xlu0 %v2838, 16
  %v3077 = vpop.permute.xlu0 %3076
  %3078 = vrot.lane.b32.xlu0 %v2847, 16
  %v3079 = vpop.permute.xlu0 %3078
  %3080 = vrot.lane.b32.xlu0 %v2856, 16
  %v3081 = vpop.permute.xlu0 %3080
  %3082 = vrot.lane.b32.xlu0 %v2865, 16
  %v3083 = vpop.permute.xlu0 %3082
  %3084 = vrot.lane.b32.xlu0 %v2874, 16
  %v3085 = vpop.permute.xlu0 %3084
  %3086 = vrot.lane.b32.xlu0 %v2883, 16
  %v3087 = vpop.permute.xlu0 %3086
  %3088 = vrot.lane.b32.xlu0 %v2892, 16
  %v3089 = vpop.permute.xlu0 %3088
  %3090 = vrot.lane.b32.xlu0 %v2901, 16
  %v3091 = vpop.permute.xlu0 %3090
  %3092 = vrot.lane.b32.xlu0 %v2910, 16
  %v3093 = vpop.permute.xlu0 %3092
  %3094 = vrot.lane.b32.xlu0 %v2919, 16
  %v3095 = vpop.permute.xlu0 %3094
  %3096 = vrot.lane.b32.xlu0 %v2928, 16
  %v3097 = vpop.permute.xlu0 %3096
  %3098 = vrot.lane.b32.xlu0 %v2937, 16
  %v3099 = vpop.permute.xlu0 %3098
  %3100 = vrot.lane.b32.xlu0 %v2946, 16
  %v3101 = vpop.permute.xlu0 %3100
  %3102 = vrot.lane.b32.xlu0 %v2955, 16
  %v3103 = vpop.permute.xlu0 %3102
  %3104 = vrot.lane.b32.xlu0 %v2964, 16
  %v3105 = vpop.permute.xlu0 %3104
  %3106 = vrot.lane.b32.xlu0 %v2973, 16
  %v3107 = vpop.permute.xlu0 %3106
  %3108 = vrot.lane.b32.xlu0 %v2982, 16
  %v3109 = vpop.permute.xlu0 %3108
  %3110 = vrot.lane.b32.xlu0 %v2991, 16
  %v3111 = vpop.permute.xlu0 %3110
  %3112 = vrot.lane.b32.xlu0 %v3000, 16
  %v3113 = vpop.permute.xlu0 %3112
  %3114 = vrot.lane.b32.xlu0 %v3009, 16
  %v3115 = vpop.permute.xlu0 %3114
  %3116 = vrot.lane.b32.xlu0 %v3018, 16
  %v3117 = vpop.permute.xlu0 %3116
  %3118 = vrot.lane.b32.xlu0 %v3027, 16
  %v3119 = vpop.permute.xlu0 %3118
  %3120 = vrot.lane.b32.xlu0 %v3036, 16
  %v3121 = vpop.permute.xlu0 %3120
  %3122 = vrot.lane.b32.xlu0 %v3045, 16
  %v3123 = vpop.permute.xlu0 %3122
  %v3125 = vunpack.c.l.b16 %v1810
  %v3126 = vpack.c.b16 %v3125, %v3125
  %vm3127 = vcmask 1041408
  %v3128 = vrot.slane %v2656, 6
  %v3129 = vrot.slane %v2657, 6
  %v3130 = vsel %vm3127, %v3128, %v3129
  %v3131 = vrot.slane %v2658, 6
  %v3132 = vsel %vm3127, %v3129, %v3131
  %v3133 = vrot.slane %v2659, 6
  %v3134 = vsel %vm3127, %v3131, %v3133
  %v3135 = vrot.slane %v2660, 6
  %v3136 = vsel %vm3127, %v3133, %v3135
  %v3137 = vrot.slane %v2661, 6
  %v3138 = vsel %vm3127, %v3135, %v3137
  %v3139 = vrot.slane %v2662, 6
  %v3140 = vsel %vm3127, %v3137, %v3139
  %v3141 = vrot.slane %v2663, 6
  %v3142 = vsel %vm3127, %v3139, %v3141
  %v3143 = vrot.slane %v2664, 6
  %v3144 = vsel %vm3127, %v3141, %v3143
  %v3145 = vrot.slane %v2665, 6
  %v3146 = vsel %vm3127, %v3143, %v3145
  %v3147 = vrot.slane %v2666, 6
  %v3148 = vsel %vm3127, %v3145, %v3147
  %v3149 = vrot.slane %v2667, 6
  %v3150 = vsel %vm3127, %v3147, %v3149
  %v3151 = vrot.slane %v2668, 6
  %v3152 = vsel %vm3127, %v3149, %v3151
  %v3153 = vrot.slane %v2669, 6
  %v3154 = vsel %vm3127, %v3151, %v3153
  %v3155 = vrot.slane %v2670, 6
  %v3156 = vsel %vm3127, %v3153, %v3155
  %v3157 = vrot.slane %v2671, 6
  %v3158 = vsel %vm3127, %v3155, %v3157
  %v3159 = vrot.slane %v2672, 6
  %v3160 = vsel %vm3127, %v3157, %v3159
  %v3161 = vrot.slane %v2673, 6
  %v3162 = vsel %vm3127, %v3159, %v3161
  %v3163 = vrot.slane %v2674, 6
  %v3164 = vsel %vm3127, %v3161, %v3163
  %v3165 = vrot.slane %v2675, 6
  %v3166 = vsel %vm3127, %v3163, %v3165
  %v3167 = vrot.slane %v2676, 6
  %v3168 = vsel %vm3127, %v3165, %v3167
  %v3169 = vrot.slane %v2677, 6
  %v3170 = vsel %vm3127, %v3167, %v3169
  %v3171 = vrot.slane %v2678, 6
  %v3172 = vsel %vm3127, %v3169, %v3171
  %v3173 = vrot.slane %v2679, 6
  %v3174 = vsel %vm3127, %v3171, %v3173
  %v3175 = vrot.slane %v2680, 6
  %v3176 = vsel %vm3127, %v3173, %v3175
  %v3177 = vrot.slane %v2681, 6
  %v3178 = vsel %vm3127, %v3175, %v3177
  %v3179 = vrot.slane %v2682, 6
  %v3180 = vsel %vm3127, %v3177, %v3179
  %v3181 = vrot.slane %v2683, 6
  %v3182 = vsel %vm3127, %v3179, %v3181
  %v3183 = vrot.slane %v2684, 6
  %v3184 = vsel %vm3127, %v3181, %v3183
  %v3185 = vrot.slane %v2685, 6
  %v3186 = vsel %vm3127, %v3183, %v3185
  %v3187 = vrot.slane %v2686, 6
  %v3188 = vsel %vm3127, %v3185, %v3187
  %v3189 = vrot.slane %v2687, 6
  %v3190 = vsel %vm3127, %v3187, %v3189
  %v3191 = vrot.slane %v2688, 6
  %v3192 = vsel %vm3127, %v3189, %v3191
  %v3193 = vrot.slane %v2689, 6
  %v3194 = vsel %vm3127, %v3191, %v3193
  %v3195 = vrot.slane %v2690, 6
  %v3196 = vsel %vm3127, %v3193, %v3195
  %v3197 = vrot.slane %v2691, 6
  %v3198 = vsel %vm3127, %v3195, %v3197
  %v3199 = vrot.slane %v2692, 6
  %v3200 = vsel %vm3127, %v3197, %v3199
  %v3201 = vrot.slane %v2693, 6
  %v3202 = vsel %vm3127, %v3199, %v3201
  %v3203 = vrot.slane %v3126, 6
  %v3204 = vsel %vm3127, %v3201, %v3203
  %3205 = vrot.lane.b32.xlu0 %v3128, 20
  %v3206 = vpop.permute.xlu0 %3205
  %3207 = vrot.lane.b32.xlu0 %v3130, 20
  %v3208 = vpop.permute.xlu0 %3207
  %3209 = vrot.lane.b32.xlu0 %v3132, 20
  %v3210 = vpop.permute.xlu0 %3209
  %3211 = vrot.lane.b32.xlu0 %v3134, 20
  %v3212 = vpop.permute.xlu0 %3211
  %3213 = vrot.lane.b32.xlu0 %v3136, 20
  %v3214 = vpop.permute.xlu0 %3213
  %3215 = vrot.lane.b32.xlu0 %v3138, 20
  %v3216 = vpop.permute.xlu0 %3215
  %3217 = vrot.lane.b32.xlu0 %v3140, 20
  %v3218 = vpop.permute.xlu0 %3217
  %3219 = vrot.lane.b32.xlu0 %v3142, 20
  %v3220 = vpop.permute.xlu0 %3219
  %3221 = vrot.lane.b32.xlu0 %v3144, 20
  %v3222 = vpop.permute.xlu0 %3221
  %3223 = vrot.lane.b32.xlu0 %v3146, 20
  %v3224 = vpop.permute.xlu0 %3223
  %3225 = vrot.lane.b32.xlu0 %v3148, 20
  %v3226 = vpop.permute.xlu0 %3225
  %3227 = vrot.lane.b32.xlu0 %v3150, 20
  %v3228 = vpop.permute.xlu0 %3227
  %3229 = vrot.lane.b32.xlu0 %v3152, 20
  %v3230 = vpop.permute.xlu0 %3229
  %3231 = vrot.lane.b32.xlu0 %v3154, 20
  %v3232 = vpop.permute.xlu0 %3231
  %3233 = vrot.lane.b32.xlu0 %v3156, 20
  %v3234 = vpop.permute.xlu0 %3233
  %3235 = vrot.lane.b32.xlu0 %v3158, 20
  %v3236 = vpop.permute.xlu0 %3235
  %3237 = vrot.lane.b32.xlu0 %v3160, 20
  %v3238 = vpop.permute.xlu0 %3237
  %3239 = vrot.lane.b32.xlu0 %v3162, 20
  %v3240 = vpop.permute.xlu0 %3239
  %3241 = vrot.lane.b32.xlu0 %v3164, 20
  %v3242 = vpop.permute.xlu0 %3241
  %3243 = vrot.lane.b32.xlu0 %v3166, 20
  %v3244 = vpop.permute.xlu0 %3243
  %3245 = vrot.lane.b32.xlu0 %v3168, 20
  %v3246 = vpop.permute.xlu0 %3245
  %3247 = vrot.lane.b32.xlu0 %v3170, 20
  %v3248 = vpop.permute.xlu0 %3247
  %3249 = vrot.lane.b32.xlu0 %v3172, 20
  %v3250 = vpop.permute.xlu0 %3249
  %3251 = vrot.lane.b32.xlu0 %v3174, 20
  %v3252 = vpop.permute.xlu0 %3251
  %3253 = vrot.lane.b32.xlu0 %v3176, 20
  %v3254 = vpop.permute.xlu0 %3253
  %3255 = vrot.lane.b32.xlu0 %v3178, 20
  %v3256 = vpop.permute.xlu0 %3255
  %3257 = vrot.lane.b32.xlu0 %v3180, 20
  %v3258 = vpop.permute.xlu0 %3257
  %3259 = vrot.lane.b32.xlu0 %v3182, 20
  %v3260 = vpop.permute.xlu0 %3259
  %3261 = vrot.lane.b32.xlu0 %v3184, 20
  %v3262 = vpop.permute.xlu0 %3261
  %3263 = vrot.lane.b32.xlu0 %v3186, 20
  %v3264 = vpop.permute.xlu0 %3263
  %3265 = vrot.lane.b32.xlu0 %v3188, 20
  %v3266 = vpop.permute.xlu0 %3265
  %3267 = vrot.lane.b32.xlu0 %v3190, 20
  %v3268 = vpop.permute.xlu0 %3267
  %3269 = vrot.lane.b32.xlu0 %v3192, 20
  %v3270 = vpop.permute.xlu0 %3269
  %3271 = vrot.lane.b32.xlu0 %v3194, 20
  %v3272 = vpop.permute.xlu0 %3271
  %3273 = vrot.lane.b32.xlu0 %v3196, 20
  %v3274 = vpop.permute.xlu0 %3273
  %3275 = vrot.lane.b32.xlu0 %v3198, 20
  %v3276 = vpop.permute.xlu0 %3275
  %3277 = vrot.lane.b32.xlu0 %v3200, 20
  %v3278 = vpop.permute.xlu0 %3277
  %3279 = vrot.lane.b32.xlu0 %v3202, 20
  %v3280 = vpop.permute.xlu0 %3279
  %3281 = vrot.lane.b32.xlu0 %v3204, 20
  %v3282 = vpop.permute.xlu0 %3281
  %v3286 = vunpack.c.l.b16 %v1811
  %v3287 = vunpack.c.l.b16 %v1812
  %v3288 = vunpack.c.l.b16 %v1813
  %v3289 = vpack.c.b16 %v3287, %v3286
  %v3290 = vpack.c.b16 %v3288, %v3288
  %v3291 = vrot.slane %v3289, 6
  %v3292 = vsel %vm3127, %v3201, %v3291
  %v3293 = vrot.slane %v3290, 6
  %v3294 = vsel %vm3127, %v3291, %v3293
  %3295 = vrot.lane.b32.xlu0 %v3129, 24
  %v3296 = vpop.permute.xlu0 %3295
  %3297 = vrot.lane.b32.xlu0 %v3132, 24
  %v3298 = vpop.permute.xlu0 %3297
  %3299 = vrot.lane.b32.xlu0 %v3134, 24
  %v3300 = vpop.permute.xlu0 %3299
  %3301 = vrot.lane.b32.xlu0 %v3136, 24
  %v3302 = vpop.permute.xlu0 %3301
  %3303 = vrot.lane.b32.xlu0 %v3138, 24
  %v3304 = vpop.permute.xlu0 %3303
  %3305 = vrot.lane.b32.xlu0 %v3140, 24
  %v3306 = vpop.permute.xlu0 %3305
  %3307 = vrot.lane.b32.xlu0 %v3142, 24
  %v3308 = vpop.permute.xlu0 %3307
  %3309 = vrot.lane.b32.xlu0 %v3144, 24
  %v3310 = vpop.permute.xlu0 %3309
  %3311 = vrot.lane.b32.xlu0 %v3146, 24
  %v3312 = vpop.permute.xlu0 %3311
  %3313 = vrot.lane.b32.xlu0 %v3148, 24
  %v3314 = vpop.permute.xlu0 %3313
  %3315 = vrot.lane.b32.xlu0 %v3150, 24
  %v3316 = vpop.permute.xlu0 %3315
  %3317 = vrot.lane.b32.xlu0 %v3152, 24
  %v3318 = vpop.permute.xlu0 %3317
  %3319 = vrot.lane.b32.xlu0 %v3154, 24
  %v3320 = vpop.permute.xlu0 %3319
  %3321 = vrot.lane.b32.xlu0 %v3156, 24
  %v3322 = vpop.permute.xlu0 %3321
  %3323 = vrot.lane.b32.xlu0 %v3158, 24
  %v3324 = vpop.permute.xlu0 %3323
  %3325 = vrot.lane.b32.xlu0 %v3160, 24
  %v3326 = vpop.permute.xlu0 %3325
  %3327 = vrot.lane.b32.xlu0 %v3162, 24
  %v3328 = vpop.permute.xlu0 %3327
  %3329 = vrot.lane.b32.xlu0 %v3164, 24
  %v3330 = vpop.permute.xlu0 %3329
  %3331 = vrot.lane.b32.xlu0 %v3166, 24
  %v3332 = vpop.permute.xlu0 %3331
  %3333 = vrot.lane.b32.xlu0 %v3168, 24
  %v3334 = vpop.permute.xlu0 %3333
  %3335 = vrot.lane.b32.xlu0 %v3170, 24
  %v3336 = vpop.permute.xlu0 %3335
  %3337 = vrot.lane.b32.xlu0 %v3172, 24
  %v3338 = vpop.permute.xlu0 %3337
  %3339 = vrot.lane.b32.xlu0 %v3174, 24
  %v3340 = vpop.permute.xlu0 %3339
  %3341 = vrot.lane.b32.xlu0 %v3176, 24
  %v3342 = vpop.permute.xlu0 %3341
  %3343 = vrot.lane.b32.xlu0 %v3178, 24
  %v3344 = vpop.permute.xlu0 %3343
  %3345 = vrot.lane.b32.xlu0 %v3180, 24
  %v3346 = vpop.permute.xlu0 %3345
  %3347 = vrot.lane.b32.xlu0 %v3182, 24
  %v3348 = vpop.permute.xlu0 %3347
  %3349 = vrot.lane.b32.xlu0 %v3184, 24
  %v3350 = vpop.permute.xlu0 %3349
  %3351 = vrot.lane.b32.xlu0 %v3186, 24
  %v3352 = vpop.permute.xlu0 %3351
  %3353 = vrot.lane.b32.xlu0 %v3188, 24
  %v3354 = vpop.permute.xlu0 %3353
  %3355 = vrot.lane.b32.xlu0 %v3190, 24
  %v3356 = vpop.permute.xlu0 %3355
  %3357 = vrot.lane.b32.xlu0 %v3192, 24
  %v3358 = vpop.permute.xlu0 %3357
  %3359 = vrot.lane.b32.xlu0 %v3194, 24
  %v3360 = vpop.permute.xlu0 %3359
  %3361 = vrot.lane.b32.xlu0 %v3196, 24
  %v3362 = vpop.permute.xlu0 %3361
  %3363 = vrot.lane.b32.xlu0 %v3198, 24
  %v3364 = vpop.permute.xlu0 %3363
  %3365 = vrot.lane.b32.xlu0 %v3200, 24
  %v3366 = vpop.permute.xlu0 %3365
  %3367 = vrot.lane.b32.xlu0 %v3202, 24
  %v3368 = vpop.permute.xlu0 %3367
  %3369 = vrot.lane.b32.xlu0 %v3292, 24
  %v3370 = vpop.permute.xlu0 %3369
  %3371 = vrot.lane.b32.xlu0 %v3294, 24
  %v3372 = vpop.permute.xlu0 %3371
  %v3374 = vunpack.c.l.b16 %v1814
  %v3375 = vpack.c.b16 %v1899, %v3374
  %vm3376 = vsmask.f32 1280
  %v3378 = vshrl.u32 %v3375, 16
  %v3380 = vrot.slane %v3378, 6
  %v3381 = vshll.u32 %v3375, 16
  %v3383 = vrot.slane %v3381, 7
  %v3384 = vor.u32 %v3380, %v3383
  %v3385 = vrot.slane %v2714, 6
  %v3386 = vrot.slane %v2717, 7
  %v3387 = vor.u32 %v3385, %v3386
  %v3388 = vsel %vm3376, %v3384, %v3387
  %v3389 = vrot.slane %v2723, 6
  %v3390 = vrot.slane %v2726, 7
  %v3391 = vor.u32 %v3389, %v3390
  %v3392 = vsel %vm3376, %v3387, %v3391
  %v3393 = vrot.slane %v2732, 6
  %v3394 = vrot.slane %v2735, 7
  %v3395 = vor.u32 %v3393, %v3394
  %v3396 = vsel %vm3376, %v3391, %v3395
  %v3397 = vrot.slane %v2741, 6
  %v3398 = vrot.slane %v2744, 7
  %v3399 = vor.u32 %v3397, %v3398
  %v3400 = vsel %vm3376, %v3395, %v3399
  %v3401 = vrot.slane %v2750, 6
  %v3402 = vrot.slane %v2753, 7
  %v3403 = vor.u32 %v3401, %v3402
  %v3404 = vsel %vm3376, %v3399, %v3403
  %v3405 = vrot.slane %v2759, 6
  %v3406 = vrot.slane %v2762, 7
  %v3407 = vor.u32 %v3405, %v3406
  %v3408 = vsel %vm3376, %v3403, %v3407
  %v3409 = vrot.slane %v2768, 6
  %v3410 = vrot.slane %v2771, 7
  %v3411 = vor.u32 %v3409, %v3410
  %v3412 = vsel %vm3376, %v3407, %v3411
  %v3413 = vrot.slane %v2777, 6
  %v3414 = vrot.slane %v2780, 7
  %v3415 = vor.u32 %v3413, %v3414
  %v3416 = vsel %vm3376, %v3411, %v3415
  %v3417 = vrot.slane %v2786, 6
  %v3418 = vrot.slane %v2789, 7
  %v3419 = vor.u32 %v3417, %v3418
  %v3420 = vsel %vm3376, %v3415, %v3419
  %v3421 = vrot.slane %v2795, 6
  %v3422 = vrot.slane %v2798, 7
  %v3423 = vor.u32 %v3421, %v3422
  %v3424 = vsel %vm3376, %v3419, %v3423
  %v3425 = vrot.slane %v2804, 6
  %v3426 = vrot.slane %v2807, 7
  %v3427 = vor.u32 %v3425, %v3426
  %v3428 = vsel %vm3376, %v3423, %v3427
  %v3429 = vrot.slane %v2813, 6
  %v3430 = vrot.slane %v2816, 7
  %v3431 = vor.u32 %v3429, %v3430
  %v3432 = vsel %vm3376, %v3427, %v3431
  %v3433 = vrot.slane %v2822, 6
  %v3434 = vrot.slane %v2825, 7
  %v3435 = vor.u32 %v3433, %v3434
  %v3436 = vsel %vm3376, %v3431, %v3435
  %v3437 = vrot.slane %v2831, 6
  %v3438 = vrot.slane %v2834, 7
  %v3439 = vor.u32 %v3437, %v3438
  %v3440 = vsel %vm3376, %v3435, %v3439
  %v3441 = vrot.slane %v2840, 6
  %v3442 = vrot.slane %v2843, 7
  %v3443 = vor.u32 %v3441, %v3442
  %v3444 = vsel %vm3376, %v3439, %v3443
  %v3445 = vrot.slane %v2849, 6
  %v3446 = vrot.slane %v2852, 7
  %v3447 = vor.u32 %v3445, %v3446
  %v3448 = vsel %vm3376, %v3443, %v3447
  %v3449 = vrot.slane %v2858, 6
  %v3450 = vrot.slane %v2861, 7
  %v3451 = vor.u32 %v3449, %v3450
  %v3452 = vsel %vm3376, %v3447, %v3451
  %v3453 = vrot.slane %v2867, 6
  %v3454 = vrot.slane %v2870, 7
  %v3455 = vor.u32 %v3453, %v3454
  %v3456 = vsel %vm3376, %v3451, %v3455
  %v3457 = vrot.slane %v2876, 6
  %v3458 = vrot.slane %v2879, 7
  %v3459 = vor.u32 %v3457, %v3458
  %v3460 = vsel %vm3376, %v3455, %v3459
  %v3461 = vrot.slane %v2885, 6
  %v3462 = vrot.slane %v2888, 7
  %v3463 = vor.u32 %v3461, %v3462
  %v3464 = vsel %vm3376, %v3459, %v3463
  %v3465 = vrot.slane %v2894, 6
  %v3466 = vrot.slane %v2897, 7
  %v3467 = vor.u32 %v3465, %v3466
  %v3468 = vsel %vm3376, %v3463, %v3467
  %v3469 = vrot.slane %v2903, 6
  %v3470 = vrot.slane %v2906, 7
  %v3471 = vor.u32 %v3469, %v3470
  %v3472 = vsel %vm3376, %v3467, %v3471
  %v3473 = vrot.slane %v2912, 6
  %v3474 = vrot.slane %v2915, 7
  %v3475 = vor.u32 %v3473, %v3474
  %v3476 = vsel %vm3376, %v3471, %v3475
  %v3477 = vrot.slane %v2921, 6
  %v3478 = vrot.slane %v2924, 7
  %v3479 = vor.u32 %v3477, %v3478
  %v3480 = vsel %vm3376, %v3475, %v3479
  %v3481 = vrot.slane %v2930, 6
  %v3482 = vrot.slane %v2933, 7
  %v3483 = vor.u32 %v3481, %v3482
  %v3484 = vsel %vm3376, %v3479, %v3483
  %v3485 = vrot.slane %v2939, 6
  %v3486 = vrot.slane %v2942, 7
  %v3487 = vor.u32 %v3485, %v3486
  %v3488 = vsel %vm3376, %v3483, %v3487
  %v3489 = vrot.slane %v2948, 6
  %v3490 = vrot.slane %v2951, 7
  %v3491 = vor.u32 %v3489, %v3490
  %v3492 = vsel %vm3376, %v3487, %v3491
  %v3493 = vrot.slane %v2957, 6
  %v3494 = vrot.slane %v2960, 7
  %v3495 = vor.u32 %v3493, %v3494
  %v3496 = vsel %vm3376, %v3491, %v3495
  %v3497 = vrot.slane %v2966, 6
  %v3498 = vrot.slane %v2969, 7
  %v3499 = vor.u32 %v3497, %v3498
  %v3500 = vsel %vm3376, %v3495, %v3499
  %v3501 = vrot.slane %v2975, 6
  %v3502 = vrot.slane %v2978, 7
  %v3503 = vor.u32 %v3501, %v3502
  %v3504 = vsel %vm3376, %v3499, %v3503
  %v3505 = vrot.slane %v2984, 6
  %v3506 = vrot.slane %v2987, 7
  %v3507 = vor.u32 %v3505, %v3506
  %v3508 = vsel %vm3376, %v3503, %v3507
  %v3509 = vrot.slane %v2993, 6
  %v3510 = vrot.slane %v2996, 7
  %v3511 = vor.u32 %v3509, %v3510
  %v3512 = vsel %vm3376, %v3507, %v3511
  %v3513 = vrot.slane %v3002, 6
  %v3514 = vrot.slane %v3005, 7
  %v3515 = vor.u32 %v3513, %v3514
  %v3516 = vsel %vm3376, %v3511, %v3515
  %v3517 = vrot.slane %v3011, 6
  %v3518 = vrot.slane %v3014, 7
  %v3519 = vor.u32 %v3517, %v3518
  %v3520 = vsel %vm3376, %v3515, %v3519
  %v3521 = vrot.slane %v3020, 6
  %v3522 = vrot.slane %v3023, 7
  %v3523 = vor.u32 %v3521, %v3522
  %v3524 = vsel %vm3376, %v3519, %v3523
  %v3525 = vrot.slane %v3029, 6
  %v3526 = vrot.slane %v3032, 7
  %v3527 = vor.u32 %v3525, %v3526
  %v3528 = vsel %vm3376, %v3523, %v3527
  %v3530 = vshrl.u32 %v3289, 16
  %v3532 = vrot.slane %v3530, 6
  %v3533 = vshll.u32 %v3289, 16
  %v3535 = vrot.slane %v3533, 7
  %v3536 = vor.u32 %v3532, %v3535
  %v3537 = vsel %vm3376, %v3527, %v3536
  %v3539 = vshrl.u32 %v3290, 16
  %v3541 = vrot.slane %v3539, 6
  %v3542 = vshll.u32 %v3290, 16
  %v3544 = vrot.slane %v3542, 7
  %v3545 = vor.u32 %v3541, %v3544
  %v3546 = vsel %vm3376, %v3536, %v3545
  %3547 = vrot.lane.b32.xlu0 %v3384, 28
  %v3548 = vpop.permute.xlu0 %3547
  %3549 = vrot.lane.b32.xlu0 %v3388, 28
  %v3550 = vpop.permute.xlu0 %3549
  %3551 = vrot.lane.b32.xlu0 %v3392, 28
  %v3552 = vpop.permute.xlu0 %3551
  %3553 = vrot.lane.b32.xlu0 %v3396, 28
  %v3554 = vpop.permute.xlu0 %3553
  %3555 = vrot.lane.b32.xlu0 %v3400, 28
  %v3556 = vpop.permute.xlu0 %3555
  %3557 = vrot.lane.b32.xlu0 %v3404, 28
  %v3558 = vpop.permute.xlu0 %3557
  %3559 = vrot.lane.b32.xlu0 %v3408, 28
  %v3560 = vpop.permute.xlu0 %3559
  %3561 = vrot.lane.b32.xlu0 %v3412, 28
  %v3562 = vpop.permute.xlu0 %3561
  %3563 = vrot.lane.b32.xlu0 %v3416, 28
  %v3564 = vpop.permute.xlu0 %3563
  %3565 = vrot.lane.b32.xlu0 %v3420, 28
  %v3566 = vpop.permute.xlu0 %3565
  %3567 = vrot.lane.b32.xlu0 %v3424, 28
  %v3568 = vpop.permute.xlu0 %3567
  %3569 = vrot.lane.b32.xlu0 %v3428, 28
  %v3570 = vpop.permute.xlu0 %3569
  %3571 = vrot.lane.b32.xlu0 %v3432, 28
  %v3572 = vpop.permute.xlu0 %3571
  %3573 = vrot.lane.b32.xlu0 %v3436, 28
  %v3574 = vpop.permute.xlu0 %3573
  %3575 = vrot.lane.b32.xlu0 %v3440, 28
  %v3576 = vpop.permute.xlu0 %3575
  %3577 = vrot.lane.b32.xlu0 %v3444, 28
  %v3578 = vpop.permute.xlu0 %3577
  %3579 = vrot.lane.b32.xlu0 %v3448, 28
  %v3580 = vpop.permute.xlu0 %3579
  %3581 = vrot.lane.b32.xlu0 %v3452, 28
  %v3582 = vpop.permute.xlu0 %3581
  %3583 = vrot.lane.b32.xlu0 %v3456, 28
  %v3584 = vpop.permute.xlu0 %3583
  %3585 = vrot.lane.b32.xlu0 %v3460, 28
  %v3586 = vpop.permute.xlu0 %3585
  %3587 = vrot.lane.b32.xlu0 %v3464, 28
  %v3588 = vpop.permute.xlu0 %3587
  %3589 = vrot.lane.b32.xlu0 %v3468, 28
  %v3590 = vpop.permute.xlu0 %3589
  %3591 = vrot.lane.b32.xlu0 %v3472, 28
  %v3592 = vpop.permute.xlu0 %3591
  %3593 = vrot.lane.b32.xlu0 %v3476, 28
  %v3594 = vpop.permute.xlu0 %3593
  %3595 = vrot.lane.b32.xlu0 %v3480, 28
  %v3596 = vpop.permute.xlu0 %3595
  %3597 = vrot.lane.b32.xlu0 %v3484, 28
  %v3598 = vpop.permute.xlu0 %3597
  %3599 = vrot.lane.b32.xlu0 %v3488, 28
  %v3600 = vpop.permute.xlu0 %3599
  %3601 = vrot.lane.b32.xlu0 %v3492, 28
  %v3602 = vpop.permute.xlu0 %3601
  %3603 = vrot.lane.b32.xlu0 %v3496, 28
  %v3604 = vpop.permute.xlu0 %3603
  %3605 = vrot.lane.b32.xlu0 %v3500, 28
  %v3606 = vpop.permute.xlu0 %3605
  %3607 = vrot.lane.b32.xlu0 %v3504, 28
  %v3608 = vpop.permute.xlu0 %3607
  %3609 = vrot.lane.b32.xlu0 %v3508, 28
  %v3610 = vpop.permute.xlu0 %3609
  %3611 = vrot.lane.b32.xlu0 %v3512, 28
  %v3612 = vpop.permute.xlu0 %3611
  %3613 = vrot.lane.b32.xlu0 %v3516, 28
  %v3614 = vpop.permute.xlu0 %3613
  %3615 = vrot.lane.b32.xlu0 %v3520, 28
  %v3616 = vpop.permute.xlu0 %3615
  %3617 = vrot.lane.b32.xlu0 %v3524, 28
  %v3618 = vpop.permute.xlu0 %3617
  %3619 = vrot.lane.b32.xlu0 %v3528, 28
  %v3620 = vpop.permute.xlu0 %3619
  %3621 = vrot.lane.b32.xlu0 %v3537, 28
  %v3622 = vpop.permute.xlu0 %3621
  %3623 = vrot.lane.b32.xlu0 %v3546, 28
  %v3624 = vpop.permute.xlu0 %3623
  %v3626 = vunpack.c.l.b16 %v1815
  %v3627 = vpack.c.b16 %v3626, %v3626
  %vm3628 = vcmask 1040384
  %v3629 = vrot.slane %v3375, 7
  %v3630 = vrot.slane %v2658, 7
  %v3631 = vsel %vm3628, %v3629, %v3630
  %v3632 = vrot.slane %v2659, 7
  %v3633 = vsel %vm3628, %v3630, %v3632
  %v3634 = vrot.slane %v2660, 7
  %v3635 = vsel %vm3628, %v3632, %v3634
  %v3636 = vrot.slane %v2661, 7
  %v3637 = vsel %vm3628, %v3634, %v3636
  %v3638 = vrot.slane %v2662, 7
  %v3639 = vsel %vm3628, %v3636, %v3638
  %v3640 = vrot.slane %v2663, 7
  %v3641 = vsel %vm3628, %v3638, %v3640
  %v3642 = vrot.slane %v2664, 7
  %v3643 = vsel %vm3628, %v3640, %v3642
  %v3644 = vrot.slane %v2665, 7
  %v3645 = vsel %vm3628, %v3642, %v3644
  %v3646 = vrot.slane %v2666, 7
  %v3647 = vsel %vm3628, %v3644, %v3646
  %v3648 = vrot.slane %v2667, 7
  %v3649 = vsel %vm3628, %v3646, %v3648
  %v3650 = vrot.slane %v2668, 7
  %v3651 = vsel %vm3628, %v3648, %v3650
  %v3652 = vrot.slane %v2669, 7
  %v3653 = vsel %vm3628, %v3650, %v3652
  %v3654 = vrot.slane %v2670, 7
  %v3655 = vsel %vm3628, %v3652, %v3654
  %v3656 = vrot.slane %v2671, 7
  %v3657 = vsel %vm3628, %v3654, %v3656
  %v3658 = vrot.slane %v2672, 7
  %v3659 = vsel %vm3628, %v3656, %v3658
  %v3660 = vrot.slane %v2673, 7
  %v3661 = vsel %vm3628, %v3658, %v3660
  %v3662 = vrot.slane %v2674, 7
  %v3663 = vsel %vm3628, %v3660, %v3662
  %v3664 = vrot.slane %v2675, 7
  %v3665 = vsel %vm3628, %v3662, %v3664
  %v3666 = vrot.slane %v2676, 7
  %v3667 = vsel %vm3628, %v3664, %v3666
  %v3668 = vrot.slane %v2677, 7
  %v3669 = vsel %vm3628, %v3666, %v3668
  %v3670 = vrot.slane %v2678, 7
  %v3671 = vsel %vm3628, %v3668, %v3670
  %v3672 = vrot.slane %v2679, 7
  %v3673 = vsel %vm3628, %v3670, %v3672
  %v3674 = vrot.slane %v2680, 7
  %v3675 = vsel %vm3628, %v3672, %v3674
  %v3676 = vrot.slane %v2681, 7
  %v3677 = vsel %vm3628, %v3674, %v3676
  %v3678 = vrot.slane %v2682, 7
  %v3679 = vsel %vm3628, %v3676, %v3678
  %v3680 = vrot.slane %v2683, 7
  %v3681 = vsel %vm3628, %v3678, %v3680
  %v3682 = vrot.slane %v2684, 7
  %v3683 = vsel %vm3628, %v3680, %v3682
  %v3684 = vrot.slane %v2685, 7
  %v3685 = vsel %vm3628, %v3682, %v3684
  %v3686 = vrot.slane %v2686, 7
  %v3687 = vsel %vm3628, %v3684, %v3686
  %v3688 = vrot.slane %v2687, 7
  %v3689 = vsel %vm3628, %v3686, %v3688
  %v3690 = vrot.slane %v2688, 7
  %v3691 = vsel %vm3628, %v3688, %v3690
  %v3692 = vrot.slane %v2689, 7
  %v3693 = vsel %vm3628, %v3690, %v3692
  %v3694 = vrot.slane %v2690, 7
  %v3695 = vsel %vm3628, %v3692, %v3694
  %v3696 = vrot.slane %v2691, 7
  %v3697 = vsel %vm3628, %v3694, %v3696
  %v3698 = vrot.slane %v2692, 7
  %v3699 = vsel %vm3628, %v3696, %v3698
  %v3700 = vrot.slane %v2693, 7
  %v3701 = vsel %vm3628, %v3698, %v3700
  %v3702 = vrot.slane %v3289, 7
  %v3703 = vsel %vm3628, %v3700, %v3702
  %v3704 = vrot.slane %v3627, 7
  %v3705 = vsel %vm3628, %v3702, %v3704
  %3706 = vrot.lane.b32.xlu0 %v3629, 32
  %v3707 = vpop.permute.xlu0 %3706
  %3708 = vrot.lane.b32.xlu0 %v3631, 32
  %v3709 = vpop.permute.xlu0 %3708
  %3710 = vrot.lane.b32.xlu0 %v3633, 32
  %v3711 = vpop.permute.xlu0 %3710
  %3712 = vrot.lane.b32.xlu0 %v3635, 32
  %v3713 = vpop.permute.xlu0 %3712
  %3714 = vrot.lane.b32.xlu0 %v3637, 32
  %v3715 = vpop.permute.xlu0 %3714
  %3716 = vrot.lane.b32.xlu0 %v3639, 32
  %v3717 = vpop.permute.xlu0 %3716
  %3718 = vrot.lane.b32.xlu0 %v3641, 32
  %v3719 = vpop.permute.xlu0 %3718
  %3720 = vrot.lane.b32.xlu0 %v3643, 32
  %v3721 = vpop.permute.xlu0 %3720
  %3722 = vrot.lane.b32.xlu0 %v3645, 32
  %v3723 = vpop.permute.xlu0 %3722
  %3724 = vrot.lane.b32.xlu0 %v3647, 32
  %v3725 = vpop.permute.xlu0 %3724
  %3726 = vrot.lane.b32.xlu0 %v3649, 32
  %v3727 = vpop.permute.xlu0 %3726
  %3728 = vrot.lane.b32.xlu0 %v3651, 32
  %v3729 = vpop.permute.xlu0 %3728
  %3730 = vrot.lane.b32.xlu0 %v3653, 32
  %v3731 = vpop.permute.xlu0 %3730
  %3732 = vrot.lane.b32.xlu0 %v3655, 32
  %v3733 = vpop.permute.xlu0 %3732
  %3734 = vrot.lane.b32.xlu0 %v3657, 32
  %v3735 = vpop.permute.xlu0 %3734
  %3736 = vrot.lane.b32.xlu0 %v3659, 32
  %v3737 = vpop.permute.xlu0 %3736
  %3738 = vrot.lane.b32.xlu0 %v3661, 32
  %v3739 = vpop.permute.xlu0 %3738
  %3740 = vrot.lane.b32.xlu0 %v3663, 32
  %v3741 = vpop.permute.xlu0 %3740
  %3742 = vrot.lane.b32.xlu0 %v3665, 32
  %v3743 = vpop.permute.xlu0 %3742
  %3744 = vrot.lane.b32.xlu0 %v3667, 32
  %v3745 = vpop.permute.xlu0 %3744
  %3746 = vrot.lane.b32.xlu0 %v3669, 32
  %v3747 = vpop.permute.xlu0 %3746
  %3748 = vrot.lane.b32.xlu0 %v3671, 32
  %v3749 = vpop.permute.xlu0 %3748
  %3750 = vrot.lane.b32.xlu0 %v3673, 32
  %v3751 = vpop.permute.xlu0 %3750
  %3752 = vrot.lane.b32.xlu0 %v3675, 32
  %v3753 = vpop.permute.xlu0 %3752
  %3754 = vrot.lane.b32.xlu0 %v3677, 32
  %v3755 = vpop.permute.xlu0 %3754
  %3756 = vrot.lane.b32.xlu0 %v3679, 32
  %v3757 = vpop.permute.xlu0 %3756
  %3758 = vrot.lane.b32.xlu0 %v3681, 32
  %v3759 = vpop.permute.xlu0 %3758
  %3760 = vrot.lane.b32.xlu0 %v3683, 32
  %v3761 = vpop.permute.xlu0 %3760
  %3762 = vrot.lane.b32.xlu0 %v3685, 32
  %v3763 = vpop.permute.xlu0 %3762
  %3764 = vrot.lane.b32.xlu0 %v3687, 32
  %v3765 = vpop.permute.xlu0 %3764
  %3766 = vrot.lane.b32.xlu0 %v3689, 32
  %v3767 = vpop.permute.xlu0 %3766
  %3768 = vrot.lane.b32.xlu0 %v3691, 32
  %v3769 = vpop.permute.xlu0 %3768
  %3770 = vrot.lane.b32.xlu0 %v3693, 32
  %v3771 = vpop.permute.xlu0 %3770
  %3772 = vrot.lane.b32.xlu0 %v3695, 32
  %v3773 = vpop.permute.xlu0 %3772
  %3774 = vrot.lane.b32.xlu0 %v3697, 32
  %v3775 = vpop.permute.xlu0 %3774
  %3776 = vrot.lane.b32.xlu0 %v3699, 32
  %v3777 = vpop.permute.xlu0 %3776
  %3778 = vrot.lane.b32.xlu0 %v3701, 32
  %v3779 = vpop.permute.xlu0 %3778
  %3780 = vrot.lane.b32.xlu0 %v3703, 32
  %v3781 = vpop.permute.xlu0 %3780
  %3782 = vrot.lane.b32.xlu0 %v3705, 32
  %v3783 = vpop.permute.xlu0 %3782
  %vm3784 = vcmask 31744
  %v3787 = vsel %vm3784, %v1970, %v2325
  %v3789 = vsel %vm3784, %v1971, %v2327
  %v3791 = vsel %vm3784, %v1972, %v2329
  %v3793 = vsel %vm3784, %v1973, %v2331
  %v3795 = vsel %vm3784, %v1974, %v2333
  %v3797 = vsel %vm3784, %v1975, %v2335
  %v3799 = vsel %vm3784, %v1976, %v2337
  %v3801 = vsel %vm3784, %v1977, %v2339
  %v3803 = vsel %vm3784, %v1978, %v2341
  %v3805 = vsel %vm3784, %v1979, %v2343
  %v3807 = vsel %vm3784, %v1980, %v2345
  %v3809 = vsel %vm3784, %v1981, %v2347
  %v3811 = vsel %vm3784, %v1982, %v2349
  %v3813 = vsel %vm3784, %v1983, %v2351
  %v3815 = vsel %vm3784, %v1984, %v2353
  %v3817 = vsel %vm3784, %v1985, %v2355
  %v3819 = vsel %vm3784, %v1986, %v2357
  %v3821 = vsel %vm3784, %v1987, %v2359
  %v3823 = vsel %vm3784, %v1988, %v2361
  %v3825 = vsel %vm3784, %v1989, %v2363
  %v3827 = vsel %vm3784, %v1990, %v2365
  %v3829 = vsel %vm3784, %v1991, %v2367
  %v3831 = vsel %vm3784, %v1992, %v2369
  %v3833 = vsel %vm3784, %v1993, %v2371
  %v3835 = vsel %vm3784, %v1994, %v2373
  %v3837 = vsel %vm3784, %v1995, %v2375
  %v3839 = vsel %vm3784, %v1996, %v2377
  %v3841 = vsel %vm3784, %v1997, %v2379
  %v3843 = vsel %vm3784, %v1998, %v2381
  %v3845 = vsel %vm3784, %v1999, %v2383
  %v3847 = vsel %vm3784, %v2000, %v2385
  %v3849 = vsel %vm3784, %v2001, %v2387
  %v3851 = vsel %vm3784, %v2002, %v2389
  %v3853 = vsel %vm3784, %v2003, %v2391
  %v3855 = vsel %vm3784, %v2004, %v2393
  %v3857 = vsel %vm3784, %v2005, %v2395
  %v3859 = vsel %vm3784, %v2006, %v2397
  %v3861 = vsel %vm3784, %v2007, %v2399
  %v3863 = vsel %vm3784, %v2008, %v2401
  %vm3864 = vcmask 64512
  %v3866 = vsel %vm3864, %v3787, %v2484
  %v3868 = vsel %vm3864, %v3789, %v2486
  %v3870 = vsel %vm3864, %v3791, %v2488
  %v3872 = vsel %vm3864, %v3793, %v2490
  %v3874 = vsel %vm3864, %v3795, %v2492
  %v3876 = vsel %vm3864, %v3797, %v2494
  %v3878 = vsel %vm3864, %v3799, %v2496
  %v3880 = vsel %vm3864, %v3801, %v2498
  %v3882 = vsel %vm3864, %v3803, %v2500
  %v3884 = vsel %vm3864, %v3805, %v2502
  %v3886 = vsel %vm3864, %v3807, %v2504
  %v3888 = vsel %vm3864, %v3809, %v2506
  %v3890 = vsel %vm3864, %v3811, %v2508
  %v3892 = vsel %vm3864, %v3813, %v2510
  %v3894 = vsel %vm3864, %v3815, %v2512
  %v3896 = vsel %vm3864, %v3817, %v2514
  %v3898 = vsel %vm3864, %v3819, %v2516
  %v3900 = vsel %vm3864, %v3821, %v2518
  %v3902 = vsel %vm3864, %v3823, %v2520
  %v3904 = vsel %vm3864, %v3825, %v2522
  %v3906 = vsel %vm3864, %v3827, %v2524
  %v3908 = vsel %vm3864, %v3829, %v2526
  %v3910 = vsel %vm3864, %v3831, %v2528
  %v3912 = vsel %vm3864, %v3833, %v2530
  %v3914 = vsel %vm3864, %v3835, %v2532
  %v3916 = vsel %vm3864, %v3837, %v2534
  %v3918 = vsel %vm3864, %v3839, %v2536
  %v3920 = vsel %vm3864, %v3841, %v2538
  %v3922 = vsel %vm3864, %v3843, %v2540
  %v3924 = vsel %vm3864, %v3845, %v2542
  %v3926 = vsel %vm3864, %v3847, %v2544
  %v3928 = vsel %vm3864, %v3849, %v2546
  %v3930 = vsel %vm3864, %v3851, %v2548
  %v3932 = vsel %vm3864, %v3853, %v2550
  %v3934 = vsel %vm3864, %v3855, %v2552
  %v3936 = vsel %vm3864, %v3857, %v2554
  %v3938 = vsel %vm3864, %v3859, %v2556
  %v3940 = vsel %vm3864, %v3861, %v2558
  %v3942 = vsel %vm3864, %v3863, %v2560
  %vm3943 = vcmask 97280
  %v3945 = vsel %vm3943, %v3866, %v2579
  %v3947 = vsel %vm3943, %v3868, %v2581
  %v3949 = vsel %vm3943, %v3870, %v2583
  %v3951 = vsel %vm3943, %v3872, %v2585
  %v3953 = vsel %vm3943, %v3874, %v2587
  %v3955 = vsel %vm3943, %v3876, %v2589
  %v3957 = vsel %vm3943, %v3878, %v2591
  %v3959 = vsel %vm3943, %v3880, %v2593
  %v3961 = vsel %vm3943, %v3882, %v2595
  %v3963 = vsel %vm3943, %v3884, %v2597
  %v3965 = vsel %vm3943, %v3886, %v2599
  %v3967 = vsel %vm3943, %v3888, %v2601
  %v3969 = vsel %vm3943, %v3890, %v2603
  %v3971 = vsel %vm3943, %v3892, %v2605
  %v3973 = vsel %vm3943, %v3894, %v2607
  %v3975 = vsel %vm3943, %v3896, %v2609
  %v3977 = vsel %vm3943, %v3898, %v2611
  %v3979 = vsel %vm3943, %v3900, %v2613
  %v3981 = vsel %vm3943, %v3902, %v2615
  %v3983 = vsel %vm3943, %v3904, %v2617
  %v3985 = vsel %vm3943, %v3906, %v2619
  %v3987 = vsel %vm3943, %v3908, %v2621
  %v3989 = vsel %vm3943, %v3910, %v2623
  %v3991 = vsel %vm3943, %v3912, %v2625
  %v3993 = vsel %vm3943, %v3914, %v2627
  %v3995 = vsel %vm3943, %v3916, %v2629
  %v3997 = vsel %vm3943, %v3918, %v2631
  %v3999 = vsel %vm3943, %v3920, %v2633
  %v4001 = vsel %vm3943, %v3922, %v2635
  %v4003 = vsel %vm3943, %v3924, %v2637
  %v4005 = vsel %vm3943, %v3926, %v2639
  %v4007 = vsel %vm3943, %v3928, %v2641
  %v4009 = vsel %vm3943, %v3930, %v2643
  %v4011 = vsel %vm3943, %v3932, %v2645
  %v4013 = vsel %vm3943, %v3934, %v2647
  %v4015 = vsel %vm3943, %v3936, %v2649
  %v4017 = vsel %vm3943, %v3938, %v2651
  %v4019 = vsel %vm3943, %v3940, %v2653
  %v4021 = vsel %vm3943, %v3942, %v2655
  %vm4022 = vcmask 130048
  %v4024 = vsel %vm4022, %v3945, %v3047
  %v4026 = vsel %vm4022, %v3947, %v3049
  %v4028 = vsel %vm4022, %v3949, %v3051
  %v4030 = vsel %vm4022, %v3951, %v3053
  %v4032 = vsel %vm4022, %v3953, %v3055
  %v4034 = vsel %vm4022, %v3955, %v3057
  %v4036 = vsel %vm4022, %v3957, %v3059
  %v4038 = vsel %vm4022, %v3959, %v3061
  %v4040 = vsel %vm4022, %v3961, %v3063
  %v4042 = vsel %vm4022, %v3963, %v3065
  %v4044 = vsel %vm4022, %v3965, %v3067
  %v4046 = vsel %vm4022, %v3967, %v3069
  %v4048 = vsel %vm4022, %v3969, %v3071
  %v4050 = vsel %vm4022, %v3971, %v3073
  %v4052 = vsel %vm4022, %v3973, %v3075
  %v4054 = vsel %vm4022, %v3975, %v3077
  %v4056 = vsel %vm4022, %v3977, %v3079
  %v4058 = vsel %vm4022, %v3979, %v3081
  %v4060 = vsel %vm4022, %v3981, %v3083
  %v4062 = vsel %vm4022, %v3983, %v3085
  %v4064 = vsel %vm4022, %v3985, %v3087
  %v4066 = vsel %vm4022, %v3987, %v3089
  %v4068 = vsel %vm4022, %v3989, %v3091
  %v4070 = vsel %vm4022, %v3991, %v3093
  %v4072 = vsel %vm4022, %v3993, %v3095
  %v4074 = vsel %vm4022, %v3995, %v3097
  %v4076 = vsel %vm4022, %v3997, %v3099
  %v4078 = vsel %vm4022, %v3999, %v3101
  %v4080 = vsel %vm4022, %v4001, %v3103
  %v4082 = vsel %vm4022, %v4003, %v3105
  %v4084 = vsel %vm4022, %v4005, %v3107
  %v4086 = vsel %vm4022, %v4007, %v3109
  %v4088 = vsel %vm4022, %v4009, %v3111
  %v4090 = vsel %vm4022, %v4011, %v3113
  %v4092 = vsel %vm4022, %v4013, %v3115
  %v4094 = vsel %vm4022, %v4015, %v3117
  %v4096 = vsel %vm4022, %v4017, %v3119
  %v4098 = vsel %vm4022, %v4019, %v3121
  %v4100 = vsel %vm4022, %v4021, %v3123
  %vm4101 = vcmask 162816
  %v4103 = vsel %vm4101, %v4024, %v3206
  %v4105 = vsel %vm4101, %v4026, %v3208
  %v4107 = vsel %vm4101, %v4028, %v3210
  %v4109 = vsel %vm4101, %v4030, %v3212
  %v4111 = vsel %vm4101, %v4032, %v3214
  %v4113 = vsel %vm4101, %v4034, %v3216
  %v4115 = vsel %vm4101, %v4036, %v3218
  %v4117 = vsel %vm4101, %v4038, %v3220
  %v4119 = vsel %vm4101, %v4040, %v3222
  %v4121 = vsel %vm4101, %v4042, %v3224
  %v4123 = vsel %vm4101, %v4044, %v3226
  %v4125 = vsel %vm4101, %v4046, %v3228
  %v4127 = vsel %vm4101, %v4048, %v3230
  %v4129 = vsel %vm4101, %v4050, %v3232
  %v4131 = vsel %vm4101, %v4052, %v3234
  %v4133 = vsel %vm4101, %v4054, %v3236
  %v4135 = vsel %vm4101, %v4056, %v3238
  %v4137 = vsel %vm4101, %v4058, %v3240
  %v4139 = vsel %vm4101, %v4060, %v3242
  %v4141 = vsel %vm4101, %v4062, %v3244
  %v4143 = vsel %vm4101, %v4064, %v3246
  %v4145 = vsel %vm4101, %v4066, %v3248
  %v4147 = vsel %vm4101, %v4068, %v3250
  %v4149 = vsel %vm4101, %v4070, %v3252
  %v4151 = vsel %vm4101, %v4072, %v3254
  %v4153 = vsel %vm4101, %v4074, %v3256
  %v4155 = vsel %vm4101, %v4076, %v3258
  %v4157 = vsel %vm4101, %v4078, %v3260
  %v4159 = vsel %vm4101, %v4080, %v3262
  %v4161 = vsel %vm4101, %v4082, %v3264
  %v4163 = vsel %vm4101, %v4084, %v3266
  %v4165 = vsel %vm4101, %v4086, %v3268
  %v4167 = vsel %vm4101, %v4088, %v3270
  %v4169 = vsel %vm4101, %v4090, %v3272
  %v4171 = vsel %vm4101, %v4092, %v3274
  %v4173 = vsel %vm4101, %v4094, %v3276
  %v4175 = vsel %vm4101, %v4096, %v3278
  %v4177 = vsel %vm4101, %v4098, %v3280
  %v4179 = vsel %vm4101, %v4100, %v3282
  %vm4180 = vcmask 195584
  %v4182 = vsel %vm4180, %v4103, %v3296
  %v4184 = vsel %vm4180, %v4105, %v3298
  %v4186 = vsel %vm4180, %v4107, %v3300
  %v4188 = vsel %vm4180, %v4109, %v3302
  %v4190 = vsel %vm4180, %v4111, %v3304
  %v4192 = vsel %vm4180, %v4113, %v3306
  %v4194 = vsel %vm4180, %v4115, %v3308
  %v4196 = vsel %vm4180, %v4117, %v3310
  %v4198 = vsel %vm4180, %v4119, %v3312
  %v4200 = vsel %vm4180, %v4121, %v3314
  %v4202 = vsel %vm4180, %v4123, %v3316
  %v4204 = vsel %vm4180, %v4125, %v3318
  %v4206 = vsel %vm4180, %v4127, %v3320
  %v4208 = vsel %vm4180, %v4129, %v3322
  %v4210 = vsel %vm4180, %v4131, %v3324
  %v4212 = vsel %vm4180, %v4133, %v3326
  %v4214 = vsel %vm4180, %v4135, %v3328
  %v4216 = vsel %vm4180, %v4137, %v3330
  %v4218 = vsel %vm4180, %v4139, %v3332
  %v4220 = vsel %vm4180, %v4141, %v3334
  %v4222 = vsel %vm4180, %v4143, %v3336
  %v4224 = vsel %vm4180, %v4145, %v3338
  %v4226 = vsel %vm4180, %v4147, %v3340
  %v4228 = vsel %vm4180, %v4149, %v3342
  %v4230 = vsel %vm4180, %v4151, %v3344
  %v4232 = vsel %vm4180, %v4153, %v3346
  %v4234 = vsel %vm4180, %v4155, %v3348
  %v4236 = vsel %vm4180, %v4157, %v3350
  %v4238 = vsel %vm4180, %v4159, %v3352
  %v4240 = vsel %vm4180, %v4161, %v3354
  %v4242 = vsel %vm4180, %v4163, %v3356
  %v4244 = vsel %vm4180, %v4165, %v3358
  %v4246 = vsel %vm4180, %v4167, %v3360
  %v4248 = vsel %vm4180, %v4169, %v3362
  %v4250 = vsel %vm4180, %v4171, %v3364
  %v4252 = vsel %vm4180, %v4173, %v3366
  %v4254 = vsel %vm4180, %v4175, %v3368
  %v4256 = vsel %vm4180, %v4177, %v3370
  %v4258 = vsel %vm4180, %v4179, %v3372
  %vm4259 = vcmask 228352
  %v4261 = vsel %vm4259, %v4182, %v3548
  %v4263 = vsel %vm4259, %v4184, %v3550
  %v4265 = vsel %vm4259, %v4186, %v3552
  %v4267 = vsel %vm4259, %v4188, %v3554
  %v4269 = vsel %vm4259, %v4190, %v3556
  %v4271 = vsel %vm4259, %v4192, %v3558
  %v4273 = vsel %vm4259, %v4194, %v3560
  %v4275 = vsel %vm4259, %v4196, %v3562
  %v4277 = vsel %vm4259, %v4198, %v3564
  %v4279 = vsel %vm4259, %v4200, %v3566
  %v4281 = vsel %vm4259, %v4202, %v3568
  %v4283 = vsel %vm4259, %v4204, %v3570
  %v4285 = vsel %vm4259, %v4206, %v3572
  %v4287 = vsel %vm4259, %v4208, %v3574
  %v4289 = vsel %vm4259, %v4210, %v3576
  %v4291 = vsel %vm4259, %v4212, %v3578
  %v4293 = vsel %vm4259, %v4214, %v3580
  %v4295 = vsel %vm4259, %v4216, %v3582
  %v4297 = vsel %vm4259, %v4218, %v3584
  %v4299 = vsel %vm4259, %v4220, %v3586
  %v4301 = vsel %vm4259, %v4222, %v3588
  %v4303 = vsel %vm4259, %v4224, %v3590
  %v4305 = vsel %vm4259, %v4226, %v3592
  %v4307 = vsel %vm4259, %v4228, %v3594
  %v4309 = vsel %vm4259, %v4230, %v3596
  %v4311 = vsel %vm4259, %v4232, %v3598
  %v4313 = vsel %vm4259, %v4234, %v3600
  %v4315 = vsel %vm4259, %v4236, %v3602
  %v4317 = vsel %vm4259, %v4238, %v3604
  %v4319 = vsel %vm4259, %v4240, %v3606
  %v4321 = vsel %vm4259, %v4242, %v3608
  %v4323 = vsel %vm4259, %v4244, %v3610
  %v4325 = vsel %vm4259, %v4246, %v3612
  %v4327 = vsel %vm4259, %v4248, %v3614
  %v4329 = vsel %vm4259, %v4250, %v3616
  %v4331 = vsel %vm4259, %v4252, %v3618
  %v4333 = vsel %vm4259, %v4254, %v3620
  %v4335 = vsel %vm4259, %v4256, %v3622
  %v4337 = vsel %vm4259, %v4258, %v3624
  %vm4338 = vcmask 261120
  %v4340 = vsel %vm4338, %v4261, %v3707
  %v4342 = vsel %vm4338, %v4263, %v3709
  %v4344 = vsel %vm4338, %v4265, %v3711
  %v4346 = vsel %vm4338, %v4267, %v3713
  %v4348 = vsel %vm4338, %v4269, %v3715
  %v4350 = vsel %vm4338, %v4271, %v3717
  %v4352 = vsel %vm4338, %v4273, %v3719
  %v4354 = vsel %vm4338, %v4275, %v3721
  %v4356 = vsel %vm4338, %v4277, %v3723
  %v4358 = vsel %vm4338, %v4279, %v3725
  %v4360 = vsel %vm4338, %v4281, %v3727
  %v4362 = vsel %vm4338, %v4283, %v3729
  %v4364 = vsel %vm4338, %v4285, %v3731
  %v4366 = vsel %vm4338, %v4287, %v3733
  %v4368 = vsel %vm4338, %v4289, %v3735
  %v4370 = vsel %vm4338, %v4291, %v3737
  %v4372 = vsel %vm4338, %v4293, %v3739
  %v4374 = vsel %vm4338, %v4295, %v3741
  %v4376 = vsel %vm4338, %v4297, %v3743
  %v4378 = vsel %vm4338, %v4299, %v3745
  %v4380 = vsel %vm4338, %v4301, %v3747
  %v4382 = vsel %vm4338, %v4303, %v3749
  %v4384 = vsel %vm4338, %v4305, %v3751
  %v4386 = vsel %vm4338, %v4307, %v3753
  %v4388 = vsel %vm4338, %v4309, %v3755
  %v4390 = vsel %vm4338, %v4311, %v3757
  %v4392 = vsel %vm4338, %v4313, %v3759
  %v4394 = vsel %vm4338, %v4315, %v3761
  %v4396 = vsel %vm4338, %v4317, %v3763
  %v4398 = vsel %vm4338, %v4319, %v3765
  %v4400 = vsel %vm4338, %v4321, %v3767
  %v4402 = vsel %vm4338, %v4323, %v3769
  %v4404 = vsel %vm4338, %v4325, %v3771
  %v4406 = vsel %vm4338, %v4327, %v3773
  %v4408 = vsel %vm4338, %v4329, %v3775
  %v4410 = vsel %vm4338, %v4331, %v3777
  %v4412 = vsel %vm4338, %v4333, %v3779
  %v4414 = vsel %vm4338, %v4335, %v3781
  %v4416 = vsel %vm4338, %v4337, %v3783
  %v4417 = vld [vmem:[%s1] sm:$0xf]
  %v4418 = vld [vmem:[%s1 + $0x4] sm:$0xf]
  %v4419 = vld [vmem:[%s1 + $0x8] sm:$0xf]
  %v4420 = vld [vmem:[%s1 + $0xc] sm:$0xf]
  %v4421 = vld [vmem:[%s1 + $0x10] sm:$0x3]
  %vm4422 = vsmask.f32 5376
  %v4423 = vshrl.u32 %v4340, 16
  %v4425 = vrot.slane %v4423, 2
  %v4426 = vshll.u32 %v4340, 16
  %v4428 = vrot.slane %v4426, 3
  %v4429 = vor.u32 %v4425, %v4428
  %v4430 = vshrl.u32 %v4342, 16
  %v4432 = vrot.slane %v4430, 2
  %v4433 = vshll.u32 %v4342, 16
  %v4435 = vrot.slane %v4433, 3
  %v4436 = vor.u32 %v4432, %v4435
  %v4437 = vsel %vm4422, %v4429, %v4436
  %v4438 = vshrl.u32 %v4344, 16
  %v4440 = vrot.slane %v4438, 2
  %v4441 = vshll.u32 %v4344, 16
  %v4443 = vrot.slane %v4441, 3
  %v4444 = vor.u32 %v4440, %v4443
  %v4445 = vsel %vm4422, %v4436, %v4444
  %v4446 = vshrl.u32 %v4346, 16
  %v4448 = vrot.slane %v4446, 2
  %v4449 = vshll.u32 %v4346, 16
  %v4451 = vrot.slane %v4449, 3
  %v4452 = vor.u32 %v4448, %v4451
  %v4453 = vsel %vm4422, %v4444, %v4452
  %v4454 = vshrl.u32 %v4348, 16
  %v4456 = vrot.slane %v4454, 2
  %v4457 = vshll.u32 %v4348, 16
  %v4459 = vrot.slane %v4457, 3
  %v4460 = vor.u32 %v4456, %v4459
  %v4461 = vsel %vm4422, %v4452, %v4460
  %v4462 = vshrl.u32 %v4350, 16
  %v4464 = vrot.slane %v4462, 2
  %v4465 = vshll.u32 %v4350, 16
  %v4467 = vrot.slane %v4465, 3
  %v4468 = vor.u32 %v4464, %v4467
  %v4469 = vsel %vm4422, %v4460, %v4468
  %v4470 = vshrl.u32 %v4352, 16
  %v4472 = vrot.slane %v4470, 2
  %v4473 = vshll.u32 %v4352, 16
  %v4475 = vrot.slane %v4473, 3
  %v4476 = vor.u32 %v4472, %v4475
  %v4477 = vsel %vm4422, %v4468, %v4476
  %v4478 = vshrl.u32 %v4354, 16
  %v4480 = vrot.slane %v4478, 2
  %v4481 = vshll.u32 %v4354, 16
  %v4483 = vrot.slane %v4481, 3
  %v4484 = vor.u32 %v4480, %v4483
  %v4485 = vsel %vm4422, %v4476, %v4484
  %v4486 = vshrl.u32 %v4356, 16
  %v4488 = vrot.slane %v4486, 2
  %v4489 = vshll.u32 %v4356, 16
  %v4491 = vrot.slane %v4489, 3
  %v4492 = vor.u32 %v4488, %v4491
  %v4493 = vsel %vm4422, %v4484, %v4492
  %v4494 = vshrl.u32 %v4358, 16
  %v4496 = vrot.slane %v4494, 2
  %v4497 = vshll.u32 %v4358, 16
  %v4499 = vrot.slane %v4497, 3
  %v4500 = vor.u32 %v4496, %v4499
  %v4501 = vsel %vm4422, %v4492, %v4500
  %v4502 = vshrl.u32 %v4360, 16
  %v4504 = vrot.slane %v4502, 2
  %v4505 = vshll.u32 %v4360, 16
  %v4507 = vrot.slane %v4505, 3
  %v4508 = vor.u32 %v4504, %v4507
  %v4509 = vsel %vm4422, %v4500, %v4508
  %v4510 = vshrl.u32 %v4362, 16
  %v4512 = vrot.slane %v4510, 2
  %v4513 = vshll.u32 %v4362, 16
  %v4515 = vrot.slane %v4513, 3
  %v4516 = vor.u32 %v4512, %v4515
  %v4517 = vsel %vm4422, %v4508, %v4516
  %v4518 = vshrl.u32 %v4364, 16
  %v4520 = vrot.slane %v4518, 2
  %v4521 = vshll.u32 %v4364, 16
  %v4523 = vrot.slane %v4521, 3
  %v4524 = vor.u32 %v4520, %v4523
  %v4525 = vsel %vm4422, %v4516, %v4524
  %v4526 = vshrl.u32 %v4366, 16
  %v4528 = vrot.slane %v4526, 2
  %v4529 = vshll.u32 %v4366, 16
  %v4531 = vrot.slane %v4529, 3
  %v4532 = vor.u32 %v4528, %v4531
  %v4533 = vsel %vm4422, %v4524, %v4532
  %v4534 = vshrl.u32 %v4368, 16
  %v4536 = vrot.slane %v4534, 2
  %v4537 = vshll.u32 %v4368, 16
  %v4539 = vrot.slane %v4537, 3
  %v4540 = vor.u32 %v4536, %v4539
  %v4541 = vsel %vm4422, %v4532, %v4540
  %v4542 = vshrl.u32 %v4370, 16
  %v4544 = vrot.slane %v4542, 2
  %v4545 = vshll.u32 %v4370, 16
  %v4547 = vrot.slane %v4545, 3
  %v4548 = vor.u32 %v4544, %v4547
  %v4549 = vsel %vm4422, %v4540, %v4548
  %v4550 = vshrl.u32 %v4372, 16
  %v4552 = vrot.slane %v4550, 2
  %v4553 = vshll.u32 %v4372, 16
  %v4555 = vrot.slane %v4553, 3
  %v4556 = vor.u32 %v4552, %v4555
  %v4557 = vsel %vm4422, %v4548, %v4556
  %v4558 = vshrl.u32 %v4374, 16
  %v4560 = vrot.slane %v4558, 2
  %v4561 = vshll.u32 %v4374, 16
  %v4563 = vrot.slane %v4561, 3
  %v4564 = vor.u32 %v4560, %v4563
  %v4565 = vsel %vm4422, %v4556, %v4564
  %v4566 = vshrl.u32 %v4376, 16
  %v4568 = vrot.slane %v4566, 2
  %v4569 = vshll.u32 %v4376, 16
  %v4571 = vrot.slane %v4569, 3
  %v4572 = vor.u32 %v4568, %v4571
  %v4573 = vsel %vm4422, %v4564, %v4572
  %v4574 = vshrl.u32 %v4378, 16
  %v4576 = vrot.slane %v4574, 2
  %v4577 = vshll.u32 %v4378, 16
  %v4579 = vrot.slane %v4577, 3
  %v4580 = vor.u32 %v4576, %v4579
  %v4581 = vsel %vm4422, %v4572, %v4580
  %v4582 = vshrl.u32 %v4380, 16
  %v4584 = vrot.slane %v4582, 2
  %v4585 = vshll.u32 %v4380, 16
  %v4587 = vrot.slane %v4585, 3
  %v4588 = vor.u32 %v4584, %v4587
  %v4589 = vsel %vm4422, %v4580, %v4588
  %v4590 = vshrl.u32 %v4382, 16
  %v4592 = vrot.slane %v4590, 2
  %v4593 = vshll.u32 %v4382, 16
  %v4595 = vrot.slane %v4593, 3
  %v4596 = vor.u32 %v4592, %v4595
  %v4597 = vsel %vm4422, %v4588, %v4596
  %v4598 = vshrl.u32 %v4384, 16
  %v4600 = vrot.slane %v4598, 2
  %v4601 = vshll.u32 %v4384, 16
  %v4603 = vrot.slane %v4601, 3
  %v4604 = vor.u32 %v4600, %v4603
  %v4605 = vsel %vm4422, %v4596, %v4604
  %v4606 = vshrl.u32 %v4386, 16
  %v4608 = vrot.slane %v4606, 2
  %v4609 = vshll.u32 %v4386, 16
  %v4611 = vrot.slane %v4609, 3
  %v4612 = vor.u32 %v4608, %v4611
  %v4613 = vsel %vm4422, %v4604, %v4612
  %v4614 = vshrl.u32 %v4388, 16
  %v4616 = vrot.slane %v4614, 2
  %v4617 = vshll.u32 %v4388, 16
  %v4619 = vrot.slane %v4617, 3
  %v4620 = vor.u32 %v4616, %v4619
  %v4621 = vsel %vm4422, %v4612, %v4620
  %v4622 = vshrl.u32 %v4390, 16
  %v4624 = vrot.slane %v4622, 2
  %v4625 = vshll.u32 %v4390, 16
  %v4627 = vrot.slane %v4625, 3
  %v4628 = vor.u32 %v4624, %v4627
  %v4629 = vsel %vm4422, %v4620, %v4628
  %v4630 = vshrl.u32 %v4392, 16
  %v4632 = vrot.slane %v4630, 2
  %v4633 = vshll.u32 %v4392, 16
  %v4635 = vrot.slane %v4633, 3
  %v4636 = vor.u32 %v4632, %v4635
  %v4637 = vsel %vm4422, %v4628, %v4636
  %v4638 = vshrl.u32 %v4394, 16
  %v4640 = vrot.slane %v4638, 2
  %v4641 = vshll.u32 %v4394, 16
  %v4643 = vrot.slane %v4641, 3
  %v4644 = vor.u32 %v4640, %v4643
  %v4645 = vsel %vm4422, %v4636, %v4644
  %v4646 = vshrl.u32 %v4396, 16
  %v4648 = vrot.slane %v4646, 2
  %v4649 = vshll.u32 %v4396, 16
  %v4651 = vrot.slane %v4649, 3
  %v4652 = vor.u32 %v4648, %v4651
  %v4653 = vsel %vm4422, %v4644, %v4652
  %v4654 = vshrl.u32 %v4398, 16
  %v4656 = vrot.slane %v4654, 2
  %v4657 = vshll.u32 %v4398, 16
  %v4659 = vrot.slane %v4657, 3
  %v4660 = vor.u32 %v4656, %v4659
  %v4661 = vsel %vm4422, %v4652, %v4660
  %v4662 = vshrl.u32 %v4400, 16
  %v4664 = vrot.slane %v4662, 2
  %v4665 = vshll.u32 %v4400, 16
  %v4667 = vrot.slane %v4665, 3
  %v4668 = vor.u32 %v4664, %v4667
  %v4669 = vsel %vm4422, %v4660, %v4668
  %v4670 = vshrl.u32 %v4402, 16
  %v4672 = vrot.slane %v4670, 2
  %v4673 = vshll.u32 %v4402, 16
  %v4675 = vrot.slane %v4673, 3
  %v4676 = vor.u32 %v4672, %v4675
  %v4677 = vsel %vm4422, %v4668, %v4676
  %v4678 = vshrl.u32 %v4404, 16
  %v4680 = vrot.slane %v4678, 2
  %v4681 = vshll.u32 %v4404, 16
  %v4683 = vrot.slane %v4681, 3
  %v4684 = vor.u32 %v4680, %v4683
  %v4685 = vsel %vm4422, %v4676, %v4684
  %v4686 = vshrl.u32 %v4406, 16
  %v4688 = vrot.slane %v4686, 2
  %v4689 = vshll.u32 %v4406, 16
  %v4691 = vrot.slane %v4689, 3
  %v4692 = vor.u32 %v4688, %v4691
  %v4693 = vsel %vm4422, %v4684, %v4692
  %v4694 = vshrl.u32 %v4408, 16
  %v4696 = vrot.slane %v4694, 2
  %v4697 = vshll.u32 %v4408, 16
  %v4699 = vrot.slane %v4697, 3
  %v4700 = vor.u32 %v4696, %v4699
  %v4701 = vsel %vm4422, %v4692, %v4700
  %v4702 = vshrl.u32 %v4410, 16
  %v4704 = vrot.slane %v4702, 2
  %v4705 = vshll.u32 %v4410, 16
  %v4707 = vrot.slane %v4705, 3
  %v4708 = vor.u32 %v4704, %v4707
  %v4709 = vsel %vm4422, %v4700, %v4708
  %v4710 = vshrl.u32 %v4412, 16
  %v4712 = vrot.slane %v4710, 2
  %v4713 = vshll.u32 %v4412, 16
  %v4715 = vrot.slane %v4713, 3
  %v4716 = vor.u32 %v4712, %v4715
  %v4717 = vsel %vm4422, %v4708, %v4716
  %v4718 = vshrl.u32 %v4414, 16
  %v4720 = vrot.slane %v4718, 2
  %v4721 = vshll.u32 %v4414, 16
  %v4723 = vrot.slane %v4721, 3
  %v4724 = vor.u32 %v4720, %v4723
  %v4725 = vsel %vm4422, %v4716, %v4724
  %v4726 = vshrl.u32 %v4416, 16
  %v4728 = vrot.slane %v4726, 2
  %v4729 = vshll.u32 %v4416, 16
  %v4731 = vrot.slane %v4729, 3
  %v4732 = vor.u32 %v4728, %v4731
  %v4733 = vsel %vm4422, %v4724, %v4732
  %v4739 = vunpack.c.l.b16 %v4417
  %v4740 = vunpack.c.l.b16 %v4418
  %v4741 = vunpack.c.l.b16 %v4419
  %v4742 = vunpack.c.l.b16 %v4420
  %v4743 = vunpack.c.l.b16 %v4421
  %v4744 = vpack.c.b16 %v4740, %v4739
  %v4745 = vpack.c.b16 %v4742, %v4741
  %v4746 = vpack.c.b16 %v4743, %v4743
  %vm4749 = vcmask 293888
  %v4751 = vsel %vm4749, %v4437, 0
  %v4754 = vsel %vm4749, %v4445, 0
  %v4757 = vsel %vm4749, %v4453, 0
  %v4760 = vsel %vm4749, %v4461, 0
  %v4763 = vsel %vm4749, %v4469, 0
  %v4766 = vsel %vm4749, %v4477, 0
  %v4769 = vsel %vm4749, %v4485, 0
  %v4772 = vsel %vm4749, %v4493, 0
  %v4775 = vsel %vm4749, %v4501, 0
  %v4778 = vsel %vm4749, %v4509, 0
  %v4781 = vsel %vm4749, %v4517, 0
  %v4784 = vsel %vm4749, %v4525, 0
  %v4787 = vsel %vm4749, %v4533, 0
  %v4790 = vsel %vm4749, %v4541, 0
  %v4793 = vsel %vm4749, %v4549, 0
  %v4796 = vsel %vm4749, %v4557, 0
  %v4799 = vsel %vm4749, %v4565, 0
  %v4802 = vsel %vm4749, %v4573, 0
  %v4805 = vsel %vm4749, %v4581, 0
  %v4808 = vsel %vm4749, %v4589, 0
  %v4811 = vsel %vm4749, %v4597, 0
  %v4814 = vsel %vm4749, %v4605, 0
  %v4817 = vsel %vm4749, %v4613, 0
  %v4820 = vsel %vm4749, %v4621, 0
  %v4823 = vsel %vm4749, %v4629, 0
  %v4826 = vsel %vm4749, %v4637, 0
  %v4829 = vsel %vm4749, %v4645, 0
  %v4832 = vsel %vm4749, %v4653, 0
  %v4835 = vsel %vm4749, %v4661, 0
  %v4838 = vsel %vm4749, %v4669, 0
  %v4841 = vsel %vm4749, %v4677, 0
  %v4844 = vsel %vm4749, %v4685, 0
  %v4847 = vsel %vm4749, %v4693, 0
  %v4850 = vsel %vm4749, %v4701, 0
  %v4853 = vsel %vm4749, %v4709, 0
  %v4856 = vsel %vm4749, %v4717, 0
  %v4859 = vsel %vm4749, %v4725, 0
  %v4862 = vsel %vm4749, %v4733, 0
  %v4865 = vsel %vm4749, %v4732, 0
  %vm4867 = vcmask 1041408
  %v4869 = vsel %vm4867, %v4746, 0
  %4871 = vmatprep.subr.bf16.mxu0 0
  %4872 = vmatpush1.bf16.msra.mxu0 %v4744
  %4873 = vmatprep.subr.bf16.mxu0 0
  %4874 = vmatpush1.bf16.msra.mxu0 %v4745
  %4875 = vmatprep.subr.bf16.mxu0 0
  %4876 = vmatpush1.bf16.msra.mxu0 %v4869
  %4877 = vmatprep.subr.bf16.mxu0 0
  %4878 = vmatpush1.bf16.msra.mxu0 0
  %4879 = vmatprep.subr.bf16.mxu0 0
  %4880 = vmatpush1.bf16.msra.mxu0 0
  %4881 = vmatprep.subr.bf16.mxu0 0
  %4882 = vmatpush1.bf16.msra.mxu0 0
  %4883 = vmatprep.subr.bf16.mxu0 0
  %4884 = vmatpush1.bf16.msra.mxu0 0
  %4885 = vmatprep.subr.bf16.mxu0 0
  %4886 = vmatpush1.bf16.msra.mxu0 0
  %4887 = vmatprep.subr.bf16.mxu0 0
  %4888 = vmatpush1.bf16.msra.mxu0 0
  %4889 = vmatprep.subr.bf16.mxu0 0
  %4890 = vmatpush1.bf16.msra.mxu0 0
  %4891 = vmatprep.subr.bf16.mxu0 0
  %4892 = vmatpush1.bf16.msra.mxu0 0
  %4893 = vmatprep.subr.bf16.mxu0 0
  %4894 = vmatpush1.bf16.msra.mxu0 0
  %4895 = vmatprep.subr.bf16.mxu0 0
  %4896 = vmatpush1.bf16.msra.mxu0 0
  %4897 = vmatprep.subr.bf16.mxu0 0
  %4898 = vmatpush1.bf16.msra.mxu0 0
  %4899 = vmatprep.subr.bf16.mxu0 0
  %4900 = vmatpush1.bf16.msra.mxu0 0
  %4901 = vmatprep.subr.bf16.mxu0 0
  %4902 = vmatpush1.bf16.msra.mxu0 0
  %4903 = vmatprep.mubr.bf16.mxu0 0
  %4904 = vmatmul.mubr.bf16.gmra.mrb[0].mxu0 %v4751
  %v4905 = vpop.f32.mrb[0].mxu0
  %v4906 = vadd.f32 0.0, %v4905
  %v4907 = vpop.f32.mrb[0].mxu0
  %v4908 = vpop.f32.mrb[0].mxu0
  %v4909 = vadd.f32 0.0, %v4908
  %v4910 = vpop.f32.mrb[0].mxu0
  %4911 = vmatprep.mubr.bf16.mxu0 0
  %4912 = vmatmul.mubr.bf16.gmra.mrb[0].mxu0 %v4754
  %v4913 = vpop.f32.mrb[0].mxu0
  %v4914 = vadd.f32 0.0, %v4913
  %v4915 = vpop.f32.mrb[0].mxu0
  %v4916 = vpop.f32.mrb[0].mxu0
  %v4917 = vadd.f32 0.0, %v4916
  %v4918 = vpop.f32.mrb[0].mxu0
  %4919 = vmatprep.mubr.bf16.mxu0 0
  %4920 = vmatmul.mubr.bf16.gmra.mrb[0].mxu0 %v4757
  %v4921 = vpop.f32.mrb[0].mxu0
  %v4922 = vadd.f32 0.0, %v4921
  %v4923 = vpop.f32.mrb[0].mxu0
  %v4924 = vpop.f32.mrb[0].mxu0
  %v4925 = vadd.f32 0.0, %v4924
  %v4926 = vpop.f32.mrb[0].mxu0
  %4927 = vmatprep.mubr.bf16.mxu0 0
  %4928 = vmatmul.mubr.bf16.gmra.mrb[0].mxu0 %v4760
  %v4929 = vpop.f32.mrb[0].mxu0
  %v4930 = vadd.f32 0.0, %v4929
  %v4931 = vpop.f32.mrb[0].mxu0
  %v4932 = vpop.f32.mrb[0].mxu0
  %v4933 = vadd.f32 0.0, %v4932
  %v4934 = vpop.f32.mrb[0].mxu0
  %4935 = vmatprep.mubr.bf16.mxu0 0
  %4936 = vmatmul.mubr.bf16.gmra.mrb[0].mxu0 %v4763
  %v4937 = vpop.f32.mrb[0].mxu0
  %v4938 = vadd.f32 0.0, %v4937
  %v4939 = vpop.f32.mrb[0].mxu0
  %v4940 = vpop.f32.mrb[0].mxu0
  %v4941 = vadd.f32 0.0, %v4940
  %v4942 = vpop.f32.mrb[0].mxu0
  %4943 = vmatprep.mubr.bf16.mxu0 0
  %4944 = vmatmul.mubr.bf16.gmra.mrb[0].mxu0 %v4766
  %v4945 = vpop.f32.mrb[0].mxu0
  %v4946 = vadd.f32 0.0, %v4945
  %v4947 = vpop.f32.mrb[0].mxu0
  %v4948 = vpop.f32.mrb[0].mxu0
  %v4949 = vadd.f32 0.0, %v4948
  %v4950 = vpop.f32.mrb[0].mxu0
  %4951 = vmatprep.mubr.bf16.mxu0 0
  %4952 = vmatmul.mubr.bf16.gmra.mrb[0].mxu0 %v4769
  %v4953 = vpop.f32.mrb[0].mxu0
  %v4954 = vadd.f32 0.0, %v4953
  %v4955 = vpop.f32.mrb[0].mxu0
  %v4956 = vpop.f32.mrb[0].mxu0
  %v4957 = vadd.f32 0.0, %v4956
  %v4958 = vpop.f32.mrb[0].mxu0
  %4959 = vmatprep.mubr.bf16.mxu0 0
  %4960 = vmatmul.mubr.bf16.gmra.mrb[0].mxu0 %v4772
  %v4961 = vpop.f32.mrb[0].mxu0
  %v4962 = vadd.f32 0.0, %v4961
  %v4963 = vpop.f32.mrb[0].mxu0
  %v4964 = vpop.f32.mrb[0].mxu0
  %v4965 = vadd.f32 0.0, %v4964
  %v4966 = vpop.f32.mrb[0].mxu0
  %4967 = vmatprep.mubr.bf16.mxu0 0
  %4968 = vmatmul.mubr.bf16.gmra.mrb[0].mxu0 %v4775
  %v4969 = vpop.f32.mrb[0].mxu0
  %v4970 = vadd.f32 0.0, %v4969
  %v4971 = vpop.f32.mrb[0].mxu0
  %v4972 = vpop.f32.mrb[0].mxu0
  %v4973 = vadd.f32 0.0, %v4972
  %v4974 = vpop.f32.mrb[0].mxu0
  %4975 = vmatprep.mubr.bf16.mxu0 0
  %4976 = vmatmul.mubr.bf16.gmra.mrb[0].mxu0 %v4778
  %v4977 = vpop.f32.mrb[0].mxu0
  %v4978 = vadd.f32 0.0, %v4977
  %v4979 = vpop.f32.mrb[0].mxu0
  %v4980 = vpop.f32.mrb[0].mxu0
  %v4981 = vadd.f32 0.0, %v4980
  %v4982 = vpop.f32.mrb[0].mxu0
  %4983 = vmatprep.mubr.bf16.mxu0 0
  %4984 = vmatmul.mubr.bf16.gmra.mrb[0].mxu0 %v4781
  %v4985 = vpop.f32.mrb[0].mxu0
  %v4986 = vadd.f32 0.0, %v4985
  %v4987 = vpop.f32.mrb[0].mxu0
  %v4988 = vpop.f32.mrb[0].mxu0
  %v4989 = vadd.f32 0.0, %v4988
  %v4990 = vpop.f32.mrb[0].mxu0
  %4991 = vmatprep.mubr.bf16.mxu0 0
  %4992 = vmatmul.mubr.bf16.gmra.mrb[0].mxu0 %v4784
  %v4993 = vpop.f32.mrb[0].mxu0
  %v4994 = vadd.f32 0.0, %v4993
  %v4995 = vpop.f32.mrb[0].mxu0
  %v4996 = vpop.f32.mrb[0].mxu0
  %v4997 = vadd.f32 0.0, %v4996
  %v4998 = vpop.f32.mrb[0].mxu0
  %4999 = vmatprep.mubr.bf16.mxu0 0
  %5000 = vmatmul.mubr.bf16.gmra.mrb[0].mxu0 %v4787
  %v5001 = vpop.f32.mrb[0].mxu0
  %v5002 = vadd.f32 0.0, %v5001
  %v5003 = vpop.f32.mrb[0].mxu0
  %v5004 = vpop.f32.mrb[0].mxu0
  %v5005 = vadd.f32 0.0, %v5004
  %v5006 = vpop.f32.mrb[0].mxu0
  %5007 = vmatprep.mubr.bf16.mxu0 0
  %5008 = vmatmul.mubr.bf16.gmra.mrb[0].mxu0 %v4790
  %v5009 = vpop.f32.mrb[0].mxu0
  %v5010 = vadd.f32 0.0, %v5009
  %v5011 = vpop.f32.mrb[0].mxu0
  %v5012 = vpop.f32.mrb[0].mxu0
  %v5013 = vadd.f32 0.0, %v5012
  %v5014 = vpop.f32.mrb[0].mxu0
  %5015 = vmatprep.mubr.bf16.mxu0 0
  %5016 = vmatmul.mubr.bf16.gmra.mrb[0].mxu0 %v4793
  %v5017 = vpop.f32.mrb[0].mxu0
  %v5018 = vadd.f32 0.0, %v5017
  %v5019 = vpop.f32.mrb[0].mxu0
  %v5020 = vpop.f32.mrb[0].mxu0
  %v5021 = vadd.f32 0.0, %v5020
  %v5022 = vpop.f32.mrb[0].mxu0
  %5023 = vmatprep.mubr.bf16.mxu0 0
  %5024 = vmatmul.mubr.bf16.gmra.mrb[0].mxu0 %v4796
  %v5025 = vpop.f32.mrb[0].mxu0
  %v5026 = vadd.f32 0.0, %v5025
  %v5027 = vpop.f32.mrb[0].mxu0
  %v5028 = vpop.f32.mrb[0].mxu0
  %v5029 = vadd.f32 0.0, %v5028
  %v5030 = vpop.f32.mrb[0].mxu0
  %5031 = vmatprep.mubr.bf16.mxu0 0
  %5032 = vmatmul.mubr.bf16.gmra.mrb[0].mxu0 %v4799
  %v5033 = vpop.f32.mrb[0].mxu0
  %v5034 = vadd.f32 0.0, %v5033
  %v5035 = vpop.f32.mrb[0].mxu0
  %v5036 = vpop.f32.mrb[0].mxu0
  %v5037 = vadd.f32 0.0, %v5036
  %v5038 = vpop.f32.mrb[0].mxu0
  %5039 = vmatprep.mubr.bf16.mxu0 0
  %5040 = vmatmul.mubr.bf16.gmra.mrb[0].mxu0 %v4802
  %v5041 = vpop.f32.mrb[0].mxu0
  %v5042 = vadd.f32 0.0, %v5041
  %v5043 = vpop.f32.mrb[0].mxu0
  %v5044 = vpop.f32.mrb[0].mxu0
  %v5045 = vadd.f32 0.0, %v5044
  %v5046 = vpop.f32.mrb[0].mxu0
  %5047 = vmatprep.mubr.bf16.mxu0 0
  %5048 = vmatmul.mubr.bf16.gmra.mrb[0].mxu0 %v4805
  %v5049 = vpop.f32.mrb[0].mxu0
  %v5050 = vadd.f32 0.0, %v5049
  %v5051 = vpop.f32.mrb[0].mxu0
  %v5052 = vpop.f32.mrb[0].mxu0
  %v5053 = vadd.f32 0.0, %v5052
  %v5054 = vpop.f32.mrb[0].mxu0
  %5055 = vmatprep.mubr.bf16.mxu0 0
  %5056 = vmatmul.mubr.bf16.gmra.mrb[0].mxu0 %v4808
  %v5057 = vpop.f32.mrb[0].mxu0
  %v5058 = vadd.f32 0.0, %v5057
  %v5059 = vpop.f32.mrb[0].mxu0
  %v5060 = vpop.f32.mrb[0].mxu0
  %v5061 = vadd.f32 0.0, %v5060
  %v5062 = vpop.f32.mrb[0].mxu0
  %5063 = vmatprep.mubr.bf16.mxu0 0
  %5064 = vmatmul.mubr.bf16.gmra.mrb[0].mxu0 %v4811
  %v5065 = vpop.f32.mrb[0].mxu0
  %v5066 = vadd.f32 0.0, %v5065
  %v5067 = vpop.f32.mrb[0].mxu0
  %v5068 = vpop.f32.mrb[0].mxu0
  %v5069 = vadd.f32 0.0, %v5068
  %v5070 = vpop.f32.mrb[0].mxu0
  %5071 = vmatprep.mubr.bf16.mxu0 0
  %5072 = vmatmul.mubr.bf16.gmra.mrb[0].mxu0 %v4814
  %v5073 = vpop.f32.mrb[0].mxu0
  %v5074 = vadd.f32 0.0, %v5073
  %v5075 = vpop.f32.mrb[0].mxu0
  %v5076 = vpop.f32.mrb[0].mxu0
  %v5077 = vadd.f32 0.0, %v5076
  %v5078 = vpop.f32.mrb[0].mxu0
  %5079 = vmatprep.mubr.bf16.mxu0 0
  %5080 = vmatmul.mubr.bf16.gmra.mrb[0].mxu0 %v4817
  %v5081 = vpop.f32.mrb[0].mxu0
  %v5082 = vadd.f32 0.0, %v5081
  %v5083 = vpop.f32.mrb[0].mxu0
  %v5084 = vpop.f32.mrb[0].mxu0
  %v5085 = vadd.f32 0.0, %v5084
  %v5086 = vpop.f32.mrb[0].mxu0
  %5087 = vmatprep.mubr.bf16.mxu0 0
  %5088 = vmatmul.mubr.bf16.gmra.mrb[0].mxu0 %v4820
  %v5089 = vpop.f32.mrb[0].mxu0
  %v5090 = vadd.f32 0.0, %v5089
  %v5091 = vpop.f32.mrb[0].mxu0
  %v5092 = vpop.f32.mrb[0].mxu0
  %v5093 = vadd.f32 0.0, %v5092
  %v5094 = vpop.f32.mrb[0].mxu0
  %5095 = vmatprep.mubr.bf16.mxu0 0
  %5096 = vmatmul.mubr.bf16.gmra.mrb[0].mxu0 %v4823
  %v5097 = vpop.f32.mrb[0].mxu0
  %v5098 = vadd.f32 0.0, %v5097
  %v5099 = vpop.f32.mrb[0].mxu0
  %v5100 = vpop.f32.mrb[0].mxu0
  %v5101 = vadd.f32 0.0, %v5100
  %v5102 = vpop.f32.mrb[0].mxu0
  %5103 = vmatprep.mubr.bf16.mxu0 0
  %5104 = vmatmul.mubr.bf16.gmra.mrb[0].mxu0 %v4826
  %v5105 = vpop.f32.mrb[0].mxu0
  %v5106 = vadd.f32 0.0, %v5105
  %v5107 = vpop.f32.mrb[0].mxu0
  %v5108 = vpop.f32.mrb[0].mxu0
  %v5109 = vadd.f32 0.0, %v5108
  %v5110 = vpop.f32.mrb[0].mxu0
  %5111 = vmatprep.mubr.bf16.mxu0 0
  %5112 = vmatmul.mubr.bf16.gmra.mrb[0].mxu0 %v4829
  %v5113 = vpop.f32.mrb[0].mxu0
  %v5114 = vadd.f32 0.0, %v5113
  %v5115 = vpop.f32.mrb[0].mxu0
  %v5116 = vpop.f32.mrb[0].mxu0
  %v5117 = vadd.f32 0.0, %v5116
  %v5118 = vpop.f32.mrb[0].mxu0
  %5119 = vmatprep.mubr.bf16.mxu0 0
  %5120 = vmatmul.mubr.bf16.gmra.mrb[0].mxu0 %v4832
  %v5121 = vpop.f32.mrb[0].mxu0
  %v5122 = vadd.f32 0.0, %v5121
  %v5123 = vpop.f32.mrb[0].mxu0
  %v5124 = vpop.f32.mrb[0].mxu0
  %v5125 = vadd.f32 0.0, %v5124
  %v5126 = vpop.f32.mrb[0].mxu0
  %5127 = vmatprep.mubr.bf16.mxu0 0
  %5128 = vmatmul.mubr.bf16.gmra.mrb[0].mxu0 %v4835
  %v5129 = vpop.f32.mrb[0].mxu0
  %v5130 = vadd.f32 0.0, %v5129
  %v5131 = vpop.f32.mrb[0].mxu0
  %v5132 = vpop.f32.mrb[0].mxu0
  %v5133 = vadd.f32 0.0, %v5132
  %v5134 = vpop.f32.mrb[0].mxu0
  %5135 = vmatprep.mubr.bf16.mxu0 0
  %5136 = vmatmul.mubr.bf16.gmra.mrb[0].mxu0 %v4838
  %v5137 = vpop.f32.mrb[0].mxu0
  %v5138 = vadd.f32 0.0, %v5137
  %v5139 = vpop.f32.mrb[0].mxu0
  %v5140 = vpop.f32.mrb[0].mxu0
  %v5141 = vadd.f32 0.0, %v5140
  %v5142 = vpop.f32.mrb[0].mxu0
  %5143 = vmatprep.mubr.bf16.mxu0 0
  %5144 = vmatmul.mubr.bf16.gmra.mrb[0].mxu0 %v4841
  %v5145 = vpop.f32.mrb[0].mxu0
  %v5146 = vadd.f32 0.0, %v5145
  %v5147 = vpop.f32.mrb[0].mxu0
  %v5148 = vpop.f32.mrb[0].mxu0
  %v5149 = vadd.f32 0.0, %v5148
  %v5150 = vpop.f32.mrb[0].mxu0
  %5151 = vmatprep.mubr.bf16.mxu0 0
  %5152 = vmatmul.mubr.bf16.gmra.mrb[0].mxu0 %v4844
  %v5153 = vpop.f32.mrb[0].mxu0
  %v5154 = vadd.f32 0.0, %v5153
  %v5155 = vpop.f32.mrb[0].mxu0
  %v5156 = vpop.f32.mrb[0].mxu0
  %v5157 = vadd.f32 0.0, %v5156
  %v5158 = vpop.f32.mrb[0].mxu0
  %5159 = vmatprep.mubr.bf16.mxu0 0
  %5160 = vmatmul.mubr.bf16.gmra.mrb[0].mxu0 %v4847
  %v5161 = vpop.f32.mrb[0].mxu0
  %v5162 = vadd.f32 0.0, %v5161
  %v5163 = vpop.f32.mrb[0].mxu0
  %v5164 = vpop.f32.mrb[0].mxu0
  %v5165 = vadd.f32 0.0, %v5164
  %v5166 = vpop.f32.mrb[0].mxu0
  %5167 = vmatprep.mubr.bf16.mxu0 0
  %5168 = vmatmul.mubr.bf16.gmra.mrb[0].mxu0 %v4850
  %v5169 = vpop.f32.mrb[0].mxu0
  %v5170 = vadd.f32 0.0, %v5169
  %v5171 = vpop.f32.mrb[0].mxu0
  %v5172 = vpop.f32.mrb[0].mxu0
  %v5173 = vadd.f32 0.0, %v5172
  %v5174 = vpop.f32.mrb[0].mxu0
  %5175 = vmatprep.mubr.bf16.mxu0 0
  %5176 = vmatmul.mubr.bf16.gmra.mrb[0].mxu0 %v4853
  %v5177 = vpop.f32.mrb[0].mxu0
  %v5178 = vadd.f32 0.0, %v5177
  %v5179 = vpop.f32.mrb[0].mxu0
  %v5180 = vpop.f32.mrb[0].mxu0
  %v5181 = vadd.f32 0.0, %v5180
  %v5182 = vpop.f32.mrb[0].mxu0
  %5183 = vmatprep.mubr.bf16.mxu0 0
  %5184 = vmatmul.mubr.bf16.gmra.mrb[0].mxu0 %v4856
  %v5185 = vpop.f32.mrb[0].mxu0
  %v5186 = vadd.f32 0.0, %v5185
  %v5187 = vpop.f32.mrb[0].mxu0
  %v5188 = vpop.f32.mrb[0].mxu0
  %v5189 = vadd.f32 0.0, %v5188
  %v5190 = vpop.f32.mrb[0].mxu0
  %5191 = vmatprep.mubr.bf16.mxu0 0
  %5192 = vmatmul.mubr.bf16.gmra.mrb[0].mxu0 %v4859
  %v5193 = vpop.f32.mrb[0].mxu0
  %v5194 = vadd.f32 0.0, %v5193
  %v5195 = vpop.f32.mrb[0].mxu0
  %v5196 = vpop.f32.mrb[0].mxu0
  %v5197 = vadd.f32 0.0, %v5196
  %v5198 = vpop.f32.mrb[0].mxu0
  %5199 = vmatprep.mubr.bf16.mxu0 0
  %5200 = vmatmul.mubr.bf16.gmra.mrb[0].mxu0 %v4862
  %v5201 = vpop.f32.mrb[0].mxu0
  %v5202 = vadd.f32 0.0, %v5201
  %v5203 = vpop.f32.mrb[0].mxu0
  %v5204 = vpop.f32.mrb[0].mxu0
  %v5205 = vadd.f32 0.0, %v5204
  %v5206 = vpop.f32.mrb[0].mxu0
  %5207 = vmatprep.mubr.bf16.mxu0 0
  %5208 = vmatmul.mubr.bf16.gmra.mrb[0].mxu0 %v4865
  %v5209 = vpop.f32.mrb[0].mxu0
  %v5210 = vadd.f32 0.0, %v5209
  %v5211 = vpop.f32.mrb[0].mxu0
  %v5212 = vpop.f32.mrb[0].mxu0
  %v5213 = vpop.f32.mrb[0].mxu0
  %5214 = vdwg.mxu0
  %v5215 = vmul.f32 %v4906, %v1650
  %v5216 = vmul.f32 %v4909, %v1651
  %v5217 = vmul.f32 %v4914, %v1652
  %v5218 = vmul.f32 %v4917, %v1653
  %v5219 = vmul.f32 %v4922, %v1654
  %v5220 = vmul.f32 %v4925, %v1655
  %v5221 = vmul.f32 %v4930, %v1656
  %v5222 = vmul.f32 %v4933, %v1657
  %v5223 = vmul.f32 %v4938, %v1658
  %v5224 = vmul.f32 %v4941, %v1659
  %v5225 = vmul.f32 %v4946, %v1660
  %v5226 = vmul.f32 %v4949, %v1661
  %v5227 = vmul.f32 %v4954, %v1662
  %v5228 = vmul.f32 %v4957, %v1663
  %v5229 = vmul.f32 %v4962, %v1664
  %v5230 = vmul.f32 %v4965, %v1665
  %v5231 = vmul.f32 %v4970, %v1666
  %v5232 = vmul.f32 %v4973, %v1667
  %v5233 = vmul.f32 %v4978, %v1668
  %v5234 = vmul.f32 %v4981, %v1669
  %v5235 = vmul.f32 %v4986, %v1670
  %v5236 = vmul.f32 %v4989, %v1671
  %v5237 = vmul.f32 %v4994, %v1672
  %v5238 = vmul.f32 %v4997, %v1673
  %v5239 = vmul.f32 %v5002, %v1674
  %v5240 = vmul.f32 %v5005, %v1675
  %v5241 = vmul.f32 %v5010, %v1676
  %v5242 = vmul.f32 %v5013, %v1677
  %v5243 = vmul.f32 %v5018, %v1678
  %v5244 = vmul.f32 %v5021, %v1679
  %v5245 = vmul.f32 %v5026, %v1680
  %v5246 = vmul.f32 %v5029, %v1681
  %v5247 = vmul.f32 %v5034, %v1682
  %v5248 = vmul.f32 %v5037, %v1683
  %v5249 = vmul.f32 %v5042, %v1684
  %v5250 = vmul.f32 %v5045, %v1685
  %v5251 = vmul.f32 %v5050, %v1686
  %v5252 = vmul.f32 %v5053, %v1687
  %v5253 = vmul.f32 %v5058, %v1688
  %v5254 = vmul.f32 %v5061, %v1689
  %v5255 = vmul.f32 %v5066, %v1690
  %v5256 = vmul.f32 %v5069, %v1691
  %v5257 = vmul.f32 %v5074, %v1692
  %v5258 = vmul.f32 %v5077, %v1693
  %v5259 = vmul.f32 %v5082, %v1694
  %v5260 = vmul.f32 %v5085, %v1695
  %v5261 = vmul.f32 %v5090, %v1696
  %v5262 = vmul.f32 %v5093, %v1697
  %v5263 = vmul.f32 %v5098, %v1698
  %v5264 = vmul.f32 %v5101, %v1699
  %v5265 = vmul.f32 %v5106, %v1700
  %v5266 = vmul.f32 %v5109, %v1701
  %v5267 = vmul.f32 %v5114, %v1702
  %v5268 = vmul.f32 %v5117, %v1703
  %v5269 = vmul.f32 %v5122, %v1704
  %v5270 = vmul.f32 %v5125, %v1705
  %v5271 = vmul.f32 %v5130, %v1706
  %v5272 = vmul.f32 %v5133, %v1707
  %v5273 = vmul.f32 %v5138, %v1708
  %v5274 = vmul.f32 %v5141, %v1709
  %v5275 = vmul.f32 %v5146, %v1710
  %v5276 = vmul.f32 %v5149, %v1711
  %v5277 = vmul.f32 %v5154, %v1712
  %v5278 = vmul.f32 %v5157, %v1713
  %v5279 = vmul.f32 %v5162, %v1714
  %v5280 = vmul.f32 %v5165, %v1715
  %v5281 = vmul.f32 %v5170, %v1716
  %v5282 = vmul.f32 %v5173, %v1717
  %v5283 = vmul.f32 %v5178, %v1718
  %v5284 = vmul.f32 %v5181, %v1719
  %v5285 = vmul.f32 %v5186, %v1720
  %v5286 = vmul.f32 %v5189, %v1721
  %v5287 = vmul.f32 %v5194, %v1722
  %v5288 = vmul.f32 %v5197, %v1723
  %v5289 = vmul.f32 %v5202, %v1724
  %v5290 = vmul.f32 %v5205, %v1725
  %v5291 = vmul.f32 %v5210, %v1726
  %v5292 = vsel %vm3864, %v5215, 0.0
  %v5293 = vsel %vm3864, %v5216, 0.0
  %v5294 = vadd.f32 %v5292, %v5293
  %v5295 = vsel %vm3864, %v5217, 0.0
  %v5296 = vadd.f32 %v5294, %v5295
  %v5297 = vsel %vm3864, %v5218, 0.0
  %v5298 = vadd.f32 %v5296, %v5297
  %v5299 = vsel %vm3864, %v5219, 0.0
  %v5300 = vadd.f32 %v5298, %v5299
  %v5301 = vsel %vm3864, %v5220, 0.0
  %v5302 = vadd.f32 %v5300, %v5301
  %v5303 = vsel %vm3864, %v5221, 0.0
  %v5304 = vadd.f32 %v5302, %v5303
  %v5305 = vsel %vm3864, %v5222, 0.0
  %v5306 = vadd.f32 %v5304, %v5305
  %v5307 = vsel %vm3864, %v5223, 0.0
  %v5308 = vadd.f32 %v5306, %v5307
  %v5309 = vsel %vm3864, %v5224, 0.0
  %v5310 = vadd.f32 %v5308, %v5309
  %v5311 = vsel %vm3864, %v5225, 0.0
  %v5312 = vadd.f32 %v5310, %v5311
  %v5313 = vsel %vm3864, %v5226, 0.0
  %v5314 = vadd.f32 %v5312, %v5313
  %v5315 = vsel %vm3864, %v5227, 0.0
  %v5316 = vadd.f32 %v5314, %v5315
  %v5317 = vsel %vm3864, %v5228, 0.0
  %v5318 = vadd.f32 %v5316, %v5317
  %v5319 = vsel %vm3864, %v5229, 0.0
  %v5320 = vadd.f32 %v5318, %v5319
  %v5321 = vsel %vm3864, %v5230, 0.0
  %v5322 = vadd.f32 %v5320, %v5321
  %v5323 = vsel %vm3864, %v5231, 0.0
  %v5324 = vadd.f32 %v5322, %v5323
  %v5325 = vsel %vm3864, %v5232, 0.0
  %v5326 = vadd.f32 %v5324, %v5325
  %v5327 = vsel %vm3864, %v5233, 0.0
  %v5328 = vadd.f32 %v5326, %v5327
  %v5329 = vsel %vm3864, %v5234, 0.0
  %v5330 = vadd.f32 %v5328, %v5329
  %v5331 = vsel %vm3864, %v5235, 0.0
  %v5332 = vadd.f32 %v5330, %v5331
  %v5333 = vsel %vm3864, %v5236, 0.0
  %v5334 = vadd.f32 %v5332, %v5333
  %v5335 = vsel %vm3864, %v5237, 0.0
  %v5336 = vadd.f32 %v5334, %v5335
  %v5337 = vsel %vm3864, %v5238, 0.0
  %v5338 = vadd.f32 %v5336, %v5337
  %v5339 = vsel %vm3864, %v5239, 0.0
  %v5340 = vadd.f32 %v5338, %v5339
  %v5341 = vsel %vm3864, %v5240, 0.0
  %v5342 = vadd.f32 %v5340, %v5341
  %v5343 = vsel %vm3864, %v5241, 0.0
  %v5344 = vadd.f32 %v5342, %v5343
  %v5345 = vsel %vm3864, %v5242, 0.0
  %v5346 = vadd.f32 %v5344, %v5345
  %v5347 = vsel %vm3864, %v5243, 0.0
  %v5348 = vadd.f32 %v5346, %v5347
  %v5349 = vsel %vm3864, %v5244, 0.0
  %v5350 = vadd.f32 %v5348, %v5349
  %v5351 = vsel %vm3864, %v5245, 0.0
  %v5352 = vadd.f32 %v5350, %v5351
  %v5353 = vsel %vm3864, %v5246, 0.0
  %v5354 = vadd.f32 %v5352, %v5353
  %v5355 = vsel %vm3864, %v5247, 0.0
  %v5356 = vadd.f32 %v5354, %v5355
  %v5357 = vsel %vm3864, %v5248, 0.0
  %v5358 = vadd.f32 %v5356, %v5357
  %v5359 = vsel %vm3864, %v5249, 0.0
  %v5360 = vadd.f32 %v5358, %v5359
  %v5361 = vsel %vm3864, %v5250, 0.0
  %v5362 = vadd.f32 %v5360, %v5361
  %v5363 = vsel %vm3864, %v5251, 0.0
  %v5364 = vadd.f32 %v5362, %v5363
  %v5365 = vsel %vm3864, %v5252, 0.0
  %v5366 = vadd.f32 %v5364, %v5365
  %v5367 = vsel %vm3864, %v5253, 0.0
  %v5368 = vadd.f32 %v5366, %v5367
  %v5369 = vsel %vm3864, %v5254, 0.0
  %v5370 = vadd.f32 %v5368, %v5369
  %v5371 = vsel %vm3864, %v5255, 0.0
  %v5372 = vadd.f32 %v5370, %v5371
  %v5373 = vsel %vm3864, %v5256, 0.0
  %v5374 = vadd.f32 %v5372, %v5373
  %v5375 = vsel %vm3864, %v5257, 0.0
  %v5376 = vadd.f32 %v5374, %v5375
  %v5377 = vsel %vm3864, %v5258, 0.0
  %v5378 = vadd.f32 %v5376, %v5377
  %v5379 = vsel %vm3864, %v5259, 0.0
  %v5380 = vadd.f32 %v5378, %v5379
  %v5381 = vsel %vm3864, %v5260, 0.0
  %v5382 = vadd.f32 %v5380, %v5381
  %v5383 = vsel %vm3864, %v5261, 0.0
  %v5384 = vadd.f32 %v5382, %v5383
  %v5385 = vsel %vm3864, %v5262, 0.0
  %v5386 = vadd.f32 %v5384, %v5385
  %v5387 = vsel %vm3864, %v5263, 0.0
  %v5388 = vadd.f32 %v5386, %v5387
  %v5389 = vsel %vm3864, %v5264, 0.0
  %v5390 = vadd.f32 %v5388, %v5389
  %v5391 = vsel %vm3864, %v5265, 0.0
  %v5392 = vadd.f32 %v5390, %v5391
  %v5393 = vsel %vm3864, %v5266, 0.0
  %v5394 = vadd.f32 %v5392, %v5393
  %v5395 = vsel %vm3864, %v5267, 0.0
  %v5396 = vadd.f32 %v5394, %v5395
  %v5397 = vsel %vm3864, %v5268, 0.0
  %v5398 = vadd.f32 %v5396, %v5397
  %v5399 = vsel %vm3864, %v5269, 0.0
  %v5400 = vadd.f32 %v5398, %v5399
  %v5401 = vsel %vm3864, %v5270, 0.0
  %v5402 = vadd.f32 %v5400, %v5401
  %v5403 = vsel %vm3864, %v5271, 0.0
  %v5404 = vadd.f32 %v5402, %v5403
  %v5405 = vsel %vm3864, %v5272, 0.0
  %v5406 = vadd.f32 %v5404, %v5405
  %v5407 = vsel %vm3864, %v5273, 0.0
  %v5408 = vadd.f32 %v5406, %v5407
  %v5409 = vsel %vm3864, %v5274, 0.0
  %v5410 = vadd.f32 %v5408, %v5409
  %v5411 = vsel %vm3864, %v5275, 0.0
  %v5412 = vadd.f32 %v5410, %v5411
  %v5413 = vsel %vm3864, %v5276, 0.0
  %v5414 = vadd.f32 %v5412, %v5413
  %v5415 = vsel %vm3864, %v5277, 0.0
  %v5416 = vadd.f32 %v5414, %v5415
  %v5417 = vsel %vm3864, %v5278, 0.0
  %v5418 = vadd.f32 %v5416, %v5417
  %v5419 = vsel %vm3864, %v5279, 0.0
  %v5420 = vadd.f32 %v5418, %v5419
  %v5421 = vsel %vm3864, %v5280, 0.0
  %v5422 = vadd.f32 %v5420, %v5421
  %v5423 = vsel %vm3864, %v5281, 0.0
  %v5424 = vadd.f32 %v5422, %v5423
  %v5425 = vsel %vm3864, %v5282, 0.0
  %v5426 = vadd.f32 %v5424, %v5425
  %v5427 = vsel %vm3864, %v5283, 0.0
  %v5428 = vadd.f32 %v5426, %v5427
  %v5429 = vsel %vm3864, %v5284, 0.0
  %v5430 = vadd.f32 %v5428, %v5429
  %v5431 = vsel %vm3864, %v5285, 0.0
  %v5432 = vadd.f32 %v5430, %v5431
  %v5433 = vsel %vm3864, %v5286, 0.0
  %v5434 = vadd.f32 %v5432, %v5433
  %v5435 = vsel %vm3864, %v5287, 0.0
  %v5436 = vadd.f32 %v5434, %v5435
  %v5437 = vsel %vm3864, %v5288, 0.0
  %v5438 = vadd.f32 %v5436, %v5437
  %v5439 = vsel %vm3864, %v5289, 0.0
  %v5440 = vadd.f32 %v5438, %v5439
  %v5441 = vsel %vm3864, %v5290, 0.0
  %v5442 = vadd.f32 %v5440, %v5441
  %vm5443 = vcmask 58368
  %v5444 = vsel %vm5443, %v5291, 0.0
  %v5445 = vadd.f32 %v5442, %v5444
  %v5446 = vrot.slane %v5445, 4
  %v5447 = vadd.f32 %v5445, %v5446
  %v5448 = vrot.slane %v5447, 2
  %v5449 = vadd.f32 %v5447, %v5448
  %v5450 = vrot.slane %v5449, 1
  %v5451 = vadd.f32 %v5449, %v5450
  %v5452 = vmul.f32 %v5451, 0.001953125
  %v5453 = vmul.f32 %v5215, %v4906
  %v5454 = vmul.f32 %v5216, %v4909
  %v5455 = vmul.f32 %v5217, %v4914
  %v5456 = vmul.f32 %v5218, %v4917
  %v5457 = vmul.f32 %v5219, %v4922
  %v5458 = vmul.f32 %v5220, %v4925
  %v5459 = vmul.f32 %v5221, %v4930
  %v5460 = vmul.f32 %v5222, %v4933
  %v5461 = vmul.f32 %v5223, %v4938
  %v5462 = vmul.f32 %v5224, %v4941
  %v5463 = vmul.f32 %v5225, %v4946
  %v5464 = vmul.f32 %v5226, %v4949
  %v5465 = vmul.f32 %v5227, %v4954
  %v5466 = vmul.f32 %v5228, %v4957
  %v5467 = vmul.f32 %v5229, %v4962
  %v5468 = vmul.f32 %v5230, %v4965
  %v5469 = vmul.f32 %v5231, %v4970
  %v5470 = vmul.f32 %v5232, %v4973
  %v5471 = vmul.f32 %v5233, %v4978
  %v5472 = vmul.f32 %v5234, %v4981
  %v5473 = vmul.f32 %v5235, %v4986
  %v5474 = vmul.f32 %v5236, %v4989
  %v5475 = vmul.f32 %v5237, %v4994
  %v5476 = vmul.f32 %v5238, %v4997
  %v5477 = vmul.f32 %v5239, %v5002
  %v5478 = vmul.f32 %v5240, %v5005
  %v5479 = vmul.f32 %v5241, %v5010
  %v5480 = vmul.f32 %v5242, %v5013
  %v5481 = vmul.f32 %v5243, %v5018
  %v5482 = vmul.f32 %v5244, %v5021
  %v5483 = vmul.f32 %v5245, %v5026
  %v5484 = vmul.f32 %v5246, %v5029
  %v5485 = vmul.f32 %v5247, %v5034
  %v5486 = vmul.f32 %v5248, %v5037
  %v5487 = vmul.f32 %v5249, %v5042
  %v5488 = vmul.f32 %v5250, %v5045
  %v5489 = vmul.f32 %v5251, %v5050
  %v5490 = vmul.f32 %v5252, %v5053
  %v5491 = vmul.f32 %v5253, %v5058
  %v5492 = vmul.f32 %v5254, %v5061
  %v5493 = vmul.f32 %v5255, %v5066
  %v5494 = vmul.f32 %v5256, %v5069
  %v5495 = vmul.f32 %v5257, %v5074
  %v5496 = vmul.f32 %v5258, %v5077
  %v5497 = vmul.f32 %v5259, %v5082
  %v5498 = vmul.f32 %v5260, %v5085
  %v5499 = vmul.f32 %v5261, %v5090
  %v5500 = vmul.f32 %v5262, %v5093
  %v5501 = vmul.f32 %v5263, %v5098
  %v5502 = vmul.f32 %v5264, %v5101
  %v5503 = vmul.f32 %v5265, %v5106
  %v5504 = vmul.f32 %v5266, %v5109
  %v5505 = vmul.f32 %v5267, %v5114
  %v5506 = vmul.f32 %v5268, %v5117
  %v5507 = vmul.f32 %v5269, %v5122
  %v5508 = vmul.f32 %v5270, %v5125
  %v5509 = vmul.f32 %v5271, %v5130
  %v5510 = vmul.f32 %v5272, %v5133
  %v5511 = vmul.f32 %v5273, %v5138
  %v5512 = vmul.f32 %v5274, %v5141
  %v5513 = vmul.f32 %v5275, %v5146
  %v5514 = vmul.f32 %v5276, %v5149
  %v5515 = vmul.f32 %v5277, %v5154
  %v5516 = vmul.f32 %v5278, %v5157
  %v5517 = vmul.f32 %v5279, %v5162
  %v5518 = vmul.f32 %v5280, %v5165
  %v5519 = vmul.f32 %v5281, %v5170
  %v5520 = vmul.f32 %v5282, %v5173
  %v5521 = vmul.f32 %v5283, %v5178
  %v5522 = vmul.f32 %v5284, %v5181
  %v5523 = vmul.f32 %v5285, %v5186
  %v5524 = vmul.f32 %v5286, %v5189
  %v5525 = vmul.f32 %v5287, %v5194
  %v5526 = vmul.f32 %v5288, %v5197
  %v5527 = vmul.f32 %v5289, %v5202
  %v5528 = vmul.f32 %v5290, %v5205
  %v5529 = vmul.f32 %v5291, %v5210
  %v5530 = vsel %vm3864, %v5453, 0.0
  %v5531 = vsel %vm3864, %v5454, 0.0
  %v5532 = vadd.f32 %v5530, %v5531
  %v5533 = vsel %vm3864, %v5455, 0.0
  %v5534 = vadd.f32 %v5532, %v5533
  %v5535 = vsel %vm3864, %v5456, 0.0
  %v5536 = vadd.f32 %v5534, %v5535
  %v5537 = vsel %vm3864, %v5457, 0.0
  %v5538 = vadd.f32 %v5536, %v5537
  %v5539 = vsel %vm3864, %v5458, 0.0
  %v5540 = vadd.f32 %v5538, %v5539
  %v5541 = vsel %vm3864, %v5459, 0.0
  %v5542 = vadd.f32 %v5540, %v5541
  %v5543 = vsel %vm3864, %v5460, 0.0
  %v5544 = vadd.f32 %v5542, %v5543
  %v5545 = vsel %vm3864, %v5461, 0.0
  %v5546 = vadd.f32 %v5544, %v5545
  %v5547 = vsel %vm3864, %v5462, 0.0
  %v5548 = vadd.f32 %v5546, %v5547
  %v5549 = vsel %vm3864, %v5463, 0.0
  %v5550 = vadd.f32 %v5548, %v5549
  %v5551 = vsel %vm3864, %v5464, 0.0
  %v5552 = vadd.f32 %v5550, %v5551
  %v5553 = vsel %vm3864, %v5465, 0.0
  %v5554 = vadd.f32 %v5552, %v5553
  %v5555 = vsel %vm3864, %v5466, 0.0
  %v5556 = vadd.f32 %v5554, %v5555
  %v5557 = vsel %vm3864, %v5467, 0.0
  %v5558 = vadd.f32 %v5556, %v5557
  %v5559 = vsel %vm3864, %v5468, 0.0
  %v5560 = vadd.f32 %v5558, %v5559
  %v5561 = vsel %vm3864, %v5469, 0.0
  %v5562 = vadd.f32 %v5560, %v5561
  %v5563 = vsel %vm3864, %v5470, 0.0
  %v5564 = vadd.f32 %v5562, %v5563
  %v5565 = vsel %vm3864, %v5471, 0.0
  %v5566 = vadd.f32 %v5564, %v5565
  %v5567 = vsel %vm3864, %v5472, 0.0
  %v5568 = vadd.f32 %v5566, %v5567
  %v5569 = vsel %vm3864, %v5473, 0.0
  %v5570 = vadd.f32 %v5568, %v5569
  %v5571 = vsel %vm3864, %v5474, 0.0
  %v5572 = vadd.f32 %v5570, %v5571
  %v5573 = vsel %vm3864, %v5475, 0.0
  %v5574 = vadd.f32 %v5572, %v5573
  %v5575 = vsel %vm3864, %v5476, 0.0
  %v5576 = vadd.f32 %v5574, %v5575
  %v5577 = vsel %vm3864, %v5477, 0.0
  %v5578 = vadd.f32 %v5576, %v5577
  %v5579 = vsel %vm3864, %v5478, 0.0
  %v5580 = vadd.f32 %v5578, %v5579
  %v5581 = vsel %vm3864, %v5479, 0.0
  %v5582 = vadd.f32 %v5580, %v5581
  %v5583 = vsel %vm3864, %v5480, 0.0
  %v5584 = vadd.f32 %v5582, %v5583
  %v5585 = vsel %vm3864, %v5481, 0.0
  %v5586 = vadd.f32 %v5584, %v5585
  %v5587 = vsel %vm3864, %v5482, 0.0
  %v5588 = vadd.f32 %v5586, %v5587
  %v5589 = vsel %vm3864, %v5483, 0.0
  %v5590 = vadd.f32 %v5588, %v5589
  %v5591 = vsel %vm3864, %v5484, 0.0
  %v5592 = vadd.f32 %v5590, %v5591
  %v5593 = vsel %vm3864, %v5485, 0.0
  %v5594 = vadd.f32 %v5592, %v5593
  %v5595 = vsel %vm3864, %v5486, 0.0
  %v5596 = vadd.f32 %v5594, %v5595
  %v5597 = vsel %vm3864, %v5487, 0.0
  %v5598 = vadd.f32 %v5596, %v5597
  %v5599 = vsel %vm3864, %v5488, 0.0
  %v5600 = vadd.f32 %v5598, %v5599
  %v5601 = vsel %vm3864, %v5489, 0.0
  %v5602 = vadd.f32 %v5600, %v5601
  %v5603 = vsel %vm3864, %v5490, 0.0
  %v5604 = vadd.f32 %v5602, %v5603
  %v5605 = vsel %vm3864, %v5491, 0.0
  %v5606 = vadd.f32 %v5604, %v5605
  %v5607 = vsel %vm3864, %v5492, 0.0
  %v5608 = vadd.f32 %v5606, %v5607
  %v5609 = vsel %vm3864, %v5493, 0.0
  %v5610 = vadd.f32 %v5608, %v5609
  %v5611 = vsel %vm3864, %v5494, 0.0
  %v5612 = vadd.f32 %v5610, %v5611
  %v5613 = vsel %vm3864, %v5495, 0.0
  %v5614 = vadd.f32 %v5612, %v5613
  %v5615 = vsel %vm3864, %v5496, 0.0
  %v5616 = vadd.f32 %v5614, %v5615
  %v5617 = vsel %vm3864, %v5497, 0.0
  %v5618 = vadd.f32 %v5616, %v5617
  %v5619 = vsel %vm3864, %v5498, 0.0
  %v5620 = vadd.f32 %v5618, %v5619
  %v5621 = vsel %vm3864, %v5499, 0.0
  %v5622 = vadd.f32 %v5620, %v5621
  %v5623 = vsel %vm3864, %v5500, 0.0
  %v5624 = vadd.f32 %v5622, %v5623
  %v5625 = vsel %vm3864, %v5501, 0.0
  %v5626 = vadd.f32 %v5624, %v5625
  %v5627 = vsel %vm3864, %v5502, 0.0
  %v5628 = vadd.f32 %v5626, %v5627
  %v5629 = vsel %vm3864, %v5503, 0.0
  %v5630 = vadd.f32 %v5628, %v5629
  %v5631 = vsel %vm3864, %v5504, 0.0
  %v5632 = vadd.f32 %v5630, %v5631
  %v5633 = vsel %vm3864, %v5505, 0.0
  %v5634 = vadd.f32 %v5632, %v5633
  %v5635 = vsel %vm3864, %v5506, 0.0
  %v5636 = vadd.f32 %v5634, %v5635
  %v5637 = vsel %vm3864, %v5507, 0.0
  %v5638 = vadd.f32 %v5636, %v5637
  %v5639 = vsel %vm3864, %v5508, 0.0
  %v5640 = vadd.f32 %v5638, %v5639
  %v5641 = vsel %vm3864, %v5509, 0.0
  %v5642 = vadd.f32 %v5640, %v5641
  %v5643 = vsel %vm3864, %v5510, 0.0
  %v5644 = vadd.f32 %v5642, %v5643
  %v5645 = vsel %vm3864, %v5511, 0.0
  %v5646 = vadd.f32 %v5644, %v5645
  %v5647 = vsel %vm3864, %v5512, 0.0
  %v5648 = vadd.f32 %v5646, %v5647
  %v5649 = vsel %vm3864, %v5513, 0.0
  %v5650 = vadd.f32 %v5648, %v5649
  %v5651 = vsel %vm3864, %v5514, 0.0
  %v5652 = vadd.f32 %v5650, %v5651
  %v5653 = vsel %vm3864, %v5515, 0.0
  %v5654 = vadd.f32 %v5652, %v5653
  %v5655 = vsel %vm3864, %v5516, 0.0
  %v5656 = vadd.f32 %v5654, %v5655
  %v5657 = vsel %vm3864, %v5517, 0.0
  %v5658 = vadd.f32 %v5656, %v5657
  %v5659 = vsel %vm3864, %v5518, 0.0
  %v5660 = vadd.f32 %v5658, %v5659
  %v5661 = vsel %vm3864, %v5519, 0.0
  %v5662 = vadd.f32 %v5660, %v5661
  %v5663 = vsel %vm3864, %v5520, 0.0
  %v5664 = vadd.f32 %v5662, %v5663
  %v5665 = vsel %vm3864, %v5521, 0.0
  %v5666 = vadd.f32 %v5664, %v5665
  %v5667 = vsel %vm3864, %v5522, 0.0
  %v5668 = vadd.f32 %v5666, %v5667
  %v5669 = vsel %vm3864, %v5523, 0.0
  %v5670 = vadd.f32 %v5668, %v5669
  %v5671 = vsel %vm3864, %v5524, 0.0
  %v5672 = vadd.f32 %v5670, %v5671
  %v5673 = vsel %vm3864, %v5525, 0.0
  %v5674 = vadd.f32 %v5672, %v5673
  %v5675 = vsel %vm3864, %v5526, 0.0
  %v5676 = vadd.f32 %v5674, %v5675
  %v5677 = vsel %vm3864, %v5527, 0.0
  %v5678 = vadd.f32 %v5676, %v5677
  %v5679 = vsel %vm3864, %v5528, 0.0
  %v5680 = vadd.f32 %v5678, %v5679
  %v5681 = vsel %vm5443, %v5529, 0.0
  %v5682 = vadd.f32 %v5680, %v5681
  %v5683 = vrot.slane %v5682, 4
  %v5684 = vadd.f32 %v5682, %v5683
  %v5685 = vrot.slane %v5684, 2
  %v5686 = vadd.f32 %v5684, %v5685
  %v5687 = vrot.slane %v5686, 1
  %v5688 = vadd.f32 %v5686, %v5687
  %v5689 = vmul.f32 %v5688, 0.001953125
  %v5690 = vmul.f32 %v5452, %v5452
  %v5691 = vsub.f32 %v5689, %v5690
  %v5692 = vld [vmem:[%s2] sm:$0x1]
  %v5693 = vmax.f32 %v5691, 0.0
  %v5694 = vadd.f32 %v5693, 1e-05
  %v5695 = vrsqrt.pop %v5694
  %v5696 = vmul.f32 %v5692, %v5695
  %v5697 = vsub.f32 %v4906, %v5452
  %v5698 = vsub.f32 %v4909, %v5452
  %v5699 = vsub.f32 %v4914, %v5452
  %v5700 = vsub.f32 %v4917, %v5452
  %v5701 = vsub.f32 %v4922, %v5452
  %v5702 = vsub.f32 %v4925, %v5452
  %v5703 = vsub.f32 %v4930, %v5452
  %v5704 = vsub.f32 %v4933, %v5452
  %v5705 = vsub.f32 %v4938, %v5452
  %v5706 = vsub.f32 %v4941, %v5452
  %v5707 = vsub.f32 %v4946, %v5452
  %v5708 = vsub.f32 %v4949, %v5452
  %v5709 = vsub.f32 %v4954, %v5452
  %v5710 = vsub.f32 %v4957, %v5452
  %v5711 = vsub.f32 %v4962, %v5452
  %v5712 = vsub.f32 %v4965, %v5452
  %v5713 = vsub.f32 %v4970, %v5452
  %v5714 = vsub.f32 %v4973, %v5452
  %v5715 = vsub.f32 %v4978, %v5452
  %v5716 = vsub.f32 %v4981, %v5452
  %v5717 = vsub.f32 %v4986, %v5452
  %v5718 = vsub.f32 %v4989, %v5452
  %v5719 = vsub.f32 %v4994, %v5452
  %v5720 = vsub.f32 %v4997, %v5452
  %v5721 = vsub.f32 %v5002, %v5452
  %v5722 = vsub.f32 %v5005, %v5452
  %v5723 = vsub.f32 %v5010, %v5452
  %v5724 = vsub.f32 %v5013, %v5452
  %v5725 = vsub.f32 %v5018, %v5452
  %v5726 = vsub.f32 %v5021, %v5452
  %v5727 = vsub.f32 %v5026, %v5452
  %v5728 = vsub.f32 %v5029, %v5452
  %v5729 = vsub.f32 %v5034, %v5452
  %v5730 = vsub.f32 %v5037, %v5452
  %v5731 = vsub.f32 %v5042, %v5452
  %v5732 = vsub.f32 %v5045, %v5452
  %v5733 = vsub.f32 %v5050, %v5452
  %v5734 = vsub.f32 %v5053, %v5452
  %v5735 = vsub.f32 %v5058, %v5452
  %v5736 = vsub.f32 %v5061, %v5452
  %v5737 = vsub.f32 %v5066, %v5452
  %v5738 = vsub.f32 %v5069, %v5452
  %v5739 = vsub.f32 %v5074, %v5452
  %v5740 = vsub.f32 %v5077, %v5452
  %v5741 = vsub.f32 %v5082, %v5452
  %v5742 = vsub.f32 %v5085, %v5452
  %v5743 = vsub.f32 %v5090, %v5452
  %v5744 = vsub.f32 %v5093, %v5452
  %v5745 = vsub.f32 %v5098, %v5452
  %v5746 = vsub.f32 %v5101, %v5452
  %v5747 = vsub.f32 %v5106, %v5452
  %v5748 = vsub.f32 %v5109, %v5452
  %v5749 = vsub.f32 %v5114, %v5452
  %v5750 = vsub.f32 %v5117, %v5452
  %v5751 = vsub.f32 %v5122, %v5452
  %v5752 = vsub.f32 %v5125, %v5452
  %v5753 = vsub.f32 %v5130, %v5452
  %v5754 = vsub.f32 %v5133, %v5452
  %v5755 = vsub.f32 %v5138, %v5452
  %v5756 = vsub.f32 %v5141, %v5452
  %v5757 = vsub.f32 %v5146, %v5452
  %v5758 = vsub.f32 %v5149, %v5452
  %v5759 = vsub.f32 %v5154, %v5452
  %v5760 = vsub.f32 %v5157, %v5452
  %v5761 = vsub.f32 %v5162, %v5452
  %v5762 = vsub.f32 %v5165, %v5452
  %v5763 = vsub.f32 %v5170, %v5452
  %v5764 = vsub.f32 %v5173, %v5452
  %v5765 = vsub.f32 %v5178, %v5452
  %v5766 = vsub.f32 %v5181, %v5452
  %v5767 = vsub.f32 %v5186, %v5452
  %v5768 = vsub.f32 %v5189, %v5452
  %v5769 = vsub.f32 %v5194, %v5452
  %v5770 = vsub.f32 %v5197, %v5452
  %v5771 = vsub.f32 %v5202, %v5452
  %v5772 = vsub.f32 %v5205, %v5452
  %v5773 = vsub.f32 %v5210, %v5452
  %v5775 = vlaneseq
  %v5776 = vshrl.u32 %v5775, 7
  %v5777 = vsub.s32 0, %v5776
  %v5778 = vrot.slane %v5696, %v5777
  %v5780 = vmul.f32 %v5697, %v5778
  %v5781 = vmul.f32 %v5698, %v5778
  %v5782 = vmul.f32 %v5699, %v5778
  %v5783 = vmul.f32 %v5700, %v5778
  %v5784 = vmul.f32 %v5701, %v5778
  %v5785 = vmul.f32 %v5702, %v5778
  %v5786 = vmul.f32 %v5703, %v5778
  %v5787 = vmul.f32 %v5704, %v5778
  %v5788 = vmul.f32 %v5705, %v5778
  %v5789 = vmul.f32 %v5706, %v5778
  %v5790 = vmul.f32 %v5707, %v5778
  %v5791 = vmul.f32 %v5708, %v5778
  %v5792 = vmul.f32 %v5709, %v5778
  %v5793 = vmul.f32 %v5710, %v5778
  %v5794 = vmul.f32 %v5711, %v5778
  %v5795 = vmul.f32 %v5712, %v5778
  %v5796 = vmul.f32 %v5713, %v5778
  %v5797 = vmul.f32 %v5714, %v5778
  %v5798 = vmul.f32 %v5715, %v5778
  %v5799 = vmul.f32 %v5716, %v5778
  %v5800 = vmul.f32 %v5717, %v5778
  %v5801 = vmul.f32 %v5718, %v5778
  %v5802 = vmul.f32 %v5719, %v5778
  %v5803 = vmul.f32 %v5720, %v5778
  %v5804 = vmul.f32 %v5721, %v5778
  %v5805 = vmul.f32 %v5722, %v5778
  %v5806 = vmul.f32 %v5723, %v5778
  %v5807 = vmul.f32 %v5724, %v5778
  %v5808 = vmul.f32 %v5725, %v5778
  %v5809 = vmul.f32 %v5726, %v5778
  %v5810 = vmul.f32 %v5727, %v5778
  %v5811 = vmul.f32 %v5728, %v5778
  %v5812 = vmul.f32 %v5729, %v5778
  %v5813 = vmul.f32 %v5730, %v5778
  %v5814 = vmul.f32 %v5731, %v5778
  %v5815 = vmul.f32 %v5732, %v5778
  %v5816 = vmul.f32 %v5733, %v5778
  %v5817 = vmul.f32 %v5734, %v5778
  %v5818 = vmul.f32 %v5735, %v5778
  %v5819 = vmul.f32 %v5736, %v5778
  %v5820 = vmul.f32 %v5737, %v5778
  %v5821 = vmul.f32 %v5738, %v5778
  %v5822 = vmul.f32 %v5739, %v5778
  %v5823 = vmul.f32 %v5740, %v5778
  %v5824 = vmul.f32 %v5741, %v5778
  %v5825 = vmul.f32 %v5742, %v5778
  %v5826 = vmul.f32 %v5743, %v5778
  %v5827 = vmul.f32 %v5744, %v5778
  %v5828 = vmul.f32 %v5745, %v5778
  %v5829 = vmul.f32 %v5746, %v5778
  %v5830 = vmul.f32 %v5747, %v5778
  %v5831 = vmul.f32 %v5748, %v5778
  %v5832 = vmul.f32 %v5749, %v5778
  %v5833 = vmul.f32 %v5750, %v5778
  %v5834 = vmul.f32 %v5751, %v5778
  %v5835 = vmul.f32 %v5752, %v5778
  %v5836 = vmul.f32 %v5753, %v5778
  %v5837 = vmul.f32 %v5754, %v5778
  %v5838 = vmul.f32 %v5755, %v5778
  %v5839 = vmul.f32 %v5756, %v5778
  %v5840 = vmul.f32 %v5757, %v5778
  %v5841 = vmul.f32 %v5758, %v5778
  %v5842 = vmul.f32 %v5759, %v5778
  %v5843 = vmul.f32 %v5760, %v5778
  %v5844 = vmul.f32 %v5761, %v5778
  %v5845 = vmul.f32 %v5762, %v5778
  %v5846 = vmul.f32 %v5763, %v5778
  %v5847 = vmul.f32 %v5764, %v5778
  %v5848 = vmul.f32 %v5765, %v5778
  %v5849 = vmul.f32 %v5766, %v5778
  %v5850 = vmul.f32 %v5767, %v5778
  %v5851 = vmul.f32 %v5768, %v5778
  %v5852 = vmul.f32 %v5769, %v5778
  %v5853 = vmul.f32 %v5770, %v5778
  %v5854 = vmul.f32 %v5771, %v5778
  %v5855 = vmul.f32 %v5772, %v5778
  %v5856 = vmul.f32 %v5773, %v5778
  %v5857 = vld [vmem:[%s3] sm:$0x1]
  %v5859 = vlaneseq
  %v5860 = vshrl.u32 %v5859, 7
  %v5861 = vsub.s32 0, %v5860
  %v5862 = vrot.slane %v5857, %v5861
  %v5864 = vadd.f32 %v5780, %v5862
  %v5865 = vadd.f32 %v5781, %v5862
  %v5866 = vadd.f32 %v5782, %v5862
  %v5867 = vadd.f32 %v5783, %v5862
  %v5868 = vadd.f32 %v5784, %v5862
  %v5869 = vadd.f32 %v5785, %v5862
  %v5870 = vadd.f32 %v5786, %v5862
  %v5871 = vadd.f32 %v5787, %v5862
  %v5872 = vadd.f32 %v5788, %v5862
  %v5873 = vadd.f32 %v5789, %v5862
  %v5874 = vadd.f32 %v5790, %v5862
  %v5875 = vadd.f32 %v5791, %v5862
  %v5876 = vadd.f32 %v5792, %v5862
  %v5877 = vadd.f32 %v5793, %v5862
  %v5878 = vadd.f32 %v5794, %v5862
  %v5879 = vadd.f32 %v5795, %v5862
  %v5880 = vadd.f32 %v5796, %v5862
  %v5881 = vadd.f32 %v5797, %v5862
  %v5882 = vadd.f32 %v5798, %v5862
  %v5883 = vadd.f32 %v5799, %v5862
  %v5884 = vadd.f32 %v5800, %v5862
  %v5885 = vadd.f32 %v5801, %v5862
  %v5886 = vadd.f32 %v5802, %v5862
  %v5887 = vadd.f32 %v5803, %v5862
  %v5888 = vadd.f32 %v5804, %v5862
  %v5889 = vadd.f32 %v5805, %v5862
  %v5890 = vadd.f32 %v5806, %v5862
  %v5891 = vadd.f32 %v5807, %v5862
  %v5892 = vadd.f32 %v5808, %v5862
  %v5893 = vadd.f32 %v5809, %v5862
  %v5894 = vadd.f32 %v5810, %v5862
  %v5895 = vadd.f32 %v5811, %v5862
  %v5896 = vadd.f32 %v5812, %v5862
  %v5897 = vadd.f32 %v5813, %v5862
  %v5898 = vadd.f32 %v5814, %v5862
  %v5899 = vadd.f32 %v5815, %v5862
  %v5900 = vadd.f32 %v5816, %v5862
  %v5901 = vadd.f32 %v5817, %v5862
  %v5902 = vadd.f32 %v5818, %v5862
  %v5903 = vadd.f32 %v5819, %v5862
  %v5904 = vadd.f32 %v5820, %v5862
  %v5905 = vadd.f32 %v5821, %v5862
  %v5906 = vadd.f32 %v5822, %v5862
  %v5907 = vadd.f32 %v5823, %v5862
  %v5908 = vadd.f32 %v5824, %v5862
  %v5909 = vadd.f32 %v5825, %v5862
  %v5910 = vadd.f32 %v5826, %v5862
  %v5911 = vadd.f32 %v5827, %v5862
  %v5912 = vadd.f32 %v5828, %v5862
  %v5913 = vadd.f32 %v5829, %v5862
  %v5914 = vadd.f32 %v5830, %v5862
  %v5915 = vadd.f32 %v5831, %v5862
  %v5916 = vadd.f32 %v5832, %v5862
  %v5917 = vadd.f32 %v5833, %v5862
  %v5918 = vadd.f32 %v5834, %v5862
  %v5919 = vadd.f32 %v5835, %v5862
  %v5920 = vadd.f32 %v5836, %v5862
  %v5921 = vadd.f32 %v5837, %v5862
  %v5922 = vadd.f32 %v5838, %v5862
  %v5923 = vadd.f32 %v5839, %v5862
  %v5924 = vadd.f32 %v5840, %v5862
  %v5925 = vadd.f32 %v5841, %v5862
  %v5926 = vadd.f32 %v5842, %v5862
  %v5927 = vadd.f32 %v5843, %v5862
  %v5928 = vadd.f32 %v5844, %v5862
  %v5929 = vadd.f32 %v5845, %v5862
  %v5930 = vadd.f32 %v5846, %v5862
  %v5931 = vadd.f32 %v5847, %v5862
  %v5932 = vadd.f32 %v5848, %v5862
  %v5933 = vadd.f32 %v5849, %v5862
  %v5934 = vadd.f32 %v5850, %v5862
  %v5935 = vadd.f32 %v5851, %v5862
  %v5936 = vadd.f32 %v5852, %v5862
  %v5937 = vadd.f32 %v5853, %v5862
  %v5938 = vadd.f32 %v5854, %v5862
  %v5939 = vadd.f32 %v5855, %v5862
  %v5940 = vadd.f32 %v5856, %v5862
  %v5941 = vmax.f32 %v5864, 0.0
  %v5942 = vmax.f32 %v5865, 0.0
  %v5943 = vmax.f32 %v5866, 0.0
  %v5944 = vmax.f32 %v5867, 0.0
  %v5945 = vmax.f32 %v5868, 0.0
  %v5946 = vmax.f32 %v5869, 0.0
  %v5947 = vmax.f32 %v5870, 0.0
  %v5948 = vmax.f32 %v5871, 0.0
  %v5949 = vmax.f32 %v5872, 0.0
  %v5950 = vmax.f32 %v5873, 0.0
  %v5951 = vmax.f32 %v5874, 0.0
  %v5952 = vmax.f32 %v5875, 0.0
  %v5953 = vmax.f32 %v5876, 0.0
  %v5954 = vmax.f32 %v5877, 0.0
  %v5955 = vmax.f32 %v5878, 0.0
  %v5956 = vmax.f32 %v5879, 0.0
  %v5957 = vmax.f32 %v5880, 0.0
  %v5958 = vmax.f32 %v5881, 0.0
  %v5959 = vmax.f32 %v5882, 0.0
  %v5960 = vmax.f32 %v5883, 0.0
  %v5961 = vmax.f32 %v5884, 0.0
  %v5962 = vmax.f32 %v5885, 0.0
  %v5963 = vmax.f32 %v5886, 0.0
  %v5964 = vmax.f32 %v5887, 0.0
  %v5965 = vmax.f32 %v5888, 0.0
  %v5966 = vmax.f32 %v5889, 0.0
  %v5967 = vmax.f32 %v5890, 0.0
  %v5968 = vmax.f32 %v5891, 0.0
  %v5969 = vmax.f32 %v5892, 0.0
  %v5970 = vmax.f32 %v5893, 0.0
  %v5971 = vmax.f32 %v5894, 0.0
  %v5972 = vmax.f32 %v5895, 0.0
  %v5973 = vmax.f32 %v5896, 0.0
  %v5974 = vmax.f32 %v5897, 0.0
  %v5975 = vmax.f32 %v5898, 0.0
  %v5976 = vmax.f32 %v5899, 0.0
  %v5977 = vmax.f32 %v5900, 0.0
  %v5978 = vmax.f32 %v5901, 0.0
  %v5979 = vmax.f32 %v5902, 0.0
  %v5980 = vmax.f32 %v5903, 0.0
  %v5981 = vmax.f32 %v5904, 0.0
  %v5982 = vmax.f32 %v5905, 0.0
  %v5983 = vmax.f32 %v5906, 0.0
  %v5984 = vmax.f32 %v5907, 0.0
  %v5985 = vmax.f32 %v5908, 0.0
  %v5986 = vmax.f32 %v5909, 0.0
  %v5987 = vmax.f32 %v5910, 0.0
  %v5988 = vmax.f32 %v5911, 0.0
  %v5989 = vmax.f32 %v5912, 0.0
  %v5990 = vmax.f32 %v5913, 0.0
  %v5991 = vmax.f32 %v5914, 0.0
  %v5992 = vmax.f32 %v5915, 0.0
  %v5993 = vmax.f32 %v5916, 0.0
  %v5994 = vmax.f32 %v5917, 0.0
  %v5995 = vmax.f32 %v5918, 0.0
  %v5996 = vmax.f32 %v5919, 0.0
  %v5997 = vmax.f32 %v5920, 0.0
  %v5998 = vmax.f32 %v5921, 0.0
  %v5999 = vmax.f32 %v5922, 0.0
  %v6000 = vmax.f32 %v5923, 0.0
  %v6001 = vmax.f32 %v5924, 0.0
  %v6002 = vmax.f32 %v5925, 0.0
  %v6003 = vmax.f32 %v5926, 0.0
  %v6004 = vmax.f32 %v5927, 0.0
  %v6005 = vmax.f32 %v5928, 0.0
  %v6006 = vmax.f32 %v5929, 0.0
  %v6007 = vmax.f32 %v5930, 0.0
  %v6008 = vmax.f32 %v5931, 0.0
  %v6009 = vmax.f32 %v5932, 0.0
  %v6010 = vmax.f32 %v5933, 0.0
  %v6011 = vmax.f32 %v5934, 0.0
  %v6012 = vmax.f32 %v5935, 0.0
  %v6013 = vmax.f32 %v5936, 0.0
  %v6014 = vmax.f32 %v5937, 0.0
  %v6015 = vmax.f32 %v5938, 0.0
  %v6016 = vmax.f32 %v5939, 0.0
  %v6017 = vmax.f32 %v5940, 0.0
  %v6018 = vmul.f32 %v5941, %v1650
  %v6019 = vmul.f32 %v5942, %v1651
  %v6020 = vmul.f32 %v5943, %v1652
  %v6021 = vmul.f32 %v5944, %v1653
  %v6022 = vmul.f32 %v5945, %v1654
  %v6023 = vmul.f32 %v5946, %v1655
  %v6024 = vmul.f32 %v5947, %v1656
  %v6025 = vmul.f32 %v5948, %v1657
  %v6026 = vmul.f32 %v5949, %v1658
  %v6027 = vmul.f32 %v5950, %v1659
  %v6028 = vmul.f32 %v5951, %v1660
  %v6029 = vmul.f32 %v5952, %v1661
  %v6030 = vmul.f32 %v5953, %v1662
  %v6031 = vmul.f32 %v5954, %v1663
  %v6032 = vmul.f32 %v5955, %v1664
  %v6033 = vmul.f32 %v5956, %v1665
  %v6034 = vmul.f32 %v5957, %v1666
  %v6035 = vmul.f32 %v5958, %v1667
  %v6036 = vmul.f32 %v5959, %v1668
  %v6037 = vmul.f32 %v5960, %v1669
  %v6038 = vmul.f32 %v5961, %v1670
  %v6039 = vmul.f32 %v5962, %v1671
  %v6040 = vmul.f32 %v5963, %v1672
  %v6041 = vmul.f32 %v5964, %v1673
  %v6042 = vmul.f32 %v5965, %v1674
  %v6043 = vmul.f32 %v5966, %v1675
  %v6044 = vmul.f32 %v5967, %v1676
  %v6045 = vmul.f32 %v5968, %v1677
  %v6046 = vmul.f32 %v5969, %v1678
  %v6047 = vmul.f32 %v5970, %v1679
  %v6048 = vmul.f32 %v5971, %v1680
  %v6049 = vmul.f32 %v5972, %v1681
  %v6050 = vmul.f32 %v5973, %v1682
  %v6051 = vmul.f32 %v5974, %v1683
  %v6052 = vmul.f32 %v5975, %v1684
  %v6053 = vmul.f32 %v5976, %v1685
  %v6054 = vmul.f32 %v5977, %v1686
  %v6055 = vmul.f32 %v5978, %v1687
  %v6056 = vmul.f32 %v5979, %v1688
  %v6057 = vmul.f32 %v5980, %v1689
  %v6058 = vmul.f32 %v5981, %v1690
  %v6059 = vmul.f32 %v5982, %v1691
  %v6060 = vmul.f32 %v5983, %v1692
  %v6061 = vmul.f32 %v5984, %v1693
  %v6062 = vmul.f32 %v5985, %v1694
  %v6063 = vmul.f32 %v5986, %v1695
  %v6064 = vmul.f32 %v5987, %v1696
  %v6065 = vmul.f32 %v5988, %v1697
  %v6066 = vmul.f32 %v5989, %v1698
  %v6067 = vmul.f32 %v5990, %v1699
  %v6068 = vmul.f32 %v5991, %v1700
  %v6069 = vmul.f32 %v5992, %v1701
  %v6070 = vmul.f32 %v5993, %v1702
  %v6071 = vmul.f32 %v5994, %v1703
  %v6072 = vmul.f32 %v5995, %v1704
  %v6073 = vmul.f32 %v5996, %v1705
  %v6074 = vmul.f32 %v5997, %v1706
  %v6075 = vmul.f32 %v5998, %v1707
  %v6076 = vmul.f32 %v5999, %v1708
  %v6077 = vmul.f32 %v6000, %v1709
  %v6078 = vmul.f32 %v6001, %v1710
  %v6079 = vmul.f32 %v6002, %v1711
  %v6080 = vmul.f32 %v6003, %v1712
  %v6081 = vmul.f32 %v6004, %v1713
  %v6082 = vmul.f32 %v6005, %v1714
  %v6083 = vmul.f32 %v6006, %v1715
  %v6084 = vmul.f32 %v6007, %v1716
  %v6085 = vmul.f32 %v6008, %v1717
  %v6086 = vmul.f32 %v6009, %v1718
  %v6087 = vmul.f32 %v6010, %v1719
  %v6088 = vmul.f32 %v6011, %v1720
  %v6089 = vmul.f32 %v6012, %v1721
  %v6090 = vmul.f32 %v6013, %v1722
  %v6091 = vmul.f32 %v6014, %v1723
  %v6092 = vmul.f32 %v6015, %v1724
  %v6093 = vmul.f32 %v6016, %v1725
  %v6094 = vmul.f32 %v6017, %v1726
  %vm6095 = vcmask 60416
  %6096 = vst.msk [vmem:[#allocation2] sm:$0xf] %vm6095, 0
  %6097 = vst.msk [vmem:[#allocation2 + $0x4] sm:$0xf] %vm6095, 0
  %6098 = vst.msk [vmem:[#allocation2 + $0x8] sm:$0xf] %vm6095, 0
  %6099 = vst.msk [vmem:[#allocation2 + $0xc] sm:$0xf] %vm6095, 0
  %vm6100 = vcmask 60417
  %6101 = vst.msk [vmem:[#allocation2 + $0x140] sm:$0xe] %vm6100, 0
  %6102 = vst.msk [vmem:[#allocation2 + $0x144] sm:$0xf] %vm6095, 0
  %vm6103 = vcmask 59392
  %vm6104 = vmand %vm6103, %vm2695
  %v6105 = vld [vmem:[#allocation2 + $0x148] sm:$0x7]
  %v6106 = vsel %vm6104, 0, %v6105
  %6107 = vst [vmem:[#allocation2 + $0x148] sm:$0x7] %v6106
  %v6108 = vpack.c.bf16 %v6019, %v6018
  %v6109 = vpack.c.bf16 %v6021, %v6020
  %v6110 = vpack.c.bf16 %v6023, %v6022
  %v6111 = vpack.c.bf16 %v6025, %v6024
  %v6112 = vpack.c.bf16 %v6027, %v6026
  %v6113 = vpack.c.bf16 %v6029, %v6028
  %v6114 = vpack.c.bf16 %v6031, %v6030
  %v6115 = vpack.c.bf16 %v6033, %v6032
  %v6116 = vpack.c.bf16 %v6035, %v6034
  %v6117 = vpack.c.bf16 %v6037, %v6036
  %v6118 = vpack.c.bf16 %v6039, %v6038
  %v6119 = vpack.c.bf16 %v6041, %v6040
  %v6120 = vpack.c.bf16 %v6043, %v6042
  %v6121 = vpack.c.bf16 %v6045, %v6044
  %v6122 = vpack.c.bf16 %v6047, %v6046
  %v6123 = vpack.c.bf16 %v6049, %v6048
  %v6124 = vpack.c.bf16 %v6051, %v6050
  %v6125 = vpack.c.bf16 %v6053, %v6052
  %v6126 = vpack.c.bf16 %v6055, %v6054
  %v6127 = vpack.c.bf16 %v6057, %v6056
  %v6128 = vpack.c.bf16 %v6059, %v6058
  %v6129 = vpack.c.bf16 %v6061, %v6060
  %v6130 = vpack.c.bf16 %v6063, %v6062
  %v6131 = vpack.c.bf16 %v6065, %v6064
  %v6132 = vpack.c.bf16 %v6067, %v6066
  %v6133 = vpack.c.bf16 %v6069, %v6068
  %v6134 = vpack.c.bf16 %v6071, %v6070
  %v6135 = vpack.c.bf16 %v6073, %v6072
  %v6136 = vpack.c.bf16 %v6075, %v6074
  %v6137 = vpack.c.bf16 %v6077, %v6076
  %v6138 = vpack.c.bf16 %v6079, %v6078
  %v6139 = vpack.c.bf16 %v6081, %v6080
  %v6140 = vpack.c.bf16 %v6083, %v6082
  %v6141 = vpack.c.bf16 %v6085, %v6084
  %v6142 = vpack.c.bf16 %v6087, %v6086
  %v6143 = vpack.c.bf16 %v6089, %v6088
  %v6144 = vpack.c.bf16 %v6091, %v6090
  %v6145 = vpack.c.bf16 %v6093, %v6092
  %v6146 = vpack.c.bf16 %v6094, %v6094
  %v6186 = vunpack.c.l.b16 %v6108
  %v6187 = vunpack.c.h.b16 %v6108
  %v6188 = vunpack.c.l.b16 %v6109
  %v6189 = vunpack.c.h.b16 %v6109
  %v6190 = vunpack.c.l.b16 %v6110
  %v6191 = vunpack.c.h.b16 %v6110
  %v6192 = vunpack.c.l.b16 %v6111
  %v6193 = vunpack.c.h.b16 %v6111
  %v6194 = vunpack.c.l.b16 %v6112
  %v6195 = vunpack.c.h.b16 %v6112
  %v6196 = vunpack.c.l.b16 %v6113
  %v6197 = vunpack.c.h.b16 %v6113
  %v6198 = vunpack.c.l.b16 %v6114
  %v6199 = vunpack.c.h.b16 %v6114
  %v6200 = vunpack.c.l.b16 %v6115
  %v6201 = vunpack.c.h.b16 %v6115
  %v6202 = vunpack.c.l.b16 %v6116
  %v6203 = vunpack.c.h.b16 %v6116
  %v6204 = vunpack.c.l.b16 %v6117
  %v6205 = vunpack.c.h.b16 %v6117
  %v6206 = vunpack.c.l.b16 %v6118
  %v6207 = vunpack.c.h.b16 %v6118
  %v6208 = vunpack.c.l.b16 %v6119
  %v6209 = vunpack.c.h.b16 %v6119
  %v6210 = vunpack.c.l.b16 %v6120
  %v6211 = vunpack.c.h.b16 %v6120
  %v6212 = vunpack.c.l.b16 %v6121
  %v6213 = vunpack.c.h.b16 %v6121
  %v6214 = vunpack.c.l.b16 %v6122
  %v6215 = vunpack.c.h.b16 %v6122
  %v6216 = vunpack.c.l.b16 %v6123
  %v6217 = vunpack.c.h.b16 %v6123
  %v6218 = vunpack.c.l.b16 %v6124
  %v6219 = vunpack.c.h.b16 %v6124
  %v6220 = vunpack.c.l.b16 %v6125
  %v6221 = vunpack.c.h.b16 %v6125
  %v6222 = vunpack.c.l.b16 %v6126
  %v6223 = vunpack.c.h.b16 %v6126
  %v6224 = vunpack.c.l.b16 %v6127
  %v6225 = vunpack.c.h.b16 %v6127
  %v6226 = vunpack.c.l.b16 %v6128
  %v6227 = vunpack.c.h.b16 %v6128
  %v6228 = vunpack.c.l.b16 %v6129
  %v6229 = vunpack.c.h.b16 %v6129
  %v6230 = vunpack.c.l.b16 %v6130
  %v6231 = vunpack.c.h.b16 %v6130
  %v6232 = vunpack.c.l.b16 %v6131
  %v6233 = vunpack.c.h.b16 %v6131
  %v6234 = vunpack.c.l.b16 %v6132
  %v6235 = vunpack.c.h.b16 %v6132
  %v6236 = vunpack.c.l.b16 %v6133
  %v6237 = vunpack.c.h.b16 %v6133
  %v6238 = vunpack.c.l.b16 %v6134
  %v6239 = vunpack.c.h.b16 %v6134
  %v6240 = vunpack.c.l.b16 %v6135
  %v6241 = vunpack.c.h.b16 %v6135
  %v6242 = vunpack.c.l.b16 %v6136
  %v6243 = vunpack.c.h.b16 %v6136
  %v6244 = vunpack.c.l.b16 %v6137
  %v6245 = vunpack.c.h.b16 %v6137
  %v6246 = vunpack.c.l.b16 %v6138
  %v6247 = vunpack.c.h.b16 %v6138
  %v6248 = vunpack.c.l.b16 %v6139
  %v6249 = vunpack.c.h.b16 %v6139
  %v6250 = vunpack.c.l.b16 %v6140
  %v6251 = vunpack.c.h.b16 %v6140
  %v6252 = vunpack.c.l.b16 %v6141
  %v6253 = vunpack.c.h.b16 %v6141
  %v6254 = vunpack.c.l.b16 %v6142
  %v6255 = vunpack.c.h.b16 %v6142
  %v6256 = vunpack.c.l.b16 %v6143
  %v6257 = vunpack.c.h.b16 %v6143
  %v6258 = vunpack.c.l.b16 %v6144
  %v6259 = vunpack.c.h.b16 %v6144
  %v6260 = vunpack.c.l.b16 %v6145
  %v6261 = vunpack.c.h.b16 %v6145
  %v6262 = vunpack.c.l.b16 %v6146
  %v6263 = vpack.c.b16 %v6186, %v6186
  %v6264 = vpack.c.b16 %v6187, %v6187
  %v6265 = vpack.c.b16 %v6188, %v6188
  %v6266 = vpack.c.b16 %v6189, %v6189
  %v6267 = vpack.c.b16 %v6190, %v6190
  %v6268 = vpack.c.b16 %v6191, %v6191
  %v6269 = vpack.c.b16 %v6192, %v6192
  %v6270 = vpack.c.b16 %v6193, %v6193
  %v6271 = vpack.c.b16 %v6194, %v6194
  %v6272 = vpack.c.b16 %v6195, %v6195
  %v6273 = vpack.c.b16 %v6196, %v6196
  %v6274 = vpack.c.b16 %v6197, %v6197
  %v6275 = vpack.c.b16 %v6198, %v6198
  %v6276 = vpack.c.b16 %v6199, %v6199
  %v6277 = vpack.c.b16 %v6200, %v6200
  %v6278 = vpack.c.b16 %v6201, %v6201
  %v6279 = vpack.c.b16 %v6202, %v6202
  %v6280 = vpack.c.b16 %v6203, %v6203
  %v6281 = vpack.c.b16 %v6204, %v6204
  %v6282 = vpack.c.b16 %v6205, %v6205
  %v6283 = vpack.c.b16 %v6206, %v6206
  %v6284 = vpack.c.b16 %v6207, %v6207
  %v6285 = vpack.c.b16 %v6208, %v6208
  %v6286 = vpack.c.b16 %v6209, %v6209
  %v6287 = vpack.c.b16 %v6210, %v6210
  %v6288 = vpack.c.b16 %v6211, %v6211
  %v6289 = vpack.c.b16 %v6212, %v6212
  %v6290 = vpack.c.b16 %v6213, %v6213
  %v6291 = vpack.c.b16 %v6214, %v6214
  %v6292 = vpack.c.b16 %v6215, %v6215
  %v6293 = vpack.c.b16 %v6216, %v6216
  %v6294 = vpack.c.b16 %v6217, %v6217
  %v6295 = vpack.c.b16 %v6218, %v6218
  %v6296 = vpack.c.b16 %v6219, %v6219
  %v6297 = vpack.c.b16 %v6220, %v6220
  %v6298 = vpack.c.b16 %v6221, %v6221
  %v6299 = vpack.c.b16 %v6222, %v6222
  %v6300 = vpack.c.b16 %v6223, %v6223
  %v6301 = vpack.c.b16 %v6224, %v6224
  %v6302 = vpack.c.b16 %v6225, %v6225
  %v6303 = vpack.c.b16 %v6226, %v6226
  %v6304 = vpack.c.b16 %v6227, %v6227
  %v6305 = vpack.c.b16 %v6228, %v6228
  %v6306 = vpack.c.b16 %v6229, %v6229
  %v6307 = vpack.c.b16 %v6230, %v6230
  %v6308 = vpack.c.b16 %v6231, %v6231
  %v6309 = vpack.c.b16 %v6232, %v6232
  %v6310 = vpack.c.b16 %v6233, %v6233
  %v6311 = vpack.c.b16 %v6234, %v6234
  %v6312 = vpack.c.b16 %v6235, %v6235
  %v6313 = vpack.c.b16 %v6236, %v6236
  %v6314 = vpack.c.b16 %v6237, %v6237
  %v6315 = vpack.c.b16 %v6238, %v6238
  %v6316 = vpack.c.b16 %v6239, %v6239
  %v6317 = vpack.c.b16 %v6240, %v6240
  %v6318 = vpack.c.b16 %v6241, %v6241
  %v6319 = vpack.c.b16 %v6242, %v6242
  %v6320 = vpack.c.b16 %v6243, %v6243
  %v6321 = vpack.c.b16 %v6244, %v6244
  %v6322 = vpack.c.b16 %v6245, %v6245
  %v6323 = vpack.c.b16 %v6246, %v6246
  %v6324 = vpack.c.b16 %v6247, %v6247
  %v6325 = vpack.c.b16 %v6248, %v6248
  %v6326 = vpack.c.b16 %v6249, %v6249
  %v6327 = vpack.c.b16 %v6250, %v6250
  %v6328 = vpack.c.b16 %v6251, %v6251
  %v6329 = vpack.c.b16 %v6252, %v6252
  %v6330 = vpack.c.b16 %v6253, %v6253
  %v6331 = vpack.c.b16 %v6254, %v6254
  %v6332 = vpack.c.b16 %v6255, %v6255
  %v6333 = vpack.c.b16 %v6256, %v6256
  %v6334 = vpack.c.b16 %v6257, %v6257
  %v6335 = vpack.c.b16 %v6258, %v6258
  %v6336 = vpack.c.b16 %v6259, %v6259
  %v6337 = vpack.c.b16 %v6260, %v6260
  %v6338 = vpack.c.b16 %v6261, %v6261
  %v6339 = vpack.c.b16 %v6262, %v6262
  %6417 = vst.msk [vmem:[#allocation2 + $0x10] sm:$0xf] %vm6095, %v6263
  %6418 = vst.msk [vmem:[#allocation2 + $0x14] sm:$0xf] %vm6095, %v6264
  %6419 = vst.msk [vmem:[#allocation2 + $0x18] sm:$0xf] %vm6095, %v6265
  %6420 = vst.msk [vmem:[#allocation2 + $0x1c] sm:$0xf] %vm6095, %v6266
  %6421 = vst.msk [vmem:[#allocation2 + $0x20] sm:$0xf] %vm6095, %v6267
  %6422 = vst.msk [vmem:[#allocation2 + $0x24] sm:$0xf] %vm6095, %v6268
  %6423 = vst.msk [vmem:[#allocation2 + $0x28] sm:$0xf] %vm6095, %v6269
  %6424 = vst.msk [vmem:[#allocation2 + $0x2c] sm:$0xf] %vm6095, %v6270
  %6425 = vst.msk [vmem:[#allocation2 + $0x30] sm:$0xf] %vm6095, %v6271
  %6426 = vst.msk [vmem:[#allocation2 + $0x34] sm:$0xf] %vm6095, %v6272
  %6427 = vst.msk [vmem:[#allocation2 + $0x38] sm:$0xf] %vm6095, %v6273
  %6428 = vst.msk [vmem:[#allocation2 + $0x3c] sm:$0xf] %vm6095, %v6274
  %6429 = vst.msk [vmem:[#allocation2 + $0x40] sm:$0xf] %vm6095, %v6275
  %6430 = vst.msk [vmem:[#allocation2 + $0x44] sm:$0xf] %vm6095, %v6276
  %6431 = vst.msk [vmem:[#allocation2 + $0x48] sm:$0xf] %vm6095, %v6277
  %6432 = vst.msk [vmem:[#allocation2 + $0x4c] sm:$0xf] %vm6095, %v6278
  %6433 = vst.msk [vmem:[#allocation2 + $0x50] sm:$0xf] %vm6095, %v6279
  %6434 = vst.msk [vmem:[#allocation2 + $0x54] sm:$0xf] %vm6095, %v6280
  %6435 = vst.msk [vmem:[#allocation2 + $0x58] sm:$0xf] %vm6095, %v6281
  %6436 = vst.msk [vmem:[#allocation2 + $0x5c] sm:$0xf] %vm6095, %v6282
  %6437 = vst.msk [vmem:[#allocation2 + $0x60] sm:$0xf] %vm6095, %v6283
  %6438 = vst.msk [vmem:[#allocation2 + $0x64] sm:$0xf] %vm6095, %v6284
  %6439 = vst.msk [vmem:[#allocation2 + $0x68] sm:$0xf] %vm6095, %v6285
  %6440 = vst.msk [vmem:[#allocation2 + $0x6c] sm:$0xf] %vm6095, %v6286
  %6441 = vst.msk [vmem:[#allocation2 + $0x70] sm:$0xf] %vm6095, %v6287
  %6442 = vst.msk [vmem:[#allocation2 + $0x74] sm:$0xf] %vm6095, %v6288
  %6443 = vst.msk [vmem:[#allocation2 + $0x78] sm:$0xf] %vm6095, %v6289
  %6444 = vst.msk [vmem:[#allocation2 + $0x7c] sm:$0xf] %vm6095, %v6290
  %6445 = vst.msk [vmem:[#allocation2 + $0x80] sm:$0xf] %vm6095, %v6291
  %6446 = vst.msk [vmem:[#allocation2 + $0x84] sm:$0xf] %vm6095, %v6292
  %6447 = vst.msk [vmem:[#allocation2 + $0x88] sm:$0xf] %vm6095, %v6293
  %6448 = vst.msk [vmem:[#allocation2 + $0x8c] sm:$0xf] %vm6095, %v6294
  %6449 = vst.msk [vmem:[#allocation2 + $0x90] sm:$0xf] %vm6095, %v6295
  %6450 = vst.msk [vmem:[#allocation2 + $0x94] sm:$0xf] %vm6095, %v6296
  %6451 = vst.msk [vmem:[#allocation2 + $0x98] sm:$0xf] %vm6095, %v6297
  %6452 = vst.msk [vmem:[#allocation2 + $0x9c] sm:$0xf] %vm6095, %v6298
  %6453 = vst.msk [vmem:[#allocation2 + $0xa0] sm:$0xf] %vm6095, %v6299
  %6454 = vst.msk [vmem:[#allocation2 + $0xa4] sm:$0xf] %vm6095, %v6300
  %6455 = vst.msk [vmem:[#allocation2 + $0xa8] sm:$0xf] %vm6095, %v6301
  %6456 = vst.msk [vmem:[#allocation2 + $0xac] sm:$0xf] %vm6095, %v6302
  %6457 = vst.msk [vmem:[#allocation2 + $0xb0] sm:$0xf] %vm6095, %v6303
  %6458 = vst.msk [vmem:[#allocation2 + $0xb4] sm:$0xf] %vm6095, %v6304
  %6459 = vst.msk [vmem:[#allocation2 + $0xb8] sm:$0xf] %vm6095, %v6305
  %6460 = vst.msk [vmem:[#allocation2 + $0xbc] sm:$0xf] %vm6095, %v6306
  %6461 = vst.msk [vmem:[#allocation2 + $0xc0] sm:$0xf] %vm6095, %v6307
  %6462 = vst.msk [vmem:[#allocation2 + $0xc4] sm:$0xf] %vm6095, %v6308
  %6463 = vst.msk [vmem:[#allocation2 + $0xc8] sm:$0xf] %vm6095, %v6309
  %6464 = vst.msk [vmem:[#allocation2 + $0xcc] sm:$0xf] %vm6095, %v6310
  %6465 = vst.msk [vmem:[#allocation2 + $0xd0] sm:$0xf] %vm6095, %v6311
  %6466 = vst.msk [vmem:[#allocation2 + $0xd4] sm:$0xf] %vm6095, %v6312
  %6467 = vst.msk [vmem:[#allocation2 + $0xd8] sm:$0xf] %vm6095, %v6313
  %6468 = vst.msk [vmem:[#allocation2 + $0xdc] sm:$0xf] %vm6095, %v6314
  %6469 = vst.msk [vmem:[#allocation2 + $0xe0] sm:$0xf] %vm6095, %v6315
  %6470 = vst.msk [vmem:[#allocation2 + $0xe4] sm:$0xf] %vm6095, %v6316
  %6471 = vst.msk [vmem:[#allocation2 + $0xe8] sm:$0xf] %vm6095, %v6317
  %6472 = vst.msk [vmem:[#allocation2 + $0xec] sm:$0xf] %vm6095, %v6318
  %6473 = vst.msk [vmem:[#allocation2 + $0xf0] sm:$0xf] %vm6095, %v6319
  %6474 = vst.msk [vmem:[#allocation2 + $0xf4] sm:$0xf] %vm6095, %v6320
  %6475 = vst.msk [vmem:[#allocation2 + $0xf8] sm:$0xf] %vm6095, %v6321
  %6476 = vst.msk [vmem:[#allocation2 + $0xfc] sm:$0xf] %vm6095, %v6322
  %6477 = vst.msk [vmem:[#allocation2 + $0x100] sm:$0xf] %vm6095, %v6323
  %6478 = vst.msk [vmem:[#allocation2 + $0x104] sm:$0xf] %vm6095, %v6324
  %6479 = vst.msk [vmem:[#allocation2 + $0x108] sm:$0xf] %vm6095, %v6325
  %6480 = vst.msk [vmem:[#allocation2 + $0x10c] sm:$0xf] %vm6095, %v6326
  %6481 = vst.msk [vmem:[#allocation2 + $0x110] sm:$0xf] %vm6095, %v6327
  %6482 = vst.msk [vmem:[#allocation2 + $0x114] sm:$0xf] %vm6095, %v6328
  %6483 = vst.msk [vmem:[#allocation2 + $0x118] sm:$0xf] %vm6095, %v6329
  %6484 = vst.msk [vmem:[#allocation2 + $0x11c] sm:$0xf] %vm6095, %v6330
  %6485 = vst.msk [vmem:[#allocation2 + $0x120] sm:$0xf] %vm6095, %v6331
  %6486 = vst.msk [vmem:[#allocation2 + $0x124] sm:$0xf] %vm6095, %v6332
  %6487 = vst.msk [vmem:[#allocation2 + $0x128] sm:$0xf] %vm6095, %v6333
  %6488 = vst.msk [vmem:[#allocation2 + $0x12c] sm:$0xf] %vm6095, %v6334
  %6489 = vst.msk [vmem:[#allocation2 + $0x130] sm:$0xf] %vm6095, %v6335
  %6490 = vst.msk [vmem:[#allocation2 + $0x134] sm:$0xf] %vm6095, %v6336
  %6491 = vst.msk [vmem:[#allocation2 + $0x138] sm:$0xf] %vm6095, %v6337
  %6492 = vst.msk [vmem:[#allocation2 + $0x13c] sm:$0xf] %vm6095, %v6338
  %vm6493 = vcmask 57344
  %6494 = vst.msk [vmem:[#allocation2 + $0x140] sm:$0x1] %vm6493, %v6339
  %v6495 = vld [vmem:[#allocation2 + $0x4] sm:$0xc]
  %v6496 = vld [vmem:[#allocation2 + $0x8] sm:$0xf]
  %v6497 = vld [vmem:[#allocation2 + $0xc] sm:$0xf]
  %v6498 = vld [vmem:[#allocation2 + $0x10] sm:$0xf]
  %v6499 = vld [vmem:[#allocation2 + $0x14] sm:$0xf]
  %v6500 = vld [vmem:[#allocation2 + $0x18] sm:$0xf]
  %v6501 = vld [vmem:[#allocation2 + $0x1c] sm:$0xf]
  %v6502 = vld [vmem:[#allocation2 + $0x20] sm:$0xf]
  %v6503 = vld [vmem:[#allocation2 + $0x24] sm:$0xf]
  %v6504 = vld [vmem:[#allocation2 + $0x28] sm:$0xf]
  %v6505 = vld [vmem:[#allocation2 + $0x2c] sm:$0xf]
  %v6506 = vld [vmem:[#allocation2 + $0x30] sm:$0xf]
  %v6507 = vld [vmem:[#allocation2 + $0x34] sm:$0xf]
  %v6508 = vld [vmem:[#allocation2 + $0x38] sm:$0xf]
  %v6509 = vld [vmem:[#allocation2 + $0x3c] sm:$0xf]
  %v6510 = vld [vmem:[#allocation2 + $0x40] sm:$0xf]
  %v6511 = vld [vmem:[#allocation2 + $0x44] sm:$0xf]
  %v6512 = vld [vmem:[#allocation2 + $0x48] sm:$0xf]
  %v6513 = vld [vmem:[#allocation2 + $0x4c] sm:$0xf]
  %v6514 = vld [vmem:[#allocation2 + $0x50] sm:$0xf]
  %v6515 = vld [vmem:[#allocation2 + $0x54] sm:$0xf]
  %v6516 = vld [vmem:[#allocation2 + $0x58] sm:$0xf]
  %v6517 = vld [vmem:[#allocation2 + $0x5c] sm:$0xf]
  %v6518 = vld [vmem:[#allocation2 + $0x60] sm:$0xf]
  %v6519 = vld [vmem:[#allocation2 + $0x64] sm:$0xf]
  %v6520 = vld [vmem:[#allocation2 + $0x68] sm:$0xf]
  %v6521 = vld [vmem:[#allocation2 + $0x6c] sm:$0xf]
  %v6522 = vld [vmem:[#allocation2 + $0x70] sm:$0xf]
  %v6523 = vld [vmem:[#allocation2 + $0x74] sm:$0xf]
  %v6524 = vld [vmem:[#allocation2 + $0x78] sm:$0xf]
  %v6525 = vld [vmem:[#allocation2 + $0x7c] sm:$0xf]
  %v6526 = vld [vmem:[#allocation2 + $0x80] sm:$0xf]
  %v6527 = vld [vmem:[#allocation2 + $0x84] sm:$0xf]
  %v6528 = vld [vmem:[#allocation2 + $0x88] sm:$0xf]
  %v6529 = vld [vmem:[#allocation2 + $0x8c] sm:$0xf]
  %v6530 = vld [vmem:[#allocation2 + $0x90] sm:$0xf]
  %v6531 = vld [vmem:[#allocation2 + $0x94] sm:$0xf]
  %v6532 = vld [vmem:[#allocation2 + $0x98] sm:$0xf]
  %v6533 = vld [vmem:[#allocation2 + $0x9c] sm:$0xf]
  %v6534 = vld [vmem:[#allocation2 + $0xa0] sm:$0xf]
  %v6535 = vld [vmem:[#allocation2 + $0xa4] sm:$0xf]
  %v6536 = vld [vmem:[#allocation2 + $0xa8] sm:$0xf]
  %v6537 = vld [vmem:[#allocation2 + $0xac] sm:$0xf]
  %v6538 = vld [vmem:[#allocation2 + $0xb0] sm:$0xf]
  %v6539 = vld [vmem:[#allocation2 + $0xb4] sm:$0xf]
  %v6540 = vld [vmem:[#allocation2 + $0xb8] sm:$0xf]
  %v6541 = vld [vmem:[#allocation2 + $0xbc] sm:$0xf]
  %v6542 = vld [vmem:[#allocation2 + $0xc0] sm:$0xf]
  %v6543 = vld [vmem:[#allocation2 + $0xc4] sm:$0xf]
  %v6544 = vld [vmem:[#allocation2 + $0xc8] sm:$0xf]
  %v6545 = vld [vmem:[#allocation2 + $0xcc] sm:$0xf]
  %v6546 = vld [vmem:[#allocation2 + $0xd0] sm:$0xf]
  %v6547 = vld [vmem:[#allocation2 + $0xd4] sm:$0xf]
  %v6548 = vld [vmem:[#allocation2 + $0xd8] sm:$0xf]
  %v6549 = vld [vmem:[#allocation2 + $0xdc] sm:$0xf]
  %v6550 = vld [vmem:[#allocation2 + $0xe0] sm:$0xf]
  %v6551 = vld [vmem:[#allocation2 + $0xe4] sm:$0xf]
  %v6552 = vld [vmem:[#allocation2 + $0xe8] sm:$0xf]
  %v6553 = vld [vmem:[#allocation2 + $0xec] sm:$0xf]
  %v6554 = vld [vmem:[#allocation2 + $0xf0] sm:$0xf]
  %v6555 = vld [vmem:[#allocation2 + $0xf4] sm:$0xf]
  %v6556 = vld [vmem:[#allocation2 + $0xf8] sm:$0xf]
  %v6557 = vld [vmem:[#allocation2 + $0xfc] sm:$0xf]
  %v6558 = vld [vmem:[#allocation2 + $0x100] sm:$0xf]
  %v6559 = vld [vmem:[#allocation2 + $0x104] sm:$0xf]
  %v6560 = vld [vmem:[#allocation2 + $0x108] sm:$0xf]
  %v6561 = vld [vmem:[#allocation2 + $0x10c] sm:$0xf]
  %v6562 = vld [vmem:[#allocation2 + $0x110] sm:$0xf]
  %v6563 = vld [vmem:[#allocation2 + $0x114] sm:$0xf]
  %v6564 = vld [vmem:[#allocation2 + $0x118] sm:$0xf]
  %v6565 = vld [vmem:[#allocation2 + $0x11c] sm:$0xf]
  %v6566 = vld [vmem:[#allocation2 + $0x120] sm:$0xf]
  %v6567 = vld [vmem:[#allocation2 + $0x124] sm:$0xf]
  %v6568 = vld [vmem:[#allocation2 + $0x128] sm:$0xf]
  %v6569 = vld [vmem:[#allocation2 + $0x12c] sm:$0xf]
  %v6570 = vld [vmem:[#allocation2 + $0x130] sm:$0xf]
  %v6571 = vld [vmem:[#allocation2 + $0x134] sm:$0xf]
  %v6572 = vld [vmem:[#allocation2 + $0x4] sm:$0x8]
  %v6573 = vld [vmem:[#allocation2 + $0x138] sm:$0x1]
  %v6574 = vld [vmem:[#allocation2 + $0xc] sm:$0x8]
  %v6575 = vld [vmem:[#allocation2 + $0x138] sm:$0xf]
  %v6576 = vld [vmem:[#allocation2 + $0x13c] sm:$0xf]
  %v6577 = vld [vmem:[#allocation2 + $0x140] sm:$0x1]
  %v6578 = vld [vmem:[#allocation2 + $0x140] sm:$0x3]
  %v6579 = vld [vmem:[#allocation2 + $0x140] sm:$0xf]
  %v6580 = vld [vmem:[#allocation2 + $0x144] sm:$0xf]
  %v6581 = vld [vmem:[#allocation2 + $0x148] sm:$0x3]
  %v6582 = vld [vmem:[#allocation2 + $0x18] sm:$0xe]
  %v6583 = vld [vmem:[#allocation2 + $0x148] sm:$0x7]
  %v6661 = vunpack.c.l.b16 %v6495
  %v6662 = vunpack.c.l.b16 %v6496
  %v6663 = vunpack.c.l.b16 %v6497
  %v6664 = vunpack.c.l.b16 %v6498
  %v6665 = vunpack.c.l.b16 %v6499
  %v6666 = vunpack.c.l.b16 %v6500
  %v6667 = vunpack.c.l.b16 %v6501
  %v6668 = vunpack.c.l.b16 %v6502
  %v6669 = vunpack.c.l.b16 %v6503
  %v6670 = vunpack.c.l.b16 %v6504
  %v6671 = vunpack.c.l.b16 %v6505
  %v6672 = vunpack.c.l.b16 %v6506
  %v6673 = vunpack.c.l.b16 %v6507
  %v6674 = vunpack.c.l.b16 %v6508
  %v6675 = vunpack.c.l.b16 %v6509
  %v6676 = vunpack.c.l.b16 %v6510
  %v6677 = vunpack.c.l.b16 %v6511
  %v6678 = vunpack.c.l.b16 %v6512
  %v6679 = vunpack.c.l.b16 %v6513
  %v6680 = vunpack.c.l.b16 %v6514
  %v6681 = vunpack.c.l.b16 %v6515
  %v6682 = vunpack.c.l.b16 %v6516
  %v6683 = vunpack.c.l.b16 %v6517
  %v6684 = vunpack.c.l.b16 %v6518
  %v6685 = vunpack.c.l.b16 %v6519
  %v6686 = vunpack.c.l.b16 %v6520
  %v6687 = vunpack.c.l.b16 %v6521
  %v6688 = vunpack.c.l.b16 %v6522
  %v6689 = vunpack.c.l.b16 %v6523
  %v6690 = vunpack.c.l.b16 %v6524
  %v6691 = vunpack.c.l.b16 %v6525
  %v6692 = vunpack.c.l.b16 %v6526
  %v6693 = vunpack.c.l.b16 %v6527
  %v6694 = vunpack.c.l.b16 %v6528
  %v6695 = vunpack.c.l.b16 %v6529
  %v6696 = vunpack.c.l.b16 %v6530
  %v6697 = vunpack.c.l.b16 %v6531
  %v6698 = vunpack.c.l.b16 %v6532
  %v6699 = vunpack.c.l.b16 %v6533
  %v6700 = vunpack.c.l.b16 %v6534
  %v6701 = vunpack.c.l.b16 %v6535
  %v6702 = vunpack.c.l.b16 %v6536
  %v6703 = vunpack.c.l.b16 %v6537
  %v6704 = vunpack.c.l.b16 %v6538
  %v6705 = vunpack.c.l.b16 %v6539
  %v6706 = vunpack.c.l.b16 %v6540
  %v6707 = vunpack.c.l.b16 %v6541
  %v6708 = vunpack.c.l.b16 %v6542
  %v6709 = vunpack.c.l.b16 %v6543
  %v6710 = vunpack.c.l.b16 %v6544
  %v6711 = vunpack.c.l.b16 %v6545
  %v6712 = vunpack.c.l.b16 %v6546
  %v6713 = vunpack.c.l.b16 %v6547
  %v6714 = vunpack.c.l.b16 %v6548
  %v6715 = vunpack.c.l.b16 %v6549
  %v6716 = vunpack.c.l.b16 %v6550
  %v6717 = vunpack.c.l.b16 %v6551
  %v6718 = vunpack.c.l.b16 %v6552
  %v6719 = vunpack.c.l.b16 %v6553
  %v6720 = vunpack.c.l.b16 %v6554
  %v6721 = vunpack.c.l.b16 %v6555
  %v6722 = vunpack.c.l.b16 %v6556
  %v6723 = vunpack.c.l.b16 %v6557
  %v6724 = vunpack.c.l.b16 %v6558
  %v6725 = vunpack.c.l.b16 %v6559
  %v6726 = vunpack.c.l.b16 %v6560
  %v6727 = vunpack.c.l.b16 %v6561
  %v6728 = vunpack.c.l.b16 %v6562
  %v6729 = vunpack.c.l.b16 %v6563
  %v6730 = vunpack.c.l.b16 %v6564
  %v6731 = vunpack.c.l.b16 %v6565
  %v6732 = vunpack.c.l.b16 %v6566
  %v6733 = vunpack.c.l.b16 %v6567
  %v6734 = vunpack.c.l.b16 %v6568
  %v6735 = vunpack.c.l.b16 %v6569
  %v6736 = vunpack.c.l.b16 %v6570
  %v6737 = vunpack.c.l.b16 %v6571
  %v6738 = vpack.c.b16 %v6662, %v6661
  %v6739 = vpack.c.b16 %v6664, %v6663
  %v6740 = vpack.c.b16 %v6666, %v6665
  %v6741 = vpack.c.b16 %v6668, %v6667
  %v6742 = vpack.c.b16 %v6670, %v6669
  %v6743 = vpack.c.b16 %v6672, %v6671
  %v6744 = vpack.c.b16 %v6674, %v6673
  %v6745 = vpack.c.b16 %v6676, %v6675
  %v6746 = vpack.c.b16 %v6678, %v6677
  %v6747 = vpack.c.b16 %v6680, %v6679
  %v6748 = vpack.c.b16 %v6682, %v6681
  %v6749 = vpack.c.b16 %v6684, %v6683
  %v6750 = vpack.c.b16 %v6686, %v6685
  %v6751 = vpack.c.b16 %v6688, %v6687
  %v6752 = vpack.c.b16 %v6690, %v6689
  %v6753 = vpack.c.b16 %v6692, %v6691
  %v6754 = vpack.c.b16 %v6694, %v6693
  %v6755 = vpack.c.b16 %v6696, %v6695
  %v6756 = vpack.c.b16 %v6698, %v6697
  %v6757 = vpack.c.b16 %v6700, %v6699
  %v6758 = vpack.c.b16 %v6702, %v6701
  %v6759 = vpack.c.b16 %v6704, %v6703
  %v6760 = vpack.c.b16 %v6706, %v6705
  %v6761 = vpack.c.b16 %v6708, %v6707
  %v6762 = vpack.c.b16 %v6710, %v6709
  %v6763 = vpack.c.b16 %v6712, %v6711
  %v6764 = vpack.c.b16 %v6714, %v6713
  %v6765 = vpack.c.b16 %v6716, %v6715
  %v6766 = vpack.c.b16 %v6718, %v6717
  %v6767 = vpack.c.b16 %v6720, %v6719
  %v6768 = vpack.c.b16 %v6722, %v6721
  %v6769 = vpack.c.b16 %v6724, %v6723
  %v6770 = vpack.c.b16 %v6726, %v6725
  %v6771 = vpack.c.b16 %v6728, %v6727
  %v6772 = vpack.c.b16 %v6730, %v6729
  %v6773 = vpack.c.b16 %v6732, %v6731
  %v6774 = vpack.c.b16 %v6734, %v6733
  %v6775 = vpack.c.b16 %v6736, %v6735
  %v6776 = vpack.c.b16 %v6737, %v6737
  %v6778 = vunpack.c.l.b16 %v6572
  %v6779 = vpack.c.b16 %v6662, %v6778
  %v6781 = vshrl.u32 %v6779, 16
  %v6783 = vshll.u32 %v6779, 16
  %v6785 = vrot.slane %v6783, 1
  %v6786 = vor.u32 %v6781, %v6785
  %v6788 = vshll.u32 %v6739, 16
  %v6790 = vrot.slane %v6788, 1
  %v6791 = vsel %vm2012, %v6786, %v6790
  %v6792 = vshrl.u32 %v6739, 16
  %v6794 = vor.u32 %v6792, %v6790
  %v6796 = vshll.u32 %v6740, 16
  %v6798 = vrot.slane %v6796, 1
  %v6799 = vsel %vm2012, %v6794, %v6798
  %v6800 = vshrl.u32 %v6740, 16
  %v6802 = vor.u32 %v6800, %v6798
  %v6804 = vshll.u32 %v6741, 16
  %v6806 = vrot.slane %v6804, 1
  %v6807 = vsel %vm2012, %v6802, %v6806
  %v6808 = vshrl.u32 %v6741, 16
  %v6810 = vor.u32 %v6808, %v6806
  %v6812 = vshll.u32 %v6742, 16
  %v6814 = vrot.slane %v6812, 1
  %v6815 = vsel %vm2012, %v6810, %v6814
  %v6816 = vshrl.u32 %v6742, 16
  %v6818 = vor.u32 %v6816, %v6814
  %v6820 = vshll.u32 %v6743, 16
  %v6822 = vrot.slane %v6820, 1
  %v6823 = vsel %vm2012, %v6818, %v6822
  %v6824 = vshrl.u32 %v6743, 16
  %v6826 = vor.u32 %v6824, %v6822
  %v6828 = vshll.u32 %v6744, 16
  %v6830 = vrot.slane %v6828, 1
  %v6831 = vsel %vm2012, %v6826, %v6830
  %v6832 = vshrl.u32 %v6744, 16
  %v6834 = vor.u32 %v6832, %v6830
  %v6836 = vshll.u32 %v6745, 16
  %v6838 = vrot.slane %v6836, 1
  %v6839 = vsel %vm2012, %v6834, %v6838
  %v6840 = vshrl.u32 %v6745, 16
  %v6842 = vor.u32 %v6840, %v6838
  %v6844 = vshll.u32 %v6746, 16
  %v6846 = vrot.slane %v6844, 1
  %v6847 = vsel %vm2012, %v6842, %v6846
  %v6848 = vshrl.u32 %v6746, 16
  %v6850 = vor.u32 %v6848, %v6846
  %v6852 = vshll.u32 %v6747, 16
  %v6854 = vrot.slane %v6852, 1
  %v6855 = vsel %vm2012, %v6850, %v6854
  %v6856 = vshrl.u32 %v6747, 16
  %v6858 = vor.u32 %v6856, %v6854
  %v6860 = vshll.u32 %v6748, 16
  %v6862 = vrot.slane %v6860, 1
  %v6863 = vsel %vm2012, %v6858, %v6862
  %v6864 = vshrl.u32 %v6748, 16
  %v6866 = vor.u32 %v6864, %v6862
  %v6868 = vshll.u32 %v6749, 16
  %v6870 = vrot.slane %v6868, 1
  %v6871 = vsel %vm2012, %v6866, %v6870
  %v6872 = vshrl.u32 %v6749, 16
  %v6874 = vor.u32 %v6872, %v6870
  %v6876 = vshll.u32 %v6750, 16
  %v6878 = vrot.slane %v6876, 1
  %v6879 = vsel %vm2012, %v6874, %v6878
  %v6880 = vshrl.u32 %v6750, 16
  %v6882 = vor.u32 %v6880, %v6878
  %v6884 = vshll.u32 %v6751, 16
  %v6886 = vrot.slane %v6884, 1
  %v6887 = vsel %vm2012, %v6882, %v6886
  %v6888 = vshrl.u32 %v6751, 16
  %v6890 = vor.u32 %v6888, %v6886
  %v6892 = vshll.u32 %v6752, 16
  %v6894 = vrot.slane %v6892, 1
  %v6895 = vsel %vm2012, %v6890, %v6894
  %v6896 = vshrl.u32 %v6752, 16
  %v6898 = vor.u32 %v6896, %v6894
  %v6900 = vshll.u32 %v6753, 16
  %v6902 = vrot.slane %v6900, 1
  %v6903 = vsel %vm2012, %v6898, %v6902
  %v6904 = vshrl.u32 %v6753, 16
  %v6906 = vor.u32 %v6904, %v6902
  %v6908 = vshll.u32 %v6754, 16
  %v6910 = vrot.slane %v6908, 1
  %v6911 = vsel %vm2012, %v6906, %v6910
  %v6912 = vshrl.u32 %v6754, 16
  %v6914 = vor.u32 %v6912, %v6910
  %v6916 = vshll.u32 %v6755, 16
  %v6918 = vrot.slane %v6916, 1
  %v6919 = vsel %vm2012, %v6914, %v6918
  %v6920 = vshrl.u32 %v6755, 16
  %v6922 = vor.u32 %v6920, %v6918
  %v6924 = vshll.u32 %v6756, 16
  %v6926 = vrot.slane %v6924, 1
  %v6927 = vsel %vm2012, %v6922, %v6926
  %v6928 = vshrl.u32 %v6756, 16
  %v6930 = vor.u32 %v6928, %v6926
  %v6932 = vshll.u32 %v6757, 16
  %v6934 = vrot.slane %v6932, 1
  %v6935 = vsel %vm2012, %v6930, %v6934
  %v6936 = vshrl.u32 %v6757, 16
  %v6938 = vor.u32 %v6936, %v6934
  %v6940 = vshll.u32 %v6758, 16
  %v6942 = vrot.slane %v6940, 1
  %v6943 = vsel %vm2012, %v6938, %v6942
  %v6944 = vshrl.u32 %v6758, 16
  %v6946 = vor.u32 %v6944, %v6942
  %v6948 = vshll.u32 %v6759, 16
  %v6950 = vrot.slane %v6948, 1
  %v6951 = vsel %vm2012, %v6946, %v6950
  %v6952 = vshrl.u32 %v6759, 16
  %v6954 = vor.u32 %v6952, %v6950
  %v6956 = vshll.u32 %v6760, 16
  %v6958 = vrot.slane %v6956, 1
  %v6959 = vsel %vm2012, %v6954, %v6958
  %v6960 = vshrl.u32 %v6760, 16
  %v6962 = vor.u32 %v6960, %v6958
  %v6964 = vshll.u32 %v6761, 16
  %v6966 = vrot.slane %v6964, 1
  %v6967 = vsel %vm2012, %v6962, %v6966
  %v6968 = vshrl.u32 %v6761, 16
  %v6970 = vor.u32 %v6968, %v6966
  %v6972 = vshll.u32 %v6762, 16
  %v6974 = vrot.slane %v6972, 1
  %v6975 = vsel %vm2012, %v6970, %v6974
  %v6976 = vshrl.u32 %v6762, 16
  %v6978 = vor.u32 %v6976, %v6974
  %v6980 = vshll.u32 %v6763, 16
  %v6982 = vrot.slane %v6980, 1
  %v6983 = vsel %vm2012, %v6978, %v6982
  %v6984 = vshrl.u32 %v6763, 16
  %v6986 = vor.u32 %v6984, %v6982
  %v6988 = vshll.u32 %v6764, 16
  %v6990 = vrot.slane %v6988, 1
  %v6991 = vsel %vm2012, %v6986, %v6990
  %v6992 = vshrl.u32 %v6764, 16
  %v6994 = vor.u32 %v6992, %v6990
  %v6996 = vshll.u32 %v6765, 16
  %v6998 = vrot.slane %v6996, 1
  %v6999 = vsel %vm2012, %v6994, %v6998
  %v7000 = vshrl.u32 %v6765, 16
  %v7002 = vor.u32 %v7000, %v6998
  %v7004 = vshll.u32 %v6766, 16
  %v7006 = vrot.slane %v7004, 1
  %v7007 = vsel %vm2012, %v7002, %v7006
  %v7008 = vshrl.u32 %v6766, 16
  %v7010 = vor.u32 %v7008, %v7006
  %v7012 = vshll.u32 %v6767, 16
  %v7014 = vrot.slane %v7012, 1
  %v7015 = vsel %vm2012, %v7010, %v7014
  %v7016 = vshrl.u32 %v6767, 16
  %v7018 = vor.u32 %v7016, %v7014
  %v7020 = vshll.u32 %v6768, 16
  %v7022 = vrot.slane %v7020, 1
  %v7023 = vsel %vm2012, %v7018, %v7022
  %v7024 = vshrl.u32 %v6768, 16
  %v7026 = vor.u32 %v7024, %v7022
  %v7028 = vshll.u32 %v6769, 16
  %v7030 = vrot.slane %v7028, 1
  %v7031 = vsel %vm2012, %v7026, %v7030
  %v7032 = vshrl.u32 %v6769, 16
  %v7034 = vor.u32 %v7032, %v7030
  %v7036 = vshll.u32 %v6770, 16
  %v7038 = vrot.slane %v7036, 1
  %v7039 = vsel %vm2012, %v7034, %v7038
  %v7040 = vshrl.u32 %v6770, 16
  %v7042 = vor.u32 %v7040, %v7038
  %v7044 = vshll.u32 %v6771, 16
  %v7046 = vrot.slane %v7044, 1
  %v7047 = vsel %vm2012, %v7042, %v7046
  %v7048 = vshrl.u32 %v6771, 16
  %v7050 = vor.u32 %v7048, %v7046
  %v7052 = vshll.u32 %v6772, 16
  %v7054 = vrot.slane %v7052, 1
  %v7055 = vsel %vm2012, %v7050, %v7054
  %v7056 = vshrl.u32 %v6772, 16
  %v7058 = vor.u32 %v7056, %v7054
  %v7060 = vshll.u32 %v6773, 16
  %v7062 = vrot.slane %v7060, 1
  %v7063 = vsel %vm2012, %v7058, %v7062
  %v7064 = vshrl.u32 %v6773, 16
  %v7066 = vor.u32 %v7064, %v7062
  %v7068 = vshll.u32 %v6774, 16
  %v7070 = vrot.slane %v7068, 1
  %v7071 = vsel %vm2012, %v7066, %v7070
  %v7072 = vshrl.u32 %v6774, 16
  %v7074 = vor.u32 %v7072, %v7070
  %v7076 = vshll.u32 %v6775, 16
  %v7078 = vrot.slane %v7076, 1
  %v7079 = vsel %vm2012, %v7074, %v7078
  %v7080 = vshrl.u32 %v6775, 16
  %v7082 = vor.u32 %v7080, %v7078
  %v7084 = vshll.u32 %v6776, 16
  %v7086 = vrot.slane %v7084, 1
  %v7087 = vsel %vm2012, %v7082, %v7086
  %v7088 = vshrl.u32 %v6776, 16
  %v7090 = vor.u32 %v7088, %v7086
  %7091 = vrot.lane.b32.xlu0 %v6791, 8
  %v7092 = vpop.permute.xlu0 %7091
  %7093 = vrot.lane.b32.xlu0 %v6799, 8
  %v7094 = vpop.permute.xlu0 %7093
  %7095 = vrot.lane.b32.xlu0 %v6807, 8
  %v7096 = vpop.permute.xlu0 %7095
  %7097 = vrot.lane.b32.xlu0 %v6815, 8
  %v7098 = vpop.permute.xlu0 %7097
  %7099 = vrot.lane.b32.xlu0 %v6823, 8
  %v7100 = vpop.permute.xlu0 %7099
  %7101 = vrot.lane.b32.xlu0 %v6831, 8
  %v7102 = vpop.permute.xlu0 %7101
  %7103 = vrot.lane.b32.xlu0 %v6839, 8
  %v7104 = vpop.permute.xlu0 %7103
  %7105 = vrot.lane.b32.xlu0 %v6847, 8
  %v7106 = vpop.permute.xlu0 %7105
  %7107 = vrot.lane.b32.xlu0 %v6855, 8
  %v7108 = vpop.permute.xlu0 %7107
  %7109 = vrot.lane.b32.xlu0 %v6863, 8
  %v7110 = vpop.permute.xlu0 %7109
  %7111 = vrot.lane.b32.xlu0 %v6871, 8
  %v7112 = vpop.permute.xlu0 %7111
  %7113 = vrot.lane.b32.xlu0 %v6879, 8
  %v7114 = vpop.permute.xlu0 %7113
  %7115 = vrot.lane.b32.xlu0 %v6887, 8
  %v7116 = vpop.permute.xlu0 %7115
  %7117 = vrot.lane.b32.xlu0 %v6895, 8
  %v7118 = vpop.permute.xlu0 %7117
  %7119 = vrot.lane.b32.xlu0 %v6903, 8
  %v7120 = vpop.permute.xlu0 %7119
  %7121 = vrot.lane.b32.xlu0 %v6911, 8
  %v7122 = vpop.permute.xlu0 %7121
  %7123 = vrot.lane.b32.xlu0 %v6919, 8
  %v7124 = vpop.permute.xlu0 %7123
  %7125 = vrot.lane.b32.xlu0 %v6927, 8
  %v7126 = vpop.permute.xlu0 %7125
  %7127 = vrot.lane.b32.xlu0 %v6935, 8
  %v7128 = vpop.permute.xlu0 %7127
  %7129 = vrot.lane.b32.xlu0 %v6943, 8
  %v7130 = vpop.permute.xlu0 %7129
  %7131 = vrot.lane.b32.xlu0 %v6951, 8
  %v7132 = vpop.permute.xlu0 %7131
  %7133 = vrot.lane.b32.xlu0 %v6959, 8
  %v7134 = vpop.permute.xlu0 %7133
  %7135 = vrot.lane.b32.xlu0 %v6967, 8
  %v7136 = vpop.permute.xlu0 %7135
  %7137 = vrot.lane.b32.xlu0 %v6975, 8
  %v7138 = vpop.permute.xlu0 %7137
  %7139 = vrot.lane.b32.xlu0 %v6983, 8
  %v7140 = vpop.permute.xlu0 %7139
  %7141 = vrot.lane.b32.xlu0 %v6991, 8
  %v7142 = vpop.permute.xlu0 %7141
  %7143 = vrot.lane.b32.xlu0 %v6999, 8
  %v7144 = vpop.permute.xlu0 %7143
  %7145 = vrot.lane.b32.xlu0 %v7007, 8
  %v7146 = vpop.permute.xlu0 %7145
  %7147 = vrot.lane.b32.xlu0 %v7015, 8
  %v7148 = vpop.permute.xlu0 %7147
  %7149 = vrot.lane.b32.xlu0 %v7023, 8
  %v7150 = vpop.permute.xlu0 %7149
  %7151 = vrot.lane.b32.xlu0 %v7031, 8
  %v7152 = vpop.permute.xlu0 %7151
  %7153 = vrot.lane.b32.xlu0 %v7039, 8
  %v7154 = vpop.permute.xlu0 %7153
  %7155 = vrot.lane.b32.xlu0 %v7047, 8
  %v7156 = vpop.permute.xlu0 %7155
  %7157 = vrot.lane.b32.xlu0 %v7055, 8
  %v7158 = vpop.permute.xlu0 %7157
  %7159 = vrot.lane.b32.xlu0 %v7063, 8
  %v7160 = vpop.permute.xlu0 %7159
  %7161 = vrot.lane.b32.xlu0 %v7071, 8
  %v7162 = vpop.permute.xlu0 %7161
  %7163 = vrot.lane.b32.xlu0 %v7079, 8
  %v7164 = vpop.permute.xlu0 %7163
  %7165 = vrot.lane.b32.xlu0 %v7087, 8
  %v7166 = vpop.permute.xlu0 %7165
  %7167 = vrot.lane.b32.xlu0 %v7090, 8
  %v7168 = vpop.permute.xlu0 %7167
  %v7170 = vunpack.c.l.b16 %v6573
  %v7171 = vpack.c.b16 %v7170, %v6737
  %v7172 = vrot.slane %v6779, 1
  %v7173 = vrot.slane %v6739, 1
  %v7174 = vsel %vm2405, %v7172, %v7173
  %v7175 = vrot.slane %v6740, 1
  %v7176 = vsel %vm2405, %v7173, %v7175
  %v7177 = vrot.slane %v6741, 1
  %v7178 = vsel %vm2405, %v7175, %v7177
  %v7179 = vrot.slane %v6742, 1
  %v7180 = vsel %vm2405, %v7177, %v7179
  %v7181 = vrot.slane %v6743, 1
  %v7182 = vsel %vm2405, %v7179, %v7181
  %v7183 = vrot.slane %v6744, 1
  %v7184 = vsel %vm2405, %v7181, %v7183
  %v7185 = vrot.slane %v6745, 1
  %v7186 = vsel %vm2405, %v7183, %v7185
  %v7187 = vrot.slane %v6746, 1
  %v7188 = vsel %vm2405, %v7185, %v7187
  %v7189 = vrot.slane %v6747, 1
  %v7190 = vsel %vm2405, %v7187, %v7189
  %v7191 = vrot.slane %v6748, 1
  %v7192 = vsel %vm2405, %v7189, %v7191
  %v7193 = vrot.slane %v6749, 1
  %v7194 = vsel %vm2405, %v7191, %v7193
  %v7195 = vrot.slane %v6750, 1
  %v7196 = vsel %vm2405, %v7193, %v7195
  %v7197 = vrot.slane %v6751, 1
  %v7198 = vsel %vm2405, %v7195, %v7197
  %v7199 = vrot.slane %v6752, 1
  %v7200 = vsel %vm2405, %v7197, %v7199
  %v7201 = vrot.slane %v6753, 1
  %v7202 = vsel %vm2405, %v7199, %v7201
  %v7203 = vrot.slane %v6754, 1
  %v7204 = vsel %vm2405, %v7201, %v7203
  %v7205 = vrot.slane %v6755, 1
  %v7206 = vsel %vm2405, %v7203, %v7205
  %v7207 = vrot.slane %v6756, 1
  %v7208 = vsel %vm2405, %v7205, %v7207
  %v7209 = vrot.slane %v6757, 1
  %v7210 = vsel %vm2405, %v7207, %v7209
  %v7211 = vrot.slane %v6758, 1
  %v7212 = vsel %vm2405, %v7209, %v7211
  %v7213 = vrot.slane %v6759, 1
  %v7214 = vsel %vm2405, %v7211, %v7213
  %v7215 = vrot.slane %v6760, 1
  %v7216 = vsel %vm2405, %v7213, %v7215
  %v7217 = vrot.slane %v6761, 1
  %v7218 = vsel %vm2405, %v7215, %v7217
  %v7219 = vrot.slane %v6762, 1
  %v7220 = vsel %vm2405, %v7217, %v7219
  %v7221 = vrot.slane %v6763, 1
  %v7222 = vsel %vm2405, %v7219, %v7221
  %v7223 = vrot.slane %v6764, 1
  %v7224 = vsel %vm2405, %v7221, %v7223
  %v7225 = vrot.slane %v6765, 1
  %v7226 = vsel %vm2405, %v7223, %v7225
  %v7227 = vrot.slane %v6766, 1
  %v7228 = vsel %vm2405, %v7225, %v7227
  %v7229 = vrot.slane %v6767, 1
  %v7230 = vsel %vm2405, %v7227, %v7229
  %v7231 = vrot.slane %v6768, 1
  %v7232 = vsel %vm2405, %v7229, %v7231
  %v7233 = vrot.slane %v6769, 1
  %v7234 = vsel %vm2405, %v7231, %v7233
  %v7235 = vrot.slane %v6770, 1
  %v7236 = vsel %vm2405, %v7233, %v7235
  %v7237 = vrot.slane %v6771, 1
  %v7238 = vsel %vm2405, %v7235, %v7237
  %v7239 = vrot.slane %v6772, 1
  %v7240 = vsel %vm2405, %v7237, %v7239
  %v7241 = vrot.slane %v6773, 1
  %v7242 = vsel %vm2405, %v7239, %v7241
  %v7243 = vrot.slane %v6774, 1
  %v7244 = vsel %vm2405, %v7241, %v7243
  %v7245 = vrot.slane %v6775, 1
  %v7246 = vsel %vm2405, %v7243, %v7245
  %v7247 = vrot.slane %v7171, 1
  %v7248 = vsel %vm2405, %v7245, %v7247
  %7249 = vrot.lane.b32.xlu0 %v7174, 16
  %v7250 = vpop.permute.xlu0 %7249
  %7251 = vrot.lane.b32.xlu0 %v7176, 16
  %v7252 = vpop.permute.xlu0 %7251
  %7253 = vrot.lane.b32.xlu0 %v7178, 16
  %v7254 = vpop.permute.xlu0 %7253
  %7255 = vrot.lane.b32.xlu0 %v7180, 16
  %v7256 = vpop.permute.xlu0 %7255
  %7257 = vrot.lane.b32.xlu0 %v7182, 16
  %v7258 = vpop.permute.xlu0 %7257
  %7259 = vrot.lane.b32.xlu0 %v7184, 16
  %v7260 = vpop.permute.xlu0 %7259
  %7261 = vrot.lane.b32.xlu0 %v7186, 16
  %v7262 = vpop.permute.xlu0 %7261
  %7263 = vrot.lane.b32.xlu0 %v7188, 16
  %v7264 = vpop.permute.xlu0 %7263
  %7265 = vrot.lane.b32.xlu0 %v7190, 16
  %v7266 = vpop.permute.xlu0 %7265
  %7267 = vrot.lane.b32.xlu0 %v7192, 16
  %v7268 = vpop.permute.xlu0 %7267
  %7269 = vrot.lane.b32.xlu0 %v7194, 16
  %v7270 = vpop.permute.xlu0 %7269
  %7271 = vrot.lane.b32.xlu0 %v7196, 16
  %v7272 = vpop.permute.xlu0 %7271
  %7273 = vrot.lane.b32.xlu0 %v7198, 16
  %v7274 = vpop.permute.xlu0 %7273
  %7275 = vrot.lane.b32.xlu0 %v7200, 16
  %v7276 = vpop.permute.xlu0 %7275
  %7277 = vrot.lane.b32.xlu0 %v7202, 16
  %v7278 = vpop.permute.xlu0 %7277
  %7279 = vrot.lane.b32.xlu0 %v7204, 16
  %v7280 = vpop.permute.xlu0 %7279
  %7281 = vrot.lane.b32.xlu0 %v7206, 16
  %v7282 = vpop.permute.xlu0 %7281
  %7283 = vrot.lane.b32.xlu0 %v7208, 16
  %v7284 = vpop.permute.xlu0 %7283
  %7285 = vrot.lane.b32.xlu0 %v7210, 16
  %v7286 = vpop.permute.xlu0 %7285
  %7287 = vrot.lane.b32.xlu0 %v7212, 16
  %v7288 = vpop.permute.xlu0 %7287
  %7289 = vrot.lane.b32.xlu0 %v7214, 16
  %v7290 = vpop.permute.xlu0 %7289
  %7291 = vrot.lane.b32.xlu0 %v7216, 16
  %v7292 = vpop.permute.xlu0 %7291
  %7293 = vrot.lane.b32.xlu0 %v7218, 16
  %v7294 = vpop.permute.xlu0 %7293
  %7295 = vrot.lane.b32.xlu0 %v7220, 16
  %v7296 = vpop.permute.xlu0 %7295
  %7297 = vrot.lane.b32.xlu0 %v7222, 16
  %v7298 = vpop.permute.xlu0 %7297
  %7299 = vrot.lane.b32.xlu0 %v7224, 16
  %v7300 = vpop.permute.xlu0 %7299
  %7301 = vrot.lane.b32.xlu0 %v7226, 16
  %v7302 = vpop.permute.xlu0 %7301
  %7303 = vrot.lane.b32.xlu0 %v7228, 16
  %v7304 = vpop.permute.xlu0 %7303
  %7305 = vrot.lane.b32.xlu0 %v7230, 16
  %v7306 = vpop.permute.xlu0 %7305
  %7307 = vrot.lane.b32.xlu0 %v7232, 16
  %v7308 = vpop.permute.xlu0 %7307
  %7309 = vrot.lane.b32.xlu0 %v7234, 16
  %v7310 = vpop.permute.xlu0 %7309
  %7311 = vrot.lane.b32.xlu0 %v7236, 16
  %v7312 = vpop.permute.xlu0 %7311
  %7313 = vrot.lane.b32.xlu0 %v7238, 16
  %v7314 = vpop.permute.xlu0 %7313
  %7315 = vrot.lane.b32.xlu0 %v7240, 16
  %v7316 = vpop.permute.xlu0 %7315
  %7317 = vrot.lane.b32.xlu0 %v7242, 16
  %v7318 = vpop.permute.xlu0 %7317
  %7319 = vrot.lane.b32.xlu0 %v7244, 16
  %v7320 = vpop.permute.xlu0 %7319
  %7321 = vrot.lane.b32.xlu0 %v7246, 16
  %v7322 = vpop.permute.xlu0 %7321
  %7323 = vrot.lane.b32.xlu0 %v7248, 16
  %v7324 = vpop.permute.xlu0 %7323
  %7325 = vrot.lane.b32.xlu0 %v7247, 16
  %v7326 = vpop.permute.xlu0 %7325
  %v7331 = vunpack.c.l.b16 %v6574
  %v7332 = vunpack.c.l.b16 %v6575
  %v7333 = vunpack.c.l.b16 %v6576
  %v7334 = vunpack.c.l.b16 %v6577
  %v7335 = vpack.c.b16 %v6664, %v7331
  %v7336 = vpack.c.b16 %v7332, %v6737
  %v7337 = vpack.c.b16 %v7334, %v7333
  %v7338 = vrot.slane %v7335, 1
  %v7339 = vsel %vm2405, %v7338, %v7175
  %v7340 = vrot.slane %v7336, 1
  %v7341 = vsel %vm2405, %v7245, %v7340
  %v7342 = vrot.slane %v7337, 1
  %v7343 = vsel %vm2405, %v7340, %v7342
  %7344 = vrot.lane.b32.xlu0 %v7339, 24
  %v7345 = vpop.permute.xlu0 %7344
  %7346 = vrot.lane.b32.xlu0 %v7178, 24
  %v7347 = vpop.permute.xlu0 %7346
  %7348 = vrot.lane.b32.xlu0 %v7180, 24
  %v7349 = vpop.permute.xlu0 %7348
  %7350 = vrot.lane.b32.xlu0 %v7182, 24
  %v7351 = vpop.permute.xlu0 %7350
  %7352 = vrot.lane.b32.xlu0 %v7184, 24
  %v7353 = vpop.permute.xlu0 %7352
  %7354 = vrot.lane.b32.xlu0 %v7186, 24
  %v7355 = vpop.permute.xlu0 %7354
  %7356 = vrot.lane.b32.xlu0 %v7188, 24
  %v7357 = vpop.permute.xlu0 %7356
  %7358 = vrot.lane.b32.xlu0 %v7190, 24
  %v7359 = vpop.permute.xlu0 %7358
  %7360 = vrot.lane.b32.xlu0 %v7192, 24
  %v7361 = vpop.permute.xlu0 %7360
  %7362 = vrot.lane.b32.xlu0 %v7194, 24
  %v7363 = vpop.permute.xlu0 %7362
  %7364 = vrot.lane.b32.xlu0 %v7196, 24
  %v7365 = vpop.permute.xlu0 %7364
  %7366 = vrot.lane.b32.xlu0 %v7198, 24
  %v7367 = vpop.permute.xlu0 %7366
  %7368 = vrot.lane.b32.xlu0 %v7200, 24
  %v7369 = vpop.permute.xlu0 %7368
  %7370 = vrot.lane.b32.xlu0 %v7202, 24
  %v7371 = vpop.permute.xlu0 %7370
  %7372 = vrot.lane.b32.xlu0 %v7204, 24
  %v7373 = vpop.permute.xlu0 %7372
  %7374 = vrot.lane.b32.xlu0 %v7206, 24
  %v7375 = vpop.permute.xlu0 %7374
  %7376 = vrot.lane.b32.xlu0 %v7208, 24
  %v7377 = vpop.permute.xlu0 %7376
  %7378 = vrot.lane.b32.xlu0 %v7210, 24
  %v7379 = vpop.permute.xlu0 %7378
  %7380 = vrot.lane.b32.xlu0 %v7212, 24
  %v7381 = vpop.permute.xlu0 %7380
  %7382 = vrot.lane.b32.xlu0 %v7214, 24
  %v7383 = vpop.permute.xlu0 %7382
  %7384 = vrot.lane.b32.xlu0 %v7216, 24
  %v7385 = vpop.permute.xlu0 %7384
  %7386 = vrot.lane.b32.xlu0 %v7218, 24
  %v7387 = vpop.permute.xlu0 %7386
  %7388 = vrot.lane.b32.xlu0 %v7220, 24
  %v7389 = vpop.permute.xlu0 %7388
  %7390 = vrot.lane.b32.xlu0 %v7222, 24
  %v7391 = vpop.permute.xlu0 %7390
  %7392 = vrot.lane.b32.xlu0 %v7224, 24
  %v7393 = vpop.permute.xlu0 %7392
  %7394 = vrot.lane.b32.xlu0 %v7226, 24
  %v7395 = vpop.permute.xlu0 %7394
  %7396 = vrot.lane.b32.xlu0 %v7228, 24
  %v7397 = vpop.permute.xlu0 %7396
  %7398 = vrot.lane.b32.xlu0 %v7230, 24
  %v7399 = vpop.permute.xlu0 %7398
  %7400 = vrot.lane.b32.xlu0 %v7232, 24
  %v7401 = vpop.permute.xlu0 %7400
  %7402 = vrot.lane.b32.xlu0 %v7234, 24
  %v7403 = vpop.permute.xlu0 %7402
  %7404 = vrot.lane.b32.xlu0 %v7236, 24
  %v7405 = vpop.permute.xlu0 %7404
  %7406 = vrot.lane.b32.xlu0 %v7238, 24
  %v7407 = vpop.permute.xlu0 %7406
  %7408 = vrot.lane.b32.xlu0 %v7240, 24
  %v7409 = vpop.permute.xlu0 %7408
  %7410 = vrot.lane.b32.xlu0 %v7242, 24
  %v7411 = vpop.permute.xlu0 %7410
  %7412 = vrot.lane.b32.xlu0 %v7244, 24
  %v7413 = vpop.permute.xlu0 %7412
  %7414 = vrot.lane.b32.xlu0 %v7246, 24
  %v7415 = vpop.permute.xlu0 %7414
  %7416 = vrot.lane.b32.xlu0 %v7341, 24
  %v7417 = vpop.permute.xlu0 %7416
  %7418 = vrot.lane.b32.xlu0 %v7343, 24
  %v7419 = vpop.permute.xlu0 %7418
  %7420 = vrot.lane.b32.xlu0 %v7342, 24
  %v7421 = vpop.permute.xlu0 %7420
  %v7422 = vpack.c.b16 %v6665, %v6664
  %v7423 = vpack.c.b16 %v6667, %v6666
  %v7424 = vpack.c.b16 %v6669, %v6668
  %v7425 = vpack.c.b16 %v6671, %v6670
  %v7426 = vpack.c.b16 %v6673, %v6672
  %v7427 = vpack.c.b16 %v6675, %v6674
  %v7428 = vpack.c.b16 %v6677, %v6676
  %v7429 = vpack.c.b16 %v6679, %v6678
  %v7430 = vpack.c.b16 %v6681, %v6680
  %v7431 = vpack.c.b16 %v6683, %v6682
  %v7432 = vpack.c.b16 %v6685, %v6684
  %v7433 = vpack.c.b16 %v6687, %v6686
  %v7434 = vpack.c.b16 %v6689, %v6688
  %v7435 = vpack.c.b16 %v6691, %v6690
  %v7436 = vpack.c.b16 %v6693, %v6692
  %v7437 = vpack.c.b16 %v6695, %v6694
  %v7438 = vpack.c.b16 %v6697, %v6696
  %v7439 = vpack.c.b16 %v6699, %v6698
  %v7440 = vpack.c.b16 %v6701, %v6700
  %v7441 = vpack.c.b16 %v6703, %v6702
  %v7442 = vpack.c.b16 %v6705, %v6704
  %v7443 = vpack.c.b16 %v6707, %v6706
  %v7444 = vpack.c.b16 %v6709, %v6708
  %v7445 = vpack.c.b16 %v6711, %v6710
  %v7446 = vpack.c.b16 %v6713, %v6712
  %v7447 = vpack.c.b16 %v6715, %v6714
  %v7448 = vpack.c.b16 %v6717, %v6716
  %v7449 = vpack.c.b16 %v6719, %v6718
  %v7450 = vpack.c.b16 %v6721, %v6720
  %v7451 = vpack.c.b16 %v6723, %v6722
  %v7452 = vpack.c.b16 %v6725, %v6724
  %v7453 = vpack.c.b16 %v6727, %v6726
  %v7454 = vpack.c.b16 %v6729, %v6728
  %v7455 = vpack.c.b16 %v6731, %v6730
  %v7456 = vpack.c.b16 %v6733, %v6732
  %v7457 = vpack.c.b16 %v6735, %v6734
  %v7458 = vpack.c.b16 %v6737, %v6736
  %v7459 = vpack.c.b16 %v7333, %v7332
  %v7460 = vpack.c.b16 %v7334, %v7334
  %v7462 = vshrl.u32 %v7422, 16
  %v7464 = vrot.slane %v7462, 5
  %v7465 = vshll.u32 %v7422, 16
  %v7467 = vrot.slane %v7465, 6
  %v7468 = vor.u32 %v7464, %v7467
  %v7470 = vshrl.u32 %v7423, 16
  %v7472 = vrot.slane %v7470, 5
  %v7473 = vshll.u32 %v7423, 16
  %v7475 = vrot.slane %v7473, 6
  %v7476 = vor.u32 %v7472, %v7475
  %v7477 = vsel %vm2695, %v7468, %v7476
  %v7479 = vshrl.u32 %v7424, 16
  %v7481 = vrot.slane %v7479, 5
  %v7482 = vshll.u32 %v7424, 16
  %v7484 = vrot.slane %v7482, 6
  %v7485 = vor.u32 %v7481, %v7484
  %v7486 = vsel %vm2695, %v7476, %v7485
  %v7488 = vshrl.u32 %v7425, 16
  %v7490 = vrot.slane %v7488, 5
  %v7491 = vshll.u32 %v7425, 16
  %v7493 = vrot.slane %v7491, 6
  %v7494 = vor.u32 %v7490, %v7493
  %v7495 = vsel %vm2695, %v7485, %v7494
  %v7497 = vshrl.u32 %v7426, 16
  %v7499 = vrot.slane %v7497, 5
  %v7500 = vshll.u32 %v7426, 16
  %v7502 = vrot.slane %v7500, 6
  %v7503 = vor.u32 %v7499, %v7502
  %v7504 = vsel %vm2695, %v7494, %v7503
  %v7506 = vshrl.u32 %v7427, 16
  %v7508 = vrot.slane %v7506, 5
  %v7509 = vshll.u32 %v7427, 16
  %v7511 = vrot.slane %v7509, 6
  %v7512 = vor.u32 %v7508, %v7511
  %v7513 = vsel %vm2695, %v7503, %v7512
  %v7515 = vshrl.u32 %v7428, 16
  %v7517 = vrot.slane %v7515, 5
  %v7518 = vshll.u32 %v7428, 16
  %v7520 = vrot.slane %v7518, 6
  %v7521 = vor.u32 %v7517, %v7520
  %v7522 = vsel %vm2695, %v7512, %v7521
  %v7524 = vshrl.u32 %v7429, 16
  %v7526 = vrot.slane %v7524, 5
  %v7527 = vshll.u32 %v7429, 16
  %v7529 = vrot.slane %v7527, 6
  %v7530 = vor.u32 %v7526, %v7529
  %v7531 = vsel %vm2695, %v7521, %v7530
  %v7533 = vshrl.u32 %v7430, 16
  %v7535 = vrot.slane %v7533, 5
  %v7536 = vshll.u32 %v7430, 16
  %v7538 = vrot.slane %v7536, 6
  %v7539 = vor.u32 %v7535, %v7538
  %v7540 = vsel %vm2695, %v7530, %v7539
  %v7542 = vshrl.u32 %v7431, 16
  %v7544 = vrot.slane %v7542, 5
  %v7545 = vshll.u32 %v7431, 16
  %v7547 = vrot.slane %v7545, 6
  %v7548 = vor.u32 %v7544, %v7547
  %v7549 = vsel %vm2695, %v7539, %v7548
  %v7551 = vshrl.u32 %v7432, 16
  %v7553 = vrot.slane %v7551, 5
  %v7554 = vshll.u32 %v7432, 16
  %v7556 = vrot.slane %v7554, 6
  %v7557 = vor.u32 %v7553, %v7556
  %v7558 = vsel %vm2695, %v7548, %v7557
  %v7560 = vshrl.u32 %v7433, 16
  %v7562 = vrot.slane %v7560, 5
  %v7563 = vshll.u32 %v7433, 16
  %v7565 = vrot.slane %v7563, 6
  %v7566 = vor.u32 %v7562, %v7565
  %v7567 = vsel %vm2695, %v7557, %v7566
  %v7569 = vshrl.u32 %v7434, 16
  %v7571 = vrot.slane %v7569, 5
  %v7572 = vshll.u32 %v7434, 16
  %v7574 = vrot.slane %v7572, 6
  %v7575 = vor.u32 %v7571, %v7574
  %v7576 = vsel %vm2695, %v7566, %v7575
  %v7578 = vshrl.u32 %v7435, 16
  %v7580 = vrot.slane %v7578, 5
  %v7581 = vshll.u32 %v7435, 16
  %v7583 = vrot.slane %v7581, 6
  %v7584 = vor.u32 %v7580, %v7583
  %v7585 = vsel %vm2695, %v7575, %v7584
  %v7587 = vshrl.u32 %v7436, 16
  %v7589 = vrot.slane %v7587, 5
  %v7590 = vshll.u32 %v7436, 16
  %v7592 = vrot.slane %v7590, 6
  %v7593 = vor.u32 %v7589, %v7592
  %v7594 = vsel %vm2695, %v7584, %v7593
  %v7596 = vshrl.u32 %v7437, 16
  %v7598 = vrot.slane %v7596, 5
  %v7599 = vshll.u32 %v7437, 16
  %v7601 = vrot.slane %v7599, 6
  %v7602 = vor.u32 %v7598, %v7601
  %v7603 = vsel %vm2695, %v7593, %v7602
  %v7605 = vshrl.u32 %v7438, 16
  %v7607 = vrot.slane %v7605, 5
  %v7608 = vshll.u32 %v7438, 16
  %v7610 = vrot.slane %v7608, 6
  %v7611 = vor.u32 %v7607, %v7610
  %v7612 = vsel %vm2695, %v7602, %v7611
  %v7614 = vshrl.u32 %v7439, 16
  %v7616 = vrot.slane %v7614, 5
  %v7617 = vshll.u32 %v7439, 16
  %v7619 = vrot.slane %v7617, 6
  %v7620 = vor.u32 %v7616, %v7619
  %v7621 = vsel %vm2695, %v7611, %v7620
  %v7623 = vshrl.u32 %v7440, 16
  %v7625 = vrot.slane %v7623, 5
  %v7626 = vshll.u32 %v7440, 16
  %v7628 = vrot.slane %v7626, 6
  %v7629 = vor.u32 %v7625, %v7628
  %v7630 = vsel %vm2695, %v7620, %v7629
  %v7632 = vshrl.u32 %v7441, 16
  %v7634 = vrot.slane %v7632, 5
  %v7635 = vshll.u32 %v7441, 16
  %v7637 = vrot.slane %v7635, 6
  %v7638 = vor.u32 %v7634, %v7637
  %v7639 = vsel %vm2695, %v7629, %v7638
  %v7641 = vshrl.u32 %v7442, 16
  %v7643 = vrot.slane %v7641, 5
  %v7644 = vshll.u32 %v7442, 16
  %v7646 = vrot.slane %v7644, 6
  %v7647 = vor.u32 %v7643, %v7646
  %v7648 = vsel %vm2695, %v7638, %v7647
  %v7650 = vshrl.u32 %v7443, 16
  %v7652 = vrot.slane %v7650, 5
  %v7653 = vshll.u32 %v7443, 16
  %v7655 = vrot.slane %v7653, 6
  %v7656 = vor.u32 %v7652, %v7655
  %v7657 = vsel %vm2695, %v7647, %v7656
  %v7659 = vshrl.u32 %v7444, 16
  %v7661 = vrot.slane %v7659, 5
  %v7662 = vshll.u32 %v7444, 16
  %v7664 = vrot.slane %v7662, 6
  %v7665 = vor.u32 %v7661, %v7664
  %v7666 = vsel %vm2695, %v7656, %v7665
  %v7668 = vshrl.u32 %v7445, 16
  %v7670 = vrot.slane %v7668, 5
  %v7671 = vshll.u32 %v7445, 16
  %v7673 = vrot.slane %v7671, 6
  %v7674 = vor.u32 %v7670, %v7673
  %v7675 = vsel %vm2695, %v7665, %v7674
  %v7677 = vshrl.u32 %v7446, 16
  %v7679 = vrot.slane %v7677, 5
  %v7680 = vshll.u32 %v7446, 16
  %v7682 = vrot.slane %v7680, 6
  %v7683 = vor.u32 %v7679, %v7682
  %v7684 = vsel %vm2695, %v7674, %v7683
  %v7686 = vshrl.u32 %v7447, 16
  %v7688 = vrot.slane %v7686, 5
  %v7689 = vshll.u32 %v7447, 16
  %v7691 = vrot.slane %v7689, 6
  %v7692 = vor.u32 %v7688, %v7691
  %v7693 = vsel %vm2695, %v7683, %v7692
  %v7695 = vshrl.u32 %v7448, 16
  %v7697 = vrot.slane %v7695, 5
  %v7698 = vshll.u32 %v7448, 16
  %v7700 = vrot.slane %v7698, 6
  %v7701 = vor.u32 %v7697, %v7700
  %v7702 = vsel %vm2695, %v7692, %v7701
  %v7704 = vshrl.u32 %v7449, 16
  %v7706 = vrot.slane %v7704, 5
  %v7707 = vshll.u32 %v7449, 16
  %v7709 = vrot.slane %v7707, 6
  %v7710 = vor.u32 %v7706, %v7709
  %v7711 = vsel %vm2695, %v7701, %v7710
  %v7713 = vshrl.u32 %v7450, 16
  %v7715 = vrot.slane %v7713, 5
  %v7716 = vshll.u32 %v7450, 16
  %v7718 = vrot.slane %v7716, 6
  %v7719 = vor.u32 %v7715, %v7718
  %v7720 = vsel %vm2695, %v7710, %v7719
  %v7722 = vshrl.u32 %v7451, 16
  %v7724 = vrot.slane %v7722, 5
  %v7725 = vshll.u32 %v7451, 16
  %v7727 = vrot.slane %v7725, 6
  %v7728 = vor.u32 %v7724, %v7727
  %v7729 = vsel %vm2695, %v7719, %v7728
  %v7731 = vshrl.u32 %v7452, 16
  %v7733 = vrot.slane %v7731, 5
  %v7734 = vshll.u32 %v7452, 16
  %v7736 = vrot.slane %v7734, 6
  %v7737 = vor.u32 %v7733, %v7736
  %v7738 = vsel %vm2695, %v7728, %v7737
  %v7740 = vshrl.u32 %v7453, 16
  %v7742 = vrot.slane %v7740, 5
  %v7743 = vshll.u32 %v7453, 16
  %v7745 = vrot.slane %v7743, 6
  %v7746 = vor.u32 %v7742, %v7745
  %v7747 = vsel %vm2695, %v7737, %v7746
  %v7749 = vshrl.u32 %v7454, 16
  %v7751 = vrot.slane %v7749, 5
  %v7752 = vshll.u32 %v7454, 16
  %v7754 = vrot.slane %v7752, 6
  %v7755 = vor.u32 %v7751, %v7754
  %v7756 = vsel %vm2695, %v7746, %v7755
  %v7758 = vshrl.u32 %v7455, 16
  %v7760 = vrot.slane %v7758, 5
  %v7761 = vshll.u32 %v7455, 16
  %v7763 = vrot.slane %v7761, 6
  %v7764 = vor.u32 %v7760, %v7763
  %v7765 = vsel %vm2695, %v7755, %v7764
  %v7767 = vshrl.u32 %v7456, 16
  %v7769 = vrot.slane %v7767, 5
  %v7770 = vshll.u32 %v7456, 16
  %v7772 = vrot.slane %v7770, 6
  %v7773 = vor.u32 %v7769, %v7772
  %v7774 = vsel %vm2695, %v7764, %v7773
  %v7776 = vshrl.u32 %v7457, 16
  %v7778 = vrot.slane %v7776, 5
  %v7779 = vshll.u32 %v7457, 16
  %v7781 = vrot.slane %v7779, 6
  %v7782 = vor.u32 %v7778, %v7781
  %v7783 = vsel %vm2695, %v7773, %v7782
  %v7785 = vshrl.u32 %v7458, 16
  %v7787 = vrot.slane %v7785, 5
  %v7788 = vshll.u32 %v7458, 16
  %v7790 = vrot.slane %v7788, 6
  %v7791 = vor.u32 %v7787, %v7790
  %v7792 = vsel %vm2695, %v7782, %v7791
  %v7794 = vshrl.u32 %v7459, 16
  %v7796 = vrot.slane %v7794, 5
  %v7797 = vshll.u32 %v7459, 16
  %v7799 = vrot.slane %v7797, 6
  %v7800 = vor.u32 %v7796, %v7799
  %v7801 = vsel %vm2695, %v7791, %v7800
  %v7803 = vshrl.u32 %v7460, 16
  %v7805 = vrot.slane %v7803, 5
  %v7806 = vshll.u32 %v7460, 16
  %v7808 = vrot.slane %v7806, 6
  %v7809 = vor.u32 %v7805, %v7808
  %v7810 = vsel %vm2695, %v7800, %v7809
  %7811 = vrot.lane.b32.xlu0 %v7468, 32
  %v7812 = vpop.permute.xlu0 %7811
  %7813 = vrot.lane.b32.xlu0 %v7477, 32
  %v7814 = vpop.permute.xlu0 %7813
  %7815 = vrot.lane.b32.xlu0 %v7486, 32
  %v7816 = vpop.permute.xlu0 %7815
  %7817 = vrot.lane.b32.xlu0 %v7495, 32
  %v7818 = vpop.permute.xlu0 %7817
  %7819 = vrot.lane.b32.xlu0 %v7504, 32
  %v7820 = vpop.permute.xlu0 %7819
  %7821 = vrot.lane.b32.xlu0 %v7513, 32
  %v7822 = vpop.permute.xlu0 %7821
  %7823 = vrot.lane.b32.xlu0 %v7522, 32
  %v7824 = vpop.permute.xlu0 %7823
  %7825 = vrot.lane.b32.xlu0 %v7531, 32
  %v7826 = vpop.permute.xlu0 %7825
  %7827 = vrot.lane.b32.xlu0 %v7540, 32
  %v7828 = vpop.permute.xlu0 %7827
  %7829 = vrot.lane.b32.xlu0 %v7549, 32
  %v7830 = vpop.permute.xlu0 %7829
  %7831 = vrot.lane.b32.xlu0 %v7558, 32
  %v7832 = vpop.permute.xlu0 %7831
  %7833 = vrot.lane.b32.xlu0 %v7567, 32
  %v7834 = vpop.permute.xlu0 %7833
  %7835 = vrot.lane.b32.xlu0 %v7576, 32
  %v7836 = vpop.permute.xlu0 %7835
  %7837 = vrot.lane.b32.xlu0 %v7585, 32
  %v7838 = vpop.permute.xlu0 %7837
  %7839 = vrot.lane.b32.xlu0 %v7594, 32
  %v7840 = vpop.permute.xlu0 %7839
  %7841 = vrot.lane.b32.xlu0 %v7603, 32
  %v7842 = vpop.permute.xlu0 %7841
  %7843 = vrot.lane.b32.xlu0 %v7612, 32
  %v7844 = vpop.permute.xlu0 %7843
  %7845 = vrot.lane.b32.xlu0 %v7621, 32
  %v7846 = vpop.permute.xlu0 %7845
  %7847 = vrot.lane.b32.xlu0 %v7630, 32
  %v7848 = vpop.permute.xlu0 %7847
  %7849 = vrot.lane.b32.xlu0 %v7639, 32
  %v7850 = vpop.permute.xlu0 %7849
  %7851 = vrot.lane.b32.xlu0 %v7648, 32
  %v7852 = vpop.permute.xlu0 %7851
  %7853 = vrot.lane.b32.xlu0 %v7657, 32
  %v7854 = vpop.permute.xlu0 %7853
  %7855 = vrot.lane.b32.xlu0 %v7666, 32
  %v7856 = vpop.permute.xlu0 %7855
  %7857 = vrot.lane.b32.xlu0 %v7675, 32
  %v7858 = vpop.permute.xlu0 %7857
  %7859 = vrot.lane.b32.xlu0 %v7684, 32
  %v7860 = vpop.permute.xlu0 %7859
  %7861 = vrot.lane.b32.xlu0 %v7693, 32
  %v7862 = vpop.permute.xlu0 %7861
  %7863 = vrot.lane.b32.xlu0 %v7702, 32
  %v7864 = vpop.permute.xlu0 %7863
  %7865 = vrot.lane.b32.xlu0 %v7711, 32
  %v7866 = vpop.permute.xlu0 %7865
  %7867 = vrot.lane.b32.xlu0 %v7720, 32
  %v7868 = vpop.permute.xlu0 %7867
  %7869 = vrot.lane.b32.xlu0 %v7729, 32
  %v7870 = vpop.permute.xlu0 %7869
  %7871 = vrot.lane.b32.xlu0 %v7738, 32
  %v7872 = vpop.permute.xlu0 %7871
  %7873 = vrot.lane.b32.xlu0 %v7747, 32
  %v7874 = vpop.permute.xlu0 %7873
  %7875 = vrot.lane.b32.xlu0 %v7756, 32
  %v7876 = vpop.permute.xlu0 %7875
  %7877 = vrot.lane.b32.xlu0 %v7765, 32
  %v7878 = vpop.permute.xlu0 %7877
  %7879 = vrot.lane.b32.xlu0 %v7774, 32
  %v7880 = vpop.permute.xlu0 %7879
  %7881 = vrot.lane.b32.xlu0 %v7783, 32
  %v7882 = vpop.permute.xlu0 %7881
  %7883 = vrot.lane.b32.xlu0 %v7792, 32
  %v7884 = vpop.permute.xlu0 %7883
  %7885 = vrot.lane.b32.xlu0 %v7801, 32
  %v7886 = vpop.permute.xlu0 %7885
  %7887 = vrot.lane.b32.xlu0 %v7810, 32
  %v7888 = vpop.permute.xlu0 %7887
  %v7890 = vunpack.c.l.b16 %v6578
  %v7891 = vpack.c.b16 %v7890, %v7890
  %v7892 = vrot.slane %v7422, 6
  %v7893 = vrot.slane %v7423, 6
  %v7894 = vsel %vm3127, %v7892, %v7893
  %v7895 = vrot.slane %v7424, 6
  %v7896 = vsel %vm3127, %v7893, %v7895
  %v7897 = vrot.slane %v7425, 6
  %v7898 = vsel %vm3127, %v7895, %v7897
  %v7899 = vrot.slane %v7426, 6
  %v7900 = vsel %vm3127, %v7897, %v7899
  %v7901 = vrot.slane %v7427, 6
  %v7902 = vsel %vm3127, %v7899, %v7901
  %v7903 = vrot.slane %v7428, 6
  %v7904 = vsel %vm3127, %v7901, %v7903
  %v7905 = vrot.slane %v7429, 6
  %v7906 = vsel %vm3127, %v7903, %v7905
  %v7907 = vrot.slane %v7430, 6
  %v7908 = vsel %vm3127, %v7905, %v7907
  %v7909 = vrot.slane %v7431, 6
  %v7910 = vsel %vm3127, %v7907, %v7909
  %v7911 = vrot.slane %v7432, 6
  %v7912 = vsel %vm3127, %v7909, %v7911
  %v7913 = vrot.slane %v7433, 6
  %v7914 = vsel %vm3127, %v7911, %v7913
  %v7915 = vrot.slane %v7434, 6
  %v7916 = vsel %vm3127, %v7913, %v7915
  %v7917 = vrot.slane %v7435, 6
  %v7918 = vsel %vm3127, %v7915, %v7917
  %v7919 = vrot.slane %v7436, 6
  %v7920 = vsel %vm3127, %v7917, %v7919
  %v7921 = vrot.slane %v7437, 6
  %v7922 = vsel %vm3127, %v7919, %v7921
  %v7923 = vrot.slane %v7438, 6
  %v7924 = vsel %vm3127, %v7921, %v7923
  %v7925 = vrot.slane %v7439, 6
  %v7926 = vsel %vm3127, %v7923, %v7925
  %v7927 = vrot.slane %v7440, 6
  %v7928 = vsel %vm3127, %v7925, %v7927
  %v7929 = vrot.slane %v7441, 6
  %v7930 = vsel %vm3127, %v7927, %v7929
  %v7931 = vrot.slane %v7442, 6
  %v7932 = vsel %vm3127, %v7929, %v7931
  %v7933 = vrot.slane %v7443, 6
  %v7934 = vsel %vm3127, %v7931, %v7933
  %v7935 = vrot.slane %v7444, 6
  %v7936 = vsel %vm3127, %v7933, %v7935
  %v7937 = vrot.slane %v7445, 6
  %v7938 = vsel %vm3127, %v7935, %v7937
  %v7939 = vrot.slane %v7446, 6
  %v7940 = vsel %vm3127, %v7937, %v7939
  %v7941 = vrot.slane %v7447, 6
  %v7942 = vsel %vm3127, %v7939, %v7941
  %v7943 = vrot.slane %v7448, 6
  %v7944 = vsel %vm3127, %v7941, %v7943
  %v7945 = vrot.slane %v7449, 6
  %v7946 = vsel %vm3127, %v7943, %v7945
  %v7947 = vrot.slane %v7450, 6
  %v7948 = vsel %vm3127, %v7945, %v7947
  %v7949 = vrot.slane %v7451, 6
  %v7950 = vsel %vm3127, %v7947, %v7949
  %v7951 = vrot.slane %v7452, 6
  %v7952 = vsel %vm3127, %v7949, %v7951
  %v7953 = vrot.slane %v7453, 6
  %v7954 = vsel %vm3127, %v7951, %v7953
  %v7955 = vrot.slane %v7454, 6
  %v7956 = vsel %vm3127, %v7953, %v7955
  %v7957 = vrot.slane %v7455, 6
  %v7958 = vsel %vm3127, %v7955, %v7957
  %v7959 = vrot.slane %v7456, 6
  %v7960 = vsel %vm3127, %v7957, %v7959
  %v7961 = vrot.slane %v7457, 6
  %v7962 = vsel %vm3127, %v7959, %v7961
  %v7963 = vrot.slane %v7458, 6
  %v7964 = vsel %vm3127, %v7961, %v7963
  %v7965 = vrot.slane %v7459, 6
  %v7966 = vsel %vm3127, %v7963, %v7965
  %v7967 = vrot.slane %v7891, 6
  %v7968 = vsel %vm3127, %v7965, %v7967
  %7969 = vrot.lane.b32.xlu0 %v7892, 40
  %v7970 = vpop.permute.xlu0 %7969
  %7971 = vrot.lane.b32.xlu0 %v7894, 40
  %v7972 = vpop.permute.xlu0 %7971
  %7973 = vrot.lane.b32.xlu0 %v7896, 40
  %v7974 = vpop.permute.xlu0 %7973
  %7975 = vrot.lane.b32.xlu0 %v7898, 40
  %v7976 = vpop.permute.xlu0 %7975
  %7977 = vrot.lane.b32.xlu0 %v7900, 40
  %v7978 = vpop.permute.xlu0 %7977
  %7979 = vrot.lane.b32.xlu0 %v7902, 40
  %v7980 = vpop.permute.xlu0 %7979
  %7981 = vrot.lane.b32.xlu0 %v7904, 40
  %v7982 = vpop.permute.xlu0 %7981
  %7983 = vrot.lane.b32.xlu0 %v7906, 40
  %v7984 = vpop.permute.xlu0 %7983
  %7985 = vrot.lane.b32.xlu0 %v7908, 40
  %v7986 = vpop.permute.xlu0 %7985
  %7987 = vrot.lane.b32.xlu0 %v7910, 40
  %v7988 = vpop.permute.xlu0 %7987
  %7989 = vrot.lane.b32.xlu0 %v7912, 40
  %v7990 = vpop.permute.xlu0 %7989
  %7991 = vrot.lane.b32.xlu0 %v7914, 40
  %v7992 = vpop.permute.xlu0 %7991
  %7993 = vrot.lane.b32.xlu0 %v7916, 40
  %v7994 = vpop.permute.xlu0 %7993
  %7995 = vrot.lane.b32.xlu0 %v7918, 40
  %v7996 = vpop.permute.xlu0 %7995
  %7997 = vrot.lane.b32.xlu0 %v7920, 40
  %v7998 = vpop.permute.xlu0 %7997
  %7999 = vrot.lane.b32.xlu0 %v7922, 40
  %v8000 = vpop.permute.xlu0 %7999
  %8001 = vrot.lane.b32.xlu0 %v7924, 40
  %v8002 = vpop.permute.xlu0 %8001
  %8003 = vrot.lane.b32.xlu0 %v7926, 40
  %v8004 = vpop.permute.xlu0 %8003
  %8005 = vrot.lane.b32.xlu0 %v7928, 40
  %v8006 = vpop.permute.xlu0 %8005
  %8007 = vrot.lane.b32.xlu0 %v7930, 40
  %v8008 = vpop.permute.xlu0 %8007
  %8009 = vrot.lane.b32.xlu0 %v7932, 40
  %v8010 = vpop.permute.xlu0 %8009
  %8011 = vrot.lane.b32.xlu0 %v7934, 40
  %v8012 = vpop.permute.xlu0 %8011
  %8013 = vrot.lane.b32.xlu0 %v7936, 40
  %v8014 = vpop.permute.xlu0 %8013
  %8015 = vrot.lane.b32.xlu0 %v7938, 40
  %v8016 = vpop.permute.xlu0 %8015
  %8017 = vrot.lane.b32.xlu0 %v7940, 40
  %v8018 = vpop.permute.xlu0 %8017
  %8019 = vrot.lane.b32.xlu0 %v7942, 40
  %v8020 = vpop.permute.xlu0 %8019
  %8021 = vrot.lane.b32.xlu0 %v7944, 40
  %v8022 = vpop.permute.xlu0 %8021
  %8023 = vrot.lane.b32.xlu0 %v7946, 40
  %v8024 = vpop.permute.xlu0 %8023
  %8025 = vrot.lane.b32.xlu0 %v7948, 40
  %v8026 = vpop.permute.xlu0 %8025
  %8027 = vrot.lane.b32.xlu0 %v7950, 40
  %v8028 = vpop.permute.xlu0 %8027
  %8029 = vrot.lane.b32.xlu0 %v7952, 40
  %v8030 = vpop.permute.xlu0 %8029
  %8031 = vrot.lane.b32.xlu0 %v7954, 40
  %v8032 = vpop.permute.xlu0 %8031
  %8033 = vrot.lane.b32.xlu0 %v7956, 40
  %v8034 = vpop.permute.xlu0 %8033
  %8035 = vrot.lane.b32.xlu0 %v7958, 40
  %v8036 = vpop.permute.xlu0 %8035
  %8037 = vrot.lane.b32.xlu0 %v7960, 40
  %v8038 = vpop.permute.xlu0 %8037
  %8039 = vrot.lane.b32.xlu0 %v7962, 40
  %v8040 = vpop.permute.xlu0 %8039
  %8041 = vrot.lane.b32.xlu0 %v7964, 40
  %v8042 = vpop.permute.xlu0 %8041
  %8043 = vrot.lane.b32.xlu0 %v7966, 40
  %v8044 = vpop.permute.xlu0 %8043
  %8045 = vrot.lane.b32.xlu0 %v7968, 40
  %v8046 = vpop.permute.xlu0 %8045
  %v8050 = vunpack.c.l.b16 %v6579
  %v8051 = vunpack.c.l.b16 %v6580
  %v8052 = vunpack.c.l.b16 %v6581
  %v8053 = vpack.c.b16 %v8051, %v8050
  %v8054 = vpack.c.b16 %v8052, %v8052
  %v8055 = vrot.slane %v8053, 6
  %v8056 = vsel %vm3127, %v7965, %v8055
  %v8057 = vrot.slane %v8054, 6
  %v8058 = vsel %vm3127, %v8055, %v8057
  %8059 = vrot.lane.b32.xlu0 %v7893, 48
  %v8060 = vpop.permute.xlu0 %8059
  %8061 = vrot.lane.b32.xlu0 %v7896, 48
  %v8062 = vpop.permute.xlu0 %8061
  %8063 = vrot.lane.b32.xlu0 %v7898, 48
  %v8064 = vpop.permute.xlu0 %8063
  %8065 = vrot.lane.b32.xlu0 %v7900, 48
  %v8066 = vpop.permute.xlu0 %8065
  %8067 = vrot.lane.b32.xlu0 %v7902, 48
  %v8068 = vpop.permute.xlu0 %8067
  %8069 = vrot.lane.b32.xlu0 %v7904, 48
  %v8070 = vpop.permute.xlu0 %8069
  %8071 = vrot.lane.b32.xlu0 %v7906, 48
  %v8072 = vpop.permute.xlu0 %8071
  %8073 = vrot.lane.b32.xlu0 %v7908, 48
  %v8074 = vpop.permute.xlu0 %8073
  %8075 = vrot.lane.b32.xlu0 %v7910, 48
  %v8076 = vpop.permute.xlu0 %8075
  %8077 = vrot.lane.b32.xlu0 %v7912, 48
  %v8078 = vpop.permute.xlu0 %8077
  %8079 = vrot.lane.b32.xlu0 %v7914, 48
  %v8080 = vpop.permute.xlu0 %8079
  %8081 = vrot.lane.b32.xlu0 %v7916, 48
  %v8082 = vpop.permute.xlu0 %8081
  %8083 = vrot.lane.b32.xlu0 %v7918, 48
  %v8084 = vpop.permute.xlu0 %8083
  %8085 = vrot.lane.b32.xlu0 %v7920, 48
  %v8086 = vpop.permute.xlu0 %8085
  %8087 = vrot.lane.b32.xlu0 %v7922, 48
  %v8088 = vpop.permute.xlu0 %8087
  %8089 = vrot.lane.b32.xlu0 %v7924, 48
  %v8090 = vpop.permute.xlu0 %8089
  %8091 = vrot.lane.b32.xlu0 %v7926, 48
  %v8092 = vpop.permute.xlu0 %8091
  %8093 = vrot.lane.b32.xlu0 %v7928, 48
  %v8094 = vpop.permute.xlu0 %8093
  %8095 = vrot.lane.b32.xlu0 %v7930, 48
  %v8096 = vpop.permute.xlu0 %8095
  %8097 = vrot.lane.b32.xlu0 %v7932, 48
  %v8098 = vpop.permute.xlu0 %8097
  %8099 = vrot.lane.b32.xlu0 %v7934, 48
  %v8100 = vpop.permute.xlu0 %8099
  %8101 = vrot.lane.b32.xlu0 %v7936, 48
  %v8102 = vpop.permute.xlu0 %8101
  %8103 = vrot.lane.b32.xlu0 %v7938, 48
  %v8104 = vpop.permute.xlu0 %8103
  %8105 = vrot.lane.b32.xlu0 %v7940, 48
  %v8106 = vpop.permute.xlu0 %8105
  %8107 = vrot.lane.b32.xlu0 %v7942, 48
  %v8108 = vpop.permute.xlu0 %8107
  %8109 = vrot.lane.b32.xlu0 %v7944, 48
  %v8110 = vpop.permute.xlu0 %8109
  %8111 = vrot.lane.b32.xlu0 %v7946, 48
  %v8112 = vpop.permute.xlu0 %8111
  %8113 = vrot.lane.b32.xlu0 %v7948, 48
  %v8114 = vpop.permute.xlu0 %8113
  %8115 = vrot.lane.b32.xlu0 %v7950, 48
  %v8116 = vpop.permute.xlu0 %8115
  %8117 = vrot.lane.b32.xlu0 %v7952, 48
  %v8118 = vpop.permute.xlu0 %8117
  %8119 = vrot.lane.b32.xlu0 %v7954, 48
  %v8120 = vpop.permute.xlu0 %8119
  %8121 = vrot.lane.b32.xlu0 %v7956, 48
  %v8122 = vpop.permute.xlu0 %8121
  %8123 = vrot.lane.b32.xlu0 %v7958, 48
  %v8124 = vpop.permute.xlu0 %8123
  %8125 = vrot.lane.b32.xlu0 %v7960, 48
  %v8126 = vpop.permute.xlu0 %8125
  %8127 = vrot.lane.b32.xlu0 %v7962, 48
  %v8128 = vpop.permute.xlu0 %8127
  %8129 = vrot.lane.b32.xlu0 %v7964, 48
  %v8130 = vpop.permute.xlu0 %8129
  %8131 = vrot.lane.b32.xlu0 %v7966, 48
  %v8132 = vpop.permute.xlu0 %8131
  %8133 = vrot.lane.b32.xlu0 %v8056, 48
  %v8134 = vpop.permute.xlu0 %8133
  %8135 = vrot.lane.b32.xlu0 %v8058, 48
  %v8136 = vpop.permute.xlu0 %8135
  %v8138 = vunpack.c.l.b16 %v6582
  %v8139 = vpack.c.b16 %v6667, %v8138
  %v8141 = vshrl.u32 %v8139, 16
  %v8143 = vrot.slane %v8141, 6
  %v8144 = vshll.u32 %v8139, 16
  %v8146 = vrot.slane %v8144, 7
  %v8147 = vor.u32 %v8143, %v8146
  %v8148 = vrot.slane %v7479, 6
  %v8149 = vrot.slane %v7482, 7
  %v8150 = vor.u32 %v8148, %v8149
  %v8151 = vsel %vm3376, %v8147, %v8150
  %v8152 = vrot.slane %v7488, 6
  %v8153 = vrot.slane %v7491, 7
  %v8154 = vor.u32 %v8152, %v8153
  %v8155 = vsel %vm3376, %v8150, %v8154
  %v8156 = vrot.slane %v7497, 6
  %v8157 = vrot.slane %v7500, 7
  %v8158 = vor.u32 %v8156, %v8157
  %v8159 = vsel %vm3376, %v8154, %v8158
  %v8160 = vrot.slane %v7506, 6
  %v8161 = vrot.slane %v7509, 7
  %v8162 = vor.u32 %v8160, %v8161
  %v8163 = vsel %vm3376, %v8158, %v8162
  %v8164 = vrot.slane %v7515, 6
  %v8165 = vrot.slane %v7518, 7
  %v8166 = vor.u32 %v8164, %v8165
  %v8167 = vsel %vm3376, %v8162, %v8166
  %v8168 = vrot.slane %v7524, 6
  %v8169 = vrot.slane %v7527, 7
  %v8170 = vor.u32 %v8168, %v8169
  %v8171 = vsel %vm3376, %v8166, %v8170
  %v8172 = vrot.slane %v7533, 6
  %v8173 = vrot.slane %v7536, 7
  %v8174 = vor.u32 %v8172, %v8173
  %v8175 = vsel %vm3376, %v8170, %v8174
  %v8176 = vrot.slane %v7542, 6
  %v8177 = vrot.slane %v7545, 7
  %v8178 = vor.u32 %v8176, %v8177
  %v8179 = vsel %vm3376, %v8174, %v8178
  %v8180 = vrot.slane %v7551, 6
  %v8181 = vrot.slane %v7554, 7
  %v8182 = vor.u32 %v8180, %v8181
  %v8183 = vsel %vm3376, %v8178, %v8182
  %v8184 = vrot.slane %v7560, 6
  %v8185 = vrot.slane %v7563, 7
  %v8186 = vor.u32 %v8184, %v8185
  %v8187 = vsel %vm3376, %v8182, %v8186
  %v8188 = vrot.slane %v7569, 6
  %v8189 = vrot.slane %v7572, 7
  %v8190 = vor.u32 %v8188, %v8189
  %v8191 = vsel %vm3376, %v8186, %v8190
  %v8192 = vrot.slane %v7578, 6
  %v8193 = vrot.slane %v7581, 7
  %v8194 = vor.u32 %v8192, %v8193
  %v8195 = vsel %vm3376, %v8190, %v8194
  %v8196 = vrot.slane %v7587, 6
  %v8197 = vrot.slane %v7590, 7
  %v8198 = vor.u32 %v8196, %v8197
  %v8199 = vsel %vm3376, %v8194, %v8198
  %v8200 = vrot.slane %v7596, 6
  %v8201 = vrot.slane %v7599, 7
  %v8202 = vor.u32 %v8200, %v8201
  %v8203 = vsel %vm3376, %v8198, %v8202
  %v8204 = vrot.slane %v7605, 6
  %v8205 = vrot.slane %v7608, 7
  %v8206 = vor.u32 %v8204, %v8205
  %v8207 = vsel %vm3376, %v8202, %v8206
  %v8208 = vrot.slane %v7614, 6
  %v8209 = vrot.slane %v7617, 7
  %v8210 = vor.u32 %v8208, %v8209
  %v8211 = vsel %vm3376, %v8206, %v8210
  %v8212 = vrot.slane %v7623, 6
  %v8213 = vrot.slane %v7626, 7
  %v8214 = vor.u32 %v8212, %v8213
  %v8215 = vsel %vm3376, %v8210, %v8214
  %v8216 = vrot.slane %v7632, 6
  %v8217 = vrot.slane %v7635, 7
  %v8218 = vor.u32 %v8216, %v8217
  %v8219 = vsel %vm3376, %v8214, %v8218
  %v8220 = vrot.slane %v7641, 6
  %v8221 = vrot.slane %v7644, 7
  %v8222 = vor.u32 %v8220, %v8221
  %v8223 = vsel %vm3376, %v8218, %v8222
  %v8224 = vrot.slane %v7650, 6
  %v8225 = vrot.slane %v7653, 7
  %v8226 = vor.u32 %v8224, %v8225
  %v8227 = vsel %vm3376, %v8222, %v8226
  %v8228 = vrot.slane %v7659, 6
  %v8229 = vrot.slane %v7662, 7
  %v8230 = vor.u32 %v8228, %v8229
  %v8231 = vsel %vm3376, %v8226, %v8230
  %v8232 = vrot.slane %v7668, 6
  %v8233 = vrot.slane %v7671, 7
  %v8234 = vor.u32 %v8232, %v8233
  %v8235 = vsel %vm3376, %v8230, %v8234
  %v8236 = vrot.slane %v7677, 6
  %v8237 = vrot.slane %v7680, 7
  %v8238 = vor.u32 %v8236, %v8237
  %v8239 = vsel %vm3376, %v8234, %v8238
  %v8240 = vrot.slane %v7686, 6
  %v8241 = vrot.slane %v7689, 7
  %v8242 = vor.u32 %v8240, %v8241
  %v8243 = vsel %vm3376, %v8238, %v8242
  %v8244 = vrot.slane %v7695, 6
  %v8245 = vrot.slane %v7698, 7
  %v8246 = vor.u32 %v8244, %v8245
  %v8247 = vsel %vm3376, %v8242, %v8246
  %v8248 = vrot.slane %v7704, 6
  %v8249 = vrot.slane %v7707, 7
  %v8250 = vor.u32 %v8248, %v8249
  %v8251 = vsel %vm3376, %v8246, %v8250
  %v8252 = vrot.slane %v7713, 6
  %v8253 = vrot.slane %v7716, 7
  %v8254 = vor.u32 %v8252, %v8253
  %v8255 = vsel %vm3376, %v8250, %v8254
  %v8256 = vrot.slane %v7722, 6
  %v8257 = vrot.slane %v7725, 7
  %v8258 = vor.u32 %v8256, %v8257
  %v8259 = vsel %vm3376, %v8254, %v8258
  %v8260 = vrot.slane %v7731, 6
  %v8261 = vrot.slane %v7734, 7
  %v8262 = vor.u32 %v8260, %v8261
  %v8263 = vsel %vm3376, %v8258, %v8262
  %v8264 = vrot.slane %v7740, 6
  %v8265 = vrot.slane %v7743, 7
  %v8266 = vor.u32 %v8264, %v8265
  %v8267 = vsel %vm3376, %v8262, %v8266
  %v8268 = vrot.slane %v7749, 6
  %v8269 = vrot.slane %v7752, 7
  %v8270 = vor.u32 %v8268, %v8269
  %v8271 = vsel %vm3376, %v8266, %v8270
  %v8272 = vrot.slane %v7758, 6
  %v8273 = vrot.slane %v7761, 7
  %v8274 = vor.u32 %v8272, %v8273
  %v8275 = vsel %vm3376, %v8270, %v8274
  %v8276 = vrot.slane %v7767, 6
  %v8277 = vrot.slane %v7770, 7
  %v8278 = vor.u32 %v8276, %v8277
  %v8279 = vsel %vm3376, %v8274, %v8278
  %v8280 = vrot.slane %v7776, 6
  %v8281 = vrot.slane %v7779, 7
  %v8282 = vor.u32 %v8280, %v8281
  %v8283 = vsel %vm3376, %v8278, %v8282
  %v8284 = vrot.slane %v7785, 6
  %v8285 = vrot.slane %v7788, 7
  %v8286 = vor.u32 %v8284, %v8285
  %v8287 = vsel %vm3376, %v8282, %v8286
  %v8288 = vrot.slane %v7794, 6
  %v8289 = vrot.slane %v7797, 7
  %v8290 = vor.u32 %v8288, %v8289
  %v8291 = vsel %vm3376, %v8286, %v8290
  %v8293 = vshrl.u32 %v8053, 16
  %v8295 = vrot.slane %v8293, 6
  %v8296 = vshll.u32 %v8053, 16
  %v8298 = vrot.slane %v8296, 7
  %v8299 = vor.u32 %v8295, %v8298
  %v8300 = vsel %vm3376, %v8290, %v8299
  %v8302 = vshrl.u32 %v8054, 16
  %v8304 = vrot.slane %v8302, 6
  %v8305 = vshll.u32 %v8054, 16
  %v8307 = vrot.slane %v8305, 7
  %v8308 = vor.u32 %v8304, %v8307
  %v8309 = vsel %vm3376, %v8299, %v8308
  %8310 = vrot.lane.b32.xlu0 %v8147, 56
  %v8311 = vpop.permute.xlu0 %8310
  %8312 = vrot.lane.b32.xlu0 %v8151, 56
  %v8313 = vpop.permute.xlu0 %8312
  %8314 = vrot.lane.b32.xlu0 %v8155, 56
  %v8315 = vpop.permute.xlu0 %8314
  %8316 = vrot.lane.b32.xlu0 %v8159, 56
  %v8317 = vpop.permute.xlu0 %8316
  %8318 = vrot.lane.b32.xlu0 %v8163, 56
  %v8319 = vpop.permute.xlu0 %8318
  %8320 = vrot.lane.b32.xlu0 %v8167, 56
  %v8321 = vpop.permute.xlu0 %8320
  %8322 = vrot.lane.b32.xlu0 %v8171, 56
  %v8323 = vpop.permute.xlu0 %8322
  %8324 = vrot.lane.b32.xlu0 %v8175, 56
  %v8325 = vpop.permute.xlu0 %8324
  %8326 = vrot.lane.b32.xlu0 %v8179, 56
  %v8327 = vpop.permute.xlu0 %8326
  %8328 = vrot.lane.b32.xlu0 %v8183, 56
  %v8329 = vpop.permute.xlu0 %8328
  %8330 = vrot.lane.b32.xlu0 %v8187, 56
  %v8331 = vpop.permute.xlu0 %8330
  %8332 = vrot.lane.b32.xlu0 %v8191, 56
  %v8333 = vpop.permute.xlu0 %8332
  %8334 = vrot.lane.b32.xlu0 %v8195, 56
  %v8335 = vpop.permute.xlu0 %8334
  %8336 = vrot.lane.b32.xlu0 %v8199, 56
  %v8337 = vpop.permute.xlu0 %8336
  %8338 = vrot.lane.b32.xlu0 %v8203, 56
  %v8339 = vpop.permute.xlu0 %8338
  %8340 = vrot.lane.b32.xlu0 %v8207, 56
  %v8341 = vpop.permute.xlu0 %8340
  %8342 = vrot.lane.b32.xlu0 %v8211, 56
  %v8343 = vpop.permute.xlu0 %8342
  %8344 = vrot.lane.b32.xlu0 %v8215, 56
  %v8345 = vpop.permute.xlu0 %8344
  %8346 = vrot.lane.b32.xlu0 %v8219, 56
  %v8347 = vpop.permute.xlu0 %8346
  %8348 = vrot.lane.b32.xlu0 %v8223, 56
  %v8349 = vpop.permute.xlu0 %8348
  %8350 = vrot.lane.b32.xlu0 %v8227, 56
  %v8351 = vpop.permute.xlu0 %8350
  %8352 = vrot.lane.b32.xlu0 %v8231, 56
  %v8353 = vpop.permute.xlu0 %8352
  %8354 = vrot.lane.b32.xlu0 %v8235, 56
  %v8355 = vpop.permute.xlu0 %8354
  %8356 = vrot.lane.b32.xlu0 %v8239, 56
  %v8357 = vpop.permute.xlu0 %8356
  %8358 = vrot.lane.b32.xlu0 %v8243, 56
  %v8359 = vpop.permute.xlu0 %8358
  %8360 = vrot.lane.b32.xlu0 %v8247, 56
  %v8361 = vpop.permute.xlu0 %8360
  %8362 = vrot.lane.b32.xlu0 %v8251, 56
  %v8363 = vpop.permute.xlu0 %8362
  %8364 = vrot.lane.b32.xlu0 %v8255, 56
  %v8365 = vpop.permute.xlu0 %8364
  %8366 = vrot.lane.b32.xlu0 %v8259, 56
  %v8367 = vpop.permute.xlu0 %8366
  %8368 = vrot.lane.b32.xlu0 %v8263, 56
  %v8369 = vpop.permute.xlu0 %8368
  %8370 = vrot.lane.b32.xlu0 %v8267, 56
  %v8371 = vpop.permute.xlu0 %8370
  %8372 = vrot.lane.b32.xlu0 %v8271, 56
  %v8373 = vpop.permute.xlu0 %8372
  %8374 = vrot.lane.b32.xlu0 %v8275, 56
  %v8375 = vpop.permute.xlu0 %8374
  %8376 = vrot.lane.b32.xlu0 %v8279, 56
  %v8377 = vpop.permute.xlu0 %8376
  %8378 = vrot.lane.b32.xlu0 %v8283, 56
  %v8379 = vpop.permute.xlu0 %8378
  %8380 = vrot.lane.b32.xlu0 %v8287, 56
  %v8381 = vpop.permute.xlu0 %8380
  %8382 = vrot.lane.b32.xlu0 %v8291, 56
  %v8383 = vpop.permute.xlu0 %8382
  %8384 = vrot.lane.b32.xlu0 %v8300, 56
  %v8385 = vpop.permute.xlu0 %8384
  %8386 = vrot.lane.b32.xlu0 %v8309, 56
  %v8387 = vpop.permute.xlu0 %8386
  %v8389 = vunpack.c.l.b16 %v6583
  %v8390 = vpack.c.b16 %v8389, %v8389
  %v8391 = vrot.slane %v8139, 7
  %v8392 = vrot.slane %v7424, 7
  %v8393 = vsel %vm3628, %v8391, %v8392
  %v8394 = vrot.slane %v7425, 7
  %v8395 = vsel %vm3628, %v8392, %v8394
  %v8396 = vrot.slane %v7426, 7
  %v8397 = vsel %vm3628, %v8394, %v8396
  %v8398 = vrot.slane %v7427, 7
  %v8399 = vsel %vm3628, %v8396, %v8398
  %v8400 = vrot.slane %v7428, 7
  %v8401 = vsel %vm3628, %v8398, %v8400
  %v8402 = vrot.slane %v7429, 7
  %v8403 = vsel %vm3628, %v8400, %v8402
  %v8404 = vrot.slane %v7430, 7
  %v8405 = vsel %vm3628, %v8402, %v8404
  %v8406 = vrot.slane %v7431, 7
  %v8407 = vsel %vm3628, %v8404, %v8406
  %v8408 = vrot.slane %v7432, 7
  %v8409 = vsel %vm3628, %v8406, %v8408
  %v8410 = vrot.slane %v7433, 7
  %v8411 = vsel %vm3628, %v8408, %v8410
  %v8412 = vrot.slane %v7434, 7
  %v8413 = vsel %vm3628, %v8410, %v8412
  %v8414 = vrot.slane %v7435, 7
  %v8415 = vsel %vm3628, %v8412, %v8414
  %v8416 = vrot.slane %v7436, 7
  %v8417 = vsel %vm3628, %v8414, %v8416
  %v8418 = vrot.slane %v7437, 7
  %v8419 = vsel %vm3628, %v8416, %v8418
  %v8420 = vrot.slane %v7438, 7
  %v8421 = vsel %vm3628, %v8418, %v8420
  %v8422 = vrot.slane %v7439, 7
  %v8423 = vsel %vm3628, %v8420, %v8422
  %v8424 = vrot.slane %v7440, 7
  %v8425 = vsel %vm3628, %v8422, %v8424
  %v8426 = vrot.slane %v7441, 7
  %v8427 = vsel %vm3628, %v8424, %v8426
  %v8428 = vrot.slane %v7442, 7
  %v8429 = vsel %vm3628, %v8426, %v8428
  %v8430 = vrot.slane %v7443, 7
  %v8431 = vsel %vm3628, %v8428, %v8430
  %v8432 = vrot.slane %v7444, 7
  %v8433 = vsel %vm3628, %v8430, %v8432
  %v8434 = vrot.slane %v7445, 7
  %v8435 = vsel %vm3628, %v8432, %v8434
  %v8436 = vrot.slane %v7446, 7
  %v8437 = vsel %vm3628, %v8434, %v8436
  %v8438 = vrot.slane %v7447, 7
  %v8439 = vsel %vm3628, %v8436, %v8438
  %v8440 = vrot.slane %v7448, 7
  %v8441 = vsel %vm3628, %v8438, %v8440
  %v8442 = vrot.slane %v7449, 7
  %v8443 = vsel %vm3628, %v8440, %v8442
  %v8444 = vrot.slane %v7450, 7
  %v8445 = vsel %vm3628, %v8442, %v8444
  %v8446 = vrot.slane %v7451, 7
  %v8447 = vsel %vm3628, %v8444, %v8446
  %v8448 = vrot.slane %v7452, 7
  %v8449 = vsel %vm3628, %v8446, %v8448
  %v8450 = vrot.slane %v7453, 7
  %v8451 = vsel %vm3628, %v8448, %v8450
  %v8452 = vrot.slane %v7454, 7
  %v8453 = vsel %vm3628, %v8450, %v8452
  %v8454 = vrot.slane %v7455, 7
  %v8455 = vsel %vm3628, %v8452, %v8454
  %v8456 = vrot.slane %v7456, 7
  %v8457 = vsel %vm3628, %v8454, %v8456
  %v8458 = vrot.slane %v7457, 7
  %v8459 = vsel %vm3628, %v8456, %v8458
  %v8460 = vrot.slane %v7458, 7
  %v8461 = vsel %vm3628, %v8458, %v8460
  %v8462 = vrot.slane %v7459, 7
  %v8463 = vsel %vm3628, %v8460, %v8462
  %v8464 = vrot.slane %v8053, 7
  %v8465 = vsel %vm3628, %v8462, %v8464
  %v8466 = vrot.slane %v8390, 7
  %v8467 = vsel %vm3628, %v8464, %v8466
  %8468 = vrot.lane.b32.xlu0 %v8391, 64
  %v8469 = vpop.permute.xlu0 %8468
  %8470 = vrot.lane.b32.xlu0 %v8393, 64
  %v8471 = vpop.permute.xlu0 %8470
  %8472 = vrot.lane.b32.xlu0 %v8395, 64
  %v8473 = vpop.permute.xlu0 %8472
  %8474 = vrot.lane.b32.xlu0 %v8397, 64
  %v8475 = vpop.permute.xlu0 %8474
  %8476 = vrot.lane.b32.xlu0 %v8399, 64
  %v8477 = vpop.permute.xlu0 %8476
  %8478 = vrot.lane.b32.xlu0 %v8401, 64
  %v8479 = vpop.permute.xlu0 %8478
  %8480 = vrot.lane.b32.xlu0 %v8403, 64
  %v8481 = vpop.permute.xlu0 %8480
  %8482 = vrot.lane.b32.xlu0 %v8405, 64
  %v8483 = vpop.permute.xlu0 %8482
  %8484 = vrot.lane.b32.xlu0 %v8407, 64
  %v8485 = vpop.permute.xlu0 %8484
  %8486 = vrot.lane.b32.xlu0 %v8409, 64
  %v8487 = vpop.permute.xlu0 %8486
  %8488 = vrot.lane.b32.xlu0 %v8411, 64
  %v8489 = vpop.permute.xlu0 %8488
  %8490 = vrot.lane.b32.xlu0 %v8413, 64
  %v8491 = vpop.permute.xlu0 %8490
  %8492 = vrot.lane.b32.xlu0 %v8415, 64
  %v8493 = vpop.permute.xlu0 %8492
  %8494 = vrot.lane.b32.xlu0 %v8417, 64
  %v8495 = vpop.permute.xlu0 %8494
  %8496 = vrot.lane.b32.xlu0 %v8419, 64
  %v8497 = vpop.permute.xlu0 %8496
  %8498 = vrot.lane.b32.xlu0 %v8421, 64
  %v8499 = vpop.permute.xlu0 %8498
  %8500 = vrot.lane.b32.xlu0 %v8423, 64
  %v8501 = vpop.permute.xlu0 %8500
  %8502 = vrot.lane.b32.xlu0 %v8425, 64
  %v8503 = vpop.permute.xlu0 %8502
  %8504 = vrot.lane.b32.xlu0 %v8427, 64
  %v8505 = vpop.permute.xlu0 %8504
  %8506 = vrot.lane.b32.xlu0 %v8429, 64
  %v8507 = vpop.permute.xlu0 %8506
  %8508 = vrot.lane.b32.xlu0 %v8431, 64
  %v8509 = vpop.permute.xlu0 %8508
  %8510 = vrot.lane.b32.xlu0 %v8433, 64
  %v8511 = vpop.permute.xlu0 %8510
  %8512 = vrot.lane.b32.xlu0 %v8435, 64
  %v8513 = vpop.permute.xlu0 %8512
  %8514 = vrot.lane.b32.xlu0 %v8437, 64
  %v8515 = vpop.permute.xlu0 %8514
  %8516 = vrot.lane.b32.xlu0 %v8439, 64
  %v8517 = vpop.permute.xlu0 %8516
  %8518 = vrot.lane.b32.xlu0 %v8441, 64
  %v8519 = vpop.permute.xlu0 %8518
  %8520 = vrot.lane.b32.xlu0 %v8443, 64
  %v8521 = vpop.permute.xlu0 %8520
  %8522 = vrot.lane.b32.xlu0 %v8445, 64
  %v8523 = vpop.permute.xlu0 %8522
  %8524 = vrot.lane.b32.xlu0 %v8447, 64
  %v8525 = vpop.permute.xlu0 %8524
  %8526 = vrot.lane.b32.xlu0 %v8449, 64
  %v8527 = vpop.permute.xlu0 %8526
  %8528 = vrot.lane.b32.xlu0 %v8451, 64
  %v8529 = vpop.permute.xlu0 %8528
  %8530 = vrot.lane.b32.xlu0 %v8453, 64
  %v8531 = vpop.permute.xlu0 %8530
  %8532 = vrot.lane.b32.xlu0 %v8455, 64
  %v8533 = vpop.permute.xlu0 %8532
  %8534 = vrot.lane.b32.xlu0 %v8457, 64
  %v8535 = vpop.permute.xlu0 %8534
  %8536 = vrot.lane.b32.xlu0 %v8459, 64
  %v8537 = vpop.permute.xlu0 %8536
  %8538 = vrot.lane.b32.xlu0 %v8461, 64
  %v8539 = vpop.permute.xlu0 %8538
  %8540 = vrot.lane.b32.xlu0 %v8463, 64
  %v8541 = vpop.permute.xlu0 %8540
  %8542 = vrot.lane.b32.xlu0 %v8465, 64
  %v8543 = vpop.permute.xlu0 %8542
  %8544 = vrot.lane.b32.xlu0 %v8467, 64
  %v8545 = vpop.permute.xlu0 %8544
  %v8548 = vsel %vm3864, %v6738, %v7092
  %v8550 = vsel %vm3864, %v6739, %v7094
  %v8552 = vsel %vm3864, %v6740, %v7096
  %v8554 = vsel %vm3864, %v6741, %v7098
  %v8556 = vsel %vm3864, %v6742, %v7100
  %v8558 = vsel %vm3864, %v6743, %v7102
  %v8560 = vsel %vm3864, %v6744, %v7104
  %v8562 = vsel %vm3864, %v6745, %v7106
  %v8564 = vsel %vm3864, %v6746, %v7108
  %v8566 = vsel %vm3864, %v6747, %v7110
  %v8568 = vsel %vm3864, %v6748, %v7112
  %v8570 = vsel %vm3864, %v6749, %v7114
  %v8572 = vsel %vm3864, %v6750, %v7116
  %v8574 = vsel %vm3864, %v6751, %v7118
  %v8576 = vsel %vm3864, %v6752, %v7120
  %v8578 = vsel %vm3864, %v6753, %v7122
  %v8580 = vsel %vm3864, %v6754, %v7124
  %v8582 = vsel %vm3864, %v6755, %v7126
  %v8584 = vsel %vm3864, %v6756, %v7128
  %v8586 = vsel %vm3864, %v6757, %v7130
  %v8588 = vsel %vm3864, %v6758, %v7132
  %v8590 = vsel %vm3864, %v6759, %v7134
  %v8592 = vsel %vm3864, %v6760, %v7136
  %v8594 = vsel %vm3864, %v6761, %v7138
  %v8596 = vsel %vm3864, %v6762, %v7140
  %v8598 = vsel %vm3864, %v6763, %v7142
  %v8600 = vsel %vm3864, %v6764, %v7144
  %v8602 = vsel %vm3864, %v6765, %v7146
  %v8604 = vsel %vm3864, %v6766, %v7148
  %v8606 = vsel %vm3864, %v6767, %v7150
  %v8608 = vsel %vm3864, %v6768, %v7152
  %v8610 = vsel %vm3864, %v6769, %v7154
  %v8612 = vsel %vm3864, %v6770, %v7156
  %v8614 = vsel %vm3864, %v6771, %v7158
  %v8616 = vsel %vm3864, %v6772, %v7160
  %v8618 = vsel %vm3864, %v6773, %v7162
  %v8620 = vsel %vm3864, %v6774, %v7164
  %v8622 = vsel %vm3864, %v6775, %v7166
  %v8624 = vsel %vm3864, %v6776, %v7168
  %v8626 = vsel %vm4022, %v8548, %v7250
  %v8628 = vsel %vm4022, %v8550, %v7252
  %v8630 = vsel %vm4022, %v8552, %v7254
  %v8632 = vsel %vm4022, %v8554, %v7256
  %v8634 = vsel %vm4022, %v8556, %v7258
  %v8636 = vsel %vm4022, %v8558, %v7260
  %v8638 = vsel %vm4022, %v8560, %v7262
  %v8640 = vsel %vm4022, %v8562, %v7264
  %v8642 = vsel %vm4022, %v8564, %v7266
  %v8644 = vsel %vm4022, %v8566, %v7268
  %v8646 = vsel %vm4022, %v8568, %v7270
  %v8648 = vsel %vm4022, %v8570, %v7272
  %v8650 = vsel %vm4022, %v8572, %v7274
  %v8652 = vsel %vm4022, %v8574, %v7276
  %v8654 = vsel %vm4022, %v8576, %v7278
  %v8656 = vsel %vm4022, %v8578, %v7280
  %v8658 = vsel %vm4022, %v8580, %v7282
  %v8660 = vsel %vm4022, %v8582, %v7284
  %v8662 = vsel %vm4022, %v8584, %v7286
  %v8664 = vsel %vm4022, %v8586, %v7288
  %v8666 = vsel %vm4022, %v8588, %v7290
  %v8668 = vsel %vm4022, %v8590, %v7292
  %v8670 = vsel %vm4022, %v8592, %v7294
  %v8672 = vsel %vm4022, %v8594, %v7296
  %v8674 = vsel %vm4022, %v8596, %v7298
  %v8676 = vsel %vm4022, %v8598, %v7300
  %v8678 = vsel %vm4022, %v8600, %v7302
  %v8680 = vsel %vm4022, %v8602, %v7304
  %v8682 = vsel %vm4022, %v8604, %v7306
  %v8684 = vsel %vm4022, %v8606, %v7308
  %v8686 = vsel %vm4022, %v8608, %v7310
  %v8688 = vsel %vm4022, %v8610, %v7312
  %v8690 = vsel %vm4022, %v8612, %v7314
  %v8692 = vsel %vm4022, %v8614, %v7316
  %v8694 = vsel %vm4022, %v8616, %v7318
  %v8696 = vsel %vm4022, %v8618, %v7320
  %v8698 = vsel %vm4022, %v8620, %v7322
  %v8700 = vsel %vm4022, %v8622, %v7324
  %v8702 = vsel %vm4022, %v8624, %v7326
  %v8704 = vsel %vm4180, %v8626, %v7345
  %v8706 = vsel %vm4180, %v8628, %v7347
  %v8708 = vsel %vm4180, %v8630, %v7349
  %v8710 = vsel %vm4180, %v8632, %v7351
  %v8712 = vsel %vm4180, %v8634, %v7353
  %v8714 = vsel %vm4180, %v8636, %v7355
  %v8716 = vsel %vm4180, %v8638, %v7357
  %v8718 = vsel %vm4180, %v8640, %v7359
  %v8720 = vsel %vm4180, %v8642, %v7361
  %v8722 = vsel %vm4180, %v8644, %v7363
  %v8724 = vsel %vm4180, %v8646, %v7365
  %v8726 = vsel %vm4180, %v8648, %v7367
  %v8728 = vsel %vm4180, %v8650, %v7369
  %v8730 = vsel %vm4180, %v8652, %v7371
  %v8732 = vsel %vm4180, %v8654, %v7373
  %v8734 = vsel %vm4180, %v8656, %v7375
  %v8736 = vsel %vm4180, %v8658, %v7377
  %v8738 = vsel %vm4180, %v8660, %v7379
  %v8740 = vsel %vm4180, %v8662, %v7381
  %v8742 = vsel %vm4180, %v8664, %v7383
  %v8744 = vsel %vm4180, %v8666, %v7385
  %v8746 = vsel %vm4180, %v8668, %v7387
  %v8748 = vsel %vm4180, %v8670, %v7389
  %v8750 = vsel %vm4180, %v8672, %v7391
  %v8752 = vsel %vm4180, %v8674, %v7393
  %v8754 = vsel %vm4180, %v8676, %v7395
  %v8756 = vsel %vm4180, %v8678, %v7397
  %v8758 = vsel %vm4180, %v8680, %v7399
  %v8760 = vsel %vm4180, %v8682, %v7401
  %v8762 = vsel %vm4180, %v8684, %v7403
  %v8764 = vsel %vm4180, %v8686, %v7405
  %v8766 = vsel %vm4180, %v8688, %v7407
  %v8768 = vsel %vm4180, %v8690, %v7409
  %v8770 = vsel %vm4180, %v8692, %v7411
  %v8772 = vsel %vm4180, %v8694, %v7413
  %v8774 = vsel %vm4180, %v8696, %v7415
  %v8776 = vsel %vm4180, %v8698, %v7417
  %v8778 = vsel %vm4180, %v8700, %v7419
  %v8780 = vsel %vm4180, %v8702, %v7421
  %v8782 = vsel %vm4338, %v8704, %v7812
  %v8784 = vsel %vm4338, %v8706, %v7814
  %v8786 = vsel %vm4338, %v8708, %v7816
  %v8788 = vsel %vm4338, %v8710, %v7818
  %v8790 = vsel %vm4338, %v8712, %v7820
  %v8792 = vsel %vm4338, %v8714, %v7822
  %v8794 = vsel %vm4338, %v8716, %v7824
  %v8796 = vsel %vm4338, %v8718, %v7826
  %v8798 = vsel %vm4338, %v8720, %v7828
  %v8800 = vsel %vm4338, %v8722, %v7830
  %v8802 = vsel %vm4338, %v8724, %v7832
  %v8804 = vsel %vm4338, %v8726, %v7834
  %v8806 = vsel %vm4338, %v8728, %v7836
  %v8808 = vsel %vm4338, %v8730, %v7838
  %v8810 = vsel %vm4338, %v8732, %v7840
  %v8812 = vsel %vm4338, %v8734, %v7842
  %v8814 = vsel %vm4338, %v8736, %v7844
  %v8816 = vsel %vm4338, %v8738, %v7846
  %v8818 = vsel %vm4338, %v8740, %v7848
  %v8820 = vsel %vm4338, %v8742, %v7850
  %v8822 = vsel %vm4338, %v8744, %v7852
  %v8824 = vsel %vm4338, %v8746, %v7854
  %v8826 = vsel %vm4338, %v8748, %v7856
  %v8828 = vsel %vm4338, %v8750, %v7858
  %v8830 = vsel %vm4338, %v8752, %v7860
  %v8832 = vsel %vm4338, %v8754, %v7862
  %v8834 = vsel %vm4338, %v8756, %v7864
  %v8836 = vsel %vm4338, %v8758, %v7866
  %v8838 = vsel %vm4338, %v8760, %v7868
  %v8840 = vsel %vm4338, %v8762, %v7870
  %v8842 = vsel %vm4338, %v8764, %v7872
  %v8844 = vsel %vm4338, %v8766, %v7874
  %v8846 = vsel %vm4338, %v8768, %v7876
  %v8848 = vsel %vm4338, %v8770, %v7878
  %v8850 = vsel %vm4338, %v8772, %v7880
  %v8852 = vsel %vm4338, %v8774, %v7882
  %v8854 = vsel %vm4338, %v8776, %v7884
  %v8856 = vsel %vm4338, %v8778, %v7886
  %v8858 = vsel %vm4338, %v8780, %v7888
  %vm8859 = vcmask 326656
  %v8861 = vsel %vm8859, %v8782, %v7970
  %v8863 = vsel %vm8859, %v8784, %v7972
  %v8865 = vsel %vm8859, %v8786, %v7974
  %v8867 = vsel %vm8859, %v8788, %v7976
  %v8869 = vsel %vm8859, %v8790, %v7978
  %v8871 = vsel %vm8859, %v8792, %v7980
  %v8873 = vsel %vm8859, %v8794, %v7982
  %v8875 = vsel %vm8859, %v8796, %v7984
  %v8877 = vsel %vm8859, %v8798, %v7986
  %v8879 = vsel %vm8859, %v8800, %v7988
  %v8881 = vsel %vm8859, %v8802, %v7990
  %v8883 = vsel %vm8859, %v8804, %v7992
  %v8885 = vsel %vm8859, %v8806, %v7994
  %v8887 = vsel %vm8859, %v8808, %v7996
  %v8889 = vsel %vm8859, %v8810, %v7998
  %v8891 = vsel %vm8859, %v8812, %v8000
  %v8893 = vsel %vm8859, %v8814, %v8002
  %v8895 = vsel %vm8859, %v8816, %v8004
  %v8897 = vsel %vm8859, %v8818, %v8006
  %v8899 = vsel %vm8859, %v8820, %v8008
  %v8901 = vsel %vm8859, %v8822, %v8010
  %v8903 = vsel %vm8859, %v8824, %v8012
  %v8905 = vsel %vm8859, %v8826, %v8014
  %v8907 = vsel %vm8859, %v8828, %v8016
  %v8909 = vsel %vm8859, %v8830, %v8018
  %v8911 = vsel %vm8859, %v8832, %v8020
  %v8913 = vsel %vm8859, %v8834, %v8022
  %v8915 = vsel %vm8859, %v8836, %v8024
  %v8917 = vsel %vm8859, %v8838, %v8026
  %v8919 = vsel %vm8859, %v8840, %v8028
  %v8921 = vsel %vm8859, %v8842, %v8030
  %v8923 = vsel %vm8859, %v8844, %v8032
  %v8925 = vsel %vm8859, %v8846, %v8034
  %v8927 = vsel %vm8859, %v8848, %v8036
  %v8929 = vsel %vm8859, %v8850, %v8038
  %v8931 = vsel %vm8859, %v8852, %v8040
  %v8933 = vsel %vm8859, %v8854, %v8042
  %v8935 = vsel %vm8859, %v8856, %v8044
  %v8937 = vsel %vm8859, %v8858, %v8046
  %vm8938 = vcmask 392192
  %v8940 = vsel %vm8938, %v8861, %v8060
  %v8942 = vsel %vm8938, %v8863, %v8062
  %v8944 = vsel %vm8938, %v8865, %v8064
  %v8946 = vsel %vm8938, %v8867, %v8066
  %v8948 = vsel %vm8938, %v8869, %v8068
  %v8950 = vsel %vm8938, %v8871, %v8070
  %v8952 = vsel %vm8938, %v8873, %v8072
  %v8954 = vsel %vm8938, %v8875, %v8074
  %v8956 = vsel %vm8938, %v8877, %v8076
  %v8958 = vsel %vm8938, %v8879, %v8078
  %v8960 = vsel %vm8938, %v8881, %v8080
  %v8962 = vsel %vm8938, %v8883, %v8082
  %v8964 = vsel %vm8938, %v8885, %v8084
  %v8966 = vsel %vm8938, %v8887, %v8086
  %v8968 = vsel %vm8938, %v8889, %v8088
  %v8970 = vsel %vm8938, %v8891, %v8090
  %v8972 = vsel %vm8938, %v8893, %v8092
  %v8974 = vsel %vm8938, %v8895, %v8094
  %v8976 = vsel %vm8938, %v8897, %v8096
  %v8978 = vsel %vm8938, %v8899, %v8098
  %v8980 = vsel %vm8938, %v8901, %v8100
  %v8982 = vsel %vm8938, %v8903, %v8102
  %v8984 = vsel %vm8938, %v8905, %v8104
  %v8986 = vsel %vm8938, %v8907, %v8106
  %v8988 = vsel %vm8938, %v8909, %v8108
  %v8990 = vsel %vm8938, %v8911, %v8110
  %v8992 = vsel %vm8938, %v8913, %v8112
  %v8994 = vsel %vm8938, %v8915, %v8114
  %v8996 = vsel %vm8938, %v8917, %v8116
  %v8998 = vsel %vm8938, %v8919, %v8118
  %v9000 = vsel %vm8938, %v8921, %v8120
  %v9002 = vsel %vm8938, %v8923, %v8122
  %v9004 = vsel %vm8938, %v8925, %v8124
  %v9006 = vsel %vm8938, %v8927, %v8126
  %v9008 = vsel %vm8938, %v8929, %v8128
  %v9010 = vsel %vm8938, %v8931, %v8130
  %v9012 = vsel %vm8938, %v8933, %v8132
  %v9014 = vsel %vm8938, %v8935, %v8134
  %v9016 = vsel %vm8938, %v8937, %v8136
  %vm9017 = vcmask 457728
  %v9019 = vsel %vm9017, %v8940, %v8311
  %v9021 = vsel %vm9017, %v8942, %v8313
  %v9023 = vsel %vm9017, %v8944, %v8315
  %v9025 = vsel %vm9017, %v8946, %v8317
  %v9027 = vsel %vm9017, %v8948, %v8319
  %v9029 = vsel %vm9017, %v8950, %v8321
  %v9031 = vsel %vm9017, %v8952, %v8323
  %v9033 = vsel %vm9017, %v8954, %v8325
  %v9035 = vsel %vm9017, %v8956, %v8327
  %v9037 = vsel %vm9017, %v8958, %v8329
  %v9039 = vsel %vm9017, %v8960, %v8331
  %v9041 = vsel %vm9017, %v8962, %v8333
  %v9043 = vsel %vm9017, %v8964, %v8335
  %v9045 = vsel %vm9017, %v8966, %v8337
  %v9047 = vsel %vm9017, %v8968, %v8339
  %v9049 = vsel %vm9017, %v8970, %v8341
  %v9051 = vsel %vm9017, %v8972, %v8343
  %v9053 = vsel %vm9017, %v8974, %v8345
  %v9055 = vsel %vm9017, %v8976, %v8347
  %v9057 = vsel %vm9017, %v8978, %v8349
  %v9059 = vsel %vm9017, %v8980, %v8351
  %v9061 = vsel %vm9017, %v8982, %v8353
  %v9063 = vsel %vm9017, %v8984, %v8355
  %v9065 = vsel %vm9017, %v8986, %v8357
  %v9067 = vsel %vm9017, %v8988, %v8359
  %v9069 = vsel %vm9017, %v8990, %v8361
  %v9071 = vsel %vm9017, %v8992, %v8363
  %v9073 = vsel %vm9017, %v8994, %v8365
  %v9075 = vsel %vm9017, %v8996, %v8367
  %v9077 = vsel %vm9017, %v8998, %v8369
  %v9079 = vsel %vm9017, %v9000, %v8371
  %v9081 = vsel %vm9017, %v9002, %v8373
  %v9083 = vsel %vm9017, %v9004, %v8375
  %v9085 = vsel %vm9017, %v9006, %v8377
  %v9087 = vsel %vm9017, %v9008, %v8379
  %v9089 = vsel %vm9017, %v9010, %v8381
  %v9091 = vsel %vm9017, %v9012, %v8383
  %v9093 = vsel %vm9017, %v9014, %v8385
  %v9095 = vsel %vm9017, %v9016, %v8387
  %vm9096 = vcmask 523264
  %v9098 = vsel %vm9096, %v9019, %v8469
  %v9100 = vsel %vm9096, %v9021, %v8471
  %v9102 = vsel %vm9096, %v9023, %v8473
  %v9104 = vsel %vm9096, %v9025, %v8475
  %v9106 = vsel %vm9096, %v9027, %v8477
  %v9108 = vsel %vm9096, %v9029, %v8479
  %v9110 = vsel %vm9096, %v9031, %v8481
  %v9112 = vsel %vm9096, %v9033, %v8483
  %v9114 = vsel %vm9096, %v9035, %v8485
  %v9116 = vsel %vm9096, %v9037, %v8487
  %v9118 = vsel %vm9096, %v9039, %v8489
  %v9120 = vsel %vm9096, %v9041, %v8491
  %v9122 = vsel %vm9096, %v9043, %v8493
  %v9124 = vsel %vm9096, %v9045, %v8495
  %v9126 = vsel %vm9096, %v9047, %v8497
  %v9128 = vsel %vm9096, %v9049, %v8499
  %v9130 = vsel %vm9096, %v9051, %v8501
  %v9132 = vsel %vm9096, %v9053, %v8503
  %v9134 = vsel %vm9096, %v9055, %v8505
  %v9136 = vsel %vm9096, %v9057, %v8507
  %v9138 = vsel %vm9096, %v9059, %v8509
  %v9140 = vsel %vm9096, %v9061, %v8511
  %v9142 = vsel %vm9096, %v9063, %v8513
  %v9144 = vsel %vm9096, %v9065, %v8515
  %v9146 = vsel %vm9096, %v9067, %v8517
  %v9148 = vsel %vm9096, %v9069, %v8519
  %v9150 = vsel %vm9096, %v9071, %v8521
  %v9152 = vsel %vm9096, %v9073, %v8523
  %v9154 = vsel %vm9096, %v9075, %v8525
  %v9156 = vsel %vm9096, %v9077, %v8527
  %v9158 = vsel %vm9096, %v9079, %v8529
  %v9160 = vsel %vm9096, %v9081, %v8531
  %v9162 = vsel %vm9096, %v9083, %v8533
  %v9164 = vsel %vm9096, %v9085, %v8535
  %v9166 = vsel %vm9096, %v9087, %v8537
  %v9168 = vsel %vm9096, %v9089, %v8539
  %v9170 = vsel %vm9096, %v9091, %v8541
  %v9172 = vsel %vm9096, %v9093, %v8543
  %v9174 = vsel %vm9096, %v9095, %v8545
  %v9175 = vld [vmem:[%s4] sm:$0xf]
  %v9176 = vld [vmem:[%s4 + $0x4] sm:$0xf]
  %v9177 = vld [vmem:[%s4 + $0x8] sm:$0xf]
  %v9178 = vld [vmem:[%s4 + $0xc] sm:$0xf]
  %v9179 = vld [vmem:[%s4 + $0x10] sm:$0xf]
  %v9180 = vld [vmem:[%s4 + $0x14] sm:$0xf]
  %v9181 = vld [vmem:[%s4 + $0x18] sm:$0xf]
  %v9182 = vld [vmem:[%s4 + $0x1c] sm:$0xf]
  %v9183 = vld [vmem:[%s4 + $0x20] sm:$0xf]
  %v9184 = vshrl.u32 %v9098, 16
  %v9186 = vrot.slane %v9184, 2
  %v9187 = vshll.u32 %v9098, 16
  %v9189 = vrot.slane %v9187, 3
  %v9190 = vor.u32 %v9186, %v9189
  %v9191 = vshrl.u32 %v9100, 16
  %v9193 = vrot.slane %v9191, 2
  %v9194 = vshll.u32 %v9100, 16
  %v9196 = vrot.slane %v9194, 3
  %v9197 = vor.u32 %v9193, %v9196
  %v9198 = vsel %vm4422, %v9190, %v9197
  %v9199 = vshrl.u32 %v9102, 16
  %v9201 = vrot.slane %v9199, 2
  %v9202 = vshll.u32 %v9102, 16
  %v9204 = vrot.slane %v9202, 3
  %v9205 = vor.u32 %v9201, %v9204
  %v9206 = vsel %vm4422, %v9197, %v9205
  %v9207 = vshrl.u32 %v9104, 16
  %v9209 = vrot.slane %v9207, 2
  %v9210 = vshll.u32 %v9104, 16
  %v9212 = vrot.slane %v9210, 3
  %v9213 = vor.u32 %v9209, %v9212
  %v9214 = vsel %vm4422, %v9205, %v9213
  %v9215 = vshrl.u32 %v9106, 16
  %v9217 = vrot.slane %v9215, 2
  %v9218 = vshll.u32 %v9106, 16
  %v9220 = vrot.slane %v9218, 3
  %v9221 = vor.u32 %v9217, %v9220
  %v9222 = vsel %vm4422, %v9213, %v9221
  %v9223 = vshrl.u32 %v9108, 16
  %v9225 = vrot.slane %v9223, 2
  %v9226 = vshll.u32 %v9108, 16
  %v9228 = vrot.slane %v9226, 3
  %v9229 = vor.u32 %v9225, %v9228
  %v9230 = vsel %vm4422, %v9221, %v9229
  %v9231 = vshrl.u32 %v9110, 16
  %v9233 = vrot.slane %v9231, 2
  %v9234 = vshll.u32 %v9110, 16
  %v9236 = vrot.slane %v9234, 3
  %v9237 = vor.u32 %v9233, %v9236
  %v9238 = vsel %vm4422, %v9229, %v9237
  %v9239 = vshrl.u32 %v9112, 16
  %v9241 = vrot.slane %v9239, 2
  %v9242 = vshll.u32 %v9112, 16
  %v9244 = vrot.slane %v9242, 3
  %v9245 = vor.u32 %v9241, %v9244
  %v9246 = vsel %vm4422, %v9237, %v9245
  %v9247 = vshrl.u32 %v9114, 16
  %v9249 = vrot.slane %v9247, 2
  %v9250 = vshll.u32 %v9114, 16
  %v9252 = vrot.slane %v9250, 3
  %v9253 = vor.u32 %v9249, %v9252
  %v9254 = vsel %vm4422, %v9245, %v9253
  %v9255 = vshrl.u32 %v9116, 16
  %v9257 = vrot.slane %v9255, 2
  %v9258 = vshll.u32 %v9116, 16
  %v9260 = vrot.slane %v9258, 3
  %v9261 = vor.u32 %v9257, %v9260
  %v9262 = vsel %vm4422, %v9253, %v9261
  %v9263 = vshrl.u32 %v9118, 16
  %v9265 = vrot.slane %v9263, 2
  %v9266 = vshll.u32 %v9118, 16
  %v9268 = vrot.slane %v9266, 3
  %v9269 = vor.u32 %v9265, %v9268
  %v9270 = vsel %vm4422, %v9261, %v9269
  %v9271 = vshrl.u32 %v9120, 16
  %v9273 = vrot.slane %v9271, 2
  %v9274 = vshll.u32 %v9120, 16
  %v9276 = vrot.slane %v9274, 3
  %v9277 = vor.u32 %v9273, %v9276
  %v9278 = vsel %vm4422, %v9269, %v9277
  %v9279 = vshrl.u32 %v9122, 16
  %v9281 = vrot.slane %v9279, 2
  %v9282 = vshll.u32 %v9122, 16
  %v9284 = vrot.slane %v9282, 3
  %v9285 = vor.u32 %v9281, %v9284
  %v9286 = vsel %vm4422, %v9277, %v9285
  %v9287 = vshrl.u32 %v9124, 16
  %v9289 = vrot.slane %v9287, 2
  %v9290 = vshll.u32 %v9124, 16
  %v9292 = vrot.slane %v9290, 3
  %v9293 = vor.u32 %v9289, %v9292
  %v9294 = vsel %vm4422, %v9285, %v9293
  %v9295 = vshrl.u32 %v9126, 16
  %v9297 = vrot.slane %v9295, 2
  %v9298 = vshll.u32 %v9126, 16
  %v9300 = vrot.slane %v9298, 3
  %v9301 = vor.u32 %v9297, %v9300
  %v9302 = vsel %vm4422, %v9293, %v9301
  %v9303 = vshrl.u32 %v9128, 16
  %v9305 = vrot.slane %v9303, 2
  %v9306 = vshll.u32 %v9128, 16
  %v9308 = vrot.slane %v9306, 3
  %v9309 = vor.u32 %v9305, %v9308
  %v9310 = vsel %vm4422, %v9301, %v9309
  %v9311 = vshrl.u32 %v9130, 16
  %v9313 = vrot.slane %v9311, 2
  %v9314 = vshll.u32 %v9130, 16
  %v9316 = vrot.slane %v9314, 3
  %v9317 = vor.u32 %v9313, %v9316
  %v9318 = vsel %vm4422, %v9309, %v9317
  %v9319 = vshrl.u32 %v9132, 16
  %v9321 = vrot.slane %v9319, 2
  %v9322 = vshll.u32 %v9132, 16
  %v9324 = vrot.slane %v9322, 3
  %v9325 = vor.u32 %v9321, %v9324
  %v9326 = vsel %vm4422, %v9317, %v9325
  %v9327 = vshrl.u32 %v9134, 16
  %v9329 = vrot.slane %v9327, 2
  %v9330 = vshll.u32 %v9134, 16
  %v9332 = vrot.slane %v9330, 3
  %v9333 = vor.u32 %v9329, %v9332
  %v9334 = vsel %vm4422, %v9325, %v9333
  %v9335 = vshrl.u32 %v9136, 16
  %v9337 = vrot.slane %v9335, 2
  %v9338 = vshll.u32 %v9136, 16
  %v9340 = vrot.slane %v9338, 3
  %v9341 = vor.u32 %v9337, %v9340
  %v9342 = vsel %vm4422, %v9333, %v9341
  %v9343 = vshrl.u32 %v9138, 16
  %v9345 = vrot.slane %v9343, 2
  %v9346 = vshll.u32 %v9138, 16
  %v9348 = vrot.slane %v9346, 3
  %v9349 = vor.u32 %v9345, %v9348
  %v9350 = vsel %vm4422, %v9341, %v9349
  %v9351 = vshrl.u32 %v9140, 16
  %v9353 = vrot.slane %v9351, 2
  %v9354 = vshll.u32 %v9140, 16
  %v9356 = vrot.slane %v9354, 3
  %v9357 = vor.u32 %v9353, %v9356
  %v9358 = vsel %vm4422, %v9349, %v9357
  %v9359 = vshrl.u32 %v9142, 16
  %v9361 = vrot.slane %v9359, 2
  %v9362 = vshll.u32 %v9142, 16
  %v9364 = vrot.slane %v9362, 3
  %v9365 = vor.u32 %v9361, %v9364
  %v9366 = vsel %vm4422, %v9357, %v9365
  %v9367 = vshrl.u32 %v9144, 16
  %v9369 = vrot.slane %v9367, 2
  %v9370 = vshll.u32 %v9144, 16
  %v9372 = vrot.slane %v9370, 3
  %v9373 = vor.u32 %v9369, %v9372
  %v9374 = vsel %vm4422, %v9365, %v9373
  %v9375 = vshrl.u32 %v9146, 16
  %v9377 = vrot.slane %v9375, 2
  %v9378 = vshll.u32 %v9146, 16
  %v9380 = vrot.slane %v9378, 3
  %v9381 = vor.u32 %v9377, %v9380
  %v9382 = vsel %vm4422, %v9373, %v9381
  %v9383 = vshrl.u32 %v9148, 16
  %v9385 = vrot.slane %v9383, 2
  %v9386 = vshll.u32 %v9148, 16
  %v9388 = vrot.slane %v9386, 3
  %v9389 = vor.u32 %v9385, %v9388
  %v9390 = vsel %vm4422, %v9381, %v9389
  %v9391 = vshrl.u32 %v9150, 16
  %v9393 = vrot.slane %v9391, 2
  %v9394 = vshll.u32 %v9150, 16
  %v9396 = vrot.slane %v9394, 3
  %v9397 = vor.u32 %v9393, %v9396
  %v9398 = vsel %vm4422, %v9389, %v9397
  %v9399 = vshrl.u32 %v9152, 16
  %v9401 = vrot.slane %v9399, 2
  %v9402 = vshll.u32 %v9152, 16
  %v9404 = vrot.slane %v9402, 3
  %v9405 = vor.u32 %v9401, %v9404
  %v9406 = vsel %vm4422, %v9397, %v9405
  %v9407 = vshrl.u32 %v9154, 16
  %v9409 = vrot.slane %v9407, 2
  %v9410 = vshll.u32 %v9154, 16
  %v9412 = vrot.slane %v9410, 3
  %v9413 = vor.u32 %v9409, %v9412
  %v9414 = vsel %vm4422, %v9405, %v9413
  %v9415 = vshrl.u32 %v9156, 16
  %v9417 = vrot.slane %v9415, 2
  %v9418 = vshll.u32 %v9156, 16
  %v9420 = vrot.slane %v9418, 3
  %v9421 = vor.u32 %v9417, %v9420
  %v9422 = vsel %vm4422, %v9413, %v9421
  %v9423 = vshrl.u32 %v9158, 16
  %v9425 = vrot.slane %v9423, 2
  %v9426 = vshll.u32 %v9158, 16
  %v9428 = vrot.slane %v9426, 3
  %v9429 = vor.u32 %v9425, %v9428
  %v9430 = vsel %vm4422, %v9421, %v9429
  %v9431 = vshrl.u32 %v9160, 16
  %v9433 = vrot.slane %v9431, 2
  %v9434 = vshll.u32 %v9160, 16
  %v9436 = vrot.slane %v9434, 3
  %v9437 = vor.u32 %v9433, %v9436
  %v9438 = vsel %vm4422, %v9429, %v9437
  %v9439 = vshrl.u32 %v9162, 16
  %v9441 = vrot.slane %v9439, 2
  %v9442 = vshll.u32 %v9162, 16
  %v9444 = vrot.slane %v9442, 3
  %v9445 = vor.u32 %v9441, %v9444
  %v9446 = vsel %vm4422, %v9437, %v9445
  %v9447 = vshrl.u32 %v9164, 16
  %v9449 = vrot.slane %v9447, 2
  %v9450 = vshll.u32 %v9164, 16
  %v9452 = vrot.slane %v9450, 3
  %v9453 = vor.u32 %v9449, %v9452
  %v9454 = vsel %vm4422, %v9445, %v9453
  %v9455 = vshrl.u32 %v9166, 16
  %v9457 = vrot.slane %v9455, 2
  %v9458 = vshll.u32 %v9166, 16
  %v9460 = vrot.slane %v9458, 3
  %v9461 = vor.u32 %v9457, %v9460
  %v9462 = vsel %vm4422, %v9453, %v9461
  %v9463 = vshrl.u32 %v9168, 16
  %v9465 = vrot.slane %v9463, 2
  %v9466 = vshll.u32 %v9168, 16
  %v9468 = vrot.slane %v9466, 3
  %v9469 = vor.u32 %v9465, %v9468
  %v9470 = vsel %vm4422, %v9461, %v9469
  %v9471 = vshrl.u32 %v9170, 16
  %v9473 = vrot.slane %v9471, 2
  %v9474 = vshll.u32 %v9170, 16
  %v9476 = vrot.slane %v9474, 3
  %v9477 = vor.u32 %v9473, %v9476
  %v9478 = vsel %vm4422, %v9469, %v9477
  %v9479 = vshrl.u32 %v9172, 16
  %v9481 = vrot.slane %v9479, 2
  %v9482 = vshll.u32 %v9172, 16
  %v9484 = vrot.slane %v9482, 3
  %v9485 = vor.u32 %v9481, %v9484
  %v9486 = vsel %vm4422, %v9477, %v9485
  %v9487 = vshrl.u32 %v9174, 16
  %v9489 = vrot.slane %v9487, 2
  %v9490 = vshll.u32 %v9174, 16
  %v9492 = vrot.slane %v9490, 3
  %v9493 = vor.u32 %v9489, %v9492
  %v9494 = vsel %vm4422, %v9485, %v9493
  %v9504 = vunpack.c.l.b16 %v9175
  %v9505 = vunpack.c.l.b16 %v9176
  %v9506 = vunpack.c.l.b16 %v9177
  %v9507 = vunpack.c.l.b16 %v9178
  %v9508 = vunpack.c.l.b16 %v9179
  %v9509 = vunpack.c.l.b16 %v9180
  %v9510 = vunpack.c.l.b16 %v9181
  %v9511 = vunpack.c.l.b16 %v9182
  %v9512 = vunpack.c.l.b16 %v9183
  %v9513 = vpack.c.b16 %v9505, %v9504
  %v9514 = vpack.c.b16 %v9507, %v9506
  %v9515 = vpack.c.b16 %v9509, %v9508
  %v9516 = vpack.c.b16 %v9511, %v9510
  %v9517 = vpack.c.b16 %v9512, %v9512
  %vm9522 = vcmask 588800
  %v9524 = vsel %vm9522, %v9198, 0
  %v9527 = vsel %vm9522, %v9206, 0
  %v9530 = vsel %vm9522, %v9214, 0
  %v9533 = vsel %vm9522, %v9222, 0
  %v9536 = vsel %vm9522, %v9230, 0
  %v9539 = vsel %vm9522, %v9238, 0
  %v9542 = vsel %vm9522, %v9246, 0
  %v9545 = vsel %vm9522, %v9254, 0
  %v9548 = vsel %vm9522, %v9262, 0
  %v9551 = vsel %vm9522, %v9270, 0
  %v9554 = vsel %vm9522, %v9278, 0
  %v9557 = vsel %vm9522, %v9286, 0
  %v9560 = vsel %vm9522, %v9294, 0
  %v9563 = vsel %vm9522, %v9302, 0
  %v9566 = vsel %vm9522, %v9310, 0
  %v9569 = vsel %vm9522, %v9318, 0
  %v9572 = vsel %vm9522, %v9326, 0
  %v9575 = vsel %vm9522, %v9334, 0
  %v9578 = vsel %vm9522, %v9342, 0
  %v9581 = vsel %vm9522, %v9350, 0
  %v9584 = vsel %vm9522, %v9358, 0
  %v9587 = vsel %vm9522, %v9366, 0
  %v9590 = vsel %vm9522, %v9374, 0
  %v9593 = vsel %vm9522, %v9382, 0
  %v9596 = vsel %vm9522, %v9390, 0
  %v9599 = vsel %vm9522, %v9398, 0
  %v9602 = vsel %vm9522, %v9406, 0
  %v9605 = vsel %vm9522, %v9414, 0
  %v9608 = vsel %vm9522, %v9422, 0
  %v9611 = vsel %vm9522, %v9430, 0
  %v9614 = vsel %vm9522, %v9438, 0
  %v9617 = vsel %vm9522, %v9446, 0
  %v9620 = vsel %vm9522, %v9454, 0
  %v9623 = vsel %vm9522, %v9462, 0
  %v9626 = vsel %vm9522, %v9470, 0
  %v9629 = vsel %vm9522, %v9478, 0
  %v9632 = vsel %vm9522, %v9486, 0
  %v9635 = vsel %vm9522, %v9494, 0
  %v9638 = vsel %vm9522, %v9493, 0
  %vm9640 = vcmask 1043456
  %v9642 = vsel %vm9640, %v9517, 0
  %9644 = vmatprep.subr.bf16.mxu0 0
  %9645 = vmatpush1.bf16.msra.mxu0 %v9513
  %9646 = vmatprep.subr.bf16.mxu0 0
  %9647 = vmatpush1.bf16.msra.mxu0 %v9514
  %9648 = vmatprep.subr.bf16.mxu0 0
  %9649 = vmatpush1.bf16.msra.mxu0 %v9515
  %9650 = vmatprep.subr.bf16.mxu0 0
  %9651 = vmatpush1.bf16.msra.mxu0 %v9516
  %9652 = vmatprep.subr.bf16.mxu0 0
  %9653 = vmatpush1.bf16.msra.mxu0 %v9642
  %9654 = vmatprep.subr.bf16.mxu0 0
  %9655 = vmatpush1.bf16.msra.mxu0 0
  %9656 = vmatprep.subr.bf16.mxu0 0
  %9657 = vmatpush1.bf16.msra.mxu0 0
  %9658 = vmatprep.subr.bf16.mxu0 0
  %9659 = vmatpush1.bf16.msra.mxu0 0
  %9660 = vmatprep.subr.bf16.mxu0 0
  %9661 = vmatpush1.bf16.msra.mxu0 0
  %9662 = vmatprep.subr.bf16.mxu0 0
  %9663 = vmatpush1.bf16.msra.mxu0 0
  %9664 = vmatprep.subr.bf16.mxu0 0
  %9665 = vmatpush1.bf16.msra.mxu0 0
  %9666 = vmatprep.subr.bf16.mxu0 0
  %9667 = vmatpush1.bf16.msra.mxu0 0
  %9668 = vmatprep.subr.bf16.mxu0 0
  %9669 = vmatpush1.bf16.msra.mxu0 0
  %9670 = vmatprep.subr.bf16.mxu0 0
  %9671 = vmatpush1.bf16.msra.mxu0 0
  %9672 = vmatprep.subr.bf16.mxu0 0
  %9673 = vmatpush1.bf16.msra.mxu0 0
  %9674 = vmatprep.subr.bf16.mxu0 0
  %9675 = vmatpush1.bf16.msra.mxu0 0
  %9676 = vmatprep.mubr.bf16.mxu0 0
  %9677 = vmatmul.mubr.bf16.gmra.mrb[0].mxu0 %v9524
  %v9678 = vpop.f32.mrb[0].mxu0
  %v9679 = vadd.f32 0.0, %v9678
  %v9680 = vpop.f32.mrb[0].mxu0
  %v9681 = vpop.f32.mrb[0].mxu0
  %v9682 = vadd.f32 0.0, %v9681
  %v9683 = vpop.f32.mrb[0].mxu0
  %9684 = vmatprep.mubr.bf16.mxu0 0
  %9685 = vmatmul.mubr.bf16.gmra.mrb[0].mxu0 %v9527
  %v9686 = vpop.f32.mrb[0].mxu0
  %v9687 = vadd.f32 0.0, %v9686
  %v9688 = vpop.f32.mrb[0].mxu0
  %v9689 = vpop.f32.mrb[0].mxu0
  %v9690 = vadd.f32 0.0, %v9689
  %v9691 = vpop.f32.mrb[0].mxu0
  %9692 = vmatprep.mubr.bf16.mxu0 0
  %9693 = vmatmul.mubr.bf16.gmra.mrb[0].mxu0 %v9530
  %v9694 = vpop.f32.mrb[0].mxu0
  %v9695 = vadd.f32 0.0, %v9694
  %v9696 = vpop.f32.mrb[0].mxu0
  %v9697 = vpop.f32.mrb[0].mxu0
  %v9698 = vadd.f32 0.0, %v9697
  %v9699 = vpop.f32.mrb[0].mxu0
  %9700 = vmatprep.mubr.bf16.mxu0 0
  %9701 = vmatmul.mubr.bf16.gmra.mrb[0].mxu0 %v9533
  %v9702 = vpop.f32.mrb[0].mxu0
  %v9703 = vadd.f32 0.0, %v9702
  %v9704 = vpop.f32.mrb[0].mxu0
  %v9705 = vpop.f32.mrb[0].mxu0
  %v9706 = vadd.f32 0.0, %v9705
  %v9707 = vpop.f32.mrb[0].mxu0
  %9708 = vmatprep.mubr.bf16.mxu0 0
  %9709 = vmatmul.mubr.bf16.gmra.mrb[0].mxu0 %v9536
  %v9710 = vpop.f32.mrb[0].mxu0
  %v9711 = vadd.f32 0.0, %v9710
  %v9712 = vpop.f32.mrb[0].mxu0
  %v9713 = vpop.f32.mrb[0].mxu0
  %v9714 = vadd.f32 0.0, %v9713
  %v9715 = vpop.f32.mrb[0].mxu0
  %9716 = vmatprep.mubr.bf16.mxu0 0
  %9717 = vmatmul.mubr.bf16.gmra.mrb[0].mxu0 %v9539
  %v9718 = vpop.f32.mrb[0].mxu0
  %v9719 = vadd.f32 0.0, %v9718
  %v9720 = vpop.f32.mrb[0].mxu0
  %v9721 = vpop.f32.mrb[0].mxu0
  %v9722 = vadd.f32 0.0, %v9721
  %v9723 = vpop.f32.mrb[0].mxu0
  %9724 = vmatprep.mubr.bf16.mxu0 0
  %9725 = vmatmul.mubr.bf16.gmra.mrb[0].mxu0 %v9542
  %v9726 = vpop.f32.mrb[0].mxu0
  %v9727 = vadd.f32 0.0, %v9726
  %v9728 = vpop.f32.mrb[0].mxu0
  %v9729 = vpop.f32.mrb[0].mxu0
  %v9730 = vadd.f32 0.0, %v9729
  %v9731 = vpop.f32.mrb[0].mxu0
  %9732 = vmatprep.mubr.bf16.mxu0 0
  %9733 = vmatmul.mubr.bf16.gmra.mrb[0].mxu0 %v9545
  %v9734 = vpop.f32.mrb[0].mxu0
  %v9735 = vadd.f32 0.0, %v9734
  %v9736 = vpop.f32.mrb[0].mxu0
  %v9737 = vpop.f32.mrb[0].mxu0
  %v9738 = vadd.f32 0.0, %v9737
  %v9739 = vpop.f32.mrb[0].mxu0
  %9740 = vmatprep.mubr.bf16.mxu0 0
  %9741 = vmatmul.mubr.bf16.gmra.mrb[0].mxu0 %v9548
  %v9742 = vpop.f32.mrb[0].mxu0
  %v9743 = vadd.f32 0.0, %v9742
  %v9744 = vpop.f32.mrb[0].mxu0
  %v9745 = vpop.f32.mrb[0].mxu0
  %v9746 = vadd.f32 0.0, %v9745
  %v9747 = vpop.f32.mrb[0].mxu0
  %9748 = vmatprep.mubr.bf16.mxu0 0
  %9749 = vmatmul.mubr.bf16.gmra.mrb[0].mxu0 %v9551
  %v9750 = vpop.f32.mrb[0].mxu0
  %v9751 = vadd.f32 0.0, %v9750
  %v9752 = vpop.f32.mrb[0].mxu0
  %v9753 = vpop.f32.mrb[0].mxu0
  %v9754 = vadd.f32 0.0, %v9753
  %v9755 = vpop.f32.mrb[0].mxu0
  %9756 = vmatprep.mubr.bf16.mxu0 0
  %9757 = vmatmul.mubr.bf16.gmra.mrb[0].mxu0 %v9554
  %v9758 = vpop.f32.mrb[0].mxu0
  %v9759 = vadd.f32 0.0, %v9758
  %v9760 = vpop.f32.mrb[0].mxu0
  %v9761 = vpop.f32.mrb[0].mxu0
  %v9762 = vadd.f32 0.0, %v9761
  %v9763 = vpop.f32.mrb[0].mxu0
  %9764 = vmatprep.mubr.bf16.mxu0 0
  %9765 = vmatmul.mubr.bf16.gmra.mrb[0].mxu0 %v9557
  %v9766 = vpop.f32.mrb[0].mxu0
  %v9767 = vadd.f32 0.0, %v9766
  %v9768 = vpop.f32.mrb[0].mxu0
  %v9769 = vpop.f32.mrb[0].mxu0
  %v9770 = vadd.f32 0.0, %v9769
  %v9771 = vpop.f32.mrb[0].mxu0
  %9772 = vmatprep.mubr.bf16.mxu0 0
  %9773 = vmatmul.mubr.bf16.gmra.mrb[0].mxu0 %v9560
  %v9774 = vpop.f32.mrb[0].mxu0
  %v9775 = vadd.f32 0.0, %v9774
  %v9776 = vpop.f32.mrb[0].mxu0
  %v9777 = vpop.f32.mrb[0].mxu0
  %v9778 = vadd.f32 0.0, %v9777
  %v9779 = vpop.f32.mrb[0].mxu0
  %9780 = vmatprep.mubr.bf16.mxu0 0
  %9781 = vmatmul.mubr.bf16.gmra.mrb[0].mxu0 %v9563
  %v9782 = vpop.f32.mrb[0].mxu0
  %v9783 = vadd.f32 0.0, %v9782
  %v9784 = vpop.f32.mrb[0].mxu0
  %v9785 = vpop.f32.mrb[0].mxu0
  %v9786 = vadd.f32 0.0, %v9785
  %v9787 = vpop.f32.mrb[0].mxu0
  %9788 = vmatprep.mubr.bf16.mxu0 0
  %9789 = vmatmul.mubr.bf16.gmra.mrb[0].mxu0 %v9566
  %v9790 = vpop.f32.mrb[0].mxu0
  %v9791 = vadd.f32 0.0, %v9790
  %v9792 = vpop.f32.mrb[0].mxu0
  %v9793 = vpop.f32.mrb[0].mxu0
  %v9794 = vadd.f32 0.0, %v9793
  %v9795 = vpop.f32.mrb[0].mxu0
  %9796 = vmatprep.mubr.bf16.mxu0 0
  %9797 = vmatmul.mubr.bf16.gmra.mrb[0].mxu0 %v9569
  %v9798 = vpop.f32.mrb[0].mxu0
  %v9799 = vadd.f32 0.0, %v9798
  %v9800 = vpop.f32.mrb[0].mxu0
  %v9801 = vpop.f32.mrb[0].mxu0
  %v9802 = vadd.f32 0.0, %v9801
  %v9803 = vpop.f32.mrb[0].mxu0
  %9804 = vmatprep.mubr.bf16.mxu0 0
  %9805 = vmatmul.mubr.bf16.gmra.mrb[0].mxu0 %v9572
  %v9806 = vpop.f32.mrb[0].mxu0
  %v9807 = vadd.f32 0.0, %v9806
  %v9808 = vpop.f32.mrb[0].mxu0
  %v9809 = vpop.f32.mrb[0].mxu0
  %v9810 = vadd.f32 0.0, %v9809
  %v9811 = vpop.f32.mrb[0].mxu0
  %9812 = vmatprep.mubr.bf16.mxu0 0
  %9813 = vmatmul.mubr.bf16.gmra.mrb[0].mxu0 %v9575
  %v9814 = vpop.f32.mrb[0].mxu0
  %v9815 = vadd.f32 0.0, %v9814
  %v9816 = vpop.f32.mrb[0].mxu0
  %v9817 = vpop.f32.mrb[0].mxu0
  %v9818 = vadd.f32 0.0, %v9817
  %v9819 = vpop.f32.mrb[0].mxu0
  %9820 = vmatprep.mubr.bf16.mxu0 0
  %9821 = vmatmul.mubr.bf16.gmra.mrb[0].mxu0 %v9578
  %v9822 = vpop.f32.mrb[0].mxu0
  %v9823 = vadd.f32 0.0, %v9822
  %v9824 = vpop.f32.mrb[0].mxu0
  %v9825 = vpop.f32.mrb[0].mxu0
  %v9826 = vadd.f32 0.0, %v9825
  %v9827 = vpop.f32.mrb[0].mxu0
  %9828 = vmatprep.mubr.bf16.mxu0 0
  %9829 = vmatmul.mubr.bf16.gmra.mrb[0].mxu0 %v9581
  %v9830 = vpop.f32.mrb[0].mxu0
  %v9831 = vadd.f32 0.0, %v9830
  %v9832 = vpop.f32.mrb[0].mxu0
  %v9833 = vpop.f32.mrb[0].mxu0
  %v9834 = vadd.f32 0.0, %v9833
  %v9835 = vpop.f32.mrb[0].mxu0
  %9836 = vmatprep.mubr.bf16.mxu0 0
  %9837 = vmatmul.mubr.bf16.gmra.mrb[0].mxu0 %v9584
  %v9838 = vpop.f32.mrb[0].mxu0
  %v9839 = vadd.f32 0.0, %v9838
  %v9840 = vpop.f32.mrb[0].mxu0
  %v9841 = vpop.f32.mrb[0].mxu0
  %v9842 = vadd.f32 0.0, %v9841
  %v9843 = vpop.f32.mrb[0].mxu0
  %9844 = vmatprep.mubr.bf16.mxu0 0
  %9845 = vmatmul.mubr.bf16.gmra.mrb[0].mxu0 %v9587
  %v9846 = vpop.f32.mrb[0].mxu0
  %v9847 = vadd.f32 0.0, %v9846
  %v9848 = vpop.f32.mrb[0].mxu0
  %v9849 = vpop.f32.mrb[0].mxu0
  %v9850 = vadd.f32 0.0, %v9849
  %v9851 = vpop.f32.mrb[0].mxu0
  %9852 = vmatprep.mubr.bf16.mxu0 0
  %9853 = vmatmul.mubr.bf16.gmra.mrb[0].mxu0 %v9590
  %v9854 = vpop.f32.mrb[0].mxu0
  %v9855 = vadd.f32 0.0, %v9854
  %v9856 = vpop.f32.mrb[0].mxu0
  %v9857 = vpop.f32.mrb[0].mxu0
  %v9858 = vadd.f32 0.0, %v9857
  %v9859 = vpop.f32.mrb[0].mxu0
  %9860 = vmatprep.mubr.bf16.mxu0 0
  %9861 = vmatmul.mubr.bf16.gmra.mrb[0].mxu0 %v9593
  %v9862 = vpop.f32.mrb[0].mxu0
  %v9863 = vadd.f32 0.0, %v9862
  %v9864 = vpop.f32.mrb[0].mxu0
  %v9865 = vpop.f32.mrb[0].mxu0
  %v9866 = vadd.f32 0.0, %v9865
  %v9867 = vpop.f32.mrb[0].mxu0
  %9868 = vmatprep.mubr.bf16.mxu0 0
  %9869 = vmatmul.mubr.bf16.gmra.mrb[0].mxu0 %v9596
  %v9870 = vpop.f32.mrb[0].mxu0
  %v9871 = vadd.f32 0.0, %v9870
  %v9872 = vpop.f32.mrb[0].mxu0
  %v9873 = vpop.f32.mrb[0].mxu0
  %v9874 = vadd.f32 0.0, %v9873
  %v9875 = vpop.f32.mrb[0].mxu0
  %9876 = vmatprep.mubr.bf16.mxu0 0
  %9877 = vmatmul.mubr.bf16.gmra.mrb[0].mxu0 %v9599
  %v9878 = vpop.f32.mrb[0].mxu0
  %v9879 = vadd.f32 0.0, %v9878
  %v9880 = vpop.f32.mrb[0].mxu0
  %v9881 = vpop.f32.mrb[0].mxu0
  %v9882 = vadd.f32 0.0, %v9881
  %v9883 = vpop.f32.mrb[0].mxu0
  %9884 = vmatprep.mubr.bf16.mxu0 0
  %9885 = vmatmul.mubr.bf16.gmra.mrb[0].mxu0 %v9602
  %v9886 = vpop.f32.mrb[0].mxu0
  %v9887 = vadd.f32 0.0, %v9886
  %v9888 = vpop.f32.mrb[0].mxu0
  %v9889 = vpop.f32.mrb[0].mxu0
  %v9890 = vadd.f32 0.0, %v9889
  %v9891 = vpop.f32.mrb[0].mxu0
  %9892 = vmatprep.mubr.bf16.mxu0 0
  %9893 = vmatmul.mubr.bf16.gmra.mrb[0].mxu0 %v9605
  %v9894 = vpop.f32.mrb[0].mxu0
  %v9895 = vadd.f32 0.0, %v9894
  %v9896 = vpop.f32.mrb[0].mxu0
  %v9897 = vpop.f32.mrb[0].mxu0
  %v9898 = vadd.f32 0.0, %v9897
  %v9899 = vpop.f32.mrb[0].mxu0
  %9900 = vmatprep.mubr.bf16.mxu0 0
  %9901 = vmatmul.mubr.bf16.gmra.mrb[0].mxu0 %v9608
  %v9902 = vpop.f32.mrb[0].mxu0
  %v9903 = vadd.f32 0.0, %v9902
  %v9904 = vpop.f32.mrb[0].mxu0
  %v9905 = vpop.f32.mrb[0].mxu0
  %v9906 = vadd.f32 0.0, %v9905
  %v9907 = vpop.f32.mrb[0].mxu0
  %9908 = vmatprep.mubr.bf16.mxu0 0
  %9909 = vmatmul.mubr.bf16.gmra.mrb[0].mxu0 %v9611
  %v9910 = vpop.f32.mrb[0].mxu0
  %v9911 = vadd.f32 0.0, %v9910
  %v9912 = vpop.f32.mrb[0].mxu0
  %v9913 = vpop.f32.mrb[0].mxu0
  %v9914 = vadd.f32 0.0, %v9913
  %v9915 = vpop.f32.mrb[0].mxu0
  %9916 = vmatprep.mubr.bf16.mxu0 0
  %9917 = vmatmul.mubr.bf16.gmra.mrb[0].mxu0 %v9614
  %v9918 = vpop.f32.mrb[0].mxu0
  %v9919 = vadd.f32 0.0, %v9918
  %v9920 = vpop.f32.mrb[0].mxu0
  %v9921 = vpop.f32.mrb[0].mxu0
  %v9922 = vadd.f32 0.0, %v9921
  %v9923 = vpop.f32.mrb[0].mxu0
  %9924 = vmatprep.mubr.bf16.mxu0 0
  %9925 = vmatmul.mubr.bf16.gmra.mrb[0].mxu0 %v9617
  %v9926 = vpop.f32.mrb[0].mxu0
  %v9927 = vadd.f32 0.0, %v9926
  %v9928 = vpop.f32.mrb[0].mxu0
  %v9929 = vpop.f32.mrb[0].mxu0
  %v9930 = vadd.f32 0.0, %v9929
  %v9931 = vpop.f32.mrb[0].mxu0
  %9932 = vmatprep.mubr.bf16.mxu0 0
  %9933 = vmatmul.mubr.bf16.gmra.mrb[0].mxu0 %v9620
  %v9934 = vpop.f32.mrb[0].mxu0
  %v9935 = vadd.f32 0.0, %v9934
  %v9936 = vpop.f32.mrb[0].mxu0
  %v9937 = vpop.f32.mrb[0].mxu0
  %v9938 = vadd.f32 0.0, %v9937
  %v9939 = vpop.f32.mrb[0].mxu0
  %9940 = vmatprep.mubr.bf16.mxu0 0
  %9941 = vmatmul.mubr.bf16.gmra.mrb[0].mxu0 %v9623
  %v9942 = vpop.f32.mrb[0].mxu0
  %v9943 = vadd.f32 0.0, %v9942
  %v9944 = vpop.f32.mrb[0].mxu0
  %v9945 = vpop.f32.mrb[0].mxu0
  %v9946 = vadd.f32 0.0, %v9945
  %v9947 = vpop.f32.mrb[0].mxu0
  %9948 = vmatprep.mubr.bf16.mxu0 0
  %9949 = vmatmul.mubr.bf16.gmra.mrb[0].mxu0 %v9626
  %v9950 = vpop.f32.mrb[0].mxu0
  %v9951 = vadd.f32 0.0, %v9950
  %v9952 = vpop.f32.mrb[0].mxu0
  %v9953 = vpop.f32.mrb[0].mxu0
  %v9954 = vadd.f32 0.0, %v9953
  %v9955 = vpop.f32.mrb[0].mxu0
  %9956 = vmatprep.mubr.bf16.mxu0 0
  %9957 = vmatmul.mubr.bf16.gmra.mrb[0].mxu0 %v9629
  %v9958 = vpop.f32.mrb[0].mxu0
  %v9959 = vadd.f32 0.0, %v9958
  %v9960 = vpop.f32.mrb[0].mxu0
  %v9961 = vpop.f32.mrb[0].mxu0
  %v9962 = vadd.f32 0.0, %v9961
  %v9963 = vpop.f32.mrb[0].mxu0
  %9964 = vmatprep.mubr.bf16.mxu0 0
  %9965 = vmatmul.mubr.bf16.gmra.mrb[0].mxu0 %v9632
  %v9966 = vpop.f32.mrb[0].mxu0
  %v9967 = vadd.f32 0.0, %v9966
  %v9968 = vpop.f32.mrb[0].mxu0
  %v9969 = vpop.f32.mrb[0].mxu0
  %v9970 = vadd.f32 0.0, %v9969
  %v9971 = vpop.f32.mrb[0].mxu0
  %9972 = vmatprep.mubr.bf16.mxu0 0
  %9973 = vmatmul.mubr.bf16.gmra.mrb[0].mxu0 %v9635
  %v9974 = vpop.f32.mrb[0].mxu0
  %v9975 = vadd.f32 0.0, %v9974
  %v9976 = vpop.f32.mrb[0].mxu0
  %v9977 = vpop.f32.mrb[0].mxu0
  %v9978 = vadd.f32 0.0, %v9977
  %v9979 = vpop.f32.mrb[0].mxu0
  %9980 = vmatprep.mubr.bf16.mxu0 0
  %9981 = vmatmul.mubr.bf16.gmra.mrb[0].mxu0 %v9638
  %v9982 = vpop.f32.mrb[0].mxu0
  %v9983 = vadd.f32 0.0, %v9982
  %v9984 = vpop.f32.mrb[0].mxu0
  %v9985 = vpop.f32.mrb[0].mxu0
  %v9986 = vpop.f32.mrb[0].mxu0
  %9987 = vdwg.mxu0
  %v9988 = vmul.f32 %v9679, %v1650
  %v9989 = vmul.f32 %v9682, %v1651
  %v9990 = vmul.f32 %v9687, %v1652
  %v9991 = vmul.f32 %v9690, %v1653
  %v9992 = vmul.f32 %v9695, %v1654
  %v9993 = vmul.f32 %v9698, %v1655
  %v9994 = vmul.f32 %v9703, %v1656
  %v9995 = vmul.f32 %v9706, %v1657
  %v9996 = vmul.f32 %v9711, %v1658
  %v9997 = vmul.f32 %v9714, %v1659
  %v9998 = vmul.f32 %v9719, %v1660
  %v9999 = vmul.f32 %v9722, %v1661
  %v10000 = vmul.f32 %v9727, %v1662
  %v10001 = vmul.f32 %v9730, %v1663
  %v10002 = vmul.f32 %v9735, %v1664
  %v10003 = vmul.f32 %v9738, %v1665
  %v10004 = vmul.f32 %v9743, %v1666
  %v10005 = vmul.f32 %v9746, %v1667
  %v10006 = vmul.f32 %v9751, %v1668
  %v10007 = vmul.f32 %v9754, %v1669
  %v10008 = vmul.f32 %v9759, %v1670
  %v10009 = vmul.f32 %v9762, %v1671
  %v10010 = vmul.f32 %v9767, %v1672
  %v10011 = vmul.f32 %v9770, %v1673
  %v10012 = vmul.f32 %v9775, %v1674
  %v10013 = vmul.f32 %v9778, %v1675
  %v10014 = vmul.f32 %v9783, %v1676
  %v10015 = vmul.f32 %v9786, %v1677
  %v10016 = vmul.f32 %v9791, %v1678
  %v10017 = vmul.f32 %v9794, %v1679
  %v10018 = vmul.f32 %v9799, %v1680
  %v10019 = vmul.f32 %v9802, %v1681
  %v10020 = vmul.f32 %v9807, %v1682
  %v10021 = vmul.f32 %v9810, %v1683
  %v10022 = vmul.f32 %v9815, %v1684
  %v10023 = vmul.f32 %v9818, %v1685
  %v10024 = vmul.f32 %v9823, %v1686
  %v10025 = vmul.f32 %v9826, %v1687
  %v10026 = vmul.f32 %v9831, %v1688
  %v10027 = vmul.f32 %v9834, %v1689
  %v10028 = vmul.f32 %v9839, %v1690
  %v10029 = vmul.f32 %v9842, %v1691
  %v10030 = vmul.f32 %v9847, %v1692
  %v10031 = vmul.f32 %v9850, %v1693
  %v10032 = vmul.f32 %v9855, %v1694
  %v10033 = vmul.f32 %v9858, %v1695
  %v10034 = vmul.f32 %v9863, %v1696
  %v10035 = vmul.f32 %v9866, %v1697
  %v10036 = vmul.f32 %v9871, %v1698
  %v10037 = vmul.f32 %v9874, %v1699
  %v10038 = vmul.f32 %v9879, %v1700
  %v10039 = vmul.f32 %v9882, %v1701
  %v10040 = vmul.f32 %v9887, %v1702
  %v10041 = vmul.f32 %v9890, %v1703
  %v10042 = vmul.f32 %v9895, %v1704
  %v10043 = vmul.f32 %v9898, %v1705
  %v10044 = vmul.f32 %v9903, %v1706
  %v10045 = vmul.f32 %v9906, %v1707
  %v10046 = vmul.f32 %v9911, %v1708
  %v10047 = vmul.f32 %v9914, %v1709
  %v10048 = vmul.f32 %v9919, %v1710
  %v10049 = vmul.f32 %v9922, %v1711
  %v10050 = vmul.f32 %v9927, %v1712
  %v10051 = vmul.f32 %v9930, %v1713
  %v10052 = vmul.f32 %v9935, %v1714
  %v10053 = vmul.f32 %v9938, %v1715
  %v10054 = vmul.f32 %v9943, %v1716
  %v10055 = vmul.f32 %v9946, %v1717
  %v10056 = vmul.f32 %v9951, %v1718
  %v10057 = vmul.f32 %v9954, %v1719
  %v10058 = vmul.f32 %v9959, %v1720
  %v10059 = vmul.f32 %v9962, %v1721
  %v10060 = vmul.f32 %v9967, %v1722
  %v10061 = vmul.f32 %v9970, %v1723
  %v10062 = vmul.f32 %v9975, %v1724
  %v10063 = vmul.f32 %v9978, %v1725
  %v10064 = vmul.f32 %v9983, %v1726
  %v10065 = vsel %vm3784, %v9988, 0.0
  %v10066 = vsel %vm3784, %v9989, 0.0
  %v10067 = vadd.f32 %v10065, %v10066
  %v10068 = vsel %vm3784, %v9990, 0.0
  %v10069 = vadd.f32 %v10067, %v10068
  %v10070 = vsel %vm3784, %v9991, 0.0
  %v10071 = vadd.f32 %v10069, %v10070
  %v10072 = vsel %vm3784, %v9992, 0.0
  %v10073 = vadd.f32 %v10071, %v10072
  %v10074 = vsel %vm3784, %v9993, 0.0
  %v10075 = vadd.f32 %v10073, %v10074
  %v10076 = vsel %vm3784, %v9994, 0.0
  %v10077 = vadd.f32 %v10075, %v10076
  %v10078 = vsel %vm3784, %v9995, 0.0
  %v10079 = vadd.f32 %v10077, %v10078
  %v10080 = vsel %vm3784, %v9996, 0.0
  %v10081 = vadd.f32 %v10079, %v10080
  %v10082 = vsel %vm3784, %v9997, 0.0
  %v10083 = vadd.f32 %v10081, %v10082
  %v10084 = vsel %vm3784, %v9998, 0.0
  %v10085 = vadd.f32 %v10083, %v10084
  %v10086 = vsel %vm3784, %v9999, 0.0
  %v10087 = vadd.f32 %v10085, %v10086
  %v10088 = vsel %vm3784, %v10000, 0.0
  %v10089 = vadd.f32 %v10087, %v10088
  %v10090 = vsel %vm3784, %v10001, 0.0
  %v10091 = vadd.f32 %v10089, %v10090
  %v10092 = vsel %vm3784, %v10002, 0.0
  %v10093 = vadd.f32 %v10091, %v10092
  %v10094 = vsel %vm3784, %v10003, 0.0
  %v10095 = vadd.f32 %v10093, %v10094
  %v10096 = vsel %vm3784, %v10004, 0.0
  %v10097 = vadd.f32 %v10095, %v10096
  %v10098 = vsel %vm3784, %v10005, 0.0
  %v10099 = vadd.f32 %v10097, %v10098
  %v10100 = vsel %vm3784, %v10006, 0.0
  %v10101 = vadd.f32 %v10099, %v10100
  %v10102 = vsel %vm3784, %v10007, 0.0
  %v10103 = vadd.f32 %v10101, %v10102
  %v10104 = vsel %vm3784, %v10008, 0.0
  %v10105 = vadd.f32 %v10103, %v10104
  %v10106 = vsel %vm3784, %v10009, 0.0
  %v10107 = vadd.f32 %v10105, %v10106
  %v10108 = vsel %vm3784, %v10010, 0.0
  %v10109 = vadd.f32 %v10107, %v10108
  %v10110 = vsel %vm3784, %v10011, 0.0
  %v10111 = vadd.f32 %v10109, %v10110
  %v10112 = vsel %vm3784, %v10012, 0.0
  %v10113 = vadd.f32 %v10111, %v10112
  %v10114 = vsel %vm3784, %v10013, 0.0
  %v10115 = vadd.f32 %v10113, %v10114
  %v10116 = vsel %vm3784, %v10014, 0.0
  %v10117 = vadd.f32 %v10115, %v10116
  %v10118 = vsel %vm3784, %v10015, 0.0
  %v10119 = vadd.f32 %v10117, %v10118
  %v10120 = vsel %vm3784, %v10016, 0.0
  %v10121 = vadd.f32 %v10119, %v10120
  %v10122 = vsel %vm3784, %v10017, 0.0
  %v10123 = vadd.f32 %v10121, %v10122
  %v10124 = vsel %vm3784, %v10018, 0.0
  %v10125 = vadd.f32 %v10123, %v10124
  %v10126 = vsel %vm3784, %v10019, 0.0
  %v10127 = vadd.f32 %v10125, %v10126
  %v10128 = vsel %vm3784, %v10020, 0.0
  %v10129 = vadd.f32 %v10127, %v10128
  %v10130 = vsel %vm3784, %v10021, 0.0
  %v10131 = vadd.f32 %v10129, %v10130
  %v10132 = vsel %vm3784, %v10022, 0.0
  %v10133 = vadd.f32 %v10131, %v10132
  %v10134 = vsel %vm3784, %v10023, 0.0
  %v10135 = vadd.f32 %v10133, %v10134
  %v10136 = vsel %vm3784, %v10024, 0.0
  %v10137 = vadd.f32 %v10135, %v10136
  %v10138 = vsel %vm3784, %v10025, 0.0
  %v10139 = vadd.f32 %v10137, %v10138
  %v10140 = vsel %vm3784, %v10026, 0.0
  %v10141 = vadd.f32 %v10139, %v10140
  %v10142 = vsel %vm3784, %v10027, 0.0
  %v10143 = vadd.f32 %v10141, %v10142
  %v10144 = vsel %vm3784, %v10028, 0.0
  %v10145 = vadd.f32 %v10143, %v10144
  %v10146 = vsel %vm3784, %v10029, 0.0
  %v10147 = vadd.f32 %v10145, %v10146
  %v10148 = vsel %vm3784, %v10030, 0.0
  %v10149 = vadd.f32 %v10147, %v10148
  %v10150 = vsel %vm3784, %v10031, 0.0
  %v10151 = vadd.f32 %v10149, %v10150
  %v10152 = vsel %vm3784, %v10032, 0.0
  %v10153 = vadd.f32 %v10151, %v10152
  %v10154 = vsel %vm3784, %v10033, 0.0
  %v10155 = vadd.f32 %v10153, %v10154
  %v10156 = vsel %vm3784, %v10034, 0.0
  %v10157 = vadd.f32 %v10155, %v10156
  %v10158 = vsel %vm3784, %v10035, 0.0
  %v10159 = vadd.f32 %v10157, %v10158
  %v10160 = vsel %vm3784, %v10036, 0.0
  %v10161 = vadd.f32 %v10159, %v10160
  %v10162 = vsel %vm3784, %v10037, 0.0
  %v10163 = vadd.f32 %v10161, %v10162
  %v10164 = vsel %vm3784, %v10038, 0.0
  %v10165 = vadd.f32 %v10163, %v10164
  %v10166 = vsel %vm3784, %v10039, 0.0
  %v10167 = vadd.f32 %v10165, %v10166
  %v10168 = vsel %vm3784, %v10040, 0.0
  %v10169 = vadd.f32 %v10167, %v10168
  %v10170 = vsel %vm3784, %v10041, 0.0
  %v10171 = vadd.f32 %v10169, %v10170
  %v10172 = vsel %vm3784, %v10042, 0.0
  %v10173 = vadd.f32 %v10171, %v10172
  %v10174 = vsel %vm3784, %v10043, 0.0
  %v10175 = vadd.f32 %v10173, %v10174
  %v10176 = vsel %vm3784, %v10044, 0.0
  %v10177 = vadd.f32 %v10175, %v10176
  %v10178 = vsel %vm3784, %v10045, 0.0
  %v10179 = vadd.f32 %v10177, %v10178
  %v10180 = vsel %vm3784, %v10046, 0.0
  %v10181 = vadd.f32 %v10179, %v10180
  %v10182 = vsel %vm3784, %v10047, 0.0
  %v10183 = vadd.f32 %v10181, %v10182
  %v10184 = vsel %vm3784, %v10048, 0.0
  %v10185 = vadd.f32 %v10183, %v10184
  %v10186 = vsel %vm3784, %v10049, 0.0
  %v10187 = vadd.f32 %v10185, %v10186
  %v10188 = vsel %vm3784, %v10050, 0.0
  %v10189 = vadd.f32 %v10187, %v10188
  %v10190 = vsel %vm3784, %v10051, 0.0
  %v10191 = vadd.f32 %v10189, %v10190
  %v10192 = vsel %vm3784, %v10052, 0.0
  %v10193 = vadd.f32 %v10191, %v10192
  %v10194 = vsel %vm3784, %v10053, 0.0
  %v10195 = vadd.f32 %v10193, %v10194
  %v10196 = vsel %vm3784, %v10054, 0.0
  %v10197 = vadd.f32 %v10195, %v10196
  %v10198 = vsel %vm3784, %v10055, 0.0
  %v10199 = vadd.f32 %v10197, %v10198
  %v10200 = vsel %vm3784, %v10056, 0.0
  %v10201 = vadd.f32 %v10199, %v10200
  %v10202 = vsel %vm3784, %v10057, 0.0
  %v10203 = vadd.f32 %v10201, %v10202
  %v10204 = vsel %vm3784, %v10058, 0.0
  %v10205 = vadd.f32 %v10203, %v10204
  %v10206 = vsel %vm3784, %v10059, 0.0
  %v10207 = vadd.f32 %v10205, %v10206
  %v10208 = vsel %vm3784, %v10060, 0.0
  %v10209 = vadd.f32 %v10207, %v10208
  %v10210 = vsel %vm3784, %v10061, 0.0
  %v10211 = vadd.f32 %v10209, %v10210
  %v10212 = vsel %vm3784, %v10062, 0.0
  %v10213 = vadd.f32 %v10211, %v10212
  %v10214 = vsel %vm3784, %v10063, 0.0
  %v10215 = vadd.f32 %v10213, %v10214
  %vm10216 = vcmask 25600
  %v10217 = vsel %vm10216, %v10064, 0.0
  %v10218 = vadd.f32 %v10215, %v10217
  %v10219 = vrot.slane %v10218, 4
  %v10220 = vadd.f32 %v10218, %v10219
  %v10221 = vrot.slane %v10220, 2
  %v10222 = vadd.f32 %v10220, %v10221
  %v10223 = vrot.slane %v10222, 1
  %v10224 = vadd.f32 %v10222, %v10223
  %v10225 = vmul.f32 %v10224, 0.001953125
  %v10226 = vmul.f32 %v9988, %v9679
  %v10227 = vmul.f32 %v9989, %v9682
  %v10228 = vmul.f32 %v9990, %v9687
  %v10229 = vmul.f32 %v9991, %v9690
  %v10230 = vmul.f32 %v9992, %v9695
  %v10231 = vmul.f32 %v9993, %v9698
  %v10232 = vmul.f32 %v9994, %v9703
  %v10233 = vmul.f32 %v9995, %v9706
  %v10234 = vmul.f32 %v9996, %v9711
  %v10235 = vmul.f32 %v9997, %v9714
  %v10236 = vmul.f32 %v9998, %v9719
  %v10237 = vmul.f32 %v9999, %v9722
  %v10238 = vmul.f32 %v10000, %v9727
  %v10239 = vmul.f32 %v10001, %v9730
  %v10240 = vmul.f32 %v10002, %v9735
  %v10241 = vmul.f32 %v10003, %v9738
  %v10242 = vmul.f32 %v10004, %v9743
  %v10243 = vmul.f32 %v10005, %v9746
  %v10244 = vmul.f32 %v10006, %v9751
  %v10245 = vmul.f32 %v10007, %v9754
  %v10246 = vmul.f32 %v10008, %v9759
  %v10247 = vmul.f32 %v10009, %v9762
  %v10248 = vmul.f32 %v10010, %v9767
  %v10249 = vmul.f32 %v10011, %v9770
  %v10250 = vmul.f32 %v10012, %v9775
  %v10251 = vmul.f32 %v10013, %v9778
  %v10252 = vmul.f32 %v10014, %v9783
  %v10253 = vmul.f32 %v10015, %v9786
  %v10254 = vmul.f32 %v10016, %v9791
  %v10255 = vmul.f32 %v10017, %v9794
  %v10256 = vmul.f32 %v10018, %v9799
  %v10257 = vmul.f32 %v10019, %v9802
  %v10258 = vmul.f32 %v10020, %v9807
  %v10259 = vmul.f32 %v10021, %v9810
  %v10260 = vmul.f32 %v10022, %v9815
  %v10261 = vmul.f32 %v10023, %v9818
  %v10262 = vmul.f32 %v10024, %v9823
  %v10263 = vmul.f32 %v10025, %v9826
  %v10264 = vmul.f32 %v10026, %v9831
  %v10265 = vmul.f32 %v10027, %v9834
  %v10266 = vmul.f32 %v10028, %v9839
  %v10267 = vmul.f32 %v10029, %v9842
  %v10268 = vmul.f32 %v10030, %v9847
  %v10269 = vmul.f32 %v10031, %v9850
  %v10270 = vmul.f32 %v10032, %v9855
  %v10271 = vmul.f32 %v10033, %v9858
  %v10272 = vmul.f32 %v10034, %v9863
  %v10273 = vmul.f32 %v10035, %v9866
  %v10274 = vmul.f32 %v10036, %v9871
  %v10275 = vmul.f32 %v10037, %v9874
  %v10276 = vmul.f32 %v10038, %v9879
  %v10277 = vmul.f32 %v10039, %v9882
  %v10278 = vmul.f32 %v10040, %v9887
  %v10279 = vmul.f32 %v10041, %v9890
  %v10280 = vmul.f32 %v10042, %v9895
  %v10281 = vmul.f32 %v10043, %v9898
  %v10282 = vmul.f32 %v10044, %v9903
  %v10283 = vmul.f32 %v10045, %v9906
  %v10284 = vmul.f32 %v10046, %v9911
  %v10285 = vmul.f32 %v10047, %v9914
  %v10286 = vmul.f32 %v10048, %v9919
  %v10287 = vmul.f32 %v10049, %v9922
  %v10288 = vmul.f32 %v10050, %v9927
  %v10289 = vmul.f32 %v10051, %v9930
  %v10290 = vmul.f32 %v10052, %v9935
  %v10291 = vmul.f32 %v10053, %v9938
  %v10292 = vmul.f32 %v10054, %v9943
  %v10293 = vmul.f32 %v10055, %v9946
  %v10294 = vmul.f32 %v10056, %v9951
  %v10295 = vmul.f32 %v10057, %v9954
  %v10296 = vmul.f32 %v10058, %v9959
  %v10297 = vmul.f32 %v10059, %v9962
  %v10298 = vmul.f32 %v10060, %v9967
  %v10299 = vmul.f32 %v10061, %v9970
  %v10300 = vmul.f32 %v10062, %v9975
  %v10301 = vmul.f32 %v10063, %v9978
  %v10302 = vmul.f32 %v10064, %v9983
  %v10303 = vsel %vm3784, %v10226, 0.0
  %v10304 = vsel %vm3784, %v10227, 0.0
  %v10305 = vadd.f32 %v10303, %v10304
  %v10306 = vsel %vm3784, %v10228, 0.0
  %v10307 = vadd.f32 %v10305, %v10306
  %v10308 = vsel %vm3784, %v10229, 0.0
  %v10309 = vadd.f32 %v10307, %v10308
  %v10310 = vsel %vm3784, %v10230, 0.0
  %v10311 = vadd.f32 %v10309, %v10310
  %v10312 = vsel %vm3784, %v10231, 0.0
  %v10313 = vadd.f32 %v10311, %v10312
  %v10314 = vsel %vm3784, %v10232, 0.0
  %v10315 = vadd.f32 %v10313, %v10314
  %v10316 = vsel %vm3784, %v10233, 0.0
  %v10317 = vadd.f32 %v10315, %v10316
  %v10318 = vsel %vm3784, %v10234, 0.0
  %v10319 = vadd.f32 %v10317, %v10318
  %v10320 = vsel %vm3784, %v10235, 0.0
  %v10321 = vadd.f32 %v10319, %v10320
  %v10322 = vsel %vm3784, %v10236, 0.0
  %v10323 = vadd.f32 %v10321, %v10322
  %v10324 = vsel %vm3784, %v10237, 0.0
  %v10325 = vadd.f32 %v10323, %v10324
  %v10326 = vsel %vm3784, %v10238, 0.0
  %v10327 = vadd.f32 %v10325, %v10326
  %v10328 = vsel %vm3784, %v10239, 0.0
  %v10329 = vadd.f32 %v10327, %v10328
  %v10330 = vsel %vm3784, %v10240, 0.0
  %v10331 = vadd.f32 %v10329, %v10330
  %v10332 = vsel %vm3784, %v10241, 0.0
  %v10333 = vadd.f32 %v10331, %v10332
  %v10334 = vsel %vm3784, %v10242, 0.0
  %v10335 = vadd.f32 %v10333, %v10334
  %v10336 = vsel %vm3784, %v10243, 0.0
  %v10337 = vadd.f32 %v10335, %v10336
  %v10338 = vsel %vm3784, %v10244, 0.0
  %v10339 = vadd.f32 %v10337, %v10338
  %v10340 = vsel %vm3784, %v10245, 0.0
  %v10341 = vadd.f32 %v10339, %v10340
  %v10342 = vsel %vm3784, %v10246, 0.0
  %v10343 = vadd.f32 %v10341, %v10342
  %v10344 = vsel %vm3784, %v10247, 0.0
  %v10345 = vadd.f32 %v10343, %v10344
  %v10346 = vsel %vm3784, %v10248, 0.0
  %v10347 = vadd.f32 %v10345, %v10346
  %v10348 = vsel %vm3784, %v10249, 0.0
  %v10349 = vadd.f32 %v10347, %v10348
  %v10350 = vsel %vm3784, %v10250, 0.0
  %v10351 = vadd.f32 %v10349, %v10350
  %v10352 = vsel %vm3784, %v10251, 0.0
  %v10353 = vadd.f32 %v10351, %v10352
  %v10354 = vsel %vm3784, %v10252, 0.0
  %v10355 = vadd.f32 %v10353, %v10354
  %v10356 = vsel %vm3784, %v10253, 0.0
  %v10357 = vadd.f32 %v10355, %v10356
  %v10358 = vsel %vm3784, %v10254, 0.0
  %v10359 = vadd.f32 %v10357, %v10358
  %v10360 = vsel %vm3784, %v10255, 0.0
  %v10361 = vadd.f32 %v10359, %v10360
  %v10362 = vsel %vm3784, %v10256, 0.0
  %v10363 = vadd.f32 %v10361, %v10362
  %v10364 = vsel %vm3784, %v10257, 0.0
  %v10365 = vadd.f32 %v10363, %v10364
  %v10366 = vsel %vm3784, %v10258, 0.0
  %v10367 = vadd.f32 %v10365, %v10366
  %v10368 = vsel %vm3784, %v10259, 0.0
  %v10369 = vadd.f32 %v10367, %v10368
  %v10370 = vsel %vm3784, %v10260, 0.0
  %v10371 = vadd.f32 %v10369, %v10370
  %v10372 = vsel %vm3784, %v10261, 0.0
  %v10373 = vadd.f32 %v10371, %v10372
  %v10374 = vsel %vm3784, %v10262, 0.0
  %v10375 = vadd.f32 %v10373, %v10374
  %v10376 = vsel %vm3784, %v10263, 0.0
  %v10377 = vadd.f32 %v10375, %v10376
  %v10378 = vsel %vm3784, %v10264, 0.0
  %v10379 = vadd.f32 %v10377, %v10378
  %v10380 = vsel %vm3784, %v10265, 0.0
  %v10381 = vadd.f32 %v10379, %v10380
  %v10382 = vsel %vm3784, %v10266, 0.0
  %v10383 = vadd.f32 %v10381, %v10382
  %v10384 = vsel %vm3784, %v10267, 0.0
  %v10385 = vadd.f32 %v10383, %v10384
  %v10386 = vsel %vm3784, %v10268, 0.0
  %v10387 = vadd.f32 %v10385, %v10386
  %v10388 = vsel %vm3784, %v10269, 0.0
  %v10389 = vadd.f32 %v10387, %v10388
  %v10390 = vsel %vm3784, %v10270, 0.0
  %v10391 = vadd.f32 %v10389, %v10390
  %v10392 = vsel %vm3784, %v10271, 0.0
  %v10393 = vadd.f32 %v10391, %v10392
  %v10394 = vsel %vm3784, %v10272, 0.0
  %v10395 = vadd.f32 %v10393, %v10394
  %v10396 = vsel %vm3784, %v10273, 0.0
  %v10397 = vadd.f32 %v10395, %v10396
  %v10398 = vsel %vm3784, %v10274, 0.0
  %v10399 = vadd.f32 %v10397, %v10398
  %v10400 = vsel %vm3784, %v10275, 0.0
  %v10401 = vadd.f32 %v10399, %v10400
  %v10402 = vsel %vm3784, %v10276, 0.0
  %v10403 = vadd.f32 %v10401, %v10402
  %v10404 = vsel %vm3784, %v10277, 0.0
  %v10405 = vadd.f32 %v10403, %v10404
  %v10406 = vsel %vm3784, %v10278, 0.0
  %v10407 = vadd.f32 %v10405, %v10406
  %v10408 = vsel %vm3784, %v10279, 0.0
  %v10409 = vadd.f32 %v10407, %v10408
  %v10410 = vsel %vm3784, %v10280, 0.0
  %v10411 = vadd.f32 %v10409, %v10410
  %v10412 = vsel %vm3784, %v10281, 0.0
  %v10413 = vadd.f32 %v10411, %v10412
  %v10414 = vsel %vm3784, %v10282, 0.0
  %v10415 = vadd.f32 %v10413, %v10414
  %v10416 = vsel %vm3784, %v10283, 0.0
  %v10417 = vadd.f32 %v10415, %v10416
  %v10418 = vsel %vm3784, %v10284, 0.0
  %v10419 = vadd.f32 %v10417, %v10418
  %v10420 = vsel %vm3784, %v10285, 0.0
  %v10421 = vadd.f32 %v10419, %v10420
  %v10422 = vsel %vm3784, %v10286, 0.0
  %v10423 = vadd.f32 %v10421, %v10422
  %v10424 = vsel %vm3784, %v10287, 0.0
  %v10425 = vadd.f32 %v10423, %v10424
  %v10426 = vsel %vm3784, %v10288, 0.0
  %v10427 = vadd.f32 %v10425, %v10426
  %v10428 = vsel %vm3784, %v10289, 0.0
  %v10429 = vadd.f32 %v10427, %v10428
  %v10430 = vsel %vm3784, %v10290, 0.0
  %v10431 = vadd.f32 %v10429, %v10430
  %v10432 = vsel %vm3784, %v10291, 0.0
  %v10433 = vadd.f32 %v10431, %v10432
  %v10434 = vsel %vm3784, %v10292, 0.0
  %v10435 = vadd.f32 %v10433, %v10434
  %v10436 = vsel %vm3784, %v10293, 0.0
  %v10437 = vadd.f32 %v10435, %v10436
  %v10438 = vsel %vm3784, %v10294, 0.0
  %v10439 = vadd.f32 %v10437, %v10438
  %v10440 = vsel %vm3784, %v10295, 0.0
  %v10441 = vadd.f32 %v10439, %v10440
  %v10442 = vsel %vm3784, %v10296, 0.0
  %v10443 = vadd.f32 %v10441, %v10442
  %v10444 = vsel %vm3784, %v10297, 0.0
  %v10445 = vadd.f32 %v10443, %v10444
  %v10446 = vsel %vm3784, %v10298, 0.0
  %v10447 = vadd.f32 %v10445, %v10446
  %v10448 = vsel %vm3784, %v10299, 0.0
  %v10449 = vadd.f32 %v10447, %v10448
  %v10450 = vsel %vm3784, %v10300, 0.0
  %v10451 = vadd.f32 %v10449, %v10450
  %v10452 = vsel %vm3784, %v10301, 0.0
  %v10453 = vadd.f32 %v10451, %v10452
  %v10454 = vsel %vm10216, %v10302, 0.0
  %v10455 = vadd.f32 %v10453, %v10454
  %v10456 = vrot.slane %v10455, 4
  %v10457 = vadd.f32 %v10455, %v10456
  %v10458 = vrot.slane %v10457, 2
  %v10459 = vadd.f32 %v10457, %v10458
  %v10460 = vrot.slane %v10459, 1
  %v10461 = vadd.f32 %v10459, %v10460
  %v10462 = vmul.f32 %v10461, 0.001953125
  %v10463 = vmul.f32 %v10225, %v10225
  %v10464 = vsub.f32 %v10462, %v10463
  %v10465 = vld [vmem:[%s5] sm:$0x1]
  %v10466 = vmax.f32 %v10464, 0.0
  %v10467 = vadd.f32 %v10466, 1e-05
  %v10468 = vrsqrt.pop %v10467
  %v10469 = vmul.f32 %v10465, %v10468
  %v10470 = vsub.f32 %v9679, %v10225
  %v10471 = vsub.f32 %v9682, %v10225
  %v10472 = vsub.f32 %v9687, %v10225
  %v10473 = vsub.f32 %v9690, %v10225
  %v10474 = vsub.f32 %v9695, %v10225
  %v10475 = vsub.f32 %v9698, %v10225
  %v10476 = vsub.f32 %v9703, %v10225
  %v10477 = vsub.f32 %v9706, %v10225
  %v10478 = vsub.f32 %v9711, %v10225
  %v10479 = vsub.f32 %v9714, %v10225
  %v10480 = vsub.f32 %v9719, %v10225
  %v10481 = vsub.f32 %v9722, %v10225
  %v10482 = vsub.f32 %v9727, %v10225
  %v10483 = vsub.f32 %v9730, %v10225
  %v10484 = vsub.f32 %v9735, %v10225
  %v10485 = vsub.f32 %v9738, %v10225
  %v10486 = vsub.f32 %v9743, %v10225
  %v10487 = vsub.f32 %v9746, %v10225
  %v10488 = vsub.f32 %v9751, %v10225
  %v10489 = vsub.f32 %v9754, %v10225
  %v10490 = vsub.f32 %v9759, %v10225
  %v10491 = vsub.f32 %v9762, %v10225
  %v10492 = vsub.f32 %v9767, %v10225
  %v10493 = vsub.f32 %v9770, %v10225
  %v10494 = vsub.f32 %v9775, %v10225
  %v10495 = vsub.f32 %v9778, %v10225
  %v10496 = vsub.f32 %v9783, %v10225
  %v10497 = vsub.f32 %v9786, %v10225
  %v10498 = vsub.f32 %v9791, %v10225
  %v10499 = vsub.f32 %v9794, %v10225
  %v10500 = vsub.f32 %v9799, %v10225
  %v10501 = vsub.f32 %v9802, %v10225
  %v10502 = vsub.f32 %v9807, %v10225
  %v10503 = vsub.f32 %v9810, %v10225
  %v10504 = vsub.f32 %v9815, %v10225
  %v10505 = vsub.f32 %v9818, %v10225
  %v10506 = vsub.f32 %v9823, %v10225
  %v10507 = vsub.f32 %v9826, %v10225
  %v10508 = vsub.f32 %v9831, %v10225
  %v10509 = vsub.f32 %v9834, %v10225
  %v10510 = vsub.f32 %v9839, %v10225
  %v10511 = vsub.f32 %v9842, %v10225
  %v10512 = vsub.f32 %v9847, %v10225
  %v10513 = vsub.f32 %v9850, %v10225
  %v10514 = vsub.f32 %v9855, %v10225
  %v10515 = vsub.f32 %v9858, %v10225
  %v10516 = vsub.f32 %v9863, %v10225
  %v10517 = vsub.f32 %v9866, %v10225
  %v10518 = vsub.f32 %v9871, %v10225
  %v10519 = vsub.f32 %v9874, %v10225
  %v10520 = vsub.f32 %v9879, %v10225
  %v10521 = vsub.f32 %v9882, %v10225
  %v10522 = vsub.f32 %v9887, %v10225
  %v10523 = vsub.f32 %v9890, %v10225
  %v10524 = vsub.f32 %v9895, %v10225
  %v10525 = vsub.f32 %v9898, %v10225
  %v10526 = vsub.f32 %v9903, %v10225
  %v10527 = vsub.f32 %v9906, %v10225
  %v10528 = vsub.f32 %v9911, %v10225
  %v10529 = vsub.f32 %v9914, %v10225
  %v10530 = vsub.f32 %v9919, %v10225
  %v10531 = vsub.f32 %v9922, %v10225
  %v10532 = vsub.f32 %v9927, %v10225
  %v10533 = vsub.f32 %v9930, %v10225
  %v10534 = vsub.f32 %v9935, %v10225
  %v10535 = vsub.f32 %v9938, %v10225
  %v10536 = vsub.f32 %v9943, %v10225
  %v10537 = vsub.f32 %v9946, %v10225
  %v10538 = vsub.f32 %v9951, %v10225
  %v10539 = vsub.f32 %v9954, %v10225
  %v10540 = vsub.f32 %v9959, %v10225
  %v10541 = vsub.f32 %v9962, %v10225
  %v10542 = vsub.f32 %v9967, %v10225
  %v10543 = vsub.f32 %v9970, %v10225
  %v10544 = vsub.f32 %v9975, %v10225
  %v10545 = vsub.f32 %v9978, %v10225
  %v10546 = vsub.f32 %v9983, %v10225
  %v10548 = vlaneseq
  %v10549 = vshrl.u32 %v10548, 7
  %v10550 = vsub.s32 0, %v10549
  %v10551 = vrot.slane %v10469, %v10550
  %v10553 = vmul.f32 %v10470, %v10551
  %v10554 = vmul.f32 %v10471, %v10551
  %v10555 = vmul.f32 %v10472, %v10551
  %v10556 = vmul.f32 %v10473, %v10551
  %v10557 = vmul.f32 %v10474, %v10551
  %v10558 = vmul.f32 %v10475, %v10551
  %v10559 = vmul.f32 %v10476, %v10551
  %v10560 = vmul.f32 %v10477, %v10551
  %v10561 = vmul.f32 %v10478, %v10551
  %v10562 = vmul.f32 %v10479, %v10551
  %v10563 = vmul.f32 %v10480, %v10551
  %v10564 = vmul.f32 %v10481, %v10551
  %v10565 = vmul.f32 %v10482, %v10551
  %v10566 = vmul.f32 %v10483, %v10551
  %v10567 = vmul.f32 %v10484, %v10551
  %v10568 = vmul.f32 %v10485, %v10551
  %v10569 = vmul.f32 %v10486, %v10551
  %v10570 = vmul.f32 %v10487, %v10551
  %v10571 = vmul.f32 %v10488, %v10551
  %v10572 = vmul.f32 %v10489, %v10551
  %v10573 = vmul.f32 %v10490, %v10551
  %v10574 = vmul.f32 %v10491, %v10551
  %v10575 = vmul.f32 %v10492, %v10551
  %v10576 = vmul.f32 %v10493, %v10551
  %v10577 = vmul.f32 %v10494, %v10551
  %v10578 = vmul.f32 %v10495, %v10551
  %v10579 = vmul.f32 %v10496, %v10551
  %v10580 = vmul.f32 %v10497, %v10551
  %v10581 = vmul.f32 %v10498, %v10551
  %v10582 = vmul.f32 %v10499, %v10551
  %v10583 = vmul.f32 %v10500, %v10551
  %v10584 = vmul.f32 %v10501, %v10551
  %v10585 = vmul.f32 %v10502, %v10551
  %v10586 = vmul.f32 %v10503, %v10551
  %v10587 = vmul.f32 %v10504, %v10551
  %v10588 = vmul.f32 %v10505, %v10551
  %v10589 = vmul.f32 %v10506, %v10551
  %v10590 = vmul.f32 %v10507, %v10551
  %v10591 = vmul.f32 %v10508, %v10551
  %v10592 = vmul.f32 %v10509, %v10551
  %v10593 = vmul.f32 %v10510, %v10551
  %v10594 = vmul.f32 %v10511, %v10551
  %v10595 = vmul.f32 %v10512, %v10551
  %v10596 = vmul.f32 %v10513, %v10551
  %v10597 = vmul.f32 %v10514, %v10551
  %v10598 = vmul.f32 %v10515, %v10551
  %v10599 = vmul.f32 %v10516, %v10551
  %v10600 = vmul.f32 %v10517, %v10551
  %v10601 = vmul.f32 %v10518, %v10551
  %v10602 = vmul.f32 %v10519, %v10551
  %v10603 = vmul.f32 %v10520, %v10551
  %v10604 = vmul.f32 %v10521, %v10551
  %v10605 = vmul.f32 %v10522, %v10551
  %v10606 = vmul.f32 %v10523, %v10551
  %v10607 = vmul.f32 %v10524, %v10551
  %v10608 = vmul.f32 %v10525, %v10551
  %v10609 = vmul.f32 %v10526, %v10551
  %v10610 = vmul.f32 %v10527, %v10551
  %v10611 = vmul.f32 %v10528, %v10551
  %v10612 = vmul.f32 %v10529, %v10551
  %v10613 = vmul.f32 %v10530, %v10551
  %v10614 = vmul.f32 %v10531, %v10551
  %v10615 = vmul.f32 %v10532, %v10551
  %v10616 = vmul.f32 %v10533, %v10551
  %v10617 = vmul.f32 %v10534, %v10551
  %v10618 = vmul.f32 %v10535, %v10551
  %v10619 = vmul.f32 %v10536, %v10551
  %v10620 = vmul.f32 %v10537, %v10551
  %v10621 = vmul.f32 %v10538, %v10551
  %v10622 = vmul.f32 %v10539, %v10551
  %v10623 = vmul.f32 %v10540, %v10551
  %v10624 = vmul.f32 %v10541, %v10551
  %v10625 = vmul.f32 %v10542, %v10551
  %v10626 = vmul.f32 %v10543, %v10551
  %v10627 = vmul.f32 %v10544, %v10551
  %v10628 = vmul.f32 %v10545, %v10551
  %v10629 = vmul.f32 %v10546, %v10551
  %v10630 = vld [vmem:[%s6] sm:$0x1]
  %v10632 = vlaneseq
  %v10633 = vshrl.u32 %v10632, 7
  %v10634 = vsub.s32 0, %v10633
  %v10635 = vrot.slane %v10630, %v10634
  %v10637 = vadd.f32 %v10553, %v10635
  %v10638 = vadd.f32 %v10554, %v10635
  %v10639 = vadd.f32 %v10555, %v10635
  %v10640 = vadd.f32 %v10556, %v10635
  %v10641 = vadd.f32 %v10557, %v10635
  %v10642 = vadd.f32 %v10558, %v10635
  %v10643 = vadd.f32 %v10559, %v10635
  %v10644 = vadd.f32 %v10560, %v10635
  %v10645 = vadd.f32 %v10561, %v10635
  %v10646 = vadd.f32 %v10562, %v10635
  %v10647 = vadd.f32 %v10563, %v10635
  %v10648 = vadd.f32 %v10564, %v10635
  %v10649 = vadd.f32 %v10565, %v10635
  %v10650 = vadd.f32 %v10566, %v10635
  %v10651 = vadd.f32 %v10567, %v10635
  %v10652 = vadd.f32 %v10568, %v10635
  %v10653 = vadd.f32 %v10569, %v10635
  %v10654 = vadd.f32 %v10570, %v10635
  %v10655 = vadd.f32 %v10571, %v10635
  %v10656 = vadd.f32 %v10572, %v10635
  %v10657 = vadd.f32 %v10573, %v10635
  %v10658 = vadd.f32 %v10574, %v10635
  %v10659 = vadd.f32 %v10575, %v10635
  %v10660 = vadd.f32 %v10576, %v10635
  %v10661 = vadd.f32 %v10577, %v10635
  %v10662 = vadd.f32 %v10578, %v10635
  %v10663 = vadd.f32 %v10579, %v10635
  %v10664 = vadd.f32 %v10580, %v10635
  %v10665 = vadd.f32 %v10581, %v10635
  %v10666 = vadd.f32 %v10582, %v10635
  %v10667 = vadd.f32 %v10583, %v10635
  %v10668 = vadd.f32 %v10584, %v10635
  %v10669 = vadd.f32 %v10585, %v10635
  %v10670 = vadd.f32 %v10586, %v10635
  %v10671 = vadd.f32 %v10587, %v10635
  %v10672 = vadd.f32 %v10588, %v10635
  %v10673 = vadd.f32 %v10589, %v10635
  %v10674 = vadd.f32 %v10590, %v10635
  %v10675 = vadd.f32 %v10591, %v10635
  %v10676 = vadd.f32 %v10592, %v10635
  %v10677 = vadd.f32 %v10593, %v10635
  %v10678 = vadd.f32 %v10594, %v10635
  %v10679 = vadd.f32 %v10595, %v10635
  %v10680 = vadd.f32 %v10596, %v10635
  %v10681 = vadd.f32 %v10597, %v10635
  %v10682 = vadd.f32 %v10598, %v10635
  %v10683 = vadd.f32 %v10599, %v10635
  %v10684 = vadd.f32 %v10600, %v10635
  %v10685 = vadd.f32 %v10601, %v10635
  %v10686 = vadd.f32 %v10602, %v10635
  %v10687 = vadd.f32 %v10603, %v10635
  %v10688 = vadd.f32 %v10604, %v10635
  %v10689 = vadd.f32 %v10605, %v10635
  %v10690 = vadd.f32 %v10606, %v10635
  %v10691 = vadd.f32 %v10607, %v10635
  %v10692 = vadd.f32 %v10608, %v10635
  %v10693 = vadd.f32 %v10609, %v10635
  %v10694 = vadd.f32 %v10610, %v10635
  %v10695 = vadd.f32 %v10611, %v10635
  %v10696 = vadd.f32 %v10612, %v10635
  %v10697 = vadd.f32 %v10613, %v10635
  %v10698 = vadd.f32 %v10614, %v10635
  %v10699 = vadd.f32 %v10615, %v10635
  %v10700 = vadd.f32 %v10616, %v10635
  %v10701 = vadd.f32 %v10617, %v10635
  %v10702 = vadd.f32 %v10618, %v10635
  %v10703 = vadd.f32 %v10619, %v10635
  %v10704 = vadd.f32 %v10620, %v10635
  %v10705 = vadd.f32 %v10621, %v10635
  %v10706 = vadd.f32 %v10622, %v10635
  %v10707 = vadd.f32 %v10623, %v10635
  %v10708 = vadd.f32 %v10624, %v10635
  %v10709 = vadd.f32 %v10625, %v10635
  %v10710 = vadd.f32 %v10626, %v10635
  %v10711 = vadd.f32 %v10627, %v10635
  %v10712 = vadd.f32 %v10628, %v10635
  %v10713 = vadd.f32 %v10629, %v10635
  %v10714 = vmax.f32 %v10637, 0.0
  %v10715 = vmax.f32 %v10638, 0.0
  %v10716 = vmax.f32 %v10639, 0.0
  %v10717 = vmax.f32 %v10640, 0.0
  %v10718 = vmax.f32 %v10641, 0.0
  %v10719 = vmax.f32 %v10642, 0.0
  %v10720 = vmax.f32 %v10643, 0.0
  %v10721 = vmax.f32 %v10644, 0.0
  %v10722 = vmax.f32 %v10645, 0.0
  %v10723 = vmax.f32 %v10646, 0.0
  %v10724 = vmax.f32 %v10647, 0.0
  %v10725 = vmax.f32 %v10648, 0.0
  %v10726 = vmax.f32 %v10649, 0.0
  %v10727 = vmax.f32 %v10650, 0.0
  %v10728 = vmax.f32 %v10651, 0.0
  %v10729 = vmax.f32 %v10652, 0.0
  %v10730 = vmax.f32 %v10653, 0.0
  %v10731 = vmax.f32 %v10654, 0.0
  %v10732 = vmax.f32 %v10655, 0.0
  %v10733 = vmax.f32 %v10656, 0.0
  %v10734 = vmax.f32 %v10657, 0.0
  %v10735 = vmax.f32 %v10658, 0.0
  %v10736 = vmax.f32 %v10659, 0.0
  %v10737 = vmax.f32 %v10660, 0.0
  %v10738 = vmax.f32 %v10661, 0.0
  %v10739 = vmax.f32 %v10662, 0.0
  %v10740 = vmax.f32 %v10663, 0.0
  %v10741 = vmax.f32 %v10664, 0.0
  %v10742 = vmax.f32 %v10665, 0.0
  %v10743 = vmax.f32 %v10666, 0.0
  %v10744 = vmax.f32 %v10667, 0.0
  %v10745 = vmax.f32 %v10668, 0.0
  %v10746 = vmax.f32 %v10669, 0.0
  %v10747 = vmax.f32 %v10670, 0.0
  %v10748 = vmax.f32 %v10671, 0.0
  %v10749 = vmax.f32 %v10672, 0.0
  %v10750 = vmax.f32 %v10673, 0.0
  %v10751 = vmax.f32 %v10674, 0.0
  %v10752 = vmax.f32 %v10675, 0.0
  %v10753 = vmax.f32 %v10676, 0.0
  %v10754 = vmax.f32 %v10677, 0.0
  %v10755 = vmax.f32 %v10678, 0.0
  %v10756 = vmax.f32 %v10679, 0.0
  %v10757 = vmax.f32 %v10680, 0.0
  %v10758 = vmax.f32 %v10681, 0.0
  %v10759 = vmax.f32 %v10682, 0.0
  %v10760 = vmax.f32 %v10683, 0.0
  %v10761 = vmax.f32 %v10684, 0.0
  %v10762 = vmax.f32 %v10685, 0.0
  %v10763 = vmax.f32 %v10686, 0.0
  %v10764 = vmax.f32 %v10687, 0.0
  %v10765 = vmax.f32 %v10688, 0.0
  %v10766 = vmax.f32 %v10689, 0.0
  %v10767 = vmax.f32 %v10690, 0.0
  %v10768 = vmax.f32 %v10691, 0.0
  %v10769 = vmax.f32 %v10692, 0.0
  %v10770 = vmax.f32 %v10693, 0.0
  %v10771 = vmax.f32 %v10694, 0.0
  %v10772 = vmax.f32 %v10695, 0.0
  %v10773 = vmax.f32 %v10696, 0.0
  %v10774 = vmax.f32 %v10697, 0.0
  %v10775 = vmax.f32 %v10698, 0.0
  %v10776 = vmax.f32 %v10699, 0.0
  %v10777 = vmax.f32 %v10700, 0.0
  %v10778 = vmax.f32 %v10701, 0.0
  %v10779 = vmax.f32 %v10702, 0.0
  %v10780 = vmax.f32 %v10703, 0.0
  %v10781 = vmax.f32 %v10704, 0.0
  %v10782 = vmax.f32 %v10705, 0.0
  %v10783 = vmax.f32 %v10706, 0.0
  %v10784 = vmax.f32 %v10707, 0.0
  %v10785 = vmax.f32 %v10708, 0.0
  %v10786 = vmax.f32 %v10709, 0.0
  %v10787 = vmax.f32 %v10710, 0.0
  %v10788 = vmax.f32 %v10711, 0.0
  %v10789 = vmax.f32 %v10712, 0.0
  %v10790 = vmax.f32 %v10713, 0.0
  %v10791 = vmul.f32 %v10714, %v1650
  %v10792 = vmul.f32 %v10715, %v1651
  %v10793 = vmul.f32 %v10716, %v1652
  %v10794 = vmul.f32 %v10717, %v1653
  %v10795 = vmul.f32 %v10718, %v1654
  %v10796 = vmul.f32 %v10719, %v1655
  %v10797 = vmul.f32 %v10720, %v1656
  %v10798 = vmul.f32 %v10721, %v1657
  %v10799 = vmul.f32 %v10722, %v1658
  %v10800 = vmul.f32 %v10723, %v1659
  %v10801 = vmul.f32 %v10724, %v1660
  %v10802 = vmul.f32 %v10725, %v1661
  %v10803 = vmul.f32 %v10726, %v1662
  %v10804 = vmul.f32 %v10727, %v1663
  %v10805 = vmul.f32 %v10728, %v1664
  %v10806 = vmul.f32 %v10729, %v1665
  %v10807 = vmul.f32 %v10730, %v1666
  %v10808 = vmul.f32 %v10731, %v1667
  %v10809 = vmul.f32 %v10732, %v1668
  %v10810 = vmul.f32 %v10733, %v1669
  %v10811 = vmul.f32 %v10734, %v1670
  %v10812 = vmul.f32 %v10735, %v1671
  %v10813 = vmul.f32 %v10736, %v1672
  %v10814 = vmul.f32 %v10737, %v1673
  %v10815 = vmul.f32 %v10738, %v1674
  %v10816 = vmul.f32 %v10739, %v1675
  %v10817 = vmul.f32 %v10740, %v1676
  %v10818 = vmul.f32 %v10741, %v1677
  %v10819 = vmul.f32 %v10742, %v1678
  %v10820 = vmul.f32 %v10743, %v1679
  %v10821 = vmul.f32 %v10744, %v1680
  %v10822 = vmul.f32 %v10745, %v1681
  %v10823 = vmul.f32 %v10746, %v1682
  %v10824 = vmul.f32 %v10747, %v1683
  %v10825 = vmul.f32 %v10748, %v1684
  %v10826 = vmul.f32 %v10749, %v1685
  %v10827 = vmul.f32 %v10750, %v1686
  %v10828 = vmul.f32 %v10751, %v1687
  %v10829 = vmul.f32 %v10752, %v1688
  %v10830 = vmul.f32 %v10753, %v1689
  %v10831 = vmul.f32 %v10754, %v1690
  %v10832 = vmul.f32 %v10755, %v1691
  %v10833 = vmul.f32 %v10756, %v1692
  %v10834 = vmul.f32 %v10757, %v1693
  %v10835 = vmul.f32 %v10758, %v1694
  %v10836 = vmul.f32 %v10759, %v1695
  %v10837 = vmul.f32 %v10760, %v1696
  %v10838 = vmul.f32 %v10761, %v1697
  %v10839 = vmul.f32 %v10762, %v1698
  %v10840 = vmul.f32 %v10763, %v1699
  %v10841 = vmul.f32 %v10764, %v1700
  %v10842 = vmul.f32 %v10765, %v1701
  %v10843 = vmul.f32 %v10766, %v1702
  %v10844 = vmul.f32 %v10767, %v1703
  %v10845 = vmul.f32 %v10768, %v1704
  %v10846 = vmul.f32 %v10769, %v1705
  %v10847 = vmul.f32 %v10770, %v1706
  %v10848 = vmul.f32 %v10771, %v1707
  %v10849 = vmul.f32 %v10772, %v1708
  %v10850 = vmul.f32 %v10773, %v1709
  %v10851 = vmul.f32 %v10774, %v1710
  %v10852 = vmul.f32 %v10775, %v1711
  %v10853 = vmul.f32 %v10776, %v1712
  %v10854 = vmul.f32 %v10777, %v1713
  %v10855 = vmul.f32 %v10778, %v1714
  %v10856 = vmul.f32 %v10779, %v1715
  %v10857 = vmul.f32 %v10780, %v1716
  %v10858 = vmul.f32 %v10781, %v1717
  %v10859 = vmul.f32 %v10782, %v1718
  %v10860 = vmul.f32 %v10783, %v1719
  %v10861 = vmul.f32 %v10784, %v1720
  %v10862 = vmul.f32 %v10785, %v1721
  %v10863 = vmul.f32 %v10786, %v1722
  %v10864 = vmul.f32 %v10787, %v1723
  %v10865 = vmul.f32 %v10788, %v1724
  %v10866 = vmul.f32 %v10789, %v1725
  %v10867 = vmul.f32 %v10790, %v1726
  %vm10868 = vcmask 27648
  %10869 = vst.msk [vmem:[#allocation3] sm:$0xf] %vm10868, 0
  %10870 = vst.msk [vmem:[#allocation3 + $0x4] sm:$0xf] %vm10868, 0
  %10871 = vst.msk [vmem:[#allocation3 + $0x8] sm:$0xf] %vm10868, 0
  %10872 = vst.msk [vmem:[#allocation3 + $0xc] sm:$0xf] %vm10868, 0
  %vm10873 = vcmask 27649
  %10874 = vst.msk [vmem:[#allocation3 + $0x140] sm:$0xe] %vm10873, 0
  %10875 = vst.msk [vmem:[#allocation3 + $0x144] sm:$0xf] %vm10868, 0
  %vm10876 = vcmask 26624
  %vm10877 = vmand %vm10876, %vm2695
  %v10878 = vld [vmem:[#allocation3 + $0x148] sm:$0x7]
  %v10879 = vsel %vm10877, 0, %v10878
  %10880 = vst [vmem:[#allocation3 + $0x148] sm:$0x7] %v10879
  %v10881 = vpack.c.bf16 %v10792, %v10791
  %v10882 = vpack.c.bf16 %v10794, %v10793
  %v10883 = vpack.c.bf16 %v10796, %v10795
  %v10884 = vpack.c.bf16 %v10798, %v10797
  %v10885 = vpack.c.bf16 %v10800, %v10799
  %v10886 = vpack.c.bf16 %v10802, %v10801
  %v10887 = vpack.c.bf16 %v10804, %v10803
  %v10888 = vpack.c.bf16 %v10806, %v10805
  %v10889 = vpack.c.bf16 %v10808, %v10807
  %v10890 = vpack.c.bf16 %v10810, %v10809
  %v10891 = vpack.c.bf16 %v10812, %v10811
  %v10892 = vpack.c.bf16 %v10814, %v10813
  %v10893 = vpack.c.bf16 %v10816, %v10815
  %v10894 = vpack.c.bf16 %v10818, %v10817
  %v10895 = vpack.c.bf16 %v10820, %v10819
  %v10896 = vpack.c.bf16 %v10822, %v10821
  %v10897 = vpack.c.bf16 %v10824, %v10823
  %v10898 = vpack.c.bf16 %v10826, %v10825
  %v10899 = vpack.c.bf16 %v10828, %v10827
  %v10900 = vpack.c.bf16 %v10830, %v10829
  %v10901 = vpack.c.bf16 %v10832, %v10831
  %v10902 = vpack.c.bf16 %v10834, %v10833
  %v10903 = vpack.c.bf16 %v10836, %v10835
  %v10904 = vpack.c.bf16 %v10838, %v10837
  %v10905 = vpack.c.bf16 %v10840, %v10839
  %v10906 = vpack.c.bf16 %v10842, %v10841
  %v10907 = vpack.c.bf16 %v10844, %v10843
  %v10908 = vpack.c.bf16 %v10846, %v10845
  %v10909 = vpack.c.bf16 %v10848, %v10847
  %v10910 = vpack.c.bf16 %v10850, %v10849
  %v10911 = vpack.c.bf16 %v10852, %v10851
  %v10912 = vpack.c.bf16 %v10854, %v10853
  %v10913 = vpack.c.bf16 %v10856, %v10855
  %v10914 = vpack.c.bf16 %v10858, %v10857
  %v10915 = vpack.c.bf16 %v10860, %v10859
  %v10916 = vpack.c.bf16 %v10862, %v10861
  %v10917 = vpack.c.bf16 %v10864, %v10863
  %v10918 = vpack.c.bf16 %v10866, %v10865
  %v10919 = vpack.c.bf16 %v10867, %v10867
  %v10959 = vunpack.c.l.b16 %v10881
  %v10960 = vunpack.c.h.b16 %v10881
  %v10961 = vunpack.c.l.b16 %v10882
  %v10962 = vunpack.c.h.b16 %v10882
  %v10963 = vunpack.c.l.b16 %v10883
  %v10964 = vunpack.c.h.b16 %v10883
  %v10965 = vunpack.c.l.b16 %v10884
  %v10966 = vunpack.c.h.b16 %v10884
  %v10967 = vunpack.c.l.b16 %v10885
  %v10968 = vunpack.c.h.b16 %v10885
  %v10969 = vunpack.c.l.b16 %v10886
  %v10970 = vunpack.c.h.b16 %v10886
  %v10971 = vunpack.c.l.b16 %v10887
  %v10972 = vunpack.c.h.b16 %v10887
  %v10973 = vunpack.c.l.b16 %v10888
  %v10974 = vunpack.c.h.b16 %v10888
  %v10975 = vunpack.c.l.b16 %v10889
  %v10976 = vunpack.c.h.b16 %v10889
  %v10977 = vunpack.c.l.b16 %v10890
  %v10978 = vunpack.c.h.b16 %v10890
  %v10979 = vunpack.c.l.b16 %v10891
  %v10980 = vunpack.c.h.b16 %v10891
  %v10981 = vunpack.c.l.b16 %v10892
  %v10982 = vunpack.c.h.b16 %v10892
  %v10983 = vunpack.c.l.b16 %v10893
  %v10984 = vunpack.c.h.b16 %v10893
  %v10985 = vunpack.c.l.b16 %v10894
  %v10986 = vunpack.c.h.b16 %v10894
  %v10987 = vunpack.c.l.b16 %v10895
  %v10988 = vunpack.c.h.b16 %v10895
  %v10989 = vunpack.c.l.b16 %v10896
  %v10990 = vunpack.c.h.b16 %v10896
  %v10991 = vunpack.c.l.b16 %v10897
  %v10992 = vunpack.c.h.b16 %v10897
  %v10993 = vunpack.c.l.b16 %v10898
  %v10994 = vunpack.c.h.b16 %v10898
  %v10995 = vunpack.c.l.b16 %v10899
  %v10996 = vunpack.c.h.b16 %v10899
  %v10997 = vunpack.c.l.b16 %v10900
  %v10998 = vunpack.c.h.b16 %v10900
  %v10999 = vunpack.c.l.b16 %v10901
  %v11000 = vunpack.c.h.b16 %v10901
  %v11001 = vunpack.c.l.b16 %v10902
  %v11002 = vunpack.c.h.b16 %v10902
  %v11003 = vunpack.c.l.b16 %v10903
  %v11004 = vunpack.c.h.b16 %v10903
  %v11005 = vunpack.c.l.b16 %v10904
  %v11006 = vunpack.c.h.b16 %v10904
  %v11007 = vunpack.c.l.b16 %v10905
  %v11008 = vunpack.c.h.b16 %v10905
  %v11009 = vunpack.c.l.b16 %v10906
  %v11010 = vunpack.c.h.b16 %v10906
  %v11011 = vunpack.c.l.b16 %v10907
  %v11012 = vunpack.c.h.b16 %v10907
  %v11013 = vunpack.c.l.b16 %v10908
  %v11014 = vunpack.c.h.b16 %v10908
  %v11015 = vunpack.c.l.b16 %v10909
  %v11016 = vunpack.c.h.b16 %v10909
  %v11017 = vunpack.c.l.b16 %v10910
  %v11018 = vunpack.c.h.b16 %v10910
  %v11019 = vunpack.c.l.b16 %v10911
  %v11020 = vunpack.c.h.b16 %v10911
  %v11021 = vunpack.c.l.b16 %v10912
  %v11022 = vunpack.c.h.b16 %v10912
  %v11023 = vunpack.c.l.b16 %v10913
  %v11024 = vunpack.c.h.b16 %v10913
  %v11025 = vunpack.c.l.b16 %v10914
  %v11026 = vunpack.c.h.b16 %v10914
  %v11027 = vunpack.c.l.b16 %v10915
  %v11028 = vunpack.c.h.b16 %v10915
  %v11029 = vunpack.c.l.b16 %v10916
  %v11030 = vunpack.c.h.b16 %v10916
  %v11031 = vunpack.c.l.b16 %v10917
  %v11032 = vunpack.c.h.b16 %v10917
  %v11033 = vunpack.c.l.b16 %v10918
  %v11034 = vunpack.c.h.b16 %v10918
  %v11035 = vunpack.c.l.b16 %v10919
  %v11036 = vpack.c.b16 %v10959, %v10959
  %v11037 = vpack.c.b16 %v10960, %v10960
  %v11038 = vpack.c.b16 %v10961, %v10961
  %v11039 = vpack.c.b16 %v10962, %v10962
  %v11040 = vpack.c.b16 %v10963, %v10963
  %v11041 = vpack.c.b16 %v10964, %v10964
  %v11042 = vpack.c.b16 %v10965, %v10965
  %v11043 = vpack.c.b16 %v10966, %v10966
  %v11044 = vpack.c.b16 %v10967, %v10967
  %v11045 = vpack.c.b16 %v10968, %v10968
  %v11046 = vpack.c.b16 %v10969, %v10969
  %v11047 = vpack.c.b16 %v10970, %v10970
  %v11048 = vpack.c.b16 %v10971, %v10971
  %v11049 = vpack.c.b16 %v10972, %v10972
  %v11050 = vpack.c.b16 %v10973, %v10973
  %v11051 = vpack.c.b16 %v10974, %v10974
  %v11052 = vpack.c.b16 %v10975, %v10975
  %v11053 = vpack.c.b16 %v10976, %v10976
  %v11054 = vpack.c.b16 %v10977, %v10977
  %v11055 = vpack.c.b16 %v10978, %v10978
  %v11056 = vpack.c.b16 %v10979, %v10979
  %v11057 = vpack.c.b16 %v10980, %v10980
  %v11058 = vpack.c.b16 %v10981, %v10981
  %v11059 = vpack.c.b16 %v10982, %v10982
  %v11060 = vpack.c.b16 %v10983, %v10983
  %v11061 = vpack.c.b16 %v10984, %v10984
  %v11062 = vpack.c.b16 %v10985, %v10985
  %v11063 = vpack.c.b16 %v10986, %v10986
  %v11064 = vpack.c.b16 %v10987, %v10987
  %v11065 = vpack.c.b16 %v10988, %v10988
  %v11066 = vpack.c.b16 %v10989, %v10989
  %v11067 = vpack.c.b16 %v10990, %v10990
  %v11068 = vpack.c.b16 %v10991, %v10991
  %v11069 = vpack.c.b16 %v10992, %v10992
  %v11070 = vpack.c.b16 %v10993, %v10993
  %v11071 = vpack.c.b16 %v10994, %v10994
  %v11072 = vpack.c.b16 %v10995, %v10995
  %v11073 = vpack.c.b16 %v10996, %v10996
  %v11074 = vpack.c.b16 %v10997, %v10997
  %v11075 = vpack.c.b16 %v10998, %v10998
  %v11076 = vpack.c.b16 %v10999, %v10999
  %v11077 = vpack.c.b16 %v11000, %v11000
  %v11078 = vpack.c.b16 %v11001, %v11001
  %v11079 = vpack.c.b16 %v11002, %v11002
  %v11080 = vpack.c.b16 %v11003, %v11003
  %v11081 = vpack.c.b16 %v11004, %v11004
  %v11082 = vpack.c.b16 %v11005, %v11005
  %v11083 = vpack.c.b16 %v11006, %v11006
  %v11084 = vpack.c.b16 %v11007, %v11007
  %v11085 = vpack.c.b16 %v11008, %v11008
  %v11086 = vpack.c.b16 %v11009, %v11009
  %v11087 = vpack.c.b16 %v11010, %v11010
  %v11088 = vpack.c.b16 %v11011, %v11011
  %v11089 = vpack.c.b16 %v11012, %v11012
  %v11090 = vpack.c.b16 %v11013, %v11013
  %v11091 = vpack.c.b16 %v11014, %v11014
  %v11092 = vpack.c.b16 %v11015, %v11015
  %v11093 = vpack.c.b16 %v11016, %v11016
  %v11094 = vpack.c.b16 %v11017, %v11017
  %v11095 = vpack.c.b16 %v11018, %v11018
  %v11096 = vpack.c.b16 %v11019, %v11019
  %v11097 = vpack.c.b16 %v11020, %v11020
  %v11098 = vpack.c.b16 %v11021, %v11021
  %v11099 = vpack.c.b16 %v11022, %v11022
  %v11100 = vpack.c.b16 %v11023, %v11023
  %v11101 = vpack.c.b16 %v11024, %v11024
  %v11102 = vpack.c.b16 %v11025, %v11025
  %v11103 = vpack.c.b16 %v11026, %v11026
  %v11104 = vpack.c.b16 %v11027, %v11027
  %v11105 = vpack.c.b16 %v11028, %v11028
  %v11106 = vpack.c.b16 %v11029, %v11029
  %v11107 = vpack.c.b16 %v11030, %v11030
  %v11108 = vpack.c.b16 %v11031, %v11031
  %v11109 = vpack.c.b16 %v11032, %v11032
  %v11110 = vpack.c.b16 %v11033, %v11033
  %v11111 = vpack.c.b16 %v11034, %v11034
  %v11112 = vpack.c.b16 %v11035, %v11035
  %11190 = vst.msk [vmem:[#allocation3 + $0x10] sm:$0xf] %vm10868, %v11036
  %11191 = vst.msk [vmem:[#allocation3 + $0x14] sm:$0xf] %vm10868, %v11037
  %11192 = vst.msk [vmem:[#allocation3 + $0x18] sm:$0xf] %vm10868, %v11038
  %11193 = vst.msk [vmem:[#allocation3 + $0x1c] sm:$0xf] %vm10868, %v11039
  %11194 = vst.msk [vmem:[#allocation3 + $0x20] sm:$0xf] %vm10868, %v11040
  %11195 = vst.msk [vmem:[#allocation3 + $0x24] sm:$0xf] %vm10868, %v11041
  %11196 = vst.msk [vmem:[#allocation3 + $0x28] sm:$0xf] %vm10868, %v11042
  %11197 = vst.msk [vmem:[#allocation3 + $0x2c] sm:$0xf] %vm10868, %v11043
  %11198 = vst.msk [vmem:[#allocation3 + $0x30] sm:$0xf] %vm10868, %v11044
  %11199 = vst.msk [vmem:[#allocation3 + $0x34] sm:$0xf] %vm10868, %v11045
  %11200 = vst.msk [vmem:[#allocation3 + $0x38] sm:$0xf] %vm10868, %v11046
  %11201 = vst.msk [vmem:[#allocation3 + $0x3c] sm:$0xf] %vm10868, %v11047
  %11202 = vst.msk [vmem:[#allocation3 + $0x40] sm:$0xf] %vm10868, %v11048
  %11203 = vst.msk [vmem:[#allocation3 + $0x44] sm:$0xf] %vm10868, %v11049
  %11204 = vst.msk [vmem:[#allocation3 + $0x48] sm:$0xf] %vm10868, %v11050
  %11205 = vst.msk [vmem:[#allocation3 + $0x4c] sm:$0xf] %vm10868, %v11051
  %11206 = vst.msk [vmem:[#allocation3 + $0x50] sm:$0xf] %vm10868, %v11052
  %11207 = vst.msk [vmem:[#allocation3 + $0x54] sm:$0xf] %vm10868, %v11053
  %11208 = vst.msk [vmem:[#allocation3 + $0x58] sm:$0xf] %vm10868, %v11054
  %11209 = vst.msk [vmem:[#allocation3 + $0x5c] sm:$0xf] %vm10868, %v11055
  %11210 = vst.msk [vmem:[#allocation3 + $0x60] sm:$0xf] %vm10868, %v11056
  %11211 = vst.msk [vmem:[#allocation3 + $0x64] sm:$0xf] %vm10868, %v11057
  %11212 = vst.msk [vmem:[#allocation3 + $0x68] sm:$0xf] %vm10868, %v11058
  %11213 = vst.msk [vmem:[#allocation3 + $0x6c] sm:$0xf] %vm10868, %v11059
  %11214 = vst.msk [vmem:[#allocation3 + $0x70] sm:$0xf] %vm10868, %v11060
  %11215 = vst.msk [vmem:[#allocation3 + $0x74] sm:$0xf] %vm10868, %v11061
  %11216 = vst.msk [vmem:[#allocation3 + $0x78] sm:$0xf] %vm10868, %v11062
  %11217 = vst.msk [vmem:[#allocation3 + $0x7c] sm:$0xf] %vm10868, %v11063
  %11218 = vst.msk [vmem:[#allocation3 + $0x80] sm:$0xf] %vm10868, %v11064
  %11219 = vst.msk [vmem:[#allocation3 + $0x84] sm:$0xf] %vm10868, %v11065
  %11220 = vst.msk [vmem:[#allocation3 + $0x88] sm:$0xf] %vm10868, %v11066
  %11221 = vst.msk [vmem:[#allocation3 + $0x8c] sm:$0xf] %vm10868, %v11067
  %11222 = vst.msk [vmem:[#allocation3 + $0x90] sm:$0xf] %vm10868, %v11068
  %11223 = vst.msk [vmem:[#allocation3 + $0x94] sm:$0xf] %vm10868, %v11069
  %11224 = vst.msk [vmem:[#allocation3 + $0x98] sm:$0xf] %vm10868, %v11070
  %11225 = vst.msk [vmem:[#allocation3 + $0x9c] sm:$0xf] %vm10868, %v11071
  %11226 = vst.msk [vmem:[#allocation3 + $0xa0] sm:$0xf] %vm10868, %v11072
  %11227 = vst.msk [vmem:[#allocation3 + $0xa4] sm:$0xf] %vm10868, %v11073
  %11228 = vst.msk [vmem:[#allocation3 + $0xa8] sm:$0xf] %vm10868, %v11074
  %11229 = vst.msk [vmem:[#allocation3 + $0xac] sm:$0xf] %vm10868, %v11075
  %11230 = vst.msk [vmem:[#allocation3 + $0xb0] sm:$0xf] %vm10868, %v11076
  %11231 = vst.msk [vmem:[#allocation3 + $0xb4] sm:$0xf] %vm10868, %v11077
  %11232 = vst.msk [vmem:[#allocation3 + $0xb8] sm:$0xf] %vm10868, %v11078
  %11233 = vst.msk [vmem:[#allocation3 + $0xbc] sm:$0xf] %vm10868, %v11079
  %11234 = vst.msk [vmem:[#allocation3 + $0xc0] sm:$0xf] %vm10868, %v11080
  %11235 = vst.msk [vmem:[#allocation3 + $0xc4] sm:$0xf] %vm10868, %v11081
  %11236 = vst.msk [vmem:[#allocation3 + $0xc8] sm:$0xf] %vm10868, %v11082
  %11237 = vst.msk [vmem:[#allocation3 + $0xcc] sm:$0xf] %vm10868, %v11083
  %11238 = vst.msk [vmem:[#allocation3 + $0xd0] sm:$0xf] %vm10868, %v11084
  %11239 = vst.msk [vmem:[#allocation3 + $0xd4] sm:$0xf] %vm10868, %v11085
  %11240 = vst.msk [vmem:[#allocation3 + $0xd8] sm:$0xf] %vm10868, %v11086
  %11241 = vst.msk [vmem:[#allocation3 + $0xdc] sm:$0xf] %vm10868, %v11087
  %11242 = vst.msk [vmem:[#allocation3 + $0xe0] sm:$0xf] %vm10868, %v11088
  %11243 = vst.msk [vmem:[#allocation3 + $0xe4] sm:$0xf] %vm10868, %v11089
  %11244 = vst.msk [vmem:[#allocation3 + $0xe8] sm:$0xf] %vm10868, %v11090
  %11245 = vst.msk [vmem:[#allocation3 + $0xec] sm:$0xf] %vm10868, %v11091
  %11246 = vst.msk [vmem:[#allocation3 + $0xf0] sm:$0xf] %vm10868, %v11092
  %11247 = vst.msk [vmem:[#allocation3 + $0xf4] sm:$0xf] %vm10868, %v11093
  %11248 = vst.msk [vmem:[#allocation3 + $0xf8] sm:$0xf] %vm10868, %v11094
  %11249 = vst.msk [vmem:[#allocation3 + $0xfc] sm:$0xf] %vm10868, %v11095
  %11250 = vst.msk [vmem:[#allocation3 + $0x100] sm:$0xf] %vm10868, %v11096
  %11251 = vst.msk [vmem:[#allocation3 + $0x104] sm:$0xf] %vm10868, %v11097
  %11252 = vst.msk [vmem:[#allocation3 + $0x108] sm:$0xf] %vm10868, %v11098
  %11253 = vst.msk [vmem:[#allocation3 + $0x10c] sm:$0xf] %vm10868, %v11099
  %11254 = vst.msk [vmem:[#allocation3 + $0x110] sm:$0xf] %vm10868, %v11100
  %11255 = vst.msk [vmem:[#allocation3 + $0x114] sm:$0xf] %vm10868, %v11101
  %11256 = vst.msk [vmem:[#allocation3 + $0x118] sm:$0xf] %vm10868, %v11102
  %11257 = vst.msk [vmem:[#allocation3 + $0x11c] sm:$0xf] %vm10868, %v11103
  %11258 = vst.msk [vmem:[#allocation3 + $0x120] sm:$0xf] %vm10868, %v11104
  %11259 = vst.msk [vmem:[#allocation3 + $0x124] sm:$0xf] %vm10868, %v11105
  %11260 = vst.msk [vmem:[#allocation3 + $0x128] sm:$0xf] %vm10868, %v11106
  %11261 = vst.msk [vmem:[#allocation3 + $0x12c] sm:$0xf] %vm10868, %v11107
  %11262 = vst.msk [vmem:[#allocation3 + $0x130] sm:$0xf] %vm10868, %v11108
  %11263 = vst.msk [vmem:[#allocation3 + $0x134] sm:$0xf] %vm10868, %v11109
  %11264 = vst.msk [vmem:[#allocation3 + $0x138] sm:$0xf] %vm10868, %v11110
  %11265 = vst.msk [vmem:[#allocation3 + $0x13c] sm:$0xf] %vm10868, %v11111
  %vm11266 = vcmask 24576
  %11267 = vst.msk [vmem:[#allocation3 + $0x140] sm:$0x1] %vm11266, %v11112
  %v11268 = vld [vmem:[#allocation3 + $0x4] sm:$0xc]
  %v11269 = vld [vmem:[#allocation3 + $0x8] sm:$0xf]
  %v11270 = vld [vmem:[#allocation3 + $0xc] sm:$0xf]
  %v11271 = vld [vmem:[#allocation3 + $0x10] sm:$0xf]
  %v11272 = vld [vmem:[#allocation3 + $0x14] sm:$0xf]
  %v11273 = vld [vmem:[#allocation3 + $0x18] sm:$0xf]
  %v11274 = vld [vmem:[#allocation3 + $0x1c] sm:$0xf]
  %v11275 = vld [vmem:[#allocation3 + $0x20] sm:$0xf]
  %v11276 = vld [vmem:[#allocation3 + $0x24] sm:$0xf]
  %v11277 = vld [vmem:[#allocation3 + $0x28] sm:$0xf]
  %v11278 = vld [vmem:[#allocation3 + $0x2c] sm:$0xf]
  %v11279 = vld [vmem:[#allocation3 + $0x30] sm:$0xf]
  %v11280 = vld [vmem:[#allocation3 + $0x34] sm:$0xf]
  %v11281 = vld [vmem:[#allocation3 + $0x38] sm:$0xf]
  %v11282 = vld [vmem:[#allocation3 + $0x3c] sm:$0xf]
  %v11283 = vld [vmem:[#allocation3 + $0x40] sm:$0xf]
  %v11284 = vld [vmem:[#allocation3 + $0x44] sm:$0xf]
  %v11285 = vld [vmem:[#allocation3 + $0x48] sm:$0xf]
  %v11286 = vld [vmem:[#allocation3 + $0x4c] sm:$0xf]
  %v11287 = vld [vmem:[#allocation3 + $0x50] sm:$0xf]
  %v11288 = vld [vmem:[#allocation3 + $0x54] sm:$0xf]
  %v11289 = vld [vmem:[#allocation3 + $0x58] sm:$0xf]
  %v11290 = vld [vmem:[#allocation3 + $0x5c] sm:$0xf]
  %v11291 = vld [vmem:[#allocation3 + $0x60] sm:$0xf]
  %v11292 = vld [vmem:[#allocation3 + $0x64] sm:$0xf]
  %v11293 = vld [vmem:[#allocation3 + $0x68] sm:$0xf]
  %v11294 = vld [vmem:[#allocation3 + $0x6c] sm:$0xf]
  %v11295 = vld [vmem:[#allocation3 + $0x70] sm:$0xf]
  %v11296 = vld [vmem:[#allocation3 + $0x74] sm:$0xf]
  %v11297 = vld [vmem:[#allocation3 + $0x78] sm:$0xf]
  %v11298 = vld [vmem:[#allocation3 + $0x7c] sm:$0xf]
  %v11299 = vld [vmem:[#allocation3 + $0x80] sm:$0xf]
  %v11300 = vld [vmem:[#allocation3 + $0x84] sm:$0xf]
  %v11301 = vld [vmem:[#allocation3 + $0x88] sm:$0xf]
  %v11302 = vld [vmem:[#allocation3 + $0x8c] sm:$0xf]
  %v11303 = vld [vmem:[#allocation3 + $0x90] sm:$0xf]
  %v11304 = vld [vmem:[#allocation3 + $0x94] sm:$0xf]
  %v11305 = vld [vmem:[#allocation3 + $0x98] sm:$0xf]
  %v11306 = vld [vmem:[#allocation3 + $0x9c] sm:$0xf]
  %v11307 = vld [vmem:[#allocation3 + $0xa0] sm:$0xf]
  %v11308 = vld [vmem:[#allocation3 + $0xa4] sm:$0xf]
  %v11309 = vld [vmem:[#allocation3 + $0xa8] sm:$0xf]
  %v11310 = vld [vmem:[#allocation3 + $0xac] sm:$0xf]
  %v11311 = vld [vmem:[#allocation3 + $0xb0] sm:$0xf]
  %v11312 = vld [vmem:[#allocation3 + $0xb4] sm:$0xf]
  %v11313 = vld [vmem:[#allocation3 + $0xb8] sm:$0xf]
  %v11314 = vld [vmem:[#allocation3 + $0xbc] sm:$0xf]
  %v11315 = vld [vmem:[#allocation3 + $0xc0] sm:$0xf]
  %v11316 = vld [vmem:[#allocation3 + $0xc4] sm:$0xf]
  %v11317 = vld [vmem:[#allocation3 + $0xc8] sm:$0xf]
  %v11318 = vld [vmem:[#allocation3 + $0xcc] sm:$0xf]
  %v11319 = vld [vmem:[#allocation3 + $0xd0] sm:$0xf]
  %v11320 = vld [vmem:[#allocation3 + $0xd4] sm:$0xf]
  %v11321 = vld [vmem:[#allocation3 + $0xd8] sm:$0xf]
  %v11322 = vld [vmem:[#allocation3 + $0xdc] sm:$0xf]
  %v11323 = vld [vmem:[#allocation3 + $0xe0] sm:$0xf]
  %v11324 = vld [vmem:[#allocation3 + $0xe4] sm:$0xf]
  %v11325 = vld [vmem:[#allocation3 + $0xe8] sm:$0xf]
  %v11326 = vld [vmem:[#allocation3 + $0xec] sm:$0xf]
  %v11327 = vld [vmem:[#allocation3 + $0xf0] sm:$0xf]
  %v11328 = vld [vmem:[#allocation3 + $0xf4] sm:$0xf]
  %v11329 = vld [vmem:[#allocation3 + $0xf8] sm:$0xf]
  %v11330 = vld [vmem:[#allocation3 + $0xfc] sm:$0xf]
  %v11331 = vld [vmem:[#allocation3 + $0x100] sm:$0xf]
  %v11332 = vld [vmem:[#allocation3 + $0x104] sm:$0xf]
  %v11333 = vld [vmem:[#allocation3 + $0x108] sm:$0xf]
  %v11334 = vld [vmem:[#allocation3 + $0x10c] sm:$0xf]
  %v11335 = vld [vmem:[#allocation3 + $0x110] sm:$0xf]
  %v11336 = vld [vmem:[#allocation3 + $0x114] sm:$0xf]
  %v11337 = vld [vmem:[#allocation3 + $0x118] sm:$0xf]
  %v11338 = vld [vmem:[#allocation3 + $0x11c] sm:$0xf]
  %v11339 = vld [vmem:[#allocation3 + $0x120] sm:$0xf]
  %v11340 = vld [vmem:[#allocation3 + $0x124] sm:$0xf]
  %v11341 = vld [vmem:[#allocation3 + $0x128] sm:$0xf]
  %v11342 = vld [vmem:[#allocation3 + $0x12c] sm:$0xf]
  %v11343 = vld [vmem:[#allocation3 + $0x130] sm:$0xf]
  %v11344 = vld [vmem:[#allocation3 + $0x134] sm:$0xf]
  %v11345 = vld [vmem:[#allocation3 + $0x4] sm:$0x8]
  %v11346 = vld [vmem:[#allocation3 + $0x138] sm:$0x1]
  %v11347 = vld [vmem:[#allocation3 + $0xc] sm:$0x8]
  %v11348 = vld [vmem:[#allocation3 + $0x138] sm:$0xf]
  %v11349 = vld [vmem:[#allocation3 + $0x13c] sm:$0xf]
  %v11350 = vld [vmem:[#allocation3 + $0x140] sm:$0x1]
  %v11351 = vld [vmem:[#allocation3 + $0x140] sm:$0x3]
  %v11352 = vld [vmem:[#allocation3 + $0x140] sm:$0xf]
  %v11353 = vld [vmem:[#allocation3 + $0x144] sm:$0xf]
  %v11354 = vld [vmem:[#allocation3 + $0x148] sm:$0x3]
  %v11355 = vld [vmem:[#allocation3 + $0x18] sm:$0xe]
  %v11356 = vld [vmem:[#allocation3 + $0x148] sm:$0x7]
  %v11434 = vunpack.c.l.b16 %v11268
  %v11435 = vunpack.c.l.b16 %v11269
  %v11436 = vunpack.c.l.b16 %v11270
  %v11437 = vunpack.c.l.b16 %v11271
  %v11438 = vunpack.c.l.b16 %v11272
  %v11439 = vunpack.c.l.b16 %v11273
  %v11440 = vunpack.c.l.b16 %v11274
  %v11441 = vunpack.c.l.b16 %v11275
  %v11442 = vunpack.c.l.b16 %v11276
  %v11443 = vunpack.c.l.b16 %v11277
  %v11444 = vunpack.c.l.b16 %v11278
  %v11445 = vunpack.c.l.b16 %v11279
  %v11446 = vunpack.c.l.b16 %v11280
  %v11447 = vunpack.c.l.b16 %v11281
  %v11448 = vunpack.c.l.b16 %v11282
  %v11449 = vunpack.c.l.b16 %v11283
  %v11450 = vunpack.c.l.b16 %v11284
  %v11451 = vunpack.c.l.b16 %v11285
  %v11452 = vunpack.c.l.b16 %v11286
  %v11453 = vunpack.c.l.b16 %v11287
  %v11454 = vunpack.c.l.b16 %v11288
  %v11455 = vunpack.c.l.b16 %v11289
  %v11456 = vunpack.c.l.b16 %v11290
  %v11457 = vunpack.c.l.b16 %v11291
  %v11458 = vunpack.c.l.b16 %v11292
  %v11459 = vunpack.c.l.b16 %v11293
  %v11460 = vunpack.c.l.b16 %v11294
  %v11461 = vunpack.c.l.b16 %v11295
  %v11462 = vunpack.c.l.b16 %v11296
  %v11463 = vunpack.c.l.b16 %v11297
  %v11464 = vunpack.c.l.b16 %v11298
  %v11465 = vunpack.c.l.b16 %v11299
  %v11466 = vunpack.c.l.b16 %v11300
  %v11467 = vunpack.c.l.b16 %v11301
  %v11468 = vunpack.c.l.b16 %v11302
  %v11469 = vunpack.c.l.b16 %v11303
  %v11470 = vunpack.c.l.b16 %v11304
  %v11471 = vunpack.c.l.b16 %v11305
  %v11472 = vunpack.c.l.b16 %v11306
  %v11473 = vunpack.c.l.b16 %v11307
  %v11474 = vunpack.c.l.b16 %v11308
  %v11475 = vunpack.c.l.b16 %v11309
  %v11476 = vunpack.c.l.b16 %v11310
  %v11477 = vunpack.c.l.b16 %v11311
  %v11478 = vunpack.c.l.b16 %v11312
  %v11479 = vunpack.c.l.b16 %v11313
  %v11480 = vunpack.c.l.b16 %v11314
  %v11481 = vunpack.c.l.b16 %v11315
  %v11482 = vunpack.c.l.b16 %v11316
  %v11483 = vunpack.c.l.b16 %v11317
  %v11484 = vunpack.c.l.b16 %v11318
  %v11485 = vunpack.c.l.b16 %v11319
  %v11486 = vunpack.c.l.b16 %v11320
  %v11487 = vunpack.c.l.b16 %v11321
  %v11488 = vunpack.c.l.b16 %v11322
  %v11489 = vunpack.c.l.b16 %v11323
  %v11490 = vunpack.c.l.b16 %v11324
  %v11491 = vunpack.c.l.b16 %v11325
  %v11492 = vunpack.c.l.b16 %v11326
  %v11493 = vunpack.c.l.b16 %v11327
  %v11494 = vunpack.c.l.b16 %v11328
  %v11495 = vunpack.c.l.b16 %v11329
  %v11496 = vunpack.c.l.b16 %v11330
  %v11497 = vunpack.c.l.b16 %v11331
  %v11498 = vunpack.c.l.b16 %v11332
  %v11499 = vunpack.c.l.b16 %v11333
  %v11500 = vunpack.c.l.b16 %v11334
  %v11501 = vunpack.c.l.b16 %v11335
  %v11502 = vunpack.c.l.b16 %v11336
  %v11503 = vunpack.c.l.b16 %v11337
  %v11504 = vunpack.c.l.b16 %v11338
  %v11505 = vunpack.c.l.b16 %v11339
  %v11506 = vunpack.c.l.b16 %v11340
  %v11507 = vunpack.c.l.b16 %v11341
  %v11508 = vunpack.c.l.b16 %v11342
  %v11509 = vunpack.c.l.b16 %v11343
  %v11510 = vunpack.c.l.b16 %v11344
  %v11511 = vpack.c.b16 %v11435, %v11434
  %v11512 = vpack.c.b16 %v11437, %v11436
  %v11513 = vpack.c.b16 %v11439, %v11438
  %v11514 = vpack.c.b16 %v11441, %v11440
  %v11515 = vpack.c.b16 %v11443, %v11442
  %v11516 = vpack.c.b16 %v11445, %v11444
  %v11517 = vpack.c.b16 %v11447, %v11446
  %v11518 = vpack.c.b16 %v11449, %v11448
  %v11519 = vpack.c.b16 %v11451, %v11450
  %v11520 = vpack.c.b16 %v11453, %v11452
  %v11521 = vpack.c.b16 %v11455, %v11454
  %v11522 = vpack.c.b16 %v11457, %v11456
  %v11523 = vpack.c.b16 %v11459, %v11458
  %v11524 = vpack.c.b16 %v11461, %v11460
  %v11525 = vpack.c.b16 %v11463, %v11462
  %v11526 = vpack.c.b16 %v11465, %v11464
  %v11527 = vpack.c.b16 %v11467, %v11466
  %v11528 = vpack.c.b16 %v11469, %v11468
  %v11529 = vpack.c.b16 %v11471, %v11470
  %v11530 = vpack.c.b16 %v11473, %v11472
  %v11531 = vpack.c.b16 %v11475, %v11474
  %v11532 = vpack.c.b16 %v11477, %v11476
  %v11533 = vpack.c.b16 %v11479, %v11478
  %v11534 = vpack.c.b16 %v11481, %v11480
  %v11535 = vpack.c.b16 %v11483, %v11482
  %v11536 = vpack.c.b16 %v11485, %v11484
  %v11537 = vpack.c.b16 %v11487, %v11486
  %v11538 = vpack.c.b16 %v11489, %v11488
  %v11539 = vpack.c.b16 %v11491, %v11490
  %v11540 = vpack.c.b16 %v11493, %v11492
  %v11541 = vpack.c.b16 %v11495, %v11494
  %v11542 = vpack.c.b16 %v11497, %v11496
  %v11543 = vpack.c.b16 %v11499, %v11498
  %v11544 = vpack.c.b16 %v11501, %v11500
  %v11545 = vpack.c.b16 %v11503, %v11502
  %v11546 = vpack.c.b16 %v11505, %v11504
  %v11547 = vpack.c.b16 %v11507, %v11506
  %v11548 = vpack.c.b16 %v11509, %v11508
  %v11549 = vpack.c.b16 %v11510, %v11510
  %v11551 = vunpack.c.l.b16 %v11345
  %v11552 = vpack.c.b16 %v11435, %v11551
  %v11554 = vshrl.u32 %v11552, 16
  %v11556 = vshll.u32 %v11552, 16
  %v11558 = vrot.slane %v11556, 1
  %v11559 = vor.u32 %v11554, %v11558
  %v11561 = vshll.u32 %v11512, 16
  %v11563 = vrot.slane %v11561, 1
  %v11564 = vsel %vm2012, %v11559, %v11563
  %v11565 = vshrl.u32 %v11512, 16
  %v11567 = vor.u32 %v11565, %v11563
  %v11569 = vshll.u32 %v11513, 16
  %v11571 = vrot.slane %v11569, 1
  %v11572 = vsel %vm2012, %v11567, %v11571
  %v11573 = vshrl.u32 %v11513, 16
  %v11575 = vor.u32 %v11573, %v11571
  %v11577 = vshll.u32 %v11514, 16
  %v11579 = vrot.slane %v11577, 1
  %v11580 = vsel %vm2012, %v11575, %v11579
  %v11581 = vshrl.u32 %v11514, 16
  %v11583 = vor.u32 %v11581, %v11579
  %v11585 = vshll.u32 %v11515, 16
  %v11587 = vrot.slane %v11585, 1
  %v11588 = vsel %vm2012, %v11583, %v11587
  %v11589 = vshrl.u32 %v11515, 16
  %v11591 = vor.u32 %v11589, %v11587
  %v11593 = vshll.u32 %v11516, 16
  %v11595 = vrot.slane %v11593, 1
  %v11596 = vsel %vm2012, %v11591, %v11595
  %v11597 = vshrl.u32 %v11516, 16
  %v11599 = vor.u32 %v11597, %v11595
  %v11601 = vshll.u32 %v11517, 16
  %v11603 = vrot.slane %v11601, 1
  %v11604 = vsel %vm2012, %v11599, %v11603
  %v11605 = vshrl.u32 %v11517, 16
  %v11607 = vor.u32 %v11605, %v11603
  %v11609 = vshll.u32 %v11518, 16
  %v11611 = vrot.slane %v11609, 1
  %v11612 = vsel %vm2012, %v11607, %v11611
  %v11613 = vshrl.u32 %v11518, 16
  %v11615 = vor.u32 %v11613, %v11611
  %v11617 = vshll.u32 %v11519, 16
  %v11619 = vrot.slane %v11617, 1
  %v11620 = vsel %vm2012, %v11615, %v11619
  %v11621 = vshrl.u32 %v11519, 16
  %v11623 = vor.u32 %v11621, %v11619
  %v11625 = vshll.u32 %v11520, 16
  %v11627 = vrot.slane %v11625, 1
  %v11628 = vsel %vm2012, %v11623, %v11627
  %v11629 = vshrl.u32 %v11520, 16
  %v11631 = vor.u32 %v11629, %v11627
  %v11633 = vshll.u32 %v11521, 16
  %v11635 = vrot.slane %v11633, 1
  %v11636 = vsel %vm2012, %v11631, %v11635
  %v11637 = vshrl.u32 %v11521, 16
  %v11639 = vor.u32 %v11637, %v11635
  %v11641 = vshll.u32 %v11522, 16
  %v11643 = vrot.slane %v11641, 1
  %v11644 = vsel %vm2012, %v11639, %v11643
  %v11645 = vshrl.u32 %v11522, 16
  %v11647 = vor.u32 %v11645, %v11643
  %v11649 = vshll.u32 %v11523, 16
  %v11651 = vrot.slane %v11649, 1
  %v11652 = vsel %vm2012, %v11647, %v11651
  %v11653 = vshrl.u32 %v11523, 16
  %v11655 = vor.u32 %v11653, %v11651
  %v11657 = vshll.u32 %v11524, 16
  %v11659 = vrot.slane %v11657, 1
  %v11660 = vsel %vm2012, %v11655, %v11659
  %v11661 = vshrl.u32 %v11524, 16
  %v11663 = vor.u32 %v11661, %v11659
  %v11665 = vshll.u32 %v11525, 16
  %v11667 = vrot.slane %v11665, 1
  %v11668 = vsel %vm2012, %v11663, %v11667
  %v11669 = vshrl.u32 %v11525, 16
  %v11671 = vor.u32 %v11669, %v11667
  %v11673 = vshll.u32 %v11526, 16
  %v11675 = vrot.slane %v11673, 1
  %v11676 = vsel %vm2012, %v11671, %v11675
  %v11677 = vshrl.u32 %v11526, 16
  %v11679 = vor.u32 %v11677, %v11675
  %v11681 = vshll.u32 %v11527, 16
  %v11683 = vrot.slane %v11681, 1
  %v11684 = vsel %vm2012, %v11679, %v11683
  %v11685 = vshrl.u32 %v11527, 16
  %v11687 = vor.u32 %v11685, %v11683
  %v11689 = vshll.u32 %v11528, 16
  %v11691 = vrot.slane %v11689, 1
  %v11692 = vsel %vm2012, %v11687, %v11691
  %v11693 = vshrl.u32 %v11528, 16
  %v11695 = vor.u32 %v11693, %v11691
  %v11697 = vshll.u32 %v11529, 16
  %v11699 = vrot.slane %v11697, 1
  %v11700 = vsel %vm2012, %v11695, %v11699
  %v11701 = vshrl.u32 %v11529, 16
  %v11703 = vor.u32 %v11701, %v11699
  %v11705 = vshll.u32 %v11530, 16
  %v11707 = vrot.slane %v11705, 1
  %v11708 = vsel %vm2012, %v11703, %v11707
  %v11709 = vshrl.u32 %v11530, 16
  %v11711 = vor.u32 %v11709, %v11707
  %v11713 = vshll.u32 %v11531, 16
  %v11715 = vrot.slane %v11713, 1
  %v11716 = vsel %vm2012, %v11711, %v11715
  %v11717 = vshrl.u32 %v11531, 16
  %v11719 = vor.u32 %v11717, %v11715
  %v11721 = vshll.u32 %v11532, 16
  %v11723 = vrot.slane %v11721, 1
  %v11724 = vsel %vm2012, %v11719, %v11723
  %v11725 = vshrl.u32 %v11532, 16
  %v11727 = vor.u32 %v11725, %v11723
  %v11729 = vshll.u32 %v11533, 16
  %v11731 = vrot.slane %v11729, 1
  %v11732 = vsel %vm2012, %v11727, %v11731
  %v11733 = vshrl.u32 %v11533, 16
  %v11735 = vor.u32 %v11733, %v11731
  %v11737 = vshll.u32 %v11534, 16
  %v11739 = vrot.slane %v11737, 1
  %v11740 = vsel %vm2012, %v11735, %v11739
  %v11741 = vshrl.u32 %v11534, 16
  %v11743 = vor.u32 %v11741, %v11739
  %v11745 = vshll.u32 %v11535, 16
  %v11747 = vrot.slane %v11745, 1
  %v11748 = vsel %vm2012, %v11743, %v11747
  %v11749 = vshrl.u32 %v11535, 16
  %v11751 = vor.u32 %v11749, %v11747
  %v11753 = vshll.u32 %v11536, 16
  %v11755 = vrot.slane %v11753, 1
  %v11756 = vsel %vm2012, %v11751, %v11755
  %v11757 = vshrl.u32 %v11536, 16
  %v11759 = vor.u32 %v11757, %v11755
  %v11761 = vshll.u32 %v11537, 16
  %v11763 = vrot.slane %v11761, 1
  %v11764 = vsel %vm2012, %v11759, %v11763
  %v11765 = vshrl.u32 %v11537, 16
  %v11767 = vor.u32 %v11765, %v11763
  %v11769 = vshll.u32 %v11538, 16
  %v11771 = vrot.slane %v11769, 1
  %v11772 = vsel %vm2012, %v11767, %v11771
  %v11773 = vshrl.u32 %v11538, 16
  %v11775 = vor.u32 %v11773, %v11771
  %v11777 = vshll.u32 %v11539, 16
  %v11779 = vrot.slane %v11777, 1
  %v11780 = vsel %vm2012, %v11775, %v11779
  %v11781 = vshrl.u32 %v11539, 16
  %v11783 = vor.u32 %v11781, %v11779
  %v11785 = vshll.u32 %v11540, 16
  %v11787 = vrot.slane %v11785, 1
  %v11788 = vsel %vm2012, %v11783, %v11787
  %v11789 = vshrl.u32 %v11540, 16
  %v11791 = vor.u32 %v11789, %v11787
  %v11793 = vshll.u32 %v11541, 16
  %v11795 = vrot.slane %v11793, 1
  %v11796 = vsel %vm2012, %v11791, %v11795
  %v11797 = vshrl.u32 %v11541, 16
  %v11799 = vor.u32 %v11797, %v11795
  %v11801 = vshll.u32 %v11542, 16
  %v11803 = vrot.slane %v11801, 1
  %v11804 = vsel %vm2012, %v11799, %v11803
  %v11805 = vshrl.u32 %v11542, 16
  %v11807 = vor.u32 %v11805, %v11803
  %v11809 = vshll.u32 %v11543, 16
  %v11811 = vrot.slane %v11809, 1
  %v11812 = vsel %vm2012, %v11807, %v11811
  %v11813 = vshrl.u32 %v11543, 16
  %v11815 = vor.u32 %v11813, %v11811
  %v11817 = vshll.u32 %v11544, 16
  %v11819 = vrot.slane %v11817, 1
  %v11820 = vsel %vm2012, %v11815, %v11819
  %v11821 = vshrl.u32 %v11544, 16
  %v11823 = vor.u32 %v11821, %v11819
  %v11825 = vshll.u32 %v11545, 16
  %v11827 = vrot.slane %v11825, 1
  %v11828 = vsel %vm2012, %v11823, %v11827
  %v11829 = vshrl.u32 %v11545, 16
  %v11831 = vor.u32 %v11829, %v11827
  %v11833 = vshll.u32 %v11546, 16
  %v11835 = vrot.slane %v11833, 1
  %v11836 = vsel %vm2012, %v11831, %v11835
  %v11837 = vshrl.u32 %v11546, 16
  %v11839 = vor.u32 %v11837, %v11835
  %v11841 = vshll.u32 %v11547, 16
  %v11843 = vrot.slane %v11841, 1
  %v11844 = vsel %vm2012, %v11839, %v11843
  %v11845 = vshrl.u32 %v11547, 16
  %v11847 = vor.u32 %v11845, %v11843
  %v11849 = vshll.u32 %v11548, 16
  %v11851 = vrot.slane %v11849, 1
  %v11852 = vsel %vm2012, %v11847, %v11851
  %v11853 = vshrl.u32 %v11548, 16
  %v11855 = vor.u32 %v11853, %v11851
  %v11857 = vshll.u32 %v11549, 16
  %v11859 = vrot.slane %v11857, 1
  %v11860 = vsel %vm2012, %v11855, %v11859
  %v11861 = vshrl.u32 %v11549, 16
  %v11863 = vor.u32 %v11861, %v11859
  %11864 = vrot.lane.b32.xlu0 %v11564, 4
  %v11865 = vpop.permute.xlu0 %11864
  %11866 = vrot.lane.b32.xlu0 %v11572, 4
  %v11867 = vpop.permute.xlu0 %11866
  %11868 = vrot.lane.b32.xlu0 %v11580, 4
  %v11869 = vpop.permute.xlu0 %11868
  %11870 = vrot.lane.b32.xlu0 %v11588, 4
  %v11871 = vpop.permute.xlu0 %11870
  %11872 = vrot.lane.b32.xlu0 %v11596, 4
  %v11873 = vpop.permute.xlu0 %11872
  %11874 = vrot.lane.b32.xlu0 %v11604, 4
  %v11875 = vpop.permute.xlu0 %11874
  %11876 = vrot.lane.b32.xlu0 %v11612, 4
  %v11877 = vpop.permute.xlu0 %11876
  %11878 = vrot.lane.b32.xlu0 %v11620, 4
  %v11879 = vpop.permute.xlu0 %11878
  %11880 = vrot.lane.b32.xlu0 %v11628, 4
  %v11881 = vpop.permute.xlu0 %11880
  %11882 = vrot.lane.b32.xlu0 %v11636, 4
  %v11883 = vpop.permute.xlu0 %11882
  %11884 = vrot.lane.b32.xlu0 %v11644, 4
  %v11885 = vpop.permute.xlu0 %11884
  %11886 = vrot.lane.b32.xlu0 %v11652, 4
  %v11887 = vpop.permute.xlu0 %11886
  %11888 = vrot.lane.b32.xlu0 %v11660, 4
  %v11889 = vpop.permute.xlu0 %11888
  %11890 = vrot.lane.b32.xlu0 %v11668, 4
  %v11891 = vpop.permute.xlu0 %11890
  %11892 = vrot.lane.b32.xlu0 %v11676, 4
  %v11893 = vpop.permute.xlu0 %11892
  %11894 = vrot.lane.b32.xlu0 %v11684, 4
  %v11895 = vpop.permute.xlu0 %11894
  %11896 = vrot.lane.b32.xlu0 %v11692, 4
  %v11897 = vpop.permute.xlu0 %11896
  %11898 = vrot.lane.b32.xlu0 %v11700, 4
  %v11899 = vpop.permute.xlu0 %11898
  %11900 = vrot.lane.b32.xlu0 %v11708, 4
  %v11901 = vpop.permute.xlu0 %11900
  %11902 = vrot.lane.b32.xlu0 %v11716, 4
  %v11903 = vpop.permute.xlu0 %11902
  %11904 = vrot.lane.b32.xlu0 %v11724, 4
  %v11905 = vpop.permute.xlu0 %11904
  %11906 = vrot.lane.b32.xlu0 %v11732, 4
  %v11907 = vpop.permute.xlu0 %11906
  %11908 = vrot.lane.b32.xlu0 %v11740, 4
  %v11909 = vpop.permute.xlu0 %11908
  %11910 = vrot.lane.b32.xlu0 %v11748, 4
  %v11911 = vpop.permute.xlu0 %11910
  %11912 = vrot.lane.b32.xlu0 %v11756, 4
  %v11913 = vpop.permute.xlu0 %11912
  %11914 = vrot.lane.b32.xlu0 %v11764, 4
  %v11915 = vpop.permute.xlu0 %11914
  %11916 = vrot.lane.b32.xlu0 %v11772, 4
  %v11917 = vpop.permute.xlu0 %11916
  %11918 = vrot.lane.b32.xlu0 %v11780, 4
  %v11919 = vpop.permute.xlu0 %11918
  %11920 = vrot.lane.b32.xlu0 %v11788, 4
  %v11921 = vpop.permute.xlu0 %11920
  %11922 = vrot.lane.b32.xlu0 %v11796, 4
  %v11923 = vpop.permute.xlu0 %11922
  %11924 = vrot.lane.b32.xlu0 %v11804, 4
  %v11925 = vpop.permute.xlu0 %11924
  %11926 = vrot.lane.b32.xlu0 %v11812, 4
  %v11927 = vpop.permute.xlu0 %11926
  %11928 = vrot.lane.b32.xlu0 %v11820, 4
  %v11929 = vpop.permute.xlu0 %11928
  %11930 = vrot.lane.b32.xlu0 %v11828, 4
  %v11931 = vpop.permute.xlu0 %11930
  %11932 = vrot.lane.b32.xlu0 %v11836, 4
  %v11933 = vpop.permute.xlu0 %11932
  %11934 = vrot.lane.b32.xlu0 %v11844, 4
  %v11935 = vpop.permute.xlu0 %11934
  %11936 = vrot.lane.b32.xlu0 %v11852, 4
  %v11937 = vpop.permute.xlu0 %11936
  %11938 = vrot.lane.b32.xlu0 %v11860, 4
  %v11939 = vpop.permute.xlu0 %11938
  %11940 = vrot.lane.b32.xlu0 %v11863, 4
  %v11941 = vpop.permute.xlu0 %11940
  %v11943 = vunpack.c.l.b16 %v11346
  %v11944 = vpack.c.b16 %v11943, %v11510
  %v11945 = vrot.slane %v11552, 1
  %v11946 = vrot.slane %v11512, 1
  %v11947 = vsel %vm2405, %v11945, %v11946
  %v11948 = vrot.slane %v11513, 1
  %v11949 = vsel %vm2405, %v11946, %v11948
  %v11950 = vrot.slane %v11514, 1
  %v11951 = vsel %vm2405, %v11948, %v11950
  %v11952 = vrot.slane %v11515, 1
  %v11953 = vsel %vm2405, %v11950, %v11952
  %v11954 = vrot.slane %v11516, 1
  %v11955 = vsel %vm2405, %v11952, %v11954
  %v11956 = vrot.slane %v11517, 1
  %v11957 = vsel %vm2405, %v11954, %v11956
  %v11958 = vrot.slane %v11518, 1
  %v11959 = vsel %vm2405, %v11956, %v11958
  %v11960 = vrot.slane %v11519, 1
  %v11961 = vsel %vm2405, %v11958, %v11960
  %v11962 = vrot.slane %v11520, 1
  %v11963 = vsel %vm2405, %v11960, %v11962
  %v11964 = vrot.slane %v11521, 1
  %v11965 = vsel %vm2405, %v11962, %v11964
  %v11966 = vrot.slane %v11522, 1
  %v11967 = vsel %vm2405, %v11964, %v11966
  %v11968 = vrot.slane %v11523, 1
  %v11969 = vsel %vm2405, %v11966, %v11968
  %v11970 = vrot.slane %v11524, 1
  %v11971 = vsel %vm2405, %v11968, %v11970
  %v11972 = vrot.slane %v11525, 1
  %v11973 = vsel %vm2405, %v11970, %v11972
  %v11974 = vrot.slane %v11526, 1
  %v11975 = vsel %vm2405, %v11972, %v11974
  %v11976 = vrot.slane %v11527, 1
  %v11977 = vsel %vm2405, %v11974, %v11976
  %v11978 = vrot.slane %v11528, 1
  %v11979 = vsel %vm2405, %v11976, %v11978
  %v11980 = vrot.slane %v11529, 1
  %v11981 = vsel %vm2405, %v11978, %v11980
  %v11982 = vrot.slane %v11530, 1
  %v11983 = vsel %vm2405, %v11980, %v11982
  %v11984 = vrot.slane %v11531, 1
  %v11985 = vsel %vm2405, %v11982, %v11984
  %v11986 = vrot.slane %v11532, 1
  %v11987 = vsel %vm2405, %v11984, %v11986
  %v11988 = vrot.slane %v11533, 1
  %v11989 = vsel %vm2405, %v11986, %v11988
  %v11990 = vrot.slane %v11534, 1
  %v11991 = vsel %vm2405, %v11988, %v11990
  %v11992 = vrot.slane %v11535, 1
  %v11993 = vsel %vm2405, %v11990, %v11992
  %v11994 = vrot.slane %v11536, 1
  %v11995 = vsel %vm2405, %v11992, %v11994
  %v11996 = vrot.slane %v11537, 1
  %v11997 = vsel %vm2405, %v11994, %v11996
  %v11998 = vrot.slane %v11538, 1
  %v11999 = vsel %vm2405, %v11996, %v11998
  %v12000 = vrot.slane %v11539, 1
  %v12001 = vsel %vm2405, %v11998, %v12000
  %v12002 = vrot.slane %v11540, 1
  %v12003 = vsel %vm2405, %v12000, %v12002
  %v12004 = vrot.slane %v11541, 1
  %v12005 = vsel %vm2405, %v12002, %v12004
  %v12006 = vrot.slane %v11542, 1
  %v12007 = vsel %vm2405, %v12004, %v12006
  %v12008 = vrot.slane %v11543, 1
  %v12009 = vsel %vm2405, %v12006, %v12008
  %v12010 = vrot.slane %v11544, 1
  %v12011 = vsel %vm2405, %v12008, %v12010
  %v12012 = vrot.slane %v11545, 1
  %v12013 = vsel %vm2405, %v12010, %v12012
  %v12014 = vrot.slane %v11546, 1
  %v12015 = vsel %vm2405, %v12012, %v12014
  %v12016 = vrot.slane %v11547, 1
  %v12017 = vsel %vm2405, %v12014, %v12016
  %v12018 = vrot.slane %v11548, 1
  %v12019 = vsel %vm2405, %v12016, %v12018
  %v12020 = vrot.slane %v11944, 1
  %v12021 = vsel %vm2405, %v12018, %v12020
  %12022 = vrot.lane.b32.xlu0 %v11947, 8
  %v12023 = vpop.permute.xlu0 %12022
  %12024 = vrot.lane.b32.xlu0 %v11949, 8
  %v12025 = vpop.permute.xlu0 %12024
  %12026 = vrot.lane.b32.xlu0 %v11951, 8
  %v12027 = vpop.permute.xlu0 %12026
  %12028 = vrot.lane.b32.xlu0 %v11953, 8
  %v12029 = vpop.permute.xlu0 %12028
  %12030 = vrot.lane.b32.xlu0 %v11955, 8
  %v12031 = vpop.permute.xlu0 %12030
  %12032 = vrot.lane.b32.xlu0 %v11957, 8
  %v12033 = vpop.permute.xlu0 %12032
  %12034 = vrot.lane.b32.xlu0 %v11959, 8
  %v12035 = vpop.permute.xlu0 %12034
  %12036 = vrot.lane.b32.xlu0 %v11961, 8
  %v12037 = vpop.permute.xlu0 %12036
  %12038 = vrot.lane.b32.xlu0 %v11963, 8
  %v12039 = vpop.permute.xlu0 %12038
  %12040 = vrot.lane.b32.xlu0 %v11965, 8
  %v12041 = vpop.permute.xlu0 %12040
  %12042 = vrot.lane.b32.xlu0 %v11967, 8
  %v12043 = vpop.permute.xlu0 %12042
  %12044 = vrot.lane.b32.xlu0 %v11969, 8
  %v12045 = vpop.permute.xlu0 %12044
  %12046 = vrot.lane.b32.xlu0 %v11971, 8
  %v12047 = vpop.permute.xlu0 %12046
  %12048 = vrot.lane.b32.xlu0 %v11973, 8
  %v12049 = vpop.permute.xlu0 %12048
  %12050 = vrot.lane.b32.xlu0 %v11975, 8
  %v12051 = vpop.permute.xlu0 %12050
  %12052 = vrot.lane.b32.xlu0 %v11977, 8
  %v12053 = vpop.permute.xlu0 %12052
  %12054 = vrot.lane.b32.xlu0 %v11979, 8
  %v12055 = vpop.permute.xlu0 %12054
  %12056 = vrot.lane.b32.xlu0 %v11981, 8
  %v12057 = vpop.permute.xlu0 %12056
  %12058 = vrot.lane.b32.xlu0 %v11983, 8
  %v12059 = vpop.permute.xlu0 %12058
  %12060 = vrot.lane.b32.xlu0 %v11985, 8
  %v12061 = vpop.permute.xlu0 %12060
  %12062 = vrot.lane.b32.xlu0 %v11987, 8
  %v12063 = vpop.permute.xlu0 %12062
  %12064 = vrot.lane.b32.xlu0 %v11989, 8
  %v12065 = vpop.permute.xlu0 %12064
  %12066 = vrot.lane.b32.xlu0 %v11991, 8
  %v12067 = vpop.permute.xlu0 %12066
  %12068 = vrot.lane.b32.xlu0 %v11993, 8
  %v12069 = vpop.permute.xlu0 %12068
  %12070 = vrot.lane.b32.xlu0 %v11995, 8
  %v12071 = vpop.permute.xlu0 %12070
  %12072 = vrot.lane.b32.xlu0 %v11997, 8
  %v12073 = vpop.permute.xlu0 %12072
  %12074 = vrot.lane.b32.xlu0 %v11999, 8
  %v12075 = vpop.permute.xlu0 %12074
  %12076 = vrot.lane.b32.xlu0 %v12001, 8
  %v12077 = vpop.permute.xlu0 %12076
  %12078 = vrot.lane.b32.xlu0 %v12003, 8
  %v12079 = vpop.permute.xlu0 %12078
  %12080 = vrot.lane.b32.xlu0 %v12005, 8
  %v12081 = vpop.permute.xlu0 %12080
  %12082 = vrot.lane.b32.xlu0 %v12007, 8
  %v12083 = vpop.permute.xlu0 %12082
  %12084 = vrot.lane.b32.xlu0 %v12009, 8
  %v12085 = vpop.permute.xlu0 %12084
  %12086 = vrot.lane.b32.xlu0 %v12011, 8
  %v12087 = vpop.permute.xlu0 %12086
  %12088 = vrot.lane.b32.xlu0 %v12013, 8
  %v12089 = vpop.permute.xlu0 %12088
  %12090 = vrot.lane.b32.xlu0 %v12015, 8
  %v12091 = vpop.permute.xlu0 %12090
  %12092 = vrot.lane.b32.xlu0 %v12017, 8
  %v12093 = vpop.permute.xlu0 %12092
  %12094 = vrot.lane.b32.xlu0 %v12019, 8
  %v12095 = vpop.permute.xlu0 %12094
  %12096 = vrot.lane.b32.xlu0 %v12021, 8
  %v12097 = vpop.permute.xlu0 %12096
  %12098 = vrot.lane.b32.xlu0 %v12020, 8
  %v12099 = vpop.permute.xlu0 %12098
  %v12104 = vunpack.c.l.b16 %v11347
  %v12105 = vunpack.c.l.b16 %v11348
  %v12106 = vunpack.c.l.b16 %v11349
  %v12107 = vunpack.c.l.b16 %v11350
  %v12108 = vpack.c.b16 %v11437, %v12104
  %v12109 = vpack.c.b16 %v12105, %v11510
  %v12110 = vpack.c.b16 %v12107, %v12106
  %v12111 = vrot.slane %v12108, 1
  %v12112 = vsel %vm2405, %v12111, %v11948
  %v12113 = vrot.slane %v12109, 1
  %v12114 = vsel %vm2405, %v12018, %v12113
  %v12115 = vrot.slane %v12110, 1
  %v12116 = vsel %vm2405, %v12113, %v12115
  %12117 = vrot.lane.b32.xlu0 %v12112, 12
  %v12118 = vpop.permute.xlu0 %12117
  %12119 = vrot.lane.b32.xlu0 %v11951, 12
  %v12120 = vpop.permute.xlu0 %12119
  %12121 = vrot.lane.b32.xlu0 %v11953, 12
  %v12122 = vpop.permute.xlu0 %12121
  %12123 = vrot.lane.b32.xlu0 %v11955, 12
  %v12124 = vpop.permute.xlu0 %12123
  %12125 = vrot.lane.b32.xlu0 %v11957, 12
  %v12126 = vpop.permute.xlu0 %12125
  %12127 = vrot.lane.b32.xlu0 %v11959, 12
  %v12128 = vpop.permute.xlu0 %12127
  %12129 = vrot.lane.b32.xlu0 %v11961, 12
  %v12130 = vpop.permute.xlu0 %12129
  %12131 = vrot.lane.b32.xlu0 %v11963, 12
  %v12132 = vpop.permute.xlu0 %12131
  %12133 = vrot.lane.b32.xlu0 %v11965, 12
  %v12134 = vpop.permute.xlu0 %12133
  %12135 = vrot.lane.b32.xlu0 %v11967, 12
  %v12136 = vpop.permute.xlu0 %12135
  %12137 = vrot.lane.b32.xlu0 %v11969, 12
  %v12138 = vpop.permute.xlu0 %12137
  %12139 = vrot.lane.b32.xlu0 %v11971, 12
  %v12140 = vpop.permute.xlu0 %12139
  %12141 = vrot.lane.b32.xlu0 %v11973, 12
  %v12142 = vpop.permute.xlu0 %12141
  %12143 = vrot.lane.b32.xlu0 %v11975, 12
  %v12144 = vpop.permute.xlu0 %12143
  %12145 = vrot.lane.b32.xlu0 %v11977, 12
  %v12146 = vpop.permute.xlu0 %12145
  %12147 = vrot.lane.b32.xlu0 %v11979, 12
  %v12148 = vpop.permute.xlu0 %12147
  %12149 = vrot.lane.b32.xlu0 %v11981, 12
  %v12150 = vpop.permute.xlu0 %12149
  %12151 = vrot.lane.b32.xlu0 %v11983, 12
  %v12152 = vpop.permute.xlu0 %12151
  %12153 = vrot.lane.b32.xlu0 %v11985, 12
  %v12154 = vpop.permute.xlu0 %12153
  %12155 = vrot.lane.b32.xlu0 %v11987, 12
  %v12156 = vpop.permute.xlu0 %12155
  %12157 = vrot.lane.b32.xlu0 %v11989, 12
  %v12158 = vpop.permute.xlu0 %12157
  %12159 = vrot.lane.b32.xlu0 %v11991, 12
  %v12160 = vpop.permute.xlu0 %12159
  %12161 = vrot.lane.b32.xlu0 %v11993, 12
  %v12162 = vpop.permute.xlu0 %12161
  %12163 = vrot.lane.b32.xlu0 %v11995, 12
  %v12164 = vpop.permute.xlu0 %12163
  %12165 = vrot.lane.b32.xlu0 %v11997, 12
  %v12166 = vpop.permute.xlu0 %12165
  %12167 = vrot.lane.b32.xlu0 %v11999, 12
  %v12168 = vpop.permute.xlu0 %12167
  %12169 = vrot.lane.b32.xlu0 %v12001, 12
  %v12170 = vpop.permute.xlu0 %12169
  %12171 = vrot.lane.b32.xlu0 %v12003, 12
  %v12172 = vpop.permute.xlu0 %12171
  %12173 = vrot.lane.b32.xlu0 %v12005, 12
  %v12174 = vpop.permute.xlu0 %12173
  %12175 = vrot.lane.b32.xlu0 %v12007, 12
  %v12176 = vpop.permute.xlu0 %12175
  %12177 = vrot.lane.b32.xlu0 %v12009, 12
  %v12178 = vpop.permute.xlu0 %12177
  %12179 = vrot.lane.b32.xlu0 %v12011, 12
  %v12180 = vpop.permute.xlu0 %12179
  %12181 = vrot.lane.b32.xlu0 %v12013, 12
  %v12182 = vpop.permute.xlu0 %12181
  %12183 = vrot.lane.b32.xlu0 %v12015, 12
  %v12184 = vpop.permute.xlu0 %12183
  %12185 = vrot.lane.b32.xlu0 %v12017, 12
  %v12186 = vpop.permute.xlu0 %12185
  %12187 = vrot.lane.b32.xlu0 %v12019, 12
  %v12188 = vpop.permute.xlu0 %12187
  %12189 = vrot.lane.b32.xlu0 %v12114, 12
  %v12190 = vpop.permute.xlu0 %12189
  %12191 = vrot.lane.b32.xlu0 %v12116, 12
  %v12192 = vpop.permute.xlu0 %12191
  %12193 = vrot.lane.b32.xlu0 %v12115, 12
  %v12194 = vpop.permute.xlu0 %12193
  %v12195 = vpack.c.b16 %v11438, %v11437
  %v12196 = vpack.c.b16 %v11440, %v11439
  %v12197 = vpack.c.b16 %v11442, %v11441
  %v12198 = vpack.c.b16 %v11444, %v11443
  %v12199 = vpack.c.b16 %v11446, %v11445
  %v12200 = vpack.c.b16 %v11448, %v11447
  %v12201 = vpack.c.b16 %v11450, %v11449
  %v12202 = vpack.c.b16 %v11452, %v11451
  %v12203 = vpack.c.b16 %v11454, %v11453
  %v12204 = vpack.c.b16 %v11456, %v11455
  %v12205 = vpack.c.b16 %v11458, %v11457
  %v12206 = vpack.c.b16 %v11460, %v11459
  %v12207 = vpack.c.b16 %v11462, %v11461
  %v12208 = vpack.c.b16 %v11464, %v11463
  %v12209 = vpack.c.b16 %v11466, %v11465
  %v12210 = vpack.c.b16 %v11468, %v11467
  %v12211 = vpack.c.b16 %v11470, %v11469
  %v12212 = vpack.c.b16 %v11472, %v11471
  %v12213 = vpack.c.b16 %v11474, %v11473
  %v12214 = vpack.c.b16 %v11476, %v11475
  %v12215 = vpack.c.b16 %v11478, %v11477
  %v12216 = vpack.c.b16 %v11480, %v11479
  %v12217 = vpack.c.b16 %v11482, %v11481
  %v12218 = vpack.c.b16 %v11484, %v11483
  %v12219 = vpack.c.b16 %v11486, %v11485
  %v12220 = vpack.c.b16 %v11488, %v11487
  %v12221 = vpack.c.b16 %v11490, %v11489
  %v12222 = vpack.c.b16 %v11492, %v11491
  %v12223 = vpack.c.b16 %v11494, %v11493
  %v12224 = vpack.c.b16 %v11496, %v11495
  %v12225 = vpack.c.b16 %v11498, %v11497
  %v12226 = vpack.c.b16 %v11500, %v11499
  %v12227 = vpack.c.b16 %v11502, %v11501
  %v12228 = vpack.c.b16 %v11504, %v11503
  %v12229 = vpack.c.b16 %v11506, %v11505
  %v12230 = vpack.c.b16 %v11508, %v11507
  %v12231 = vpack.c.b16 %v11510, %v11509
  %v12232 = vpack.c.b16 %v12106, %v12105
  %v12233 = vpack.c.b16 %v12107, %v12107
  %v12235 = vshrl.u32 %v12195, 16
  %v12237 = vrot.slane %v12235, 5
  %v12238 = vshll.u32 %v12195, 16
  %v12240 = vrot.slane %v12238, 6
  %v12241 = vor.u32 %v12237, %v12240
  %v12243 = vshrl.u32 %v12196, 16
  %v12245 = vrot.slane %v12243, 5
  %v12246 = vshll.u32 %v12196, 16
  %v12248 = vrot.slane %v12246, 6
  %v12249 = vor.u32 %v12245, %v12248
  %v12250 = vsel %vm2695, %v12241, %v12249
  %v12252 = vshrl.u32 %v12197, 16
  %v12254 = vrot.slane %v12252, 5
  %v12255 = vshll.u32 %v12197, 16
  %v12257 = vrot.slane %v12255, 6
  %v12258 = vor.u32 %v12254, %v12257
  %v12259 = vsel %vm2695, %v12249, %v12258
  %v12261 = vshrl.u32 %v12198, 16
  %v12263 = vrot.slane %v12261, 5
  %v12264 = vshll.u32 %v12198, 16
  %v12266 = vrot.slane %v12264, 6
  %v12267 = vor.u32 %v12263, %v12266
  %v12268 = vsel %vm2695, %v12258, %v12267
  %v12270 = vshrl.u32 %v12199, 16
  %v12272 = vrot.slane %v12270, 5
  %v12273 = vshll.u32 %v12199, 16
  %v12275 = vrot.slane %v12273, 6
  %v12276 = vor.u32 %v12272, %v12275
  %v12277 = vsel %vm2695, %v12267, %v12276
  %v12279 = vshrl.u32 %v12200, 16
  %v12281 = vrot.slane %v12279, 5
  %v12282 = vshll.u32 %v12200, 16
  %v12284 = vrot.slane %v12282, 6
  %v12285 = vor.u32 %v12281, %v12284
  %v12286 = vsel %vm2695, %v12276, %v12285
  %v12288 = vshrl.u32 %v12201, 16
  %v12290 = vrot.slane %v12288, 5
  %v12291 = vshll.u32 %v12201, 16
  %v12293 = vrot.slane %v12291, 6
  %v12294 = vor.u32 %v12290, %v12293
  %v12295 = vsel %vm2695, %v12285, %v12294
  %v12297 = vshrl.u32 %v12202, 16
  %v12299 = vrot.slane %v12297, 5
  %v12300 = vshll.u32 %v12202, 16
  %v12302 = vrot.slane %v12300, 6
  %v12303 = vor.u32 %v12299, %v12302
  %v12304 = vsel %vm2695, %v12294, %v12303
  %v12306 = vshrl.u32 %v12203, 16
  %v12308 = vrot.slane %v12306, 5
  %v12309 = vshll.u32 %v12203, 16
  %v12311 = vrot.slane %v12309, 6
  %v12312 = vor.u32 %v12308, %v12311
  %v12313 = vsel %vm2695, %v12303, %v12312
  %v12315 = vshrl.u32 %v12204, 16
  %v12317 = vrot.slane %v12315, 5
  %v12318 = vshll.u32 %v12204, 16
  %v12320 = vrot.slane %v12318, 6
  %v12321 = vor.u32 %v12317, %v12320
  %v12322 = vsel %vm2695, %v12312, %v12321
  %v12324 = vshrl.u32 %v12205, 16
  %v12326 = vrot.slane %v12324, 5
  %v12327 = vshll.u32 %v12205, 16
  %v12329 = vrot.slane %v12327, 6
  %v12330 = vor.u32 %v12326, %v12329
  %v12331 = vsel %vm2695, %v12321, %v12330
  %v12333 = vshrl.u32 %v12206, 16
  %v12335 = vrot.slane %v12333, 5
  %v12336 = vshll.u32 %v12206, 16
  %v12338 = vrot.slane %v12336, 6
  %v12339 = vor.u32 %v12335, %v12338
  %v12340 = vsel %vm2695, %v12330, %v12339
  %v12342 = vshrl.u32 %v12207, 16
  %v12344 = vrot.slane %v12342, 5
  %v12345 = vshll.u32 %v12207, 16
  %v12347 = vrot.slane %v12345, 6
  %v12348 = vor.u32 %v12344, %v12347
  %v12349 = vsel %vm2695, %v12339, %v12348
  %v12351 = vshrl.u32 %v12208, 16
  %v12353 = vrot.slane %v12351, 5
  %v12354 = vshll.u32 %v12208, 16
  %v12356 = vrot.slane %v12354, 6
  %v12357 = vor.u32 %v12353, %v12356
  %v12358 = vsel %vm2695, %v12348, %v12357
  %v12360 = vshrl.u32 %v12209, 16
  %v12362 = vrot.slane %v12360, 5
  %v12363 = vshll.u32 %v12209, 16
  %v12365 = vrot.slane %v12363, 6
  %v12366 = vor.u32 %v12362, %v12365
  %v12367 = vsel %vm2695, %v12357, %v12366
  %v12369 = vshrl.u32 %v12210, 16
  %v12371 = vrot.slane %v12369, 5
  %v12372 = vshll.u32 %v12210, 16
  %v12374 = vrot.slane %v12372, 6
  %v12375 = vor.u32 %v12371, %v12374
  %v12376 = vsel %vm2695, %v12366, %v12375
  %v12378 = vshrl.u32 %v12211, 16
  %v12380 = vrot.slane %v12378, 5
  %v12381 = vshll.u32 %v12211, 16
  %v12383 = vrot.slane %v12381, 6
  %v12384 = vor.u32 %v12380, %v12383
  %v12385 = vsel %vm2695, %v12375, %v12384
  %v12387 = vshrl.u32 %v12212, 16
  %v12389 = vrot.slane %v12387, 5
  %v12390 = vshll.u32 %v12212, 16
  %v12392 = vrot.slane %v12390, 6
  %v12393 = vor.u32 %v12389, %v12392
  %v12394 = vsel %vm2695, %v12384, %v12393
  %v12396 = vshrl.u32 %v12213, 16
  %v12398 = vrot.slane %v12396, 5
  %v12399 = vshll.u32 %v12213, 16
  %v12401 = vrot.slane %v12399, 6
  %v12402 = vor.u32 %v12398, %v12401
  %v12403 = vsel %vm2695, %v12393, %v12402
  %v12405 = vshrl.u32 %v12214, 16
  %v12407 = vrot.slane %v12405, 5
  %v12408 = vshll.u32 %v12214, 16
  %v12410 = vrot.slane %v12408, 6
  %v12411 = vor.u32 %v12407, %v12410
  %v12412 = vsel %vm2695, %v12402, %v12411
  %v12414 = vshrl.u32 %v12215, 16
  %v12416 = vrot.slane %v12414, 5
  %v12417 = vshll.u32 %v12215, 16
  %v12419 = vrot.slane %v12417, 6
  %v12420 = vor.u32 %v12416, %v12419
  %v12421 = vsel %vm2695, %v12411, %v12420
  %v12423 = vshrl.u32 %v12216, 16
  %v12425 = vrot.slane %v12423, 5
  %v12426 = vshll.u32 %v12216, 16
  %v12428 = vrot.slane %v12426, 6
  %v12429 = vor.u32 %v12425, %v12428
  %v12430 = vsel %vm2695, %v12420, %v12429
  %v12432 = vshrl.u32 %v12217, 16
  %v12434 = vrot.slane %v12432, 5
  %v12435 = vshll.u32 %v12217, 16
  %v12437 = vrot.slane %v12435, 6
  %v12438 = vor.u32 %v12434, %v12437
  %v12439 = vsel %vm2695, %v12429, %v12438
  %v12441 = vshrl.u32 %v12218, 16
  %v12443 = vrot.slane %v12441, 5
  %v12444 = vshll.u32 %v12218, 16
  %v12446 = vrot.slane %v12444, 6
  %v12447 = vor.u32 %v12443, %v12446
  %v12448 = vsel %vm2695, %v12438, %v12447
  %v12450 = vshrl.u32 %v12219, 16
  %v12452 = vrot.slane %v12450, 5
  %v12453 = vshll.u32 %v12219, 16
  %v12455 = vrot.slane %v12453, 6
  %v12456 = vor.u32 %v12452, %v12455
  %v12457 = vsel %vm2695, %v12447, %v12456
  %v12459 = vshrl.u32 %v12220, 16
  %v12461 = vrot.slane %v12459, 5
  %v12462 = vshll.u32 %v12220, 16
  %v12464 = vrot.slane %v12462, 6
  %v12465 = vor.u32 %v12461, %v12464
  %v12466 = vsel %vm2695, %v12456, %v12465
  %v12468 = vshrl.u32 %v12221, 16
  %v12470 = vrot.slane %v12468, 5
  %v12471 = vshll.u32 %v12221, 16
  %v12473 = vrot.slane %v12471, 6
  %v12474 = vor.u32 %v12470, %v12473
  %v12475 = vsel %vm2695, %v12465, %v12474
  %v12477 = vshrl.u32 %v12222, 16
  %v12479 = vrot.slane %v12477, 5
  %v12480 = vshll.u32 %v12222, 16
  %v12482 = vrot.slane %v12480, 6
  %v12483 = vor.u32 %v12479, %v12482
  %v12484 = vsel %vm2695, %v12474, %v12483
  %v12486 = vshrl.u32 %v12223, 16
  %v12488 = vrot.slane %v12486, 5
  %v12489 = vshll.u32 %v12223, 16
  %v12491 = vrot.slane %v12489, 6
  %v12492 = vor.u32 %v12488, %v12491
  %v12493 = vsel %vm2695, %v12483, %v12492
  %v12495 = vshrl.u32 %v12224, 16
  %v12497 = vrot.slane %v12495, 5
  %v12498 = vshll.u32 %v12224, 16
  %v12500 = vrot.slane %v12498, 6
  %v12501 = vor.u32 %v12497, %v12500
  %v12502 = vsel %vm2695, %v12492, %v12501
  %v12504 = vshrl.u32 %v12225, 16
  %v12506 = vrot.slane %v12504, 5
  %v12507 = vshll.u32 %v12225, 16
  %v12509 = vrot.slane %v12507, 6
  %v12510 = vor.u32 %v12506, %v12509
  %v12511 = vsel %vm2695, %v12501, %v12510
  %v12513 = vshrl.u32 %v12226, 16
  %v12515 = vrot.slane %v12513, 5
  %v12516 = vshll.u32 %v12226, 16
  %v12518 = vrot.slane %v12516, 6
  %v12519 = vor.u32 %v12515, %v12518
  %v12520 = vsel %vm2695, %v12510, %v12519
  %v12522 = vshrl.u32 %v12227, 16
  %v12524 = vrot.slane %v12522, 5
  %v12525 = vshll.u32 %v12227, 16
  %v12527 = vrot.slane %v12525, 6
  %v12528 = vor.u32 %v12524, %v12527
  %v12529 = vsel %vm2695, %v12519, %v12528
  %v12531 = vshrl.u32 %v12228, 16
  %v12533 = vrot.slane %v12531, 5
  %v12534 = vshll.u32 %v12228, 16
  %v12536 = vrot.slane %v12534, 6
  %v12537 = vor.u32 %v12533, %v12536
  %v12538 = vsel %vm2695, %v12528, %v12537
  %v12540 = vshrl.u32 %v12229, 16
  %v12542 = vrot.slane %v12540, 5
  %v12543 = vshll.u32 %v12229, 16
  %v12545 = vrot.slane %v12543, 6
  %v12546 = vor.u32 %v12542, %v12545
  %v12547 = vsel %vm2695, %v12537, %v12546
  %v12549 = vshrl.u32 %v12230, 16
  %v12551 = vrot.slane %v12549, 5
  %v12552 = vshll.u32 %v12230, 16
  %v12554 = vrot.slane %v12552, 6
  %v12555 = vor.u32 %v12551, %v12554
  %v12556 = vsel %vm2695, %v12546, %v12555
  %v12558 = vshrl.u32 %v12231, 16
  %v12560 = vrot.slane %v12558, 5
  %v12561 = vshll.u32 %v12231, 16
  %v12563 = vrot.slane %v12561, 6
  %v12564 = vor.u32 %v12560, %v12563
  %v12565 = vsel %vm2695, %v12555, %v12564
  %v12567 = vshrl.u32 %v12232, 16
  %v12569 = vrot.slane %v12567, 5
  %v12570 = vshll.u32 %v12232, 16
  %v12572 = vrot.slane %v12570, 6
  %v12573 = vor.u32 %v12569, %v12572
  %v12574 = vsel %vm2695, %v12564, %v12573
  %v12576 = vshrl.u32 %v12233, 16
  %v12578 = vrot.slane %v12576, 5
  %v12579 = vshll.u32 %v12233, 16
  %v12581 = vrot.slane %v12579, 6
  %v12582 = vor.u32 %v12578, %v12581
  %v12583 = vsel %vm2695, %v12573, %v12582
  %12584 = vrot.lane.b32.xlu0 %v12241, 16
  %v12585 = vpop.permute.xlu0 %12584
  %12586 = vrot.lane.b32.xlu0 %v12250, 16
  %v12587 = vpop.permute.xlu0 %12586
  %12588 = vrot.lane.b32.xlu0 %v12259, 16
  %v12589 = vpop.permute.xlu0 %12588
  %12590 = vrot.lane.b32.xlu0 %v12268, 16
  %v12591 = vpop.permute.xlu0 %12590
  %12592 = vrot.lane.b32.xlu0 %v12277, 16
  %v12593 = vpop.permute.xlu0 %12592
  %12594 = vrot.lane.b32.xlu0 %v12286, 16
  %v12595 = vpop.permute.xlu0 %12594
  %12596 = vrot.lane.b32.xlu0 %v12295, 16
  %v12597 = vpop.permute.xlu0 %12596
  %12598 = vrot.lane.b32.xlu0 %v12304, 16
  %v12599 = vpop.permute.xlu0 %12598
  %12600 = vrot.lane.b32.xlu0 %v12313, 16
  %v12601 = vpop.permute.xlu0 %12600
  %12602 = vrot.lane.b32.xlu0 %v12322, 16
  %v12603 = vpop.permute.xlu0 %12602
  %12604 = vrot.lane.b32.xlu0 %v12331, 16
  %v12605 = vpop.permute.xlu0 %12604
  %12606 = vrot.lane.b32.xlu0 %v12340, 16
  %v12607 = vpop.permute.xlu0 %12606
  %12608 = vrot.lane.b32.xlu0 %v12349, 16
  %v12609 = vpop.permute.xlu0 %12608
  %12610 = vrot.lane.b32.xlu0 %v12358, 16
  %v12611 = vpop.permute.xlu0 %12610
  %12612 = vrot.lane.b32.xlu0 %v12367, 16
  %v12613 = vpop.permute.xlu0 %12612
  %12614 = vrot.lane.b32.xlu0 %v12376, 16
  %v12615 = vpop.permute.xlu0 %12614
  %12616 = vrot.lane.b32.xlu0 %v12385, 16
  %v12617 = vpop.permute.xlu0 %12616
  %12618 = vrot.lane.b32.xlu0 %v12394, 16
  %v12619 = vpop.permute.xlu0 %12618
  %12620 = vrot.lane.b32.xlu0 %v12403, 16
  %v12621 = vpop.permute.xlu0 %12620
  %12622 = vrot.lane.b32.xlu0 %v12412, 16
  %v12623 = vpop.permute.xlu0 %12622
  %12624 = vrot.lane.b32.xlu0 %v12421, 16
  %v12625 = vpop.permute.xlu0 %12624
  %12626 = vrot.lane.b32.xlu0 %v12430, 16
  %v12627 = vpop.permute.xlu0 %12626
  %12628 = vrot.lane.b32.xlu0 %v12439, 16
  %v12629 = vpop.permute.xlu0 %12628
  %12630 = vrot.lane.b32.xlu0 %v12448, 16
  %v12631 = vpop.permute.xlu0 %12630
  %12632 = vrot.lane.b32.xlu0 %v12457, 16
  %v12633 = vpop.permute.xlu0 %12632
  %12634 = vrot.lane.b32.xlu0 %v12466, 16
  %v12635 = vpop.permute.xlu0 %12634
  %12636 = vrot.lane.b32.xlu0 %v12475, 16
  %v12637 = vpop.permute.xlu0 %12636
  %12638 = vrot.lane.b32.xlu0 %v12484, 16
  %v12639 = vpop.permute.xlu0 %12638
  %12640 = vrot.lane.b32.xlu0 %v12493, 16
  %v12641 = vpop.permute.xlu0 %12640
  %12642 = vrot.lane.b32.xlu0 %v12502, 16
  %v12643 = vpop.permute.xlu0 %12642
  %12644 = vrot.lane.b32.xlu0 %v12511, 16
  %v12645 = vpop.permute.xlu0 %12644
  %12646 = vrot.lane.b32.xlu0 %v12520, 16
  %v12647 = vpop.permute.xlu0 %12646
  %12648 = vrot.lane.b32.xlu0 %v12529, 16
  %v12649 = vpop.permute.xlu0 %12648
  %12650 = vrot.lane.b32.xlu0 %v12538, 16
  %v12651 = vpop.permute.xlu0 %12650
  %12652 = vrot.lane.b32.xlu0 %v12547, 16
  %v12653 = vpop.permute.xlu0 %12652
  %12654 = vrot.lane.b32.xlu0 %v12556, 16
  %v12655 = vpop.permute.xlu0 %12654
  %12656 = vrot.lane.b32.xlu0 %v12565, 16
  %v12657 = vpop.permute.xlu0 %12656
  %12658 = vrot.lane.b32.xlu0 %v12574, 16
  %v12659 = vpop.permute.xlu0 %12658
  %12660 = vrot.lane.b32.xlu0 %v12583, 16
  %v12661 = vpop.permute.xlu0 %12660
  %v12663 = vunpack.c.l.b16 %v11351
  %v12664 = vpack.c.b16 %v12663, %v12663
  %v12665 = vrot.slane %v12195, 6
  %v12666 = vrot.slane %v12196, 6
  %v12667 = vsel %vm3127, %v12665, %v12666
  %v12668 = vrot.slane %v12197, 6
  %v12669 = vsel %vm3127, %v12666, %v12668
  %v12670 = vrot.slane %v12198, 6
  %v12671 = vsel %vm3127, %v12668, %v12670
  %v12672 = vrot.slane %v12199, 6
  %v12673 = vsel %vm3127, %v12670, %v12672
  %v12674 = vrot.slane %v12200, 6
  %v12675 = vsel %vm3127, %v12672, %v12674
  %v12676 = vrot.slane %v12201, 6
  %v12677 = vsel %vm3127, %v12674, %v12676
  %v12678 = vrot.slane %v12202, 6
  %v12679 = vsel %vm3127, %v12676, %v12678
  %v12680 = vrot.slane %v12203, 6
  %v12681 = vsel %vm3127, %v12678, %v12680
  %v12682 = vrot.slane %v12204, 6
  %v12683 = vsel %vm3127, %v12680, %v12682
  %v12684 = vrot.slane %v12205, 6
  %v12685 = vsel %vm3127, %v12682, %v12684
  %v12686 = vrot.slane %v12206, 6
  %v12687 = vsel %vm3127, %v12684, %v12686
  %v12688 = vrot.slane %v12207, 6
  %v12689 = vsel %vm3127, %v12686, %v12688
  %v12690 = vrot.slane %v12208, 6
  %v12691 = vsel %vm3127, %v12688, %v12690
  %v12692 = vrot.slane %v12209, 6
  %v12693 = vsel %vm3127, %v12690, %v12692
  %v12694 = vrot.slane %v12210, 6
  %v12695 = vsel %vm3127, %v12692, %v12694
  %v12696 = vrot.slane %v12211, 6
  %v12697 = vsel %vm3127, %v12694, %v12696
  %v12698 = vrot.slane %v12212, 6
  %v12699 = vsel %vm3127, %v12696, %v12698
  %v12700 = vrot.slane %v12213, 6
  %v12701 = vsel %vm3127, %v12698, %v12700
  %v12702 = vrot.slane %v12214, 6
  %v12703 = vsel %vm3127, %v12700, %v12702
  %v12704 = vrot.slane %v12215, 6
  %v12705 = vsel %vm3127, %v12702, %v12704
  %v12706 = vrot.slane %v12216, 6
  %v12707 = vsel %vm3127, %v12704, %v12706
  %v12708 = vrot.slane %v12217, 6
  %v12709 = vsel %vm3127, %v12706, %v12708
  %v12710 = vrot.slane %v12218, 6
  %v12711 = vsel %vm3127, %v12708, %v12710
  %v12712 = vrot.slane %v12219, 6
  %v12713 = vsel %vm3127, %v12710, %v12712
  %v12714 = vrot.slane %v12220, 6
  %v12715 = vsel %vm3127, %v12712, %v12714
  %v12716 = vrot.slane %v12221, 6
  %v12717 = vsel %vm3127, %v12714, %v12716
  %v12718 = vrot.slane %v12222, 6
  %v12719 = vsel %vm3127, %v12716, %v12718
  %v12720 = vrot.slane %v12223, 6
  %v12721 = vsel %vm3127, %v12718, %v12720
  %v12722 = vrot.slane %v12224, 6
  %v12723 = vsel %vm3127, %v12720, %v12722
  %v12724 = vrot.slane %v12225, 6
  %v12725 = vsel %vm3127, %v12722, %v12724
  %v12726 = vrot.slane %v12226, 6
  %v12727 = vsel %vm3127, %v12724, %v12726
  %v12728 = vrot.slane %v12227, 6
  %v12729 = vsel %vm3127, %v12726, %v12728
  %v12730 = vrot.slane %v12228, 6
  %v12731 = vsel %vm3127, %v12728, %v12730
  %v12732 = vrot.slane %v12229, 6
  %v12733 = vsel %vm3127, %v12730, %v12732
  %v12734 = vrot.slane %v12230, 6
  %v12735 = vsel %vm3127, %v12732, %v12734
  %v12736 = vrot.slane %v12231, 6
  %v12737 = vsel %vm3127, %v12734, %v12736
  %v12738 = vrot.slane %v12232, 6
  %v12739 = vsel %vm3127, %v12736, %v12738
  %v12740 = vrot.slane %v12664, 6
  %v12741 = vsel %vm3127, %v12738, %v12740
  %12742 = vrot.lane.b32.xlu0 %v12665, 20
  %v12743 = vpop.permute.xlu0 %12742
  %12744 = vrot.lane.b32.xlu0 %v12667, 20
  %v12745 = vpop.permute.xlu0 %12744
  %12746 = vrot.lane.b32.xlu0 %v12669, 20
  %v12747 = vpop.permute.xlu0 %12746
  %12748 = vrot.lane.b32.xlu0 %v12671, 20
  %v12749 = vpop.permute.xlu0 %12748
  %12750 = vrot.lane.b32.xlu0 %v12673, 20
  %v12751 = vpop.permute.xlu0 %12750
  %12752 = vrot.lane.b32.xlu0 %v12675, 20
  %v12753 = vpop.permute.xlu0 %12752
  %12754 = vrot.lane.b32.xlu0 %v12677, 20
  %v12755 = vpop.permute.xlu0 %12754
  %12756 = vrot.lane.b32.xlu0 %v12679, 20
  %v12757 = vpop.permute.xlu0 %12756
  %12758 = vrot.lane.b32.xlu0 %v12681, 20
  %v12759 = vpop.permute.xlu0 %12758
  %12760 = vrot.lane.b32.xlu0 %v12683, 20
  %v12761 = vpop.permute.xlu0 %12760
  %12762 = vrot.lane.b32.xlu0 %v12685, 20
  %v12763 = vpop.permute.xlu0 %12762
  %12764 = vrot.lane.b32.xlu0 %v12687, 20
  %v12765 = vpop.permute.xlu0 %12764
  %12766 = vrot.lane.b32.xlu0 %v12689, 20
  %v12767 = vpop.permute.xlu0 %12766
  %12768 = vrot.lane.b32.xlu0 %v12691, 20
  %v12769 = vpop.permute.xlu0 %12768
  %12770 = vrot.lane.b32.xlu0 %v12693, 20
  %v12771 = vpop.permute.xlu0 %12770
  %12772 = vrot.lane.b32.xlu0 %v12695, 20
  %v12773 = vpop.permute.xlu0 %12772
  %12774 = vrot.lane.b32.xlu0 %v12697, 20
  %v12775 = vpop.permute.xlu0 %12774
  %12776 = vrot.lane.b32.xlu0 %v12699, 20
  %v12777 = vpop.permute.xlu0 %12776
  %12778 = vrot.lane.b32.xlu0 %v12701, 20
  %v12779 = vpop.permute.xlu0 %12778
  %12780 = vrot.lane.b32.xlu0 %v12703, 20
  %v12781 = vpop.permute.xlu0 %12780
  %12782 = vrot.lane.b32.xlu0 %v12705, 20
  %v12783 = vpop.permute.xlu0 %12782
  %12784 = vrot.lane.b32.xlu0 %v12707, 20
  %v12785 = vpop.permute.xlu0 %12784
  %12786 = vrot.lane.b32.xlu0 %v12709, 20
  %v12787 = vpop.permute.xlu0 %12786
  %12788 = vrot.lane.b32.xlu0 %v12711, 20
  %v12789 = vpop.permute.xlu0 %12788
  %12790 = vrot.lane.b32.xlu0 %v12713, 20
  %v12791 = vpop.permute.xlu0 %12790
  %12792 = vrot.lane.b32.xlu0 %v12715, 20
  %v12793 = vpop.permute.xlu0 %12792
  %12794 = vrot.lane.b32.xlu0 %v12717, 20
  %v12795 = vpop.permute.xlu0 %12794
  %12796 = vrot.lane.b32.xlu0 %v12719, 20
  %v12797 = vpop.permute.xlu0 %12796
  %12798 = vrot.lane.b32.xlu0 %v12721, 20
  %v12799 = vpop.permute.xlu0 %12798
  %12800 = vrot.lane.b32.xlu0 %v12723, 20
  %v12801 = vpop.permute.xlu0 %12800
  %12802 = vrot.lane.b32.xlu0 %v12725, 20
  %v12803 = vpop.permute.xlu0 %12802
  %12804 = vrot.lane.b32.xlu0 %v12727, 20
  %v12805 = vpop.permute.xlu0 %12804
  %12806 = vrot.lane.b32.xlu0 %v12729, 20
  %v12807 = vpop.permute.xlu0 %12806
  %12808 = vrot.lane.b32.xlu0 %v12731, 20
  %v12809 = vpop.permute.xlu0 %12808
  %12810 = vrot.lane.b32.xlu0 %v12733, 20
  %v12811 = vpop.permute.xlu0 %12810
  %12812 = vrot.lane.b32.xlu0 %v12735, 20
  %v12813 = vpop.permute.xlu0 %12812
  %12814 = vrot.lane.b32.xlu0 %v12737, 20
  %v12815 = vpop.permute.xlu0 %12814
  %12816 = vrot.lane.b32.xlu0 %v12739, 20
  %v12817 = vpop.permute.xlu0 %12816
  %12818 = vrot.lane.b32.xlu0 %v12741, 20
  %v12819 = vpop.permute.xlu0 %12818
  %v12823 = vunpack.c.l.b16 %v11352
  %v12824 = vunpack.c.l.b16 %v11353
  %v12825 = vunpack.c.l.b16 %v11354
  %v12826 = vpack.c.b16 %v12824, %v12823
  %v12827 = vpack.c.b16 %v12825, %v12825
  %v12828 = vrot.slane %v12826, 6
  %v12829 = vsel %vm3127, %v12738, %v12828
  %v12830 = vrot.slane %v12827, 6
  %v12831 = vsel %vm3127, %v12828, %v12830
  %12832 = vrot.lane.b32.xlu0 %v12666, 24
  %v12833 = vpop.permute.xlu0 %12832
  %12834 = vrot.lane.b32.xlu0 %v12669, 24
  %v12835 = vpop.permute.xlu0 %12834
  %12836 = vrot.lane.b32.xlu0 %v12671, 24
  %v12837 = vpop.permute.xlu0 %12836
  %12838 = vrot.lane.b32.xlu0 %v12673, 24
  %v12839 = vpop.permute.xlu0 %12838
  %12840 = vrot.lane.b32.xlu0 %v12675, 24
  %v12841 = vpop.permute.xlu0 %12840
  %12842 = vrot.lane.b32.xlu0 %v12677, 24
  %v12843 = vpop.permute.xlu0 %12842
  %12844 = vrot.lane.b32.xlu0 %v12679, 24
  %v12845 = vpop.permute.xlu0 %12844
  %12846 = vrot.lane.b32.xlu0 %v12681, 24
  %v12847 = vpop.permute.xlu0 %12846
  %12848 = vrot.lane.b32.xlu0 %v12683, 24
  %v12849 = vpop.permute.xlu0 %12848
  %12850 = vrot.lane.b32.xlu0 %v12685, 24
  %v12851 = vpop.permute.xlu0 %12850
  %12852 = vrot.lane.b32.xlu0 %v12687, 24
  %v12853 = vpop.permute.xlu0 %12852
  %12854 = vrot.lane.b32.xlu0 %v12689, 24
  %v12855 = vpop.permute.xlu0 %12854
  %12856 = vrot.lane.b32.xlu0 %v12691, 24
  %v12857 = vpop.permute.xlu0 %12856
  %12858 = vrot.lane.b32.xlu0 %v12693, 24
  %v12859 = vpop.permute.xlu0 %12858
  %12860 = vrot.lane.b32.xlu0 %v12695, 24
  %v12861 = vpop.permute.xlu0 %12860
  %12862 = vrot.lane.b32.xlu0 %v12697, 24
  %v12863 = vpop.permute.xlu0 %12862
  %12864 = vrot.lane.b32.xlu0 %v12699, 24
  %v12865 = vpop.permute.xlu0 %12864
  %12866 = vrot.lane.b32.xlu0 %v12701, 24
  %v12867 = vpop.permute.xlu0 %12866
  %12868 = vrot.lane.b32.xlu0 %v12703, 24
  %v12869 = vpop.permute.xlu0 %12868
  %12870 = vrot.lane.b32.xlu0 %v12705, 24
  %v12871 = vpop.permute.xlu0 %12870
  %12872 = vrot.lane.b32.xlu0 %v12707, 24
  %v12873 = vpop.permute.xlu0 %12872
  %12874 = vrot.lane.b32.xlu0 %v12709, 24
  %v12875 = vpop.permute.xlu0 %12874
  %12876 = vrot.lane.b32.xlu0 %v12711, 24
  %v12877 = vpop.permute.xlu0 %12876
  %12878 = vrot.lane.b32.xlu0 %v12713, 24
  %v12879 = vpop.permute.xlu0 %12878
  %12880 = vrot.lane.b32.xlu0 %v12715, 24
  %v12881 = vpop.permute.xlu0 %12880
  %12882 = vrot.lane.b32.xlu0 %v12717, 24
  %v12883 = vpop.permute.xlu0 %12882
  %12884 = vrot.lane.b32.xlu0 %v12719, 24
  %v12885 = vpop.permute.xlu0 %12884
  %12886 = vrot.lane.b32.xlu0 %v12721, 24
  %v12887 = vpop.permute.xlu0 %12886
  %12888 = vrot.lane.b32.xlu0 %v12723, 24
  %v12889 = vpop.permute.xlu0 %12888
  %12890 = vrot.lane.b32.xlu0 %v12725, 24
  %v12891 = vpop.permute.xlu0 %12890
  %12892 = vrot.lane.b32.xlu0 %v12727, 24
  %v12893 = vpop.permute.xlu0 %12892
  %12894 = vrot.lane.b32.xlu0 %v12729, 24
  %v12895 = vpop.permute.xlu0 %12894
  %12896 = vrot.lane.b32.xlu0 %v12731, 24
  %v12897 = vpop.permute.xlu0 %12896
  %12898 = vrot.lane.b32.xlu0 %v12733, 24
  %v12899 = vpop.permute.xlu0 %12898
  %12900 = vrot.lane.b32.xlu0 %v12735, 24
  %v12901 = vpop.permute.xlu0 %12900
  %12902 = vrot.lane.b32.xlu0 %v12737, 24
  %v12903 = vpop.permute.xlu0 %12902
  %12904 = vrot.lane.b32.xlu0 %v12739, 24
  %v12905 = vpop.permute.xlu0 %12904
  %12906 = vrot.lane.b32.xlu0 %v12829, 24
  %v12907 = vpop.permute.xlu0 %12906
  %12908 = vrot.lane.b32.xlu0 %v12831, 24
  %v12909 = vpop.permute.xlu0 %12908
  %v12911 = vunpack.c.l.b16 %v11355
  %v12912 = vpack.c.b16 %v11440, %v12911
  %v12914 = vshrl.u32 %v12912, 16
  %v12916 = vrot.slane %v12914, 6
  %v12917 = vshll.u32 %v12912, 16
  %v12919 = vrot.slane %v12917, 7
  %v12920 = vor.u32 %v12916, %v12919
  %v12921 = vrot.slane %v12252, 6
  %v12922 = vrot.slane %v12255, 7
  %v12923 = vor.u32 %v12921, %v12922
  %v12924 = vsel %vm3376, %v12920, %v12923
  %v12925 = vrot.slane %v12261, 6
  %v12926 = vrot.slane %v12264, 7
  %v12927 = vor.u32 %v12925, %v12926
  %v12928 = vsel %vm3376, %v12923, %v12927
  %v12929 = vrot.slane %v12270, 6
  %v12930 = vrot.slane %v12273, 7
  %v12931 = vor.u32 %v12929, %v12930
  %v12932 = vsel %vm3376, %v12927, %v12931
  %v12933 = vrot.slane %v12279, 6
  %v12934 = vrot.slane %v12282, 7
  %v12935 = vor.u32 %v12933, %v12934
  %v12936 = vsel %vm3376, %v12931, %v12935
  %v12937 = vrot.slane %v12288, 6
  %v12938 = vrot.slane %v12291, 7
  %v12939 = vor.u32 %v12937, %v12938
  %v12940 = vsel %vm3376, %v12935, %v12939
  %v12941 = vrot.slane %v12297, 6
  %v12942 = vrot.slane %v12300, 7
  %v12943 = vor.u32 %v12941, %v12942
  %v12944 = vsel %vm3376, %v12939, %v12943
  %v12945 = vrot.slane %v12306, 6
  %v12946 = vrot.slane %v12309, 7
  %v12947 = vor.u32 %v12945, %v12946
  %v12948 = vsel %vm3376, %v12943, %v12947
  %v12949 = vrot.slane %v12315, 6
  %v12950 = vrot.slane %v12318, 7
  %v12951 = vor.u32 %v12949, %v12950
  %v12952 = vsel %vm3376, %v12947, %v12951
  %v12953 = vrot.slane %v12324, 6
  %v12954 = vrot.slane %v12327, 7
  %v12955 = vor.u32 %v12953, %v12954
  %v12956 = vsel %vm3376, %v12951, %v12955
  %v12957 = vrot.slane %v12333, 6
  %v12958 = vrot.slane %v12336, 7
  %v12959 = vor.u32 %v12957, %v12958
  %v12960 = vsel %vm3376, %v12955, %v12959
  %v12961 = vrot.slane %v12342, 6
  %v12962 = vrot.slane %v12345, 7
  %v12963 = vor.u32 %v12961, %v12962
  %v12964 = vsel %vm3376, %v12959, %v12963
  %v12965 = vrot.slane %v12351, 6
  %v12966 = vrot.slane %v12354, 7
  %v12967 = vor.u32 %v12965, %v12966
  %v12968 = vsel %vm3376, %v12963, %v12967
  %v12969 = vrot.slane %v12360, 6
  %v12970 = vrot.slane %v12363, 7
  %v12971 = vor.u32 %v12969, %v12970
  %v12972 = vsel %vm3376, %v12967, %v12971
  %v12973 = vrot.slane %v12369, 6
  %v12974 = vrot.slane %v12372, 7
  %v12975 = vor.u32 %v12973, %v12974
  %v12976 = vsel %vm3376, %v12971, %v12975
  %v12977 = vrot.slane %v12378, 6
  %v12978 = vrot.slane %v12381, 7
  %v12979 = vor.u32 %v12977, %v12978
  %v12980 = vsel %vm3376, %v12975, %v12979
  %v12981 = vrot.slane %v12387, 6
  %v12982 = vrot.slane %v12390, 7
  %v12983 = vor.u32 %v12981, %v12982
  %v12984 = vsel %vm3376, %v12979, %v12983
  %v12985 = vrot.slane %v12396, 6
  %v12986 = vrot.slane %v12399, 7
  %v12987 = vor.u32 %v12985, %v12986
  %v12988 = vsel %vm3376, %v12983, %v12987
  %v12989 = vrot.slane %v12405, 6
  %v12990 = vrot.slane %v12408, 7
  %v12991 = vor.u32 %v12989, %v12990
  %v12992 = vsel %vm3376, %v12987, %v12991
  %v12993 = vrot.slane %v12414, 6
  %v12994 = vrot.slane %v12417, 7
  %v12995 = vor.u32 %v12993, %v12994
  %v12996 = vsel %vm3376, %v12991, %v12995
  %v12997 = vrot.slane %v12423, 6
  %v12998 = vrot.slane %v12426, 7
  %v12999 = vor.u32 %v12997, %v12998
  %v13000 = vsel %vm3376, %v12995, %v12999
  %v13001 = vrot.slane %v12432, 6
  %v13002 = vrot.slane %v12435, 7
  %v13003 = vor.u32 %v13001, %v13002
  %v13004 = vsel %vm3376, %v12999, %v13003
  %v13005 = vrot.slane %v12441, 6
  %v13006 = vrot.slane %v12444, 7
  %v13007 = vor.u32 %v13005, %v13006
  %v13008 = vsel %vm3376, %v13003, %v13007
  %v13009 = vrot.slane %v12450, 6
  %v13010 = vrot.slane %v12453, 7
  %v13011 = vor.u32 %v13009, %v13010
  %v13012 = vsel %vm3376, %v13007, %v13011
  %v13013 = vrot.slane %v12459, 6
  %v13014 = vrot.slane %v12462, 7
  %v13015 = vor.u32 %v13013, %v13014
  %v13016 = vsel %vm3376, %v13011, %v13015
  %v13017 = vrot.slane %v12468, 6
  %v13018 = vrot.slane %v12471, 7
  %v13019 = vor.u32 %v13017, %v13018
  %v13020 = vsel %vm3376, %v13015, %v13019
  %v13021 = vrot.slane %v12477, 6
  %v13022 = vrot.slane %v12480, 7
  %v13023 = vor.u32 %v13021, %v13022
  %v13024 = vsel %vm3376, %v13019, %v13023
  %v13025 = vrot.slane %v12486, 6
  %v13026 = vrot.slane %v12489, 7
  %v13027 = vor.u32 %v13025, %v13026
  %v13028 = vsel %vm3376, %v13023, %v13027
  %v13029 = vrot.slane %v12495, 6
  %v13030 = vrot.slane %v12498, 7
  %v13031 = vor.u32 %v13029, %v13030
  %v13032 = vsel %vm3376, %v13027, %v13031
  %v13033 = vrot.slane %v12504, 6
  %v13034 = vrot.slane %v12507, 7
  %v13035 = vor.u32 %v13033, %v13034
  %v13036 = vsel %vm3376, %v13031, %v13035
  %v13037 = vrot.slane %v12513, 6
  %v13038 = vrot.slane %v12516, 7
  %v13039 = vor.u32 %v13037, %v13038
  %v13040 = vsel %vm3376, %v13035, %v13039
  %v13041 = vrot.slane %v12522, 6
  %v13042 = vrot.slane %v12525, 7
  %v13043 = vor.u32 %v13041, %v13042
  %v13044 = vsel %vm3376, %v13039, %v13043
  %v13045 = vrot.slane %v12531, 6
  %v13046 = vrot.slane %v12534, 7
  %v13047 = vor.u32 %v13045, %v13046
  %v13048 = vsel %vm3376, %v13043, %v13047
  %v13049 = vrot.slane %v12540, 6
  %v13050 = vrot.slane %v12543, 7
  %v13051 = vor.u32 %v13049, %v13050
  %v13052 = vsel %vm3376, %v13047, %v13051
  %v13053 = vrot.slane %v12549, 6
  %v13054 = vrot.slane %v12552, 7
  %v13055 = vor.u32 %v13053, %v13054
  %v13056 = vsel %vm3376, %v13051, %v13055
  %v13057 = vrot.slane %v12558, 6
  %v13058 = vrot.slane %v12561, 7
  %v13059 = vor.u32 %v13057, %v13058
  %v13060 = vsel %vm3376, %v13055, %v13059
  %v13061 = vrot.slane %v12567, 6
  %v13062 = vrot.slane %v12570, 7
  %v13063 = vor.u32 %v13061, %v13062
  %v13064 = vsel %vm3376, %v13059, %v13063
  %v13066 = vshrl.u32 %v12826, 16
  %v13068 = vrot.slane %v13066, 6
  %v13069 = vshll.u32 %v12826, 16
  %v13071 = vrot.slane %v13069, 7
  %v13072 = vor.u32 %v13068, %v13071
  %v13073 = vsel %vm3376, %v13063, %v13072
  %v13075 = vshrl.u32 %v12827, 16
  %v13077 = vrot.slane %v13075, 6
  %v13078 = vshll.u32 %v12827, 16
  %v13080 = vrot.slane %v13078, 7
  %v13081 = vor.u32 %v13077, %v13080
  %v13082 = vsel %vm3376, %v13072, %v13081
  %13083 = vrot.lane.b32.xlu0 %v12920, 28
  %v13084 = vpop.permute.xlu0 %13083
  %13085 = vrot.lane.b32.xlu0 %v12924, 28
  %v13086 = vpop.permute.xlu0 %13085
  %13087 = vrot.lane.b32.xlu0 %v12928, 28
  %v13088 = vpop.permute.xlu0 %13087
  %13089 = vrot.lane.b32.xlu0 %v12932, 28
  %v13090 = vpop.permute.xlu0 %13089
  %13091 = vrot.lane.b32.xlu0 %v12936, 28
  %v13092 = vpop.permute.xlu0 %13091
  %13093 = vrot.lane.b32.xlu0 %v12940, 28
  %v13094 = vpop.permute.xlu0 %13093
  %13095 = vrot.lane.b32.xlu0 %v12944, 28
  %v13096 = vpop.permute.xlu0 %13095
  %13097 = vrot.lane.b32.xlu0 %v12948, 28
  %v13098 = vpop.permute.xlu0 %13097
  %13099 = vrot.lane.b32.xlu0 %v12952, 28
  %v13100 = vpop.permute.xlu0 %13099
  %13101 = vrot.lane.b32.xlu0 %v12956, 28
  %v13102 = vpop.permute.xlu0 %13101
  %13103 = vrot.lane.b32.xlu0 %v12960, 28
  %v13104 = vpop.permute.xlu0 %13103
  %13105 = vrot.lane.b32.xlu0 %v12964, 28
  %v13106 = vpop.permute.xlu0 %13105
  %13107 = vrot.lane.b32.xlu0 %v12968, 28
  %v13108 = vpop.permute.xlu0 %13107
  %13109 = vrot.lane.b32.xlu0 %v12972, 28
  %v13110 = vpop.permute.xlu0 %13109
  %13111 = vrot.lane.b32.xlu0 %v12976, 28
  %v13112 = vpop.permute.xlu0 %13111
  %13113 = vrot.lane.b32.xlu0 %v12980, 28
  %v13114 = vpop.permute.xlu0 %13113
  %13115 = vrot.lane.b32.xlu0 %v12984, 28
  %v13116 = vpop.permute.xlu0 %13115
  %13117 = vrot.lane.b32.xlu0 %v12988, 28
  %v13118 = vpop.permute.xlu0 %13117
  %13119 = vrot.lane.b32.xlu0 %v12992, 28
  %v13120 = vpop.permute.xlu0 %13119
  %13121 = vrot.lane.b32.xlu0 %v12996, 28
  %v13122 = vpop.permute.xlu0 %13121
  %13123 = vrot.lane.b32.xlu0 %v13000, 28
  %v13124 = vpop.permute.xlu0 %13123
  %13125 = vrot.lane.b32.xlu0 %v13004, 28
  %v13126 = vpop.permute.xlu0 %13125
  %13127 = vrot.lane.b32.xlu0 %v13008, 28
  %v13128 = vpop.permute.xlu0 %13127
  %13129 = vrot.lane.b32.xlu0 %v13012, 28
  %v13130 = vpop.permute.xlu0 %13129
  %13131 = vrot.lane.b32.xlu0 %v13016, 28
  %v13132 = vpop.permute.xlu0 %13131
  %13133 = vrot.lane.b32.xlu0 %v13020, 28
  %v13134 = vpop.permute.xlu0 %13133
  %13135 = vrot.lane.b32.xlu0 %v13024, 28
  %v13136 = vpop.permute.xlu0 %13135
  %13137 = vrot.lane.b32.xlu0 %v13028, 28
  %v13138 = vpop.permute.xlu0 %13137
  %13139 = vrot.lane.b32.xlu0 %v13032, 28
  %v13140 = vpop.permute.xlu0 %13139
  %13141 = vrot.lane.b32.xlu0 %v13036, 28
  %v13142 = vpop.permute.xlu0 %13141
  %13143 = vrot.lane.b32.xlu0 %v13040, 28
  %v13144 = vpop.permute.xlu0 %13143
  %13145 = vrot.lane.b32.xlu0 %v13044, 28
  %v13146 = vpop.permute.xlu0 %13145
  %13147 = vrot.lane.b32.xlu0 %v13048, 28
  %v13148 = vpop.permute.xlu0 %13147
  %13149 = vrot.lane.b32.xlu0 %v13052, 28
  %v13150 = vpop.permute.xlu0 %13149
  %13151 = vrot.lane.b32.xlu0 %v13056, 28
  %v13152 = vpop.permute.xlu0 %13151
  %13153 = vrot.lane.b32.xlu0 %v13060, 28
  %v13154 = vpop.permute.xlu0 %13153
  %13155 = vrot.lane.b32.xlu0 %v13064, 28
  %v13156 = vpop.permute.xlu0 %13155
  %13157 = vrot.lane.b32.xlu0 %v13073, 28
  %v13158 = vpop.permute.xlu0 %13157
  %13159 = vrot.lane.b32.xlu0 %v13082, 28
  %v13160 = vpop.permute.xlu0 %13159
  %v13162 = vunpack.c.l.b16 %v11356
  %v13163 = vpack.c.b16 %v13162, %v13162
  %v13164 = vrot.slane %v12912, 7
  %v13165 = vrot.slane %v12197, 7
  %v13166 = vsel %vm3628, %v13164, %v13165
  %v13167 = vrot.slane %v12198, 7
  %v13168 = vsel %vm3628, %v13165, %v13167
  %v13169 = vrot.slane %v12199, 7
  %v13170 = vsel %vm3628, %v13167, %v13169
  %v13171 = vrot.slane %v12200, 7
  %v13172 = vsel %vm3628, %v13169, %v13171
  %v13173 = vrot.slane %v12201, 7
  %v13174 = vsel %vm3628, %v13171, %v13173
  %v13175 = vrot.slane %v12202, 7
  %v13176 = vsel %vm3628, %v13173, %v13175
  %v13177 = vrot.slane %v12203, 7
  %v13178 = vsel %vm3628, %v13175, %v13177
  %v13179 = vrot.slane %v12204, 7
  %v13180 = vsel %vm3628, %v13177, %v13179
  %v13181 = vrot.slane %v12205, 7
  %v13182 = vsel %vm3628, %v13179, %v13181
  %v13183 = vrot.slane %v12206, 7
  %v13184 = vsel %vm3628, %v13181, %v13183
  %v13185 = vrot.slane %v12207, 7
  %v13186 = vsel %vm3628, %v13183, %v13185
  %v13187 = vrot.slane %v12208, 7
  %v13188 = vsel %vm3628, %v13185, %v13187
  %v13189 = vrot.slane %v12209, 7
  %v13190 = vsel %vm3628, %v13187, %v13189
  %v13191 = vrot.slane %v12210, 7
  %v13192 = vsel %vm3628, %v13189, %v13191
  %v13193 = vrot.slane %v12211, 7
  %v13194 = vsel %vm3628, %v13191, %v13193
  %v13195 = vrot.slane %v12212, 7
  %v13196 = vsel %vm3628, %v13193, %v13195
  %v13197 = vrot.slane %v12213, 7
  %v13198 = vsel %vm3628, %v13195, %v13197
  %v13199 = vrot.slane %v12214, 7
  %v13200 = vsel %vm3628, %v13197, %v13199
  %v13201 = vrot.slane %v12215, 7
  %v13202 = vsel %vm3628, %v13199, %v13201
  %v13203 = vrot.slane %v12216, 7
  %v13204 = vsel %vm3628, %v13201, %v13203
  %v13205 = vrot.slane %v12217, 7
  %v13206 = vsel %vm3628, %v13203, %v13205
  %v13207 = vrot.slane %v12218, 7
  %v13208 = vsel %vm3628, %v13205, %v13207
  %v13209 = vrot.slane %v12219, 7
  %v13210 = vsel %vm3628, %v13207, %v13209
  %v13211 = vrot.slane %v12220, 7
  %v13212 = vsel %vm3628, %v13209, %v13211
  %v13213 = vrot.slane %v12221, 7
  %v13214 = vsel %vm3628, %v13211, %v13213
  %v13215 = vrot.slane %v12222, 7
  %v13216 = vsel %vm3628, %v13213, %v13215
  %v13217 = vrot.slane %v12223, 7
  %v13218 = vsel %vm3628, %v13215, %v13217
  %v13219 = vrot.slane %v12224, 7
  %v13220 = vsel %vm3628, %v13217, %v13219
  %v13221 = vrot.slane %v12225, 7
  %v13222 = vsel %vm3628, %v13219, %v13221
  %v13223 = vrot.slane %v12226, 7
  %v13224 = vsel %vm3628, %v13221, %v13223
  %v13225 = vrot.slane %v12227, 7
  %v13226 = vsel %vm3628, %v13223, %v13225
  %v13227 = vrot.slane %v12228, 7
  %v13228 = vsel %vm3628, %v13225, %v13227
  %v13229 = vrot.slane %v12229, 7
  %v13230 = vsel %vm3628, %v13227, %v13229
  %v13231 = vrot.slane %v12230, 7
  %v13232 = vsel %vm3628, %v13229, %v13231
  %v13233 = vrot.slane %v12231, 7
  %v13234 = vsel %vm3628, %v13231, %v13233
  %v13235 = vrot.slane %v12232, 7
  %v13236 = vsel %vm3628, %v13233, %v13235
  %v13237 = vrot.slane %v12826, 7
  %v13238 = vsel %vm3628, %v13235, %v13237
  %v13239 = vrot.slane %v13163, 7
  %v13240 = vsel %vm3628, %v13237, %v13239
  %13241 = vrot.lane.b32.xlu0 %v13164, 32
  %v13242 = vpop.permute.xlu0 %13241
  %13243 = vrot.lane.b32.xlu0 %v13166, 32
  %v13244 = vpop.permute.xlu0 %13243
  %13245 = vrot.lane.b32.xlu0 %v13168, 32
  %v13246 = vpop.permute.xlu0 %13245
  %13247 = vrot.lane.b32.xlu0 %v13170, 32
  %v13248 = vpop.permute.xlu0 %13247
  %13249 = vrot.lane.b32.xlu0 %v13172, 32
  %v13250 = vpop.permute.xlu0 %13249
  %13251 = vrot.lane.b32.xlu0 %v13174, 32
  %v13252 = vpop.permute.xlu0 %13251
  %13253 = vrot.lane.b32.xlu0 %v13176, 32
  %v13254 = vpop.permute.xlu0 %13253
  %13255 = vrot.lane.b32.xlu0 %v13178, 32
  %v13256 = vpop.permute.xlu0 %13255
  %13257 = vrot.lane.b32.xlu0 %v13180, 32
  %v13258 = vpop.permute.xlu0 %13257
  %13259 = vrot.lane.b32.xlu0 %v13182, 32
  %v13260 = vpop.permute.xlu0 %13259
  %13261 = vrot.lane.b32.xlu0 %v13184, 32
  %v13262 = vpop.permute.xlu0 %13261
  %13263 = vrot.lane.b32.xlu0 %v13186, 32
  %v13264 = vpop.permute.xlu0 %13263
  %13265 = vrot.lane.b32.xlu0 %v13188, 32
  %v13266 = vpop.permute.xlu0 %13265
  %13267 = vrot.lane.b32.xlu0 %v13190, 32
  %v13268 = vpop.permute.xlu0 %13267
  %13269 = vrot.lane.b32.xlu0 %v13192, 32
  %v13270 = vpop.permute.xlu0 %13269
  %13271 = vrot.lane.b32.xlu0 %v13194, 32
  %v13272 = vpop.permute.xlu0 %13271
  %13273 = vrot.lane.b32.xlu0 %v13196, 32
  %v13274 = vpop.permute.xlu0 %13273
  %13275 = vrot.lane.b32.xlu0 %v13198, 32
  %v13276 = vpop.permute.xlu0 %13275
  %13277 = vrot.lane.b32.xlu0 %v13200, 32
  %v13278 = vpop.permute.xlu0 %13277
  %13279 = vrot.lane.b32.xlu0 %v13202, 32
  %v13280 = vpop.permute.xlu0 %13279
  %13281 = vrot.lane.b32.xlu0 %v13204, 32
  %v13282 = vpop.permute.xlu0 %13281
  %13283 = vrot.lane.b32.xlu0 %v13206, 32
  %v13284 = vpop.permute.xlu0 %13283
  %13285 = vrot.lane.b32.xlu0 %v13208, 32
  %v13286 = vpop.permute.xlu0 %13285
  %13287 = vrot.lane.b32.xlu0 %v13210, 32
  %v13288 = vpop.permute.xlu0 %13287
  %13289 = vrot.lane.b32.xlu0 %v13212, 32
  %v13290 = vpop.permute.xlu0 %13289
  %13291 = vrot.lane.b32.xlu0 %v13214, 32
  %v13292 = vpop.permute.xlu0 %13291
  %13293 = vrot.lane.b32.xlu0 %v13216, 32
  %v13294 = vpop.permute.xlu0 %13293
  %13295 = vrot.lane.b32.xlu0 %v13218, 32
  %v13296 = vpop.permute.xlu0 %13295
  %13297 = vrot.lane.b32.xlu0 %v13220, 32
  %v13298 = vpop.permute.xlu0 %13297
  %13299 = vrot.lane.b32.xlu0 %v13222, 32
  %v13300 = vpop.permute.xlu0 %13299
  %13301 = vrot.lane.b32.xlu0 %v13224, 32
  %v13302 = vpop.permute.xlu0 %13301
  %13303 = vrot.lane.b32.xlu0 %v13226, 32
  %v13304 = vpop.permute.xlu0 %13303
  %13305 = vrot.lane.b32.xlu0 %v13228, 32
  %v13306 = vpop.permute.xlu0 %13305
  %13307 = vrot.lane.b32.xlu0 %v13230, 32
  %v13308 = vpop.permute.xlu0 %13307
  %13309 = vrot.lane.b32.xlu0 %v13232, 32
  %v13310 = vpop.permute.xlu0 %13309
  %13311 = vrot.lane.b32.xlu0 %v13234, 32
  %v13312 = vpop.permute.xlu0 %13311
  %13313 = vrot.lane.b32.xlu0 %v13236, 32
  %v13314 = vpop.permute.xlu0 %13313
  %13315 = vrot.lane.b32.xlu0 %v13238, 32
  %v13316 = vpop.permute.xlu0 %13315
  %13317 = vrot.lane.b32.xlu0 %v13240, 32
  %v13318 = vpop.permute.xlu0 %13317
  %v13321 = vsel %vm3784, %v11511, %v11865
  %v13323 = vsel %vm3784, %v11512, %v11867
  %v13325 = vsel %vm3784, %v11513, %v11869
  %v13327 = vsel %vm3784, %v11514, %v11871
  %v13329 = vsel %vm3784, %v11515, %v11873
  %v13331 = vsel %vm3784, %v11516, %v11875
  %v13333 = vsel %vm3784, %v11517, %v11877
  %v13335 = vsel %vm3784, %v11518, %v11879
  %v13337 = vsel %vm3784, %v11519, %v11881
  %v13339 = vsel %vm3784, %v11520, %v11883
  %v13341 = vsel %vm3784, %v11521, %v11885
  %v13343 = vsel %vm3784, %v11522, %v11887
  %v13345 = vsel %vm3784, %v11523, %v11889
  %v13347 = vsel %vm3784, %v11524, %v11891
  %v13349 = vsel %vm3784, %v11525, %v11893
  %v13351 = vsel %vm3784, %v11526, %v11895
  %v13353 = vsel %vm3784, %v11527, %v11897
  %v13355 = vsel %vm3784, %v11528, %v11899
  %v13357 = vsel %vm3784, %v11529, %v11901
  %v13359 = vsel %vm3784, %v11530, %v11903
  %v13361 = vsel %vm3784, %v11531, %v11905
  %v13363 = vsel %vm3784, %v11532, %v11907
  %v13365 = vsel %vm3784, %v11533, %v11909
  %v13367 = vsel %vm3784, %v11534, %v11911
  %v13369 = vsel %vm3784, %v11535, %v11913
  %v13371 = vsel %vm3784, %v11536, %v11915
  %v13373 = vsel %vm3784, %v11537, %v11917
  %v13375 = vsel %vm3784, %v11538, %v11919
  %v13377 = vsel %vm3784, %v11539, %v11921
  %v13379 = vsel %vm3784, %v11540, %v11923
  %v13381 = vsel %vm3784, %v11541, %v11925
  %v13383 = vsel %vm3784, %v11542, %v11927
  %v13385 = vsel %vm3784, %v11543, %v11929
  %v13387 = vsel %vm3784, %v11544, %v11931
  %v13389 = vsel %vm3784, %v11545, %v11933
  %v13391 = vsel %vm3784, %v11546, %v11935
  %v13393 = vsel %vm3784, %v11547, %v11937
  %v13395 = vsel %vm3784, %v11548, %v11939
  %v13397 = vsel %vm3784, %v11549, %v11941
  %v13399 = vsel %vm3864, %v13321, %v12023
  %v13401 = vsel %vm3864, %v13323, %v12025
  %v13403 = vsel %vm3864, %v13325, %v12027
  %v13405 = vsel %vm3864, %v13327, %v12029
  %v13407 = vsel %vm3864, %v13329, %v12031
  %v13409 = vsel %vm3864, %v13331, %v12033
  %v13411 = vsel %vm3864, %v13333, %v12035
  %v13413 = vsel %vm3864, %v13335, %v12037
  %v13415 = vsel %vm3864, %v13337, %v12039
  %v13417 = vsel %vm3864, %v13339, %v12041
  %v13419 = vsel %vm3864, %v13341, %v12043
  %v13421 = vsel %vm3864, %v13343, %v12045
  %v13423 = vsel %vm3864, %v13345, %v12047
  %v13425 = vsel %vm3864, %v13347, %v12049
  %v13427 = vsel %vm3864, %v13349, %v12051
  %v13429 = vsel %vm3864, %v13351, %v12053
  %v13431 = vsel %vm3864, %v13353, %v12055
  %v13433 = vsel %vm3864, %v13355, %v12057
  %v13435 = vsel %vm3864, %v13357, %v12059
  %v13437 = vsel %vm3864, %v13359, %v12061
  %v13439 = vsel %vm3864, %v13361, %v12063
  %v13441 = vsel %vm3864, %v13363, %v12065
  %v13443 = vsel %vm3864, %v13365, %v12067
  %v13445 = vsel %vm3864, %v13367, %v12069
  %v13447 = vsel %vm3864, %v13369, %v12071
  %v13449 = vsel %vm3864, %v13371, %v12073
  %v13451 = vsel %vm3864, %v13373, %v12075
  %v13453 = vsel %vm3864, %v13375, %v12077
  %v13455 = vsel %vm3864, %v13377, %v12079
  %v13457 = vsel %vm3864, %v13379, %v12081
  %v13459 = vsel %vm3864, %v13381, %v12083
  %v13461 = vsel %vm3864, %v13383, %v12085
  %v13463 = vsel %vm3864, %v13385, %v12087
  %v13465 = vsel %vm3864, %v13387, %v12089
  %v13467 = vsel %vm3864, %v13389, %v12091
  %v13469 = vsel %vm3864, %v13391, %v12093
  %v13471 = vsel %vm3864, %v13393, %v12095
  %v13473 = vsel %vm3864, %v13395, %v12097
  %v13475 = vsel %vm3864, %v13397, %v12099
  %v13477 = vsel %vm3943, %v13399, %v12118
  %v13479 = vsel %vm3943, %v13401, %v12120
  %v13481 = vsel %vm3943, %v13403, %v12122
  %v13483 = vsel %vm3943, %v13405, %v12124
  %v13485 = vsel %vm3943, %v13407, %v12126
  %v13487 = vsel %vm3943, %v13409, %v12128
  %v13489 = vsel %vm3943, %v13411, %v12130
  %v13491 = vsel %vm3943, %v13413, %v12132
  %v13493 = vsel %vm3943, %v13415, %v12134
  %v13495 = vsel %vm3943, %v13417, %v12136
  %v13497 = vsel %vm3943, %v13419, %v12138
  %v13499 = vsel %vm3943, %v13421, %v12140
  %v13501 = vsel %vm3943, %v13423, %v12142
  %v13503 = vsel %vm3943, %v13425, %v12144
  %v13505 = vsel %vm3943, %v13427, %v12146
  %v13507 = vsel %vm3943, %v13429, %v12148
  %v13509 = vsel %vm3943, %v13431, %v12150
  %v13511 = vsel %vm3943, %v13433, %v12152
  %v13513 = vsel %vm3943, %v13435, %v12154
  %v13515 = vsel %vm3943, %v13437, %v12156
  %v13517 = vsel %vm3943, %v13439, %v12158
  %v13519 = vsel %vm3943, %v13441, %v12160
  %v13521 = vsel %vm3943, %v13443, %v12162
  %v13523 = vsel %vm3943, %v13445, %v12164
  %v13525 = vsel %vm3943, %v13447, %v12166
  %v13527 = vsel %vm3943, %v13449, %v12168
  %v13529 = vsel %vm3943, %v13451, %v12170
  %v13531 = vsel %vm3943, %v13453, %v12172
  %v13533 = vsel %vm3943, %v13455, %v12174
  %v13535 = vsel %vm3943, %v13457, %v12176
  %v13537 = vsel %vm3943, %v13459, %v12178
  %v13539 = vsel %vm3943, %v13461, %v12180
  %v13541 = vsel %vm3943, %v13463, %v12182
  %v13543 = vsel %vm3943, %v13465, %v12184
  %v13545 = vsel %vm3943, %v13467, %v12186
  %v13547 = vsel %vm3943, %v13469, %v12188
  %v13549 = vsel %vm3943, %v13471, %v12190
  %v13551 = vsel %vm3943, %v13473, %v12192
  %v13553 = vsel %vm3943, %v13475, %v12194
  %v13555 = vsel %vm4022, %v13477, %v12585
  %v13557 = vsel %vm4022, %v13479, %v12587
  %v13559 = vsel %vm4022, %v13481, %v12589
  %v13561 = vsel %vm4022, %v13483, %v12591
  %v13563 = vsel %vm4022, %v13485, %v12593
  %v13565 = vsel %vm4022, %v13487, %v12595
  %v13567 = vsel %vm4022, %v13489, %v12597
  %v13569 = vsel %vm4022, %v13491, %v12599
  %v13571 = vsel %vm4022, %v13493, %v12601
  %v13573 = vsel %vm4022, %v13495, %v12603
  %v13575 = vsel %vm4022, %v13497, %v12605
  %v13577 = vsel %vm4022, %v13499, %v12607
  %v13579 = vsel %vm4022, %v13501, %v12609
  %v13581 = vsel %vm4022, %v13503, %v12611
  %v13583 = vsel %vm4022, %v13505, %v12613
  %v13585 = vsel %vm4022, %v13507, %v12615
  %v13587 = vsel %vm4022, %v13509, %v12617
  %v13589 = vsel %vm4022, %v13511, %v12619
  %v13591 = vsel %vm4022, %v13513, %v12621
  %v13593 = vsel %vm4022, %v13515, %v12623
  %v13595 = vsel %vm4022, %v13517, %v12625
  %v13597 = vsel %vm4022, %v13519, %v12627
  %v13599 = vsel %vm4022, %v13521, %v12629
  %v13601 = vsel %vm4022, %v13523, %v12631
  %v13603 = vsel %vm4022, %v13525, %v12633
  %v13605 = vsel %vm4022, %v13527, %v12635
  %v13607 = vsel %vm4022, %v13529, %v12637
  %v13609 = vsel %vm4022, %v13531, %v12639
  %v13611 = vsel %vm4022, %v13533, %v12641
  %v13613 = vsel %vm4022, %v13535, %v12643
  %v13615 = vsel %vm4022, %v13537, %v12645
  %v13617 = vsel %vm4022, %v13539, %v12647
  %v13619 = vsel %vm4022, %v13541, %v12649
  %v13621 = vsel %vm4022, %v13543, %v12651
  %v13623 = vsel %vm4022, %v13545, %v12653
  %v13625 = vsel %vm4022, %v13547, %v12655
  %v13627 = vsel %vm4022, %v13549, %v12657
  %v13629 = vsel %vm4022, %v13551, %v12659
  %v13631 = vsel %vm4022, %v13553, %v12661
  %v13633 = vsel %vm4101, %v13555, %v12743
  %v13635 = vsel %vm4101, %v13557, %v12745
  %v13637 = vsel %vm4101, %v13559, %v12747
  %v13639 = vsel %vm4101, %v13561, %v12749
  %v13641 = vsel %vm4101, %v13563, %v12751
  %v13643 = vsel %vm4101, %v13565, %v12753
  %v13645 = vsel %vm4101, %v13567, %v12755
  %v13647 = vsel %vm4101, %v13569, %v12757
  %v13649 = vsel %vm4101, %v13571, %v12759
  %v13651 = vsel %vm4101, %v13573, %v12761
  %v13653 = vsel %vm4101, %v13575, %v12763
  %v13655 = vsel %vm4101, %v13577, %v12765
  %v13657 = vsel %vm4101, %v13579, %v12767
  %v13659 = vsel %vm4101, %v13581, %v12769
  %v13661 = vsel %vm4101, %v13583, %v12771
  %v13663 = vsel %vm4101, %v13585, %v12773
  %v13665 = vsel %vm4101, %v13587, %v12775
  %v13667 = vsel %vm4101, %v13589, %v12777
  %v13669 = vsel %vm4101, %v13591, %v12779
  %v13671 = vsel %vm4101, %v13593, %v12781
  %v13673 = vsel %vm4101, %v13595, %v12783
  %v13675 = vsel %vm4101, %v13597, %v12785
  %v13677 = vsel %vm4101, %v13599, %v12787
  %v13679 = vsel %vm4101, %v13601, %v12789
  %v13681 = vsel %vm4101, %v13603, %v12791
  %v13683 = vsel %vm4101, %v13605, %v12793
  %v13685 = vsel %vm4101, %v13607, %v12795
  %v13687 = vsel %vm4101, %v13609, %v12797
  %v13689 = vsel %vm4101, %v13611, %v12799
  %v13691 = vsel %vm4101, %v13613, %v12801
  %v13693 = vsel %vm4101, %v13615, %v12803
  %v13695 = vsel %vm4101, %v13617, %v12805
  %v13697 = vsel %vm4101, %v13619, %v12807
  %v13699 = vsel %vm4101, %v13621, %v12809
  %v13701 = vsel %vm4101, %v13623, %v12811
  %v13703 = vsel %vm4101, %v13625, %v12813
  %v13705 = vsel %vm4101, %v13627, %v12815
  %v13707 = vsel %vm4101, %v13629, %v12817
  %v13709 = vsel %vm4101, %v13631, %v12819
  %v13711 = vsel %vm4180, %v13633, %v12833
  %v13713 = vsel %vm4180, %v13635, %v12835
  %v13715 = vsel %vm4180, %v13637, %v12837
  %v13717 = vsel %vm4180, %v13639, %v12839
  %v13719 = vsel %vm4180, %v13641, %v12841
  %v13721 = vsel %vm4180, %v13643, %v12843
  %v13723 = vsel %vm4180, %v13645, %v12845
  %v13725 = vsel %vm4180, %v13647, %v12847
  %v13727 = vsel %vm4180, %v13649, %v12849
  %v13729 = vsel %vm4180, %v13651, %v12851
  %v13731 = vsel %vm4180, %v13653, %v12853
  %v13733 = vsel %vm4180, %v13655, %v12855
  %v13735 = vsel %vm4180, %v13657, %v12857
  %v13737 = vsel %vm4180, %v13659, %v12859
  %v13739 = vsel %vm4180, %v13661, %v12861
  %v13741 = vsel %vm4180, %v13663, %v12863
  %v13743 = vsel %vm4180, %v13665, %v12865
  %v13745 = vsel %vm4180, %v13667, %v12867
  %v13747 = vsel %vm4180, %v13669, %v12869
  %v13749 = vsel %vm4180, %v13671, %v12871
  %v13751 = vsel %vm4180, %v13673, %v12873
  %v13753 = vsel %vm4180, %v13675, %v12875
  %v13755 = vsel %vm4180, %v13677, %v12877
  %v13757 = vsel %vm4180, %v13679, %v12879
  %v13759 = vsel %vm4180, %v13681, %v12881
  %v13761 = vsel %vm4180, %v13683, %v12883
  %v13763 = vsel %vm4180, %v13685, %v12885
  %v13765 = vsel %vm4180, %v13687, %v12887
  %v13767 = vsel %vm4180, %v13689, %v12889
  %v13769 = vsel %vm4180, %v13691, %v12891
  %v13771 = vsel %vm4180, %v13693, %v12893
  %v13773 = vsel %vm4180, %v13695, %v12895
  %v13775 = vsel %vm4180, %v13697, %v12897
  %v13777 = vsel %vm4180, %v13699, %v12899
  %v13779 = vsel %vm4180, %v13701, %v12901
  %v13781 = vsel %vm4180, %v13703, %v12903
  %v13783 = vsel %vm4180, %v13705, %v12905
  %v13785 = vsel %vm4180, %v13707, %v12907
  %v13787 = vsel %vm4180, %v13709, %v12909
  %v13789 = vsel %vm4259, %v13711, %v13084
  %v13791 = vsel %vm4259, %v13713, %v13086
  %v13793 = vsel %vm4259, %v13715, %v13088
  %v13795 = vsel %vm4259, %v13717, %v13090
  %v13797 = vsel %vm4259, %v13719, %v13092
  %v13799 = vsel %vm4259, %v13721, %v13094
  %v13801 = vsel %vm4259, %v13723, %v13096
  %v13803 = vsel %vm4259, %v13725, %v13098
  %v13805 = vsel %vm4259, %v13727, %v13100
  %v13807 = vsel %vm4259, %v13729, %v13102
  %v13809 = vsel %vm4259, %v13731, %v13104
  %v13811 = vsel %vm4259, %v13733, %v13106
  %v13813 = vsel %vm4259, %v13735, %v13108
  %v13815 = vsel %vm4259, %v13737, %v13110
  %v13817 = vsel %vm4259, %v13739, %v13112
  %v13819 = vsel %vm4259, %v13741, %v13114
  %v13821 = vsel %vm4259, %v13743, %v13116
  %v13823 = vsel %vm4259, %v13745, %v13118
  %v13825 = vsel %vm4259, %v13747, %v13120
  %v13827 = vsel %vm4259, %v13749, %v13122
  %v13829 = vsel %vm4259, %v13751, %v13124
  %v13831 = vsel %vm4259, %v13753, %v13126
  %v13833 = vsel %vm4259, %v13755, %v13128
  %v13835 = vsel %vm4259, %v13757, %v13130
  %v13837 = vsel %vm4259, %v13759, %v13132
  %v13839 = vsel %vm4259, %v13761, %v13134
  %v13841 = vsel %vm4259, %v13763, %v13136
  %v13843 = vsel %vm4259, %v13765, %v13138
  %v13845 = vsel %vm4259, %v13767, %v13140
  %v13847 = vsel %vm4259, %v13769, %v13142
  %v13849 = vsel %vm4259, %v13771, %v13144
  %v13851 = vsel %vm4259, %v13773, %v13146
  %v13853 = vsel %vm4259, %v13775, %v13148
  %v13855 = vsel %vm4259, %v13777, %v13150
  %v13857 = vsel %vm4259, %v13779, %v13152
  %v13859 = vsel %vm4259, %v13781, %v13154
  %v13861 = vsel %vm4259, %v13783, %v13156
  %v13863 = vsel %vm4259, %v13785, %v13158
  %v13865 = vsel %vm4259, %v13787, %v13160
  %v13867 = vsel %vm4338, %v13789, %v13242
  %v13869 = vsel %vm4338, %v13791, %v13244
  %v13871 = vsel %vm4338, %v13793, %v13246
  %v13873 = vsel %vm4338, %v13795, %v13248
  %v13875 = vsel %vm4338, %v13797, %v13250
  %v13877 = vsel %vm4338, %v13799, %v13252
  %v13879 = vsel %vm4338, %v13801, %v13254
  %v13881 = vsel %vm4338, %v13803, %v13256
  %v13883 = vsel %vm4338, %v13805, %v13258
  %v13885 = vsel %vm4338, %v13807, %v13260
  %v13887 = vsel %vm4338, %v13809, %v13262
  %v13889 = vsel %vm4338, %v13811, %v13264
  %v13891 = vsel %vm4338, %v13813, %v13266
  %v13893 = vsel %vm4338, %v13815, %v13268
  %v13895 = vsel %vm4338, %v13817, %v13270
  %v13897 = vsel %vm4338, %v13819, %v13272
  %v13899 = vsel %vm4338, %v13821, %v13274
  %v13901 = vsel %vm4338, %v13823, %v13276
  %v13903 = vsel %vm4338, %v13825, %v13278
  %v13905 = vsel %vm4338, %v13827, %v13280
  %v13907 = vsel %vm4338, %v13829, %v13282
  %v13909 = vsel %vm4338, %v13831, %v13284
  %v13911 = vsel %vm4338, %v13833, %v13286
  %v13913 = vsel %vm4338, %v13835, %v13288
  %v13915 = vsel %vm4338, %v13837, %v13290
  %v13917 = vsel %vm4338, %v13839, %v13292
  %v13919 = vsel %vm4338, %v13841, %v13294
  %v13921 = vsel %vm4338, %v13843, %v13296
  %v13923 = vsel %vm4338, %v13845, %v13298
  %v13925 = vsel %vm4338, %v13847, %v13300
  %v13927 = vsel %vm4338, %v13849, %v13302
  %v13929 = vsel %vm4338, %v13851, %v13304
  %v13931 = vsel %vm4338, %v13853, %v13306
  %v13933 = vsel %vm4338, %v13855, %v13308
  %v13935 = vsel %vm4338, %v13857, %v13310
  %v13937 = vsel %vm4338, %v13859, %v13312
  %v13939 = vsel %vm4338, %v13861, %v13314
  %v13941 = vsel %vm4338, %v13863, %v13316
  %v13943 = vsel %vm4338, %v13865, %v13318
  %v13944 = vld [vmem:[%s7] sm:$0xf]
  %v13945 = vld [vmem:[%s7 + $0x4] sm:$0xf]
  %v13946 = vld [vmem:[%s7 + $0x8] sm:$0xf]
  %v13947 = vld [vmem:[%s7 + $0xc] sm:$0xf]
  %v13948 = vld [vmem:[%s7 + $0x10] sm:$0x3]
  %v13949 = vshrl.u32 %v13867, 16
  %v13951 = vrot.slane %v13949, 2
  %v13952 = vshll.u32 %v13867, 16
  %v13954 = vrot.slane %v13952, 3
  %v13955 = vor.u32 %v13951, %v13954
  %v13956 = vshrl.u32 %v13869, 16
  %v13958 = vrot.slane %v13956, 2
  %v13959 = vshll.u32 %v13869, 16
  %v13961 = vrot.slane %v13959, 3
  %v13962 = vor.u32 %v13958, %v13961
  %v13963 = vsel %vm4422, %v13955, %v13962
  %v13964 = vshrl.u32 %v13871, 16
  %v13966 = vrot.slane %v13964, 2
  %v13967 = vshll.u32 %v13871, 16
  %v13969 = vrot.slane %v13967, 3
  %v13970 = vor.u32 %v13966, %v13969
  %v13971 = vsel %vm4422, %v13962, %v13970
  %v13972 = vshrl.u32 %v13873, 16
  %v13974 = vrot.slane %v13972, 2
  %v13975 = vshll.u32 %v13873, 16
  %v13977 = vrot.slane %v13975, 3
  %v13978 = vor.u32 %v13974, %v13977
  %v13979 = vsel %vm4422, %v13970, %v13978
  %v13980 = vshrl.u32 %v13875, 16
  %v13982 = vrot.slane %v13980, 2
  %v13983 = vshll.u32 %v13875, 16
  %v13985 = vrot.slane %v13983, 3
  %v13986 = vor.u32 %v13982, %v13985
  %v13987 = vsel %vm4422, %v13978, %v13986
  %v13988 = vshrl.u32 %v13877, 16
  %v13990 = vrot.slane %v13988, 2
  %v13991 = vshll.u32 %v13877, 16
  %v13993 = vrot.slane %v13991, 3
  %v13994 = vor.u32 %v13990, %v13993
  %v13995 = vsel %vm4422, %v13986, %v13994
  %v13996 = vshrl.u32 %v13879, 16
  %v13998 = vrot.slane %v13996, 2
  %v13999 = vshll.u32 %v13879, 16
  %v14001 = vrot.slane %v13999, 3
  %v14002 = vor.u32 %v13998, %v14001
  %v14003 = vsel %vm4422, %v13994, %v14002
  %v14004 = vshrl.u32 %v13881, 16
  %v14006 = vrot.slane %v14004, 2
  %v14007 = vshll.u32 %v13881, 16
  %v14009 = vrot.slane %v14007, 3
  %v14010 = vor.u32 %v14006, %v14009
  %v14011 = vsel %vm4422, %v14002, %v14010
  %v14012 = vshrl.u32 %v13883, 16
  %v14014 = vrot.slane %v14012, 2
  %v14015 = vshll.u32 %v13883, 16
  %v14017 = vrot.slane %v14015, 3
  %v14018 = vor.u32 %v14014, %v14017
  %v14019 = vsel %vm4422, %v14010, %v14018
  %v14020 = vshrl.u32 %v13885, 16
  %v14022 = vrot.slane %v14020, 2
  %v14023 = vshll.u32 %v13885, 16
  %v14025 = vrot.slane %v14023, 3
  %v14026 = vor.u32 %v14022, %v14025
  %v14027 = vsel %vm4422, %v14018, %v14026
  %v14028 = vshrl.u32 %v13887, 16
  %v14030 = vrot.slane %v14028, 2
  %v14031 = vshll.u32 %v13887, 16
  %v14033 = vrot.slane %v14031, 3
  %v14034 = vor.u32 %v14030, %v14033
  %v14035 = vsel %vm4422, %v14026, %v14034
  %v14036 = vshrl.u32 %v13889, 16
  %v14038 = vrot.slane %v14036, 2
  %v14039 = vshll.u32 %v13889, 16
  %v14041 = vrot.slane %v14039, 3
  %v14042 = vor.u32 %v14038, %v14041
  %v14043 = vsel %vm4422, %v14034, %v14042
  %v14044 = vshrl.u32 %v13891, 16
  %v14046 = vrot.slane %v14044, 2
  %v14047 = vshll.u32 %v13891, 16
  %v14049 = vrot.slane %v14047, 3
  %v14050 = vor.u32 %v14046, %v14049
  %v14051 = vsel %vm4422, %v14042, %v14050
  %v14052 = vshrl.u32 %v13893, 16
  %v14054 = vrot.slane %v14052, 2
  %v14055 = vshll.u32 %v13893, 16
  %v14057 = vrot.slane %v14055, 3
  %v14058 = vor.u32 %v14054, %v14057
  %v14059 = vsel %vm4422, %v14050, %v14058
  %v14060 = vshrl.u32 %v13895, 16
  %v14062 = vrot.slane %v14060, 2
  %v14063 = vshll.u32 %v13895, 16
  %v14065 = vrot.slane %v14063, 3
  %v14066 = vor.u32 %v14062, %v14065
  %v14067 = vsel %vm4422, %v14058, %v14066
  %v14068 = vshrl.u32 %v13897, 16
  %v14070 = vrot.slane %v14068, 2
  %v14071 = vshll.u32 %v13897, 16
  %v14073 = vrot.slane %v14071, 3
  %v14074 = vor.u32 %v14070, %v14073
  %v14075 = vsel %vm4422, %v14066, %v14074
  %v14076 = vshrl.u32 %v13899, 16
  %v14078 = vrot.slane %v14076, 2
  %v14079 = vshll.u32 %v13899, 16
  %v14081 = vrot.slane %v14079, 3
  %v14082 = vor.u32 %v14078, %v14081
  %v14083 = vsel %vm4422, %v14074, %v14082
  %v14084 = vshrl.u32 %v13901, 16
  %v14086 = vrot.slane %v14084, 2
  %v14087 = vshll.u32 %v13901, 16
  %v14089 = vrot.slane %v14087, 3
  %v14090 = vor.u32 %v14086, %v14089
  %v14091 = vsel %vm4422, %v14082, %v14090
  %v14092 = vshrl.u32 %v13903, 16
  %v14094 = vrot.slane %v14092, 2
  %v14095 = vshll.u32 %v13903, 16
  %v14097 = vrot.slane %v14095, 3
  %v14098 = vor.u32 %v14094, %v14097
  %v14099 = vsel %vm4422, %v14090, %v14098
  %v14100 = vshrl.u32 %v13905, 16
  %v14102 = vrot.slane %v14100, 2
  %v14103 = vshll.u32 %v13905, 16
  %v14105 = vrot.slane %v14103, 3
  %v14106 = vor.u32 %v14102, %v14105
  %v14107 = vsel %vm4422, %v14098, %v14106
  %v14108 = vshrl.u32 %v13907, 16
  %v14110 = vrot.slane %v14108, 2
  %v14111 = vshll.u32 %v13907, 16
  %v14113 = vrot.slane %v14111, 3
  %v14114 = vor.u32 %v14110, %v14113
  %v14115 = vsel %vm4422, %v14106, %v14114
  %v14116 = vshrl.u32 %v13909, 16
  %v14118 = vrot.slane %v14116, 2
  %v14119 = vshll.u32 %v13909, 16
  %v14121 = vrot.slane %v14119, 3
  %v14122 = vor.u32 %v14118, %v14121
  %v14123 = vsel %vm4422, %v14114, %v14122
  %v14124 = vshrl.u32 %v13911, 16
  %v14126 = vrot.slane %v14124, 2
  %v14127 = vshll.u32 %v13911, 16
  %v14129 = vrot.slane %v14127, 3
  %v14130 = vor.u32 %v14126, %v14129
  %v14131 = vsel %vm4422, %v14122, %v14130
  %v14132 = vshrl.u32 %v13913, 16
  %v14134 = vrot.slane %v14132, 2
  %v14135 = vshll.u32 %v13913, 16
  %v14137 = vrot.slane %v14135, 3
  %v14138 = vor.u32 %v14134, %v14137
  %v14139 = vsel %vm4422, %v14130, %v14138
  %v14140 = vshrl.u32 %v13915, 16
  %v14142 = vrot.slane %v14140, 2
  %v14143 = vshll.u32 %v13915, 16
  %v14145 = vrot.slane %v14143, 3
  %v14146 = vor.u32 %v14142, %v14145
  %v14147 = vsel %vm4422, %v14138, %v14146
  %v14148 = vshrl.u32 %v13917, 16
  %v14150 = vrot.slane %v14148, 2
  %v14151 = vshll.u32 %v13917, 16
  %v14153 = vrot.slane %v14151, 3
  %v14154 = vor.u32 %v14150, %v14153
  %v14155 = vsel %vm4422, %v14146, %v14154
  %v14156 = vshrl.u32 %v13919, 16
  %v14158 = vrot.slane %v14156, 2
  %v14159 = vshll.u32 %v13919, 16
  %v14161 = vrot.slane %v14159, 3
  %v14162 = vor.u32 %v14158, %v14161
  %v14163 = vsel %vm4422, %v14154, %v14162
  %v14164 = vshrl.u32 %v13921, 16
  %v14166 = vrot.slane %v14164, 2
  %v14167 = vshll.u32 %v13921, 16
  %v14169 = vrot.slane %v14167, 3
  %v14170 = vor.u32 %v14166, %v14169
  %v14171 = vsel %vm4422, %v14162, %v14170
  %v14172 = vshrl.u32 %v13923, 16
  %v14174 = vrot.slane %v14172, 2
  %v14175 = vshll.u32 %v13923, 16
  %v14177 = vrot.slane %v14175, 3
  %v14178 = vor.u32 %v14174, %v14177
  %v14179 = vsel %vm4422, %v14170, %v14178
  %v14180 = vshrl.u32 %v13925, 16
  %v14182 = vrot.slane %v14180, 2
  %v14183 = vshll.u32 %v13925, 16
  %v14185 = vrot.slane %v14183, 3
  %v14186 = vor.u32 %v14182, %v14185
  %v14187 = vsel %vm4422, %v14178, %v14186
  %v14188 = vshrl.u32 %v13927, 16
  %v14190 = vrot.slane %v14188, 2
  %v14191 = vshll.u32 %v13927, 16
  %v14193 = vrot.slane %v14191, 3
  %v14194 = vor.u32 %v14190, %v14193
  %v14195 = vsel %vm4422, %v14186, %v14194
  %v14196 = vshrl.u32 %v13929, 16
  %v14198 = vrot.slane %v14196, 2
  %v14199 = vshll.u32 %v13929, 16
  %v14201 = vrot.slane %v14199, 3
  %v14202 = vor.u32 %v14198, %v14201
  %v14203 = vsel %vm4422, %v14194, %v14202
  %v14204 = vshrl.u32 %v13931, 16
  %v14206 = vrot.slane %v14204, 2
  %v14207 = vshll.u32 %v13931, 16
  %v14209 = vrot.slane %v14207, 3
  %v14210 = vor.u32 %v14206, %v14209
  %v14211 = vsel %vm4422, %v14202, %v14210
  %v14212 = vshrl.u32 %v13933, 16
  %v14214 = vrot.slane %v14212, 2
  %v14215 = vshll.u32 %v13933, 16
  %v14217 = vrot.slane %v14215, 3
  %v14218 = vor.u32 %v14214, %v14217
  %v14219 = vsel %vm4422, %v14210, %v14218
  %v14220 = vshrl.u32 %v13935, 16
  %v14222 = vrot.slane %v14220, 2
  %v14223 = vshll.u32 %v13935, 16
  %v14225 = vrot.slane %v14223, 3
  %v14226 = vor.u32 %v14222, %v14225
  %v14227 = vsel %vm4422, %v14218, %v14226
  %v14228 = vshrl.u32 %v13937, 16
  %v14230 = vrot.slane %v14228, 2
  %v14231 = vshll.u32 %v13937, 16
  %v14233 = vrot.slane %v14231, 3
  %v14234 = vor.u32 %v14230, %v14233
  %v14235 = vsel %vm4422, %v14226, %v14234
  %v14236 = vshrl.u32 %v13939, 16
  %v14238 = vrot.slane %v14236, 2
  %v14239 = vshll.u32 %v13939, 16
  %v14241 = vrot.slane %v14239, 3
  %v14242 = vor.u32 %v14238, %v14241
  %v14243 = vsel %vm4422, %v14234, %v14242
  %v14244 = vshrl.u32 %v13941, 16
  %v14246 = vrot.slane %v14244, 2
  %v14247 = vshll.u32 %v13941, 16
  %v14249 = vrot.slane %v14247, 3
  %v14250 = vor.u32 %v14246, %v14249
  %v14251 = vsel %vm4422, %v14242, %v14250
  %v14252 = vshrl.u32 %v13943, 16
  %v14254 = vrot.slane %v14252, 2
  %v14255 = vshll.u32 %v13943, 16
  %v14257 = vrot.slane %v14255, 3
  %v14258 = vor.u32 %v14254, %v14257
  %v14259 = vsel %vm4422, %v14250, %v14258
  %v14265 = vunpack.c.l.b16 %v13944
  %v14266 = vunpack.c.l.b16 %v13945
  %v14267 = vunpack.c.l.b16 %v13946
  %v14268 = vunpack.c.l.b16 %v13947
  %v14269 = vunpack.c.l.b16 %v13948
  %v14270 = vpack.c.b16 %v14266, %v14265
  %v14271 = vpack.c.b16 %v14268, %v14267
  %v14272 = vpack.c.b16 %v14269, %v14269
  %v14276 = vsel %vm4749, %v13963, 0
  %v14279 = vsel %vm4749, %v13971, 0
  %v14282 = vsel %vm4749, %v13979, 0
  %v14285 = vsel %vm4749, %v13987, 0
  %v14288 = vsel %vm4749, %v13995, 0
  %v14291 = vsel %vm4749, %v14003, 0
  %v14294 = vsel %vm4749, %v14011, 0
  %v14297 = vsel %vm4749, %v14019, 0
  %v14300 = vsel %vm4749, %v14027, 0
  %v14303 = vsel %vm4749, %v14035, 0
  %v14306 = vsel %vm4749, %v14043, 0
  %v14309 = vsel %vm4749, %v14051, 0
  %v14312 = vsel %vm4749, %v14059, 0
  %v14315 = vsel %vm4749, %v14067, 0
  %v14318 = vsel %vm4749, %v14075, 0
  %v14321 = vsel %vm4749, %v14083, 0
  %v14324 = vsel %vm4749, %v14091, 0
  %v14327 = vsel %vm4749, %v14099, 0
  %v14330 = vsel %vm4749, %v14107, 0
  %v14333 = vsel %vm4749, %v14115, 0
  %v14336 = vsel %vm4749, %v14123, 0
  %v14339 = vsel %vm4749, %v14131, 0
  %v14342 = vsel %vm4749, %v14139, 0
  %v14345 = vsel %vm4749, %v14147, 0
  %v14348 = vsel %vm4749, %v14155, 0
  %v14351 = vsel %vm4749, %v14163, 0
  %v14354 = vsel %vm4749, %v14171, 0
  %v14357 = vsel %vm4749, %v14179, 0
  %v14360 = vsel %vm4749, %v14187, 0
  %v14363 = vsel %vm4749, %v14195, 0
  %v14366 = vsel %vm4749, %v14203, 0
  %v14369 = vsel %vm4749, %v14211, 0
  %v14372 = vsel %vm4749, %v14219, 0
  %v14375 = vsel %vm4749, %v14227, 0
  %v14378 = vsel %vm4749, %v14235, 0
  %v14381 = vsel %vm4749, %v14243, 0
  %v14384 = vsel %vm4749, %v14251, 0
  %v14387 = vsel %vm4749, %v14259, 0
  %v14390 = vsel %vm4749, %v14258, 0
  %v14393 = vsel %vm4867, %v14272, 0
  %14395 = vmatprep.subr.bf16.mxu0 0
  %14396 = vmatpush1.bf16.msra.mxu0 %v14270
  %14397 = vmatprep.subr.bf16.mxu0 0
  %14398 = vmatpush1.bf16.msra.mxu0 %v14271
  %14399 = vmatprep.subr.bf16.mxu0 0
  %14400 = vmatpush1.bf16.msra.mxu0 %v14393
  %14401 = vmatprep.subr.bf16.mxu0 0
  %14402 = vmatpush1.bf16.msra.mxu0 0
  %14403 = vmatprep.subr.bf16.mxu0 0
  %14404 = vmatpush1.bf16.msra.mxu0 0
  %14405 = vmatprep.subr.bf16.mxu0 0
  %14406 = vmatpush1.bf16.msra.mxu0 0
  %14407 = vmatprep.subr.bf16.mxu0 0
  %14408 = vmatpush1.bf16.msra.mxu0 0
  %14409 = vmatprep.subr.bf16.mxu0 0
  %14410 = vmatpush1.bf16.msra.mxu0 0
  %14411 = vmatprep.subr.bf16.mxu0 0
  %14412 = vmatpush1.bf16.msra.mxu0 0
  %14413 = vmatprep.subr.bf16.mxu0 0
  %14414 = vmatpush1.bf16.msra.mxu0 0
  %14415 = vmatprep.subr.bf16.mxu0 0
  %14416 = vmatpush1.bf16.msra.mxu0 0
  %14417 = vmatprep.subr.bf16.mxu0 0
  %14418 = vmatpush1.bf16.msra.mxu0 0
  %14419 = vmatprep.subr.bf16.mxu0 0
  %14420 = vmatpush1.bf16.msra.mxu0 0
  %14421 = vmatprep.subr.bf16.mxu0 0
  %14422 = vmatpush1.bf16.msra.mxu0 0
  %14423 = vmatprep.subr.bf16.mxu0 0
  %14424 = vmatpush1.bf16.msra.mxu0 0
  %14425 = vmatprep.subr.bf16.mxu0 0
  %14426 = vmatpush1.bf16.msra.mxu0 0
  %14427 = vmatprep.mubr.bf16.mxu0 0
  %14428 = vmatmul.mubr.bf16.gmra.mrb[0].mxu0 %v14276
  %v14429 = vpop.f32.mrb[0].mxu0
  %v14430 = vadd.f32 0.0, %v14429
  %v14431 = vpop.f32.mrb[0].mxu0
  %v14432 = vpop.f32.mrb[0].mxu0
  %v14433 = vadd.f32 0.0, %v14432
  %v14434 = vpop.f32.mrb[0].mxu0
  %14435 = vmatprep.mubr.bf16.mxu0 0
  %14436 = vmatmul.mubr.bf16.gmra.mrb[0].mxu0 %v14279
  %v14437 = vpop.f32.mrb[0].mxu0
  %v14438 = vadd.f32 0.0, %v14437
  %v14439 = vpop.f32.mrb[0].mxu0
  %v14440 = vpop.f32.mrb[0].mxu0
  %v14441 = vadd.f32 0.0, %v14440
  %v14442 = vpop.f32.mrb[0].mxu0
  %14443 = vmatprep.mubr.bf16.mxu0 0
  %14444 = vmatmul.mubr.bf16.gmra.mrb[0].mxu0 %v14282
  %v14445 = vpop.f32.mrb[0].mxu0
  %v14446 = vadd.f32 0.0, %v14445
  %v14447 = vpop.f32.mrb[0].mxu0
  %v14448 = vpop.f32.mrb[0].mxu0
  %v14449 = vadd.f32 0.0, %v14448
  %v14450 = vpop.f32.mrb[0].mxu0
  %14451 = vmatprep.mubr.bf16.mxu0 0
  %14452 = vmatmul.mubr.bf16.gmra.mrb[0].mxu0 %v14285
  %v14453 = vpop.f32.mrb[0].mxu0
  %v14454 = vadd.f32 0.0, %v14453
  %v14455 = vpop.f32.mrb[0].mxu0
  %v14456 = vpop.f32.mrb[0].mxu0
  %v14457 = vadd.f32 0.0, %v14456
  %v14458 = vpop.f32.mrb[0].mxu0
  %14459 = vmatprep.mubr.bf16.mxu0 0
  %14460 = vmatmul.mubr.bf16.gmra.mrb[0].mxu0 %v14288
  %v14461 = vpop.f32.mrb[0].mxu0
  %v14462 = vadd.f32 0.0, %v14461
  %v14463 = vpop.f32.mrb[0].mxu0
  %v14464 = vpop.f32.mrb[0].mxu0
  %v14465 = vadd.f32 0.0, %v14464
  %v14466 = vpop.f32.mrb[0].mxu0
  %14467 = vmatprep.mubr.bf16.mxu0 0
  %14468 = vmatmul.mubr.bf16.gmra.mrb[0].mxu0 %v14291
  %v14469 = vpop.f32.mrb[0].mxu0
  %v14470 = vadd.f32 0.0, %v14469
  %v14471 = vpop.f32.mrb[0].mxu0
  %v14472 = vpop.f32.mrb[0].mxu0
  %v14473 = vadd.f32 0.0, %v14472
  %v14474 = vpop.f32.mrb[0].mxu0
  %14475 = vmatprep.mubr.bf16.mxu0 0
  %14476 = vmatmul.mubr.bf16.gmra.mrb[0].mxu0 %v14294
  %v14477 = vpop.f32.mrb[0].mxu0
  %v14478 = vadd.f32 0.0, %v14477
  %v14479 = vpop.f32.mrb[0].mxu0
  %v14480 = vpop.f32.mrb[0].mxu0
  %v14481 = vadd.f32 0.0, %v14480
  %v14482 = vpop.f32.mrb[0].mxu0
  %14483 = vmatprep.mubr.bf16.mxu0 0
  %14484 = vmatmul.mubr.bf16.gmra.mrb[0].mxu0 %v14297
  %v14485 = vpop.f32.mrb[0].mxu0
  %v14486 = vadd.f32 0.0, %v14485
  %v14487 = vpop.f32.mrb[0].mxu0
  %v14488 = vpop.f32.mrb[0].mxu0
  %v14489 = vadd.f32 0.0, %v14488
  %v14490 = vpop.f32.mrb[0].mxu0
  %14491 = vmatprep.mubr.bf16.mxu0 0
  %14492 = vmatmul.mubr.bf16.gmra.mrb[0].mxu0 %v14300
  %v14493 = vpop.f32.mrb[0].mxu0
  %v14494 = vadd.f32 0.0, %v14493
  %v14495 = vpop.f32.mrb[0].mxu0
  %v14496 = vpop.f32.mrb[0].mxu0
  %v14497 = vadd.f32 0.0, %v14496
  %v14498 = vpop.f32.mrb[0].mxu0
  %14499 = vmatprep.mubr.bf16.mxu0 0
  %14500 = vmatmul.mubr.bf16.gmra.mrb[0].mxu0 %v14303
  %v14501 = vpop.f32.mrb[0].mxu0
  %v14502 = vadd.f32 0.0, %v14501
  %v14503 = vpop.f32.mrb[0].mxu0
  %v14504 = vpop.f32.mrb[0].mxu0
  %v14505 = vadd.f32 0.0, %v14504
  %v14506 = vpop.f32.mrb[0].mxu0
  %14507 = vmatprep.mubr.bf16.mxu0 0
  %14508 = vmatmul.mubr.bf16.gmra.mrb[0].mxu0 %v14306
  %v14509 = vpop.f32.mrb[0].mxu0
  %v14510 = vadd.f32 0.0, %v14509
  %v14511 = vpop.f32.mrb[0].mxu0
  %v14512 = vpop.f32.mrb[0].mxu0
  %v14513 = vadd.f32 0.0, %v14512
  %v14514 = vpop.f32.mrb[0].mxu0
  %14515 = vmatprep.mubr.bf16.mxu0 0
  %14516 = vmatmul.mubr.bf16.gmra.mrb[0].mxu0 %v14309
  %v14517 = vpop.f32.mrb[0].mxu0
  %v14518 = vadd.f32 0.0, %v14517
  %v14519 = vpop.f32.mrb[0].mxu0
  %v14520 = vpop.f32.mrb[0].mxu0
  %v14521 = vadd.f32 0.0, %v14520
  %v14522 = vpop.f32.mrb[0].mxu0
  %14523 = vmatprep.mubr.bf16.mxu0 0
  %14524 = vmatmul.mubr.bf16.gmra.mrb[0].mxu0 %v14312
  %v14525 = vpop.f32.mrb[0].mxu0
  %v14526 = vadd.f32 0.0, %v14525
  %v14527 = vpop.f32.mrb[0].mxu0
  %v14528 = vpop.f32.mrb[0].mxu0
  %v14529 = vadd.f32 0.0, %v14528
  %v14530 = vpop.f32.mrb[0].mxu0
  %14531 = vmatprep.mubr.bf16.mxu0 0
  %14532 = vmatmul.mubr.bf16.gmra.mrb[0].mxu0 %v14315
  %v14533 = vpop.f32.mrb[0].mxu0
  %v14534 = vadd.f32 0.0, %v14533
  %v14535 = vpop.f32.mrb[0].mxu0
  %v14536 = vpop.f32.mrb[0].mxu0
  %v14537 = vadd.f32 0.0, %v14536
  %v14538 = vpop.f32.mrb[0].mxu0
  %14539 = vmatprep.mubr.bf16.mxu0 0
  %14540 = vmatmul.mubr.bf16.gmra.mrb[0].mxu0 %v14318
  %v14541 = vpop.f32.mrb[0].mxu0
  %v14542 = vadd.f32 0.0, %v14541
  %v14543 = vpop.f32.mrb[0].mxu0
  %v14544 = vpop.f32.mrb[0].mxu0
  %v14545 = vadd.f32 0.0, %v14544
  %v14546 = vpop.f32.mrb[0].mxu0
  %14547 = vmatprep.mubr.bf16.mxu0 0
  %14548 = vmatmul.mubr.bf16.gmra.mrb[0].mxu0 %v14321
  %v14549 = vpop.f32.mrb[0].mxu0
  %v14550 = vadd.f32 0.0, %v14549
  %v14551 = vpop.f32.mrb[0].mxu0
  %v14552 = vpop.f32.mrb[0].mxu0
  %v14553 = vadd.f32 0.0, %v14552
  %v14554 = vpop.f32.mrb[0].mxu0
  %14555 = vmatprep.mubr.bf16.mxu0 0
  %14556 = vmatmul.mubr.bf16.gmra.mrb[0].mxu0 %v14324
  %v14557 = vpop.f32.mrb[0].mxu0
  %v14558 = vadd.f32 0.0, %v14557
  %v14559 = vpop.f32.mrb[0].mxu0
  %v14560 = vpop.f32.mrb[0].mxu0
  %v14561 = vadd.f32 0.0, %v14560
  %v14562 = vpop.f32.mrb[0].mxu0
  %14563 = vmatprep.mubr.bf16.mxu0 0
  %14564 = vmatmul.mubr.bf16.gmra.mrb[0].mxu0 %v14327
  %v14565 = vpop.f32.mrb[0].mxu0
  %v14566 = vadd.f32 0.0, %v14565
  %v14567 = vpop.f32.mrb[0].mxu0
  %v14568 = vpop.f32.mrb[0].mxu0
  %v14569 = vadd.f32 0.0, %v14568
  %v14570 = vpop.f32.mrb[0].mxu0
  %14571 = vmatprep.mubr.bf16.mxu0 0
  %14572 = vmatmul.mubr.bf16.gmra.mrb[0].mxu0 %v14330
  %v14573 = vpop.f32.mrb[0].mxu0
  %v14574 = vadd.f32 0.0, %v14573
  %v14575 = vpop.f32.mrb[0].mxu0
  %v14576 = vpop.f32.mrb[0].mxu0
  %v14577 = vadd.f32 0.0, %v14576
  %v14578 = vpop.f32.mrb[0].mxu0
  %14579 = vmatprep.mubr.bf16.mxu0 0
  %14580 = vmatmul.mubr.bf16.gmra.mrb[0].mxu0 %v14333
  %v14581 = vpop.f32.mrb[0].mxu0
  %v14582 = vadd.f32 0.0, %v14581
  %v14583 = vpop.f32.mrb[0].mxu0
  %v14584 = vpop.f32.mrb[0].mxu0
  %v14585 = vadd.f32 0.0, %v14584
  %v14586 = vpop.f32.mrb[0].mxu0
  %14587 = vmatprep.mubr.bf16.mxu0 0
  %14588 = vmatmul.mubr.bf16.gmra.mrb[0].mxu0 %v14336
  %v14589 = vpop.f32.mrb[0].mxu0
  %v14590 = vadd.f32 0.0, %v14589
  %v14591 = vpop.f32.mrb[0].mxu0
  %v14592 = vpop.f32.mrb[0].mxu0
  %v14593 = vadd.f32 0.0, %v14592
  %v14594 = vpop.f32.mrb[0].mxu0
  %14595 = vmatprep.mubr.bf16.mxu0 0
  %14596 = vmatmul.mubr.bf16.gmra.mrb[0].mxu0 %v14339
  %v14597 = vpop.f32.mrb[0].mxu0
  %v14598 = vadd.f32 0.0, %v14597
  %v14599 = vpop.f32.mrb[0].mxu0
  %v14600 = vpop.f32.mrb[0].mxu0
  %v14601 = vadd.f32 0.0, %v14600
  %v14602 = vpop.f32.mrb[0].mxu0
  %14603 = vmatprep.mubr.bf16.mxu0 0
  %14604 = vmatmul.mubr.bf16.gmra.mrb[0].mxu0 %v14342
  %v14605 = vpop.f32.mrb[0].mxu0
  %v14606 = vadd.f32 0.0, %v14605
  %v14607 = vpop.f32.mrb[0].mxu0
  %v14608 = vpop.f32.mrb[0].mxu0
  %v14609 = vadd.f32 0.0, %v14608
  %v14610 = vpop.f32.mrb[0].mxu0
  %14611 = vmatprep.mubr.bf16.mxu0 0
  %14612 = vmatmul.mubr.bf16.gmra.mrb[0].mxu0 %v14345
  %v14613 = vpop.f32.mrb[0].mxu0
  %v14614 = vadd.f32 0.0, %v14613
  %v14615 = vpop.f32.mrb[0].mxu0
  %v14616 = vpop.f32.mrb[0].mxu0
  %v14617 = vadd.f32 0.0, %v14616
  %v14618 = vpop.f32.mrb[0].mxu0
  %14619 = vmatprep.mubr.bf16.mxu0 0
  %14620 = vmatmul.mubr.bf16.gmra.mrb[0].mxu0 %v14348
  %v14621 = vpop.f32.mrb[0].mxu0
  %v14622 = vadd.f32 0.0, %v14621
  %v14623 = vpop.f32.mrb[0].mxu0
  %v14624 = vpop.f32.mrb[0].mxu0
  %v14625 = vadd.f32 0.0, %v14624
  %v14626 = vpop.f32.mrb[0].mxu0
  %14627 = vmatprep.mubr.bf16.mxu0 0
  %14628 = vmatmul.mubr.bf16.gmra.mrb[0].mxu0 %v14351
  %v14629 = vpop.f32.mrb[0].mxu0
  %v14630 = vadd.f32 0.0, %v14629
  %v14631 = vpop.f32.mrb[0].mxu0
  %v14632 = vpop.f32.mrb[0].mxu0
  %v14633 = vadd.f32 0.0, %v14632
  %v14634 = vpop.f32.mrb[0].mxu0
  %14635 = vmatprep.mubr.bf16.mxu0 0
  %14636 = vmatmul.mubr.bf16.gmra.mrb[0].mxu0 %v14354
  %v14637 = vpop.f32.mrb[0].mxu0
  %v14638 = vadd.f32 0.0, %v14637
  %v14639 = vpop.f32.mrb[0].mxu0
  %v14640 = vpop.f32.mrb[0].mxu0
  %v14641 = vadd.f32 0.0, %v14640
  %v14642 = vpop.f32.mrb[0].mxu0
  %14643 = vmatprep.mubr.bf16.mxu0 0
  %14644 = vmatmul.mubr.bf16.gmra.mrb[0].mxu0 %v14357
  %v14645 = vpop.f32.mrb[0].mxu0
  %v14646 = vadd.f32 0.0, %v14645
  %v14647 = vpop.f32.mrb[0].mxu0
  %v14648 = vpop.f32.mrb[0].mxu0
  %v14649 = vadd.f32 0.0, %v14648
  %v14650 = vpop.f32.mrb[0].mxu0
  %14651 = vmatprep.mubr.bf16.mxu0 0
  %14652 = vmatmul.mubr.bf16.gmra.mrb[0].mxu0 %v14360
  %v14653 = vpop.f32.mrb[0].mxu0
  %v14654 = vadd.f32 0.0, %v14653
  %v14655 = vpop.f32.mrb[0].mxu0
  %v14656 = vpop.f32.mrb[0].mxu0
  %v14657 = vadd.f32 0.0, %v14656
  %v14658 = vpop.f32.mrb[0].mxu0
  %14659 = vmatprep.mubr.bf16.mxu0 0
  %14660 = vmatmul.mubr.bf16.gmra.mrb[0].mxu0 %v14363
  %v14661 = vpop.f32.mrb[0].mxu0
  %v14662 = vadd.f32 0.0, %v14661
  %v14663 = vpop.f32.mrb[0].mxu0
  %v14664 = vpop.f32.mrb[0].mxu0
  %v14665 = vadd.f32 0.0, %v14664
  %v14666 = vpop.f32.mrb[0].mxu0
  %14667 = vmatprep.mubr.bf16.mxu0 0
  %14668 = vmatmul.mubr.bf16.gmra.mrb[0].mxu0 %v14366
  %v14669 = vpop.f32.mrb[0].mxu0
  %v14670 = vadd.f32 0.0, %v14669
  %v14671 = vpop.f32.mrb[0].mxu0
  %v14672 = vpop.f32.mrb[0].mxu0
  %v14673 = vadd.f32 0.0, %v14672
  %v14674 = vpop.f32.mrb[0].mxu0
  %14675 = vmatprep.mubr.bf16.mxu0 0
  %14676 = vmatmul.mubr.bf16.gmra.mrb[0].mxu0 %v14369
  %v14677 = vpop.f32.mrb[0].mxu0
  %v14678 = vadd.f32 0.0, %v14677
  %v14679 = vpop.f32.mrb[0].mxu0
  %v14680 = vpop.f32.mrb[0].mxu0
  %v14681 = vadd.f32 0.0, %v14680
  %v14682 = vpop.f32.mrb[0].mxu0
  %14683 = vmatprep.mubr.bf16.mxu0 0
  %14684 = vmatmul.mubr.bf16.gmra.mrb[0].mxu0 %v14372
  %v14685 = vpop.f32.mrb[0].mxu0
  %v14686 = vadd.f32 0.0, %v14685
  %v14687 = vpop.f32.mrb[0].mxu0
  %v14688 = vpop.f32.mrb[0].mxu0
  %v14689 = vadd.f32 0.0, %v14688
  %v14690 = vpop.f32.mrb[0].mxu0
  %14691 = vmatprep.mubr.bf16.mxu0 0
  %14692 = vmatmul.mubr.bf16.gmra.mrb[0].mxu0 %v14375
  %v14693 = vpop.f32.mrb[0].mxu0
  %v14694 = vadd.f32 0.0, %v14693
  %v14695 = vpop.f32.mrb[0].mxu0
  %v14696 = vpop.f32.mrb[0].mxu0
  %v14697 = vadd.f32 0.0, %v14696
  %v14698 = vpop.f32.mrb[0].mxu0
  %14699 = vmatprep.mubr.bf16.mxu0 0
  %14700 = vmatmul.mubr.bf16.gmra.mrb[0].mxu0 %v14378
  %v14701 = vpop.f32.mrb[0].mxu0
  %v14702 = vadd.f32 0.0, %v14701
  %v14703 = vpop.f32.mrb[0].mxu0
  %v14704 = vpop.f32.mrb[0].mxu0
  %v14705 = vadd.f32 0.0, %v14704
  %v14706 = vpop.f32.mrb[0].mxu0
  %14707 = vmatprep.mubr.bf16.mxu0 0
  %14708 = vmatmul.mubr.bf16.gmra.mrb[0].mxu0 %v14381
  %v14709 = vpop.f32.mrb[0].mxu0
  %v14710 = vadd.f32 0.0, %v14709
  %v14711 = vpop.f32.mrb[0].mxu0
  %v14712 = vpop.f32.mrb[0].mxu0
  %v14713 = vadd.f32 0.0, %v14712
  %v14714 = vpop.f32.mrb[0].mxu0
  %14715 = vmatprep.mubr.bf16.mxu0 0
  %14716 = vmatmul.mubr.bf16.gmra.mrb[0].mxu0 %v14384
  %v14717 = vpop.f32.mrb[0].mxu0
  %v14718 = vadd.f32 0.0, %v14717
  %v14719 = vpop.f32.mrb[0].mxu0
  %v14720 = vpop.f32.mrb[0].mxu0
  %v14721 = vadd.f32 0.0, %v14720
  %v14722 = vpop.f32.mrb[0].mxu0
  %14723 = vmatprep.mubr.bf16.mxu0 0
  %14724 = vmatmul.mubr.bf16.gmra.mrb[0].mxu0 %v14387
  %v14725 = vpop.f32.mrb[0].mxu0
  %v14726 = vadd.f32 0.0, %v14725
  %v14727 = vpop.f32.mrb[0].mxu0
  %v14728 = vpop.f32.mrb[0].mxu0
  %v14729 = vadd.f32 0.0, %v14728
  %v14730 = vpop.f32.mrb[0].mxu0
  %14731 = vmatprep.mubr.bf16.mxu0 0
  %14732 = vmatmul.mubr.bf16.gmra.mrb[0].mxu0 %v14390
  %v14733 = vpop.f32.mrb[0].mxu0
  %v14734 = vadd.f32 0.0, %v14733
  %v14735 = vpop.f32.mrb[0].mxu0
  %v14736 = vpop.f32.mrb[0].mxu0
  %v14737 = vpop.f32.mrb[0].mxu0
  %14738 = vdwg.mxu0
  %14739 = vst.msk [vmem:[%s8 + $0x20] sm:$0xff] %vm4022, %v14430
  %14740 = vst.msk [vmem:[%s8 + $0x28] sm:$0xff] %vm4022, %v14433
  %14741 = vst.msk [vmem:[%s8 + $0x30] sm:$0xff] %vm4022, %v14438
  %14742 = vst.msk [vmem:[%s8 + $0x38] sm:$0xff] %vm4022, %v14441
  %14743 = vst.msk [vmem:[%s8 + $0x40] sm:$0xff] %vm4022, %v14446
  %14744 = vst.msk [vmem:[%s8 + $0x48] sm:$0xff] %vm4022, %v14449
  %14745 = vst.msk [vmem:[%s8 + $0x50] sm:$0xff] %vm4022, %v14454
  %14746 = vst.msk [vmem:[%s8 + $0x58] sm:$0xff] %vm4022, %v14457
  %14747 = vst.msk [vmem:[%s8 + $0x60] sm:$0xff] %vm4022, %v14462
  %14748 = vst.msk [vmem:[%s8 + $0x68] sm:$0xff] %vm4022, %v14465
  %14749 = vst.msk [vmem:[%s8 + $0x70] sm:$0xff] %vm4022, %v14470
  %14750 = vst.msk [vmem:[%s8 + $0x78] sm:$0xff] %vm4022, %v14473
  %14751 = vst.msk [vmem:[%s8 + $0x80] sm:$0xff] %vm4022, %v14478
  %14752 = vst.msk [vmem:[%s8 + $0x88] sm:$0xff] %vm4022, %v14481
  %14753 = vst.msk [vmem:[%s8 + $0x90] sm:$0xff] %vm4022, %v14486
  %14754 = vst.msk [vmem:[%s8 + $0x98] sm:$0xff] %vm4022, %v14489
  %14755 = vst.msk [vmem:[%s8 + $0xa0] sm:$0xff] %vm4022, %v14494
  %14756 = vst.msk [vmem:[%s8 + $0xa8] sm:$0xff] %vm4022, %v14497
  %14757 = vst.msk [vmem:[%s8 + $0xb0] sm:$0xff] %vm4022, %v14502
  %14758 = vst.msk [vmem:[%s8 + $0xb8] sm:$0xff] %vm4022, %v14505
  %14759 = vst.msk [vmem:[%s8 + $0xc0] sm:$0xff] %vm4022, %v14510
  %14760 = vst.msk [vmem:[%s8 + $0xc8] sm:$0xff] %vm4022, %v14513
  %14761 = vst.msk [vmem:[%s8 + $0xd0] sm:$0xff] %vm4022, %v14518
  %14762 = vst.msk [vmem:[%s8 + $0xd8] sm:$0xff] %vm4022, %v14521
  %14763 = vst.msk [vmem:[%s8 + $0xe0] sm:$0xff] %vm4022, %v14526
  %14764 = vst.msk [vmem:[%s8 + $0xe8] sm:$0xff] %vm4022, %v14529
  %14765 = vst.msk [vmem:[%s8 + $0xf0] sm:$0xff] %vm4022, %v14534
  %14766 = vst.msk [vmem:[%s8 + $0xf8] sm:$0xff] %vm4022, %v14537
  %14767 = vst.msk [vmem:[%s8 + $0x100] sm:$0xff] %vm4022, %v14542
  %14768 = vst.msk [vmem:[%s8 + $0x108] sm:$0xff] %vm4022, %v14545
  %14769 = vst.msk [vmem:[%s8 + $0x110] sm:$0xff] %vm4022, %v14550
  %14770 = vst.msk [vmem:[%s8 + $0x118] sm:$0xff] %vm4022, %v14553
  %14771 = vst.msk [vmem:[%s8 + $0x120] sm:$0xff] %vm4022, %v14558
  %14772 = vst.msk [vmem:[%s8 + $0x128] sm:$0xff] %vm4022, %v14561
  %14773 = vst.msk [vmem:[%s8 + $0x130] sm:$0xff] %vm4022, %v14566
  %14774 = vst.msk [vmem:[%s8 + $0x138] sm:$0xff] %vm4022, %v14569
  %14775 = vst.msk [vmem:[%s8 + $0x140] sm:$0xff] %vm4022, %v14574
  %14776 = vst.msk [vmem:[%s8 + $0x148] sm:$0xff] %vm4022, %v14577
  %14777 = vst.msk [vmem:[%s8 + $0x150] sm:$0xff] %vm4022, %v14582
  %14778 = vst.msk [vmem:[%s8 + $0x158] sm:$0xff] %vm4022, %v14585
  %14779 = vst.msk [vmem:[%s8 + $0x160] sm:$0xff] %vm4022, %v14590
  %14780 = vst.msk [vmem:[%s8 + $0x168] sm:$0xff] %vm4022, %v14593
  %14781 = vst.msk [vmem:[%s8 + $0x170] sm:$0xff] %vm4022, %v14598
  %14782 = vst.msk [vmem:[%s8 + $0x178] sm:$0xff] %vm4022, %v14601
  %14783 = vst.msk [vmem:[%s8 + $0x180] sm:$0xff] %vm4022, %v14606
  %14784 = vst.msk [vmem:[%s8 + $0x188] sm:$0xff] %vm4022, %v14609
  %14785 = vst.msk [vmem:[%s8 + $0x190] sm:$0xff] %vm4022, %v14614
  %14786 = vst.msk [vmem:[%s8 + $0x198] sm:$0xff] %vm4022, %v14617
  %14787 = vst.msk [vmem:[%s8 + $0x1a0] sm:$0xff] %vm4022, %v14622
  %14788 = vst.msk [vmem:[%s8 + $0x1a8] sm:$0xff] %vm4022, %v14625
  %14789 = vst.msk [vmem:[%s8 + $0x1b0] sm:$0xff] %vm4022, %v14630
  %14790 = vst.msk [vmem:[%s8 + $0x1b8] sm:$0xff] %vm4022, %v14633
  %14791 = vst.msk [vmem:[%s8 + $0x1c0] sm:$0xff] %vm4022, %v14638
  %14792 = vst.msk [vmem:[%s8 + $0x1c8] sm:$0xff] %vm4022, %v14641
  %14793 = vst.msk [vmem:[%s8 + $0x1d0] sm:$0xff] %vm4022, %v14646
  %14794 = vst.msk [vmem:[%s8 + $0x1d8] sm:$0xff] %vm4022, %v14649
  %14795 = vst.msk [vmem:[%s8 + $0x1e0] sm:$0xff] %vm4022, %v14654
  %14796 = vst.msk [vmem:[%s8 + $0x1e8] sm:$0xff] %vm4022, %v14657
  %14797 = vst.msk [vmem:[%s8 + $0x1f0] sm:$0xff] %vm4022, %v14662
  %14798 = vst.msk [vmem:[%s8 + $0x1f8] sm:$0xff] %vm4022, %v14665
  %14799 = vst.msk [vmem:[%s8 + $0x200] sm:$0xff] %vm4022, %v14670
  %14800 = vst.msk [vmem:[%s8 + $0x208] sm:$0xff] %vm4022, %v14673
  %14801 = vst.msk [vmem:[%s8 + $0x210] sm:$0xff] %vm4022, %v14678
  %14802 = vst.msk [vmem:[%s8 + $0x218] sm:$0xff] %vm4022, %v14681
  %14803 = vst.msk [vmem:[%s8 + $0x220] sm:$0xff] %vm4022, %v14686
  %14804 = vst.msk [vmem:[%s8 + $0x228] sm:$0xff] %vm4022, %v14689
  %14805 = vst.msk [vmem:[%s8 + $0x230] sm:$0xff] %vm4022, %v14694
  %14806 = vst.msk [vmem:[%s8 + $0x238] sm:$0xff] %vm4022, %v14697
  %14807 = vst.msk [vmem:[%s8 + $0x240] sm:$0xff] %vm4022, %v14702
  %14808 = vst.msk [vmem:[%s8 + $0x248] sm:$0xff] %vm4022, %v14705
  %14809 = vst.msk [vmem:[%s8 + $0x250] sm:$0xff] %vm4022, %v14710
  %14810 = vst.msk [vmem:[%s8 + $0x258] sm:$0xff] %vm4022, %v14713
  %14811 = vst.msk [vmem:[%s8 + $0x260] sm:$0xff] %vm4022, %v14718
  %14812 = vst.msk [vmem:[%s8 + $0x268] sm:$0xff] %vm4022, %v14721
  %14813 = vst.msk [vmem:[%s8 + $0x270] sm:$0xff] %vm4022, %v14726
  %14814 = vst.msk [vmem:[%s8 + $0x278] sm:$0xff] %vm4022, %v14729
  %vm14815 = vcmask 123904
  %14816 = vst.msk [vmem:[%s8 + $0x280] sm:$0x3] %vm14815, %v14734
  // Predicated region
  $region34: #{decoder_forward.1} parent=0 // pred_check
    _
  $region35: #{decoder_forward.1} parent=0 // pred_check_branch
    %14818 = sbr.rel (0) target = $region37
  $region36: #{decoder_forward.1} parent=0 // pred_region
    _
  $region37: #{decoder_forward.1} parent=0 // pred_fallthru
    _
  // Predicated region
  $region38: #{decoder_forward.1} parent=0 // pred_check
    _
  $region39: #{decoder_forward.1} parent=0 // pred_check_branch
    %14820 = sbr.rel (0) target = $region41
  $region40: #{decoder_forward.1} parent=0 // pred_region
    _
  $region41: #{decoder_forward.1} parent=0 // pred_fallthru
    _

</llo_original>
